<compile_context>
chip_gen: v7x
topology: tpu7x:2x2x1
jax: 0.10.0
libtpu: 0.0.40
codegen_flags: <defaults>
</compile_context>

<pallas_src>
import functools

import jax
import jax.numpy as jnp
from jax import lax
from jax.experimental import pallas as pl
from jax.experimental.pallas import tpu as pltpu

LANE = 128        # TPU lane width; each LSTM gate gets one full 128-lane block
GATES = 4
BWD_OFF = 32      # lane offset (inside each gate block / state) of the bwd direction
HIDDEN = 20
INPUT_DIM = 3


# -----------------------------------------------------------------------------
# Fused Pallas kernel: Bi-LSTM + LSTM + collect-LSTM over the whole sequence.
# -----------------------------------------------------------------------------
def _model13_kernel(x_ref, wihf_ref, wihb_ref, whhbi_ref, bbi_ref,
                    wih2f_hbm, wih2b_hbm, whh2_hbm, b2_ref,
                    wih3_hbm, whh3_hbm, b3_ref,
                    out_ref,
                    buf_f, buf_b, buf2,
                    pg1f, pg1b, pg2, pg3,
                    w2f_v, w2b_v, whh2_v, wih3_v, whh3_v,
                    dma_sem,
                    *, T, B):
    f32 = jnp.float32
    bf16 = jnp.bfloat16

    # ---- Prefetch stage-2/3 weights HBM->VMEM, hidden behind stage-1 compute.
    prefetch = [
        pltpu.make_async_copy(wih2f_hbm, w2f_v, dma_sem.at[0]),
        pltpu.make_async_copy(wih2b_hbm, w2b_v, dma_sem.at[1]),
        pltpu.make_async_copy(whh2_hbm, whh2_v, dma_sem.at[2]),
        pltpu.make_async_copy(wih3_hbm, wih3_v, dma_sem.at[3]),
        pltpu.make_async_copy(whh3_hbm, whh3_v, dma_sem.at[4]),
    ]
    for cp in prefetch:
        cp.start()

    def lstm_scan(gates_fn, whh, write):
        # Only h @ W_hh (+ the gate nonlinearities) sits on the serial per-step
        # chain; the input projections were hoisted into bulk MXU matmuls.
        # i/f/o columns of every W/b were pre-scaled by 0.5 at pack time, so a
        # single wide tanh yields all four gates: sigmoid(x) = 0.5*tanh(x/2)+0.5.
        h = jnp.zeros((B, LANE), f32)
        c = jnp.zeros((B, LANE), f32)
        for t in range(T):                      # static full unroll (T is tiny)
            g = gates_fn(t) + jnp.dot(h.astype(bf16), whh,
                                      preferred_element_type=f32)
            tg = jnp.tanh(g)                    # ONE wide EUP launch per step
            i_g = 0.5 * tg[:, 0 * LANE:1 * LANE] + 0.5   # 128-aligned slices
            f_g = 0.5 * tg[:, 1 * LANE:2 * LANE] + 0.5
            g_g = tg[:, 2 * LANE:3 * LANE]
            o_g = 0.5 * tg[:, 3 * LANE:4 * LANE] + 0.5
            c = f_g * c + i_g * g_g
            h = o_g * jnp.tanh(c)
            write(t, h)

    # ---- Stage 1: Bi-LSTM, both directions packed into disjoint lane groups.
    x = x_ref[...]                              # (T*B, LANE) bf16, time-major
    pg1f[...] = jnp.dot(x, wihf_ref[...], preferred_element_type=f32) + bbi_ref[...]
    pg1b[...] = jnp.dot(x, wihb_ref[...], preferred_element_type=f32)

    def gates_bi(t):
        # fwd pre-gates of time t + bwd pre-gates of time T-1-t: the time
        # reversal is pure row indexing — no flipped copy of x is ever built.
        return (pg1f[t * B:(t + 1) * B, :]
                + pg1b[(T - 1 - t) * B:(T - t) * B, :])

    def write_bi(t, h):
        # h lanes [0,20)  = fwd hidden at time t
        # h lanes [32,52) = bwd hidden at time T-1-t
        buf_f[t * B:(t + 1) * B, :] = h
        buf_b[(T - 1 - t) * B:(T - t) * B, :] = h

    lstm_scan(gates_bi, whhbi_ref[...], write_bi)

    # ---- Stage 2: middle LSTM (input = 2*HIDDEN Bi-LSTM features) ----
    prefetch[0].wait()
    prefetch[1].wait()
    prefetch[2].wait()
    pg2[...] = (jnp.dot(buf_f[...].astype(bf16), w2f_v[...],
                        preferred_element_type=f32)
                + jnp.dot(buf_b[...].astype(bf16), w2b_v[...],
                          preferred_element_type=f32)
                + b2_ref[...])

    def gates_2(t):
        return pg2[t * B:(t + 1) * B, :]

    def write_2(t, h):
        buf2[t * B:(t + 1) * B, :] = h

    lstm_scan(gates_2, whh2_v[...], write_2)

    # ---- Stage 3: collect LSTM (hidden size 1), output written time-in-lanes ----
    prefetch[3].wait()
    prefetch[4].wait()
    pg3[...] = jnp.dot(buf2[...].astype(bf16), wih3_v[...],
                       preferred_element_type=f32) + b3_ref[...]

    def gates_3(t):
        return pg3[t * B:(t + 1) * B, :]

    lane_ids = lax.broadcasted_iota(jnp.int32, (B, LANE), 1)
    y_cell = [jnp.zeros((B, LANE), f32)]

    def write_out(t, h):
        # lane 0 of h = collect-LSTM output at time t -> placed at lane t
        y_cell[0] = jnp.where(lane_ids == t, h[:, 0:1], y_cell[0])

    lstm_scan(gates_3, whh3_v[...], write_out)
    out_ref[...] = y_cell[0]                    # (B, LANE); lanes [0, T) valid


# -----------------------------------------------------------------------------
# Weight packing (done once, under jit): lane-pad gates to 128 lanes, place the
# backward Bi-LSTM direction at lane offset BWD_OFF, pre-scale i/f/o by 0.5 for
# the single-wide-tanh trick, and store weights as bf16 (biases stay f32).
# -----------------------------------------------------------------------------
def _gate_pad_cols(w_t, H, lane_off):
    # w_t: (K, 4H), PyTorch gate order i,f,g,o along columns
    # -> (K, 4*LANE), gate g occupies cols [g*LANE + lane_off, g*LANE + lane_off + H)
    K = w_t.shape[0]
    gate_scale = jnp.array([0.5, 0.5, 1.0, 0.5], jnp.float32)   # i,f,g,o
    w4 = w_t.reshape(K, GATES, H) * gate_scale[None, :, None]
    w4 = jnp.pad(w4, ((0, 0), (0, 0), (lane_off, LANE - H - lane_off)))
    return w4.reshape(K, GATES * LANE)


def _row_pad(w, rows, row_off):
    # (K, N) -> (rows, N), original rows placed at [row_off, row_off+K)
    return jnp.pad(w, ((row_off, rows - w.shape[0] - row_off), (0, 0)))


def _pack_params(params):
    H = HIDDEN
    wih_f, whh_f, bih_f, bhh_f = [p.astype(jnp.float32) for p in params["bilstm_fwd"]]
    wih_b, whh_b, bih_b, bhh_b = [p.astype(jnp.float32) for p in params["bilstm_bwd"]]
    wih_2, whh_2, bih_2, bhh_2 = [p.astype(jnp.float32) for p in params["lstm"]]
    wih_3, whh_3, bih_3, bhh_3 = [p.astype(jnp.float32) for p in params["collect"]]

    # Bi-LSTM: fwd at lane offset 0, bwd at lane offset BWD_OFF (disjoint lanes).
    wihf = _row_pad(_gate_pad_cols(wih_f.T, H, 0), LANE, 0)
    wihb = _row_pad(_gate_pad_cols(wih_b.T, H, BWD_OFF), LANE, 0)
    whhbi = (_row_pad(_gate_pad_cols(whh_f.T, H, 0), LANE, 0)
             + _row_pad(_gate_pad_cols(whh_b.T, H, BWD_OFF), LANE, BWD_OFF))
    bbi = (_gate_pad_cols((bih_f + bhh_f).reshape(1, GATES * H), H, 0)
           + _gate_pad_cols((bih_b + bhh_b).reshape(1, GATES * H), H, BWD_OFF))

    # Middle LSTM: split W_ih into halves reading fwd lanes [0,20) / bwd lanes [32,52).
    wih2f = _row_pad(_gate_pad_cols(wih_2[:, :H].T, H, 0), LANE, 0)
    wih2b = _row_pad(_gate_pad_cols(wih_2[:, H:].T, H, 0), LANE, BWD_OFF)
    whh2 = _row_pad(_gate_pad_cols(whh_2.T, H, 0), LANE, 0)
    b2 = _gate_pad_cols((bih_2 + bhh_2).reshape(1, GATES * H), H, 0)

    # Collect LSTM (hidden size 1): input read from lanes [0,20) of layer-2 output.
    wih3 = _row_pad(_gate_pad_cols(wih_3.T, 1, 0), LANE, 0)
    whh3 = _row_pad(_gate_pad_cols(whh_3.T, 1, 0), LANE, 0)
    b3 = _gate_pad_cols((bih_3 + bhh_3).reshape(1, GATES), 1, 0)

    bf = lambda w: w.astype(jnp.bfloat16)
    return (bf(wihf), bf(wihb), bf(whhbi), bbi,
            bf(wih2f), bf(wih2b), bf(whh2), b2,
            bf(wih3), bf(whh3), b3)


# -----------------------------------------------------------------------------
# Model_1_3 forward pass (public API: batch-first, like PyTorch)
# -----------------------------------------------------------------------------
def model_1_3_forward(trace, aux, params, unnorm=False):
    """trace: (B, T, input_dim). aux is unused (matches the PyTorch forward)."""
    del aux
    B_real, T, D = trace.shape
    assert D == INPUT_DIM and T <= LANE

    # Pad batch to a multiple of 8 sublanes: all per-step VMEM stores become
    # full (8,128)-tile stores; extra rows ride along for free (latency-bound).
    B = ((B_real + 7) // 8) * 8
    trace_p = jnp.pad(trace.astype(jnp.float32),
                      ((0, B - B_real), (0, 0), (0, 0)))
    x_tbd = jnp.transpose(trace_p, (1, 0, 2))                     # (T, B, D)
    x2d = jnp.pad(x_tbd.reshape(T * B, D),
                  ((0, 0), (0, LANE - D))).astype(jnp.bfloat16)   # (T*B, 128)

    packed = _pack_params(params)

    vmem = pl.BlockSpec(memory_space=pltpu.MemorySpace.VMEM)
    anyspace = pl.BlockSpec(memory_space=pl.ANY)   # prefetched manually in-kernel

    out = pl.pallas_call(
        functools.partial(_model13_kernel, T=T, B=B),
        out_shape=jax.ShapeDtypeStruct((B, LANE), jnp.float32),
        in_specs=[vmem,                                   # x
                  vmem, vmem, vmem, vmem,                 # stage-1 W_ih f/b, W_hh, bias
                  anyspace, anyspace, anyspace, vmem,     # stage-2 W_ih f/b, W_hh, bias
                  anyspace, anyspace, vmem],              # stage-3 W_ih, W_hh, bias
        out_specs=vmem,
        scratch_shapes=[
            pltpu.VMEM((T * B, LANE), jnp.float32),           # buf_f (Bi-LSTM fwd-ordered)
            pltpu.VMEM((T * B, LANE), jnp.float32),           # buf_b (Bi-LSTM bwd-ordered)
            pltpu.VMEM((T * B, LANE), jnp.float32),           # buf2  (middle LSTM output)
            pltpu.VMEM((T * B, GATES * LANE), jnp.float32),   # pg1f (stage-1 fwd pre-gates)
            pltpu.VMEM((T * B, GATES * LANE), jnp.float32),   # pg1b (stage-1 bwd pre-gates)
            pltpu.VMEM((T * B, GATES * LANE), jnp.float32),   # pg2
            pltpu.VMEM((T * B, GATES * LANE), jnp.float32),   # pg3
            pltpu.VMEM((LANE, GATES * LANE), jnp.bfloat16),   # w2f_v  (prefetched)
            pltpu.VMEM((LANE, GATES * LANE), jnp.bfloat16),   # w2b_v  (prefetched)
            pltpu.VMEM((LANE, GATES * LANE), jnp.bfloat16),   # whh2_v (prefetched)
            pltpu.VMEM((LANE, GATES * LANE), jnp.bfloat16),   # wih3_v (prefetched)
            pltpu.VMEM((LANE, GATES * LANE), jnp.bfloat16),   # whh3_v (prefetched)
            pltpu.SemaphoreType.DMA((5,)),
        ],
    )(x2d, *packed)

    y = out[:B_real, :T][:, :, None]                  # (B, T, 1)
    if unnorm:
        y = y * jnp.log10(jnp.float32(101.0))
        y = 10.0 ** y
        y = y - 1.0
    return y


# -----------------------------------------------------------------------------
# Parameter init mirroring nn.LSTM shapes (uniform +-1/sqrt(H))
# -----------------------------------------------------------------------------
def init_params(key, input_dim=3, hidden_dim=20):
    def lstm_params(key, in_dim, hid):
        k = 1.0 / jnp.sqrt(jnp.float32(hid))
        k1, k2, k3, k4 = jax.random.split(key, 4)
        return (
            jax.random.uniform(k1, (4 * hid, in_dim), jnp.float32, -k, k),  # w_ih
            jax.random.uniform(k2, (4 * hid, hid), jnp.float32, -k, k),     # w_hh
            jax.random.uniform(k3, (4 * hid,), jnp.float32, -k, k),         # b_ih
            jax.random.uniform(k4, (4 * hid,), jnp.float32, -k, k),         # b_hh
        )

    kf, kb, kl, kc = jax.random.split(key, 4)
    return {
        "bilstm_fwd": lstm_params(kf, input_dim, hidden_dim),
        "bilstm_bwd": lstm_params(kb, input_dim, hidden_dim),
        "lstm": lstm_params(kl, 2 * hidden_dim, hidden_dim),
        "collect": lstm_params(kc, hidden_dim, 1),
    }


# -----------------------------------------------------------------------------
# Pure-JAX reference (correctness self-check)
# -----------------------------------------------------------------------------
def _lstm_ref(x, w_ih, w_hh, b_ih, b_hh):
    B, T, D = x.shape
    H = w_hh.shape[1]

    def step(carry, x_t):
        h, c = carry
        gates = x_t @ w_ih.T + h @ w_hh.T + b_ih + b_hh
        i_g, f_g, g_g, o_g = jnp.split(gates, 4, axis=-1)
        i_g = jax.nn.sigmoid(i_g)
        f_g = jax.nn.sigmoid(f_g)
        g_g = jnp.tanh(g_g)
        o_g = jax.nn.sigmoid(o_g)
        c = f_g * c + i_g * g_g
        h = o_g * jnp.tanh(c)
        return (h, c), h

    init = (jnp.zeros((B, H), jnp.float32), jnp.zeros((B, H), jnp.float32))
    _, ys = lax.scan(step, init, jnp.swapaxes(x, 0, 1))
    return jnp.swapaxes(ys, 0, 1)


def _model_ref(trace, params):
    h_fwd = _lstm_ref(trace, *params["bilstm_fwd"])
    h_bwd = jnp.flip(_lstm_ref(jnp.flip(trace, axis=1), *params["bilstm_bwd"]), axis=1)
    out = jnp.concatenate([h_fwd, h_bwd], axis=-1)
    out = _lstm_ref(out, *params["lstm"])
    out = _lstm_ref(out, *params["collect"])
    return out


# -----------------------------------------------------------------------------
if __name__ == "__main__":
    key = jax.random.PRNGKey(0)
    k_param, k_trace, k_aux = jax.random.split(key, 3)

    B, T = 2, 8
    params = init_params(k_param, input_dim=INPUT_DIM, hidden_dim=HIDDEN)

    trace = jax.random.normal(k_trace, (B, T, INPUT_DIM), jnp.float32)
    aux = jax.random.normal(k_aux, (B, 4), jnp.float32)   # unused, as in PyTorch forward

    fwd = jax.jit(functools.partial(model_1_3_forward, params=params, unnorm=False))
    out = jax.block_until_ready(fwd(trace, aux))
    assert out.shape == (B, T, 1), out.shape

    # Self-check against a pure-JAX f32 reference of the same math.
    # Tolerance reflects bf16 weight/activation feeding of the MXU — identical in
    # scale to the default-precision truncation the previous version already had.
    ref = jax.block_until_ready(_model_ref(trace, params))
    err = float(jnp.max(jnp.abs(out - ref)))
    assert jnp.allclose(out, ref, atol=1e-2, rtol=1e-2), err

    print("KERNEL_OK")
</pallas_src>

<mosaic_0001>
module attributes {stable_mosaic.version = 11 : i64} {
  func.func @_model13_kernel(%arg0: memref<64x128xbf16, #tpu.memory_space<vmem>>, %arg1: memref<128x512xbf16, #tpu.memory_space<vmem>>, %arg2: memref<128x512xbf16, #tpu.memory_space<vmem>>, %arg3: memref<128x512xbf16, #tpu.memory_space<vmem>>, %arg4: memref<1x512xf32, #tpu.memory_space<vmem>>, %arg5: memref<128x512xbf16, #tpu.memory_space<any>>, %arg6: memref<128x512xbf16, #tpu.memory_space<any>>, %arg7: memref<128x512xbf16, #tpu.memory_space<any>>, %arg8: memref<1x512xf32, #tpu.memory_space<vmem>>, %arg9: memref<128x512xbf16, #tpu.memory_space<any>>, %arg10: memref<128x512xbf16, #tpu.memory_space<any>>, %arg11: memref<1x512xf32, #tpu.memory_space<vmem>>, %arg12: memref<8x128xf32, #tpu.memory_space<vmem>>, %arg13: memref<64x128xf32, #tpu.memory_space<vmem>>, %arg14: memref<64x128xf32, #tpu.memory_space<vmem>>, %arg15: memref<64x128xf32, #tpu.memory_space<vmem>>, %arg16: memref<64x512xf32, #tpu.memory_space<vmem>>, %arg17: memref<64x512xf32, #tpu.memory_space<vmem>>, %arg18: memref<64x512xf32, #tpu.memory_space<vmem>>, %arg19: memref<64x512xf32, #tpu.memory_space<vmem>>, %arg20: memref<128x512xbf16, #tpu.memory_space<vmem>>, %arg21: memref<128x512xbf16, #tpu.memory_space<vmem>>, %arg22: memref<128x512xbf16, #tpu.memory_space<vmem>>, %arg23: memref<128x512xbf16, #tpu.memory_space<vmem>>, %arg24: memref<128x512xbf16, #tpu.memory_space<vmem>>, %arg25: memref<5x!tpu.dma_semaphore, #tpu.memory_space<semaphore_mem>>) attributes {dimension_semantics = [], scalar_prefetch = 0 : i64, scratch_operands = 13 : i64, tpu.core_type = #tpu.core_type<tc>} {
    %c0_i32 = arith.constant 0 : i32
    %0 = tpu.memref_slice %arg25[%c0_i32] : memref<5x!tpu.dma_semaphore, #tpu.memory_space<semaphore_mem>> -> memref<1x!tpu.dma_semaphore, #tpu.memory_space<semaphore_mem>>
    %1 = tpu.memref_squeeze %0 : memref<1x!tpu.dma_semaphore, #tpu.memory_space<semaphore_mem>> -> memref<!tpu.dma_semaphore, #tpu.memory_space<semaphore_mem>>
    tpu.enqueue_dma source(%arg5 : memref<128x512xbf16, #tpu.memory_space<any>>) target(%arg20 : memref<128x512xbf16, #tpu.memory_space<vmem>>) target_semaphore(%1 : memref<!tpu.dma_semaphore, #tpu.memory_space<semaphore_mem>>)
    %c1_i32 = arith.constant 1 : i32
    %2 = tpu.memref_slice %arg25[%c1_i32] : memref<5x!tpu.dma_semaphore, #tpu.memory_space<semaphore_mem>> -> memref<1x!tpu.dma_semaphore, #tpu.memory_space<semaphore_mem>>
    %3 = tpu.memref_squeeze %2 : memref<1x!tpu.dma_semaphore, #tpu.memory_space<semaphore_mem>> -> memref<!tpu.dma_semaphore, #tpu.memory_space<semaphore_mem>>
    tpu.enqueue_dma source(%arg6 : memref<128x512xbf16, #tpu.memory_space<any>>) target(%arg21 : memref<128x512xbf16, #tpu.memory_space<vmem>>) target_semaphore(%3 : memref<!tpu.dma_semaphore, #tpu.memory_space<semaphore_mem>>)
    %c2_i32 = arith.constant 2 : i32
    %4 = tpu.memref_slice %arg25[%c2_i32] : memref<5x!tpu.dma_semaphore, #tpu.memory_space<semaphore_mem>> -> memref<1x!tpu.dma_semaphore, #tpu.memory_space<semaphore_mem>>
    %5 = tpu.memref_squeeze %4 : memref<1x!tpu.dma_semaphore, #tpu.memory_space<semaphore_mem>> -> memref<!tpu.dma_semaphore, #tpu.memory_space<semaphore_mem>>
    tpu.enqueue_dma source(%arg7 : memref<128x512xbf16, #tpu.memory_space<any>>) target(%arg22 : memref<128x512xbf16, #tpu.memory_space<vmem>>) target_semaphore(%5 : memref<!tpu.dma_semaphore, #tpu.memory_space<semaphore_mem>>)
    %c3_i32 = arith.constant 3 : i32
    %6 = tpu.memref_slice %arg25[%c3_i32] : memref<5x!tpu.dma_semaphore, #tpu.memory_space<semaphore_mem>> -> memref<1x!tpu.dma_semaphore, #tpu.memory_space<semaphore_mem>>
    %7 = tpu.memref_squeeze %6 : memref<1x!tpu.dma_semaphore, #tpu.memory_space<semaphore_mem>> -> memref<!tpu.dma_semaphore, #tpu.memory_space<semaphore_mem>>
    tpu.enqueue_dma source(%arg9 : memref<128x512xbf16, #tpu.memory_space<any>>) target(%arg23 : memref<128x512xbf16, #tpu.memory_space<vmem>>) target_semaphore(%7 : memref<!tpu.dma_semaphore, #tpu.memory_space<semaphore_mem>>)
    %c4_i32 = arith.constant 4 : i32
    %8 = tpu.memref_slice %arg25[%c4_i32] : memref<5x!tpu.dma_semaphore, #tpu.memory_space<semaphore_mem>> -> memref<1x!tpu.dma_semaphore, #tpu.memory_space<semaphore_mem>>
    %9 = tpu.memref_squeeze %8 : memref<1x!tpu.dma_semaphore, #tpu.memory_space<semaphore_mem>> -> memref<!tpu.dma_semaphore, #tpu.memory_space<semaphore_mem>>
    tpu.enqueue_dma source(%arg10 : memref<128x512xbf16, #tpu.memory_space<any>>) target(%arg24 : memref<128x512xbf16, #tpu.memory_space<vmem>>) target_semaphore(%9 : memref<!tpu.dma_semaphore, #tpu.memory_space<semaphore_mem>>)
    %c0 = arith.constant 0 : index
    %c0_0 = arith.constant 0 : index
    %10 = vector.load %arg0[%c0, %c0_0] : memref<64x128xbf16, #tpu.memory_space<vmem>>, vector<64x128xbf16>
    %c0_1 = arith.constant 0 : index
    %c0_2 = arith.constant 0 : index
    %11 = vector.load %arg1[%c0_1, %c0_2] : memref<128x512xbf16, #tpu.memory_space<vmem>>, vector<128x512xbf16>
    %cst = arith.constant dense<0.000000e+00> : vector<64x512xf32>
    %12 = tpu.matmul %10, %11, %cst {dimension_numbers = #tpu.dot_dimension_numbers<[1], [0], [0], [1], [0, 0, 1, 1], [], []>} : vector<64x128xbf16>, vector<128x512xbf16>, vector<64x512xf32> -> vector<64x512xf32>
    %c0_3 = arith.constant 0 : index
    %c0_4 = arith.constant 0 : index
    %13 = vector.load %arg4[%c0_3, %c0_4] : memref<1x512xf32, #tpu.memory_space<vmem>>, vector<1x512xf32>
    %14 = vector.broadcast %13 : vector<1x512xf32> to vector<64x512xf32>
    %15 = arith.addf %12, %14 : vector<64x512xf32>
    %c0_5 = arith.constant 0 : index
    %c0_6 = arith.constant 0 : index
    %16 = vector.load %arg16[%c0_5, %c0_6] : memref<64x512xf32, #tpu.memory_space<vmem>>, vector<64x512xf32>
    tpu.vector_store %arg16[%c0_5, %c0_6], %15 {strides = array<i32>} : memref<64x512xf32, #tpu.memory_space<vmem>>, vector<64x512xf32>,
    %c0_7 = arith.constant 0 : index
    %c0_8 = arith.constant 0 : index
    %17 = vector.load %arg2[%c0_7, %c0_8] : memref<128x512xbf16, #tpu.memory_space<vmem>>, vector<128x512xbf16>
    %cst_9 = arith.constant dense<0.000000e+00> : vector<64x512xf32>
    %18 = tpu.matmul %10, %17, %cst_9 {dimension_numbers = #tpu.dot_dimension_numbers<[1], [0], [0], [1], [0, 0, 1, 1], [], []>} : vector<64x128xbf16>, vector<128x512xbf16>, vector<64x512xf32> -> vector<64x512xf32>
    %c0_10 = arith.constant 0 : index
    %c0_11 = arith.constant 0 : index
    %19 = vector.load %arg17[%c0_10, %c0_11] : memref<64x512xf32, #tpu.memory_space<vmem>>, vector<64x512xf32>
    tpu.vector_store %arg17[%c0_10, %c0_11], %18 {strides = array<i32>} : memref<64x512xf32, #tpu.memory_space<vmem>>, vector<64x512xf32>,
    %c0_12 = arith.constant 0 : index
    %c0_13 = arith.constant 0 : index
    %20 = vector.load %arg3[%c0_12, %c0_13] : memref<128x512xbf16, #tpu.memory_space<vmem>>, vector<128x512xbf16>
    %cst_14 = arith.constant 0.000000e+00 : f32
    %21 = vector.broadcast %cst_14 : f32 to vector<8x128xf32>
    %cst_15 = arith.constant 0.000000e+00 : f32
    %22 = vector.broadcast %cst_15 : f32 to vector<8x128xf32>
    %c0_16 = arith.constant 0 : index
    %c0_17 = arith.constant 0 : index
    %23 = vector.load %arg16[%c0_16, %c0_17] : memref<64x512xf32, #tpu.memory_space<vmem>>, vector<8x512xf32>
    %c56 = arith.constant 56 : index
    %c0_18 = arith.constant 0 : index
    %24 = vector.load %arg17[%c56, %c0_18] : memref<64x512xf32, #tpu.memory_space<vmem>>, vector<8x512xf32>
    %25 = arith.addf %23, %24 : vector<8x512xf32>
    %26 = arith.truncf %21 : vector<8x128xf32> to vector<8x128xbf16>
    %cst_19 = arith.constant dense<0.000000e+00> : vector<8x512xf32>
    %27 = tpu.matmul %26, %20, %cst_19 {dimension_numbers = #tpu.dot_dimension_numbers<[1], [0], [0], [1], [0, 0, 1, 1], [], []>} : vector<8x128xbf16>, vector<128x512xbf16>, vector<8x512xf32> -> vector<8x512xf32>
    %28 = arith.addf %25, %27 : vector<8x512xf32>
    %29 = math.tanh %28 : vector<8x512xf32>
    %30 = vector.extract_strided_slice %29 {offsets = [0, 0], sizes = [8, 128], strides = [1, 1]} : vector<8x512xf32> to vector<8x128xf32>
    %cst_20 = arith.constant 5.000000e-01 : f32
    %31 = vector.broadcast %cst_20 : f32 to vector<8x128xf32>
    %32 = arith.mulf %31, %30 : vector<8x128xf32>
    %cst_21 = arith.constant 5.000000e-01 : f32
    %33 = vector.broadcast %cst_21 : f32 to vector<8x128xf32>
    %34 = arith.addf %32, %33 : vector<8x128xf32>
    %35 = vector.extract_strided_slice %29 {offsets = [0, 128], sizes = [8, 128], strides = [1, 1]} : vector<8x512xf32> to vector<8x128xf32>
    %cst_22 = arith.constant 5.000000e-01 : f32
    %36 = vector.broadcast %cst_22 : f32 to vector<8x128xf32>
    %37 = arith.mulf %36, %35 : vector<8x128xf32>
    %cst_23 = arith.constant 5.000000e-01 : f32
    %38 = vector.broadcast %cst_23 : f32 to vector<8x128xf32>
    %39 = arith.addf %37, %38 : vector<8x128xf32>
    %40 = vector.extract_strided_slice %29 {offsets = [0, 256], sizes = [8, 128], strides = [1, 1]} : vector<8x512xf32> to vector<8x128xf32>
    %41 = vector.extract_strided_slice %29 {offsets = [0, 384], sizes = [8, 128], strides = [1, 1]} : vector<8x512xf32> to vector<8x128xf32>
    %cst_24 = arith.constant 5.000000e-01 : f32
    %42 = vector.broadcast %cst_24 : f32 to vector<8x128xf32>
    %43 = arith.mulf %42, %41 : vector<8x128xf32>
    %cst_25 = arith.constant 5.000000e-01 : f32
    %44 = vector.broadcast %cst_25 : f32 to vector<8x128xf32>
    %45 = arith.addf %43, %44 : vector<8x128xf32>
    %46 = arith.mulf %39, %22 : vector<8x128xf32>
    %47 = arith.mulf %34, %40 : vector<8x128xf32>
    %48 = arith.addf %46, %47 : vector<8x128xf32>
    %49 = math.tanh %48 : vector<8x128xf32>
    %50 = arith.mulf %45, %49 : vector<8x128xf32>
    %c0_26 = arith.constant 0 : index
    %c0_27 = arith.constant 0 : index
    %51 = vector.load %arg13[%c0_26, %c0_27] : memref<64x128xf32, #tpu.memory_space<vmem>>, vector<8x128xf32>
    tpu.vector_store %arg13[%c0_26, %c0_27], %50 {strides = array<i32>} : memref<64x128xf32, #tpu.memory_space<vmem>>, vector<8x128xf32>,
    %c56_28 = arith.constant 56 : index
    %c0_29 = arith.constant 0 : index
    %52 = vector.load %arg14[%c56_28, %c0_29] : memref<64x128xf32, #tpu.memory_space<vmem>>, vector<8x128xf32>
    tpu.vector_store %arg14[%c56_28, %c0_29], %50 {strides = array<i32>} : memref<64x128xf32, #tpu.memory_space<vmem>>, vector<8x128xf32>,
    %c8 = arith.constant 8 : index
    %c0_30 = arith.constant 0 : index
    %53 = vector.load %arg16[%c8, %c0_30] : memref<64x512xf32, #tpu.memory_space<vmem>>, vector<8x512xf32>
    %c48 = arith.constant 48 : index
    %c0_31 = arith.constant 0 : index
    %54 = vector.load %arg17[%c48, %c0_31] : memref<64x512xf32, #tpu.memory_space<vmem>>, vector<8x512xf32>
    %55 = arith.addf %53, %54 : vector<8x512xf32>
    %56 = arith.truncf %50 : vector<8x128xf32> to vector<8x128xbf16>
    %cst_32 = arith.constant dense<0.000000e+00> : vector<8x512xf32>
    %57 = tpu.matmul %56, %20, %cst_32 {dimension_numbers = #tpu.dot_dimension_numbers<[1], [0], [0], [1], [0, 0, 1, 1], [], []>} : vector<8x128xbf16>, vector<128x512xbf16>, vector<8x512xf32> -> vector<8x512xf32>
    %58 = arith.addf %55, %57 : vector<8x512xf32>
    %59 = math.tanh %58 : vector<8x512xf32>
    %60 = vector.extract_strided_slice %59 {offsets = [0, 0], sizes = [8, 128], strides = [1, 1]} : vector<8x512xf32> to vector<8x128xf32>
    %cst_33 = arith.constant 5.000000e-01 : f32
    %61 = vector.broadcast %cst_33 : f32 to vector<8x128xf32>
    %62 = arith.mulf %61, %60 : vector<8x128xf32>
    %cst_34 = arith.constant 5.000000e-01 : f32
    %63 = vector.broadcast %cst_34 : f32 to vector<8x128xf32>
    %64 = arith.addf %62, %63 : vector<8x128xf32>
    %65 = vector.extract_strided_slice %59 {offsets = [0, 128], sizes = [8, 128], strides = [1, 1]} : vector<8x512xf32> to vector<8x128xf32>
    %cst_35 = arith.constant 5.000000e-01 : f32
    %66 = vector.broadcast %cst_35 : f32 to vector<8x128xf32>
    %67 = arith.mulf %66, %65 : vector<8x128xf32>
    %cst_36 = arith.constant 5.000000e-01 : f32
    %68 = vector.broadcast %cst_36 : f32 to vector<8x128xf32>
    %69 = arith.addf %67, %68 : vector<8x128xf32>
    %70 = vector.extract_strided_slice %59 {offsets = [0, 256], sizes = [8, 128], strides = [1, 1]} : vector<8x512xf32> to vector<8x128xf32>
    %71 = vector.extract_strided_slice %59 {offsets = [0, 384], sizes = [8, 128], strides = [1, 1]} : vector<8x512xf32> to vector<8x128xf32>
    %cst_37 = arith.constant 5.000000e-01 : f32
    %72 = vector.broadcast %cst_37 : f32 to vector<8x128xf32>
    %73 = arith.mulf %72, %71 : vector<8x128xf32>
    %cst_38 = arith.constant 5.000000e-01 : f32
    %74 = vector.broadcast %cst_38 : f32 to vector<8x128xf32>
    %75 = arith.addf %73, %74 : vector<8x128xf32>
    %76 = arith.mulf %69, %48 : vector<8x128xf32>
    %77 = arith.mulf %64, %70 : vector<8x128xf32>
    %78 = arith.addf %76, %77 : vector<8x128xf32>
    %79 = math.tanh %78 : vector<8x128xf32>
    %80 = arith.mulf %75, %79 : vector<8x128xf32>
    %c8_39 = arith.constant 8 : index
    %c0_40 = arith.constant 0 : index
    %81 = vector.load %arg13[%c8_39, %c0_40] : memref<64x128xf32, #tpu.memory_space<vmem>>, vector<8x128xf32>
    tpu.vector_store %arg13[%c8_39, %c0_40], %80 {strides = array<i32>} : memref<64x128xf32, #tpu.memory_space<vmem>>, vector<8x128xf32>,
    %c48_41 = arith.constant 48 : index
    %c0_42 = arith.constant 0 : index
    %82 = vector.load %arg14[%c48_41, %c0_42] : memref<64x128xf32, #tpu.memory_space<vmem>>, vector<8x128xf32>
    tpu.vector_store %arg14[%c48_41, %c0_42], %80 {strides = array<i32>} : memref<64x128xf32, #tpu.memory_space<vmem>>, vector<8x128xf32>,
    %c16 = arith.constant 16 : index
    %c0_43 = arith.constant 0 : index
    %83 = vector.load %arg16[%c16, %c0_43] : memref<64x512xf32, #tpu.memory_space<vmem>>, vector<8x512xf32>
    %c40 = arith.constant 40 : index
    %c0_44 = arith.constant 0 : index
    %84 = vector.load %arg17[%c40, %c0_44] : memref<64x512xf32, #tpu.memory_space<vmem>>, vector<8x512xf32>
    %85 = arith.addf %83, %84 : vector<8x512xf32>
    %86 = arith.truncf %80 : vector<8x128xf32> to vector<8x128xbf16>
    %cst_45 = arith.constant dense<0.000000e+00> : vector<8x512xf32>
    %87 = tpu.matmul %86, %20, %cst_45 {dimension_numbers = #tpu.dot_dimension_numbers<[1], [0], [0], [1], [0, 0, 1, 1], [], []>} : vector<8x128xbf16>, vector<128x512xbf16>, vector<8x512xf32> -> vector<8x512xf32>
    %88 = arith.addf %85, %87 : vector<8x512xf32>
    %89 = math.tanh %88 : vector<8x512xf32>
    %90 = vector.extract_strided_slice %89 {offsets = [0, 0], sizes = [8, 128], strides = [1, 1]} : vector<8x512xf32> to vector<8x128xf32>
    %cst_46 = arith.constant 5.000000e-01 : f32
    %91 = vector.broadcast %cst_46 : f32 to vector<8x128xf32>
    %92 = arith.mulf %91, %90 : vector<8x128xf32>
    %cst_47 = arith.constant 5.000000e-01 : f32
    %93 = vector.broadcast %cst_47 : f32 to vector<8x128xf32>
    %94 = arith.addf %92, %93 : vector<8x128xf32>
    %95 = vector.extract_strided_slice %89 {offsets = [0, 128], sizes = [8, 128], strides = [1, 1]} : vector<8x512xf32> to vector<8x128xf32>
    %cst_48 = arith.constant 5.000000e-01 : f32
    %96 = vector.broadcast %cst_48 : f32 to vector<8x128xf32>
    %97 = arith.mulf %96, %95 : vector<8x128xf32>
    %cst_49 = arith.constant 5.000000e-01 : f32
    %98 = vector.broadcast %cst_49 : f32 to vector<8x128xf32>
    %99 = arith.addf %97, %98 : vector<8x128xf32>
    %100 = vector.extract_strided_slice %89 {offsets = [0, 256], sizes = [8, 128], strides = [1, 1]} : vector<8x512xf32> to vector<8x128xf32>
    %101 = vector.extract_strided_slice %89 {offsets = [0, 384], sizes = [8, 128], strides = [1, 1]} : vector<8x512xf32> to vector<8x128xf32>
    %cst_50 = arith.constant 5.000000e-01 : f32
    %102 = vector.broadcast %cst_50 : f32 to vector<8x128xf32>
    %103 = arith.mulf %102, %101 : vector<8x128xf32>
    %cst_51 = arith.constant 5.000000e-01 : f32
    %104 = vector.broadcast %cst_51 : f32 to vector<8x128xf32>
    %105 = arith.addf %103, %104 : vector<8x128xf32>
    %106 = arith.mulf %99, %78 : vector<8x128xf32>
    %107 = arith.mulf %94, %100 : vector<8x128xf32>
    %108 = arith.addf %106, %107 : vector<8x128xf32>
    %109 = math.tanh %108 : vector<8x128xf32>
    %110 = arith.mulf %105, %109 : vector<8x128xf32>
    %c16_52 = arith.constant 16 : index
    %c0_53 = arith.constant 0 : index
    %111 = vector.load %arg13[%c16_52, %c0_53] : memref<64x128xf32, #tpu.memory_space<vmem>>, vector<8x128xf32>
    tpu.vector_store %arg13[%c16_52, %c0_53], %110 {strides = array<i32>} : memref<64x128xf32, #tpu.memory_space<vmem>>, vector<8x128xf32>,
    %c40_54 = arith.constant 40 : index
    %c0_55 = arith.constant 0 : index
    %112 = vector.load %arg14[%c40_54, %c0_55] : memref<64x128xf32, #tpu.memory_space<vmem>>, vector<8x128xf32>
    tpu.vector_store %arg14[%c40_54, %c0_55], %110 {strides = array<i32>} : memref<64x128xf32, #tpu.memory_space<vmem>>, vector<8x128xf32>,
    %c24 = arith.constant 24 : index
    %c0_56 = arith.constant 0 : index
    %113 = vector.load %arg16[%c24, %c0_56] : memref<64x512xf32, #tpu.memory_space<vmem>>, vector<8x512xf32>
    %c32 = arith.constant 32 : index
    %c0_57 = arith.constant 0 : index
    %114 = vector.load %arg17[%c32, %c0_57] : memref<64x512xf32, #tpu.memory_space<vmem>>, vector<8x512xf32>
    %115 = arith.addf %113, %114 : vector<8x512xf32>
    %116 = arith.truncf %110 : vector<8x128xf32> to vector<8x128xbf16>
    %cst_58 = arith.constant dense<0.000000e+00> : vector<8x512xf32>
    %117 = tpu.matmul %116, %20, %cst_58 {dimension_numbers = #tpu.dot_dimension_numbers<[1], [0], [0], [1], [0, 0, 1, 1], [], []>} : vector<8x128xbf16>, vector<128x512xbf16>, vector<8x512xf32> -> vector<8x512xf32>
    %118 = arith.addf %115, %117 : vector<8x512xf32>
    %119 = math.tanh %118 : vector<8x512xf32>
    %120 = vector.extract_strided_slice %119 {offsets = [0, 0], sizes = [8, 128], strides = [1, 1]} : vector<8x512xf32> to vector<8x128xf32>
    %cst_59 = arith.constant 5.000000e-01 : f32
    %121 = vector.broadcast %cst_59 : f32 to vector<8x128xf32>
    %122 = arith.mulf %121, %120 : vector<8x128xf32>
    %cst_60 = arith.constant 5.000000e-01 : f32
    %123 = vector.broadcast %cst_60 : f32 to vector<8x128xf32>
    %124 = arith.addf %122, %123 : vector<8x128xf32>
    %125 = vector.extract_strided_slice %119 {offsets = [0, 128], sizes = [8, 128], strides = [1, 1]} : vector<8x512xf32> to vector<8x128xf32>
    %cst_61 = arith.constant 5.000000e-01 : f32
    %126 = vector.broadcast %cst_61 : f32 to vector<8x128xf32>
    %127 = arith.mulf %126, %125 : vector<8x128xf32>
    %cst_62 = arith.constant 5.000000e-01 : f32
    %128 = vector.broadcast %cst_62 : f32 to vector<8x128xf32>
    %129 = arith.addf %127, %128 : vector<8x128xf32>
    %130 = vector.extract_strided_slice %119 {offsets = [0, 256], sizes = [8, 128], strides = [1, 1]} : vector<8x512xf32> to vector<8x128xf32>
    %131 = vector.extract_strided_slice %119 {offsets = [0, 384], sizes = [8, 128], strides = [1, 1]} : vector<8x512xf32> to vector<8x128xf32>
    %cst_63 = arith.constant 5.000000e-01 : f32
    %132 = vector.broadcast %cst_63 : f32 to vector<8x128xf32>
    %133 = arith.mulf %132, %131 : vector<8x128xf32>
    %cst_64 = arith.constant 5.000000e-01 : f32
    %134 = vector.broadcast %cst_64 : f32 to vector<8x128xf32>
    %135 = arith.addf %133, %134 : vector<8x128xf32>
    %136 = arith.mulf %129, %108 : vector<8x128xf32>
    %137 = arith.mulf %124, %130 : vector<8x128xf32>
    %138 = arith.addf %136, %137 : vector<8x128xf32>
    %139 = math.tanh %138 : vector<8x128xf32>
    %140 = arith.mulf %135, %139 : vector<8x128xf32>
    %c24_65 = arith.constant 24 : index
    %c0_66 = arith.constant 0 : index
    %141 = vector.load %arg13[%c24_65, %c0_66] : memref<64x128xf32, #tpu.memory_space<vmem>>, vector<8x128xf32>
    tpu.vector_store %arg13[%c24_65, %c0_66], %140 {strides = array<i32>} : memref<64x128xf32, #tpu.memory_space<vmem>>, vector<8x128xf32>,
    %c32_67 = arith.constant 32 : index
    %c0_68 = arith.constant 0 : index
    %142 = vector.load %arg14[%c32_67, %c0_68] : memref<64x128xf32, #tpu.memory_space<vmem>>, vector<8x128xf32>
    tpu.vector_store %arg14[%c32_67, %c0_68], %140 {strides = array<i32>} : memref<64x128xf32, #tpu.memory_space<vmem>>, vector<8x128xf32>,
    %c32_69 = arith.constant 32 : index
    %c0_70 = arith.constant 0 : index
    %143 = vector.load %arg16[%c32_69, %c0_70] : memref<64x512xf32, #tpu.memory_space<vmem>>, vector<8x512xf32>
    %c24_71 = arith.constant 24 : index
    %c0_72 = arith.constant 0 : index
    %144 = vector.load %arg17[%c24_71, %c0_72] : memref<64x512xf32, #tpu.memory_space<vmem>>, vector<8x512xf32>
    %145 = arith.addf %143, %144 : vector<8x512xf32>
    %146 = arith.truncf %140 : vector<8x128xf32> to vector<8x128xbf16>
    %cst_73 = arith.constant dense<0.000000e+00> : vector<8x512xf32>
    %147 = tpu.matmul %146, %20, %cst_73 {dimension_numbers = #tpu.dot_dimension_numbers<[1], [0], [0], [1], [0, 0, 1, 1], [], []>} : vector<8x128xbf16>, vector<128x512xbf16>, vector<8x512xf32> -> vector<8x512xf32>
    %148 = arith.addf %145, %147 : vector<8x512xf32>
    %149 = math.tanh %148 : vector<8x512xf32>
    %150 = vector.extract_strided_slice %149 {offsets = [0, 0], sizes = [8, 128], strides = [1, 1]} : vector<8x512xf32> to vector<8x128xf32>
    %cst_74 = arith.constant 5.000000e-01 : f32
    %151 = vector.broadcast %cst_74 : f32 to vector<8x128xf32>
    %152 = arith.mulf %151, %150 : vector<8x128xf32>
    %cst_75 = arith.constant 5.000000e-01 : f32
    %153 = vector.broadcast %cst_75 : f32 to vector<8x128xf32>
    %154 = arith.addf %152, %153 : vector<8x128xf32>
    %155 = vector.extract_strided_slice %149 {offsets = [0, 128], sizes = [8, 128], strides = [1, 1]} : vector<8x512xf32> to vector<8x128xf32>
    %cst_76 = arith.constant 5.000000e-01 : f32
    %156 = vector.broadcast %cst_76 : f32 to vector<8x128xf32>
    %157 = arith.mulf %156, %155 : vector<8x128xf32>
    %cst_77 = arith.constant 5.000000e-01 : f32
    %158 = vector.broadcast %cst_77 : f32 to vector<8x128xf32>
    %159 = arith.addf %157, %158 : vector<8x128xf32>
    %160 = vector.extract_strided_slice %149 {offsets = [0, 256], sizes = [8, 128], strides = [1, 1]} : vector<8x512xf32> to vector<8x128xf32>
    %161 = vector.extract_strided_slice %149 {offsets = [0, 384], sizes = [8, 128], strides = [1, 1]} : vector<8x512xf32> to vector<8x128xf32>
    %cst_78 = arith.constant 5.000000e-01 : f32
    %162 = vector.broadcast %cst_78 : f32 to vector<8x128xf32>
    %163 = arith.mulf %162, %161 : vector<8x128xf32>
    %cst_79 = arith.constant 5.000000e-01 : f32
    %164 = vector.broadcast %cst_79 : f32 to vector<8x128xf32>
    %165 = arith.addf %163, %164 : vector<8x128xf32>
    %166 = arith.mulf %159, %138 : vector<8x128xf32>
    %167 = arith.mulf %154, %160 : vector<8x128xf32>
    %168 = arith.addf %166, %167 : vector<8x128xf32>
    %169 = math.tanh %168 : vector<8x128xf32>
    %170 = arith.mulf %165, %169 : vector<8x128xf32>
    %c32_80 = arith.constant 32 : index
    %c0_81 = arith.constant 0 : index
    %171 = vector.load %arg13[%c32_80, %c0_81] : memref<64x128xf32, #tpu.memory_space<vmem>>, vector<8x128xf32>
    tpu.vector_store %arg13[%c32_80, %c0_81], %170 {strides = array<i32>} : memref<64x128xf32, #tpu.memory_space<vmem>>, vector<8x128xf32>,
    %c24_82 = arith.constant 24 : index
    %c0_83 = arith.constant 0 : index
    %172 = vector.load %arg14[%c24_82, %c0_83] : memref<64x128xf32, #tpu.memory_space<vmem>>, vector<8x128xf32>
    tpu.vector_store %arg14[%c24_82, %c0_83], %170 {strides = array<i32>} : memref<64x128xf32, #tpu.memory_space<vmem>>, vector<8x128xf32>,
    %c40_84 = arith.constant 40 : index
    %c0_85 = arith.constant 0 : index
    %173 = vector.load %arg16[%c40_84, %c0_85] : memref<64x512xf32, #tpu.memory_space<vmem>>, vector<8x512xf32>
    %c16_86 = arith.constant 16 : index
    %c0_87 = arith.constant 0 : index
    %174 = vector.load %arg17[%c16_86, %c0_87] : memref<64x512xf32, #tpu.memory_space<vmem>>, vector<8x512xf32>
    %175 = arith.addf %173, %174 : vector<8x512xf32>
    %176 = arith.truncf %170 : vector<8x128xf32> to vector<8x128xbf16>
    %cst_88 = arith.constant dense<0.000000e+00> : vector<8x512xf32>
    %177 = tpu.matmul %176, %20, %cst_88 {dimension_numbers = #tpu.dot_dimension_numbers<[1], [0], [0], [1], [0, 0, 1, 1], [], []>} : vector<8x128xbf16>, vector<128x512xbf16>, vector<8x512xf32> -> vector<8x512xf32>
    %178 = arith.addf %175, %177 : vector<8x512xf32>
    %179 = math.tanh %178 : vector<8x512xf32>
    %180 = vector.extract_strided_slice %179 {offsets = [0, 0], sizes = [8, 128], strides = [1, 1]} : vector<8x512xf32> to vector<8x128xf32>
    %cst_89 = arith.constant 5.000000e-01 : f32
    %181 = vector.broadcast %cst_89 : f32 to vector<8x128xf32>
    %182 = arith.mulf %181, %180 : vector<8x128xf32>
    %cst_90 = arith.constant 5.000000e-01 : f32
    %183 = vector.broadcast %cst_90 : f32 to vector<8x128xf32>
    %184 = arith.addf %182, %183 : vector<8x128xf32>
    %185 = vector.extract_strided_slice %179 {offsets = [0, 128], sizes = [8, 128], strides = [1, 1]} : vector<8x512xf32> to vector<8x128xf32>
    %cst_91 = arith.constant 5.000000e-01 : f32
    %186 = vector.broadcast %cst_91 : f32 to vector<8x128xf32>
    %187 = arith.mulf %186, %185 : vector<8x128xf32>
    %cst_92 = arith.constant 5.000000e-01 : f32
    %188 = vector.broadcast %cst_92 : f32 to vector<8x128xf32>
    %189 = arith.addf %187, %188 : vector<8x128xf32>
    %190 = vector.extract_strided_slice %179 {offsets = [0, 256], sizes = [8, 128], strides = [1, 1]} : vector<8x512xf32> to vector<8x128xf32>
    %191 = vector.extract_strided_slice %179 {offsets = [0, 384], sizes = [8, 128], strides = [1, 1]} : vector<8x512xf32> to vector<8x128xf32>
    %cst_93 = arith.constant 5.000000e-01 : f32
    %192 = vector.broadcast %cst_93 : f32 to vector<8x128xf32>
    %193 = arith.mulf %192, %191 : vector<8x128xf32>
    %cst_94 = arith.constant 5.000000e-01 : f32
    %194 = vector.broadcast %cst_94 : f32 to vector<8x128xf32>
    %195 = arith.addf %193, %194 : vector<8x128xf32>
    %196 = arith.mulf %189, %168 : vector<8x128xf32>
    %197 = arith.mulf %184, %190 : vector<8x128xf32>
    %198 = arith.addf %196, %197 : vector<8x128xf32>
    %199 = math.tanh %198 : vector<8x128xf32>
    %200 = arith.mulf %195, %199 : vector<8x128xf32>
    %c40_95 = arith.constant 40 : index
    %c0_96 = arith.constant 0 : index
    %201 = vector.load %arg13[%c40_95, %c0_96] : memref<64x128xf32, #tpu.memory_space<vmem>>, vector<8x128xf32>
    tpu.vector_store %arg13[%c40_95, %c0_96], %200 {strides = array<i32>} : memref<64x128xf32, #tpu.memory_space<vmem>>, vector<8x128xf32>,
    %c16_97 = arith.constant 16 : index
    %c0_98 = arith.constant 0 : index
    %202 = vector.load %arg14[%c16_97, %c0_98] : memref<64x128xf32, #tpu.memory_space<vmem>>, vector<8x128xf32>
    tpu.vector_store %arg14[%c16_97, %c0_98], %200 {strides = array<i32>} : memref<64x128xf32, #tpu.memory_space<vmem>>, vector<8x128xf32>,
    %c48_99 = arith.constant 48 : index
    %c0_100 = arith.constant 0 : index
    %203 = vector.load %arg16[%c48_99, %c0_100] : memref<64x512xf32, #tpu.memory_space<vmem>>, vector<8x512xf32>
    %c8_101 = arith.constant 8 : index
    %c0_102 = arith.constant 0 : index
    %204 = vector.load %arg17[%c8_101, %c0_102] : memref<64x512xf32, #tpu.memory_space<vmem>>, vector<8x512xf32>
    %205 = arith.addf %203, %204 : vector<8x512xf32>
    %206 = arith.truncf %200 : vector<8x128xf32> to vector<8x128xbf16>
    %cst_103 = arith.constant dense<0.000000e+00> : vector<8x512xf32>
    %207 = tpu.matmul %206, %20, %cst_103 {dimension_numbers = #tpu.dot_dimension_numbers<[1], [0], [0], [1], [0, 0, 1, 1], [], []>} : vector<8x128xbf16>, vector<128x512xbf16>, vector<8x512xf32> -> vector<8x512xf32>
    %208 = arith.addf %205, %207 : vector<8x512xf32>
    %209 = math.tanh %208 : vector<8x512xf32>
    %210 = vector.extract_strided_slice %209 {offsets = [0, 0], sizes = [8, 128], strides = [1, 1]} : vector<8x512xf32> to vector<8x128xf32>
    %cst_104 = arith.constant 5.000000e-01 : f32
    %211 = vector.broadcast %cst_104 : f32 to vector<8x128xf32>
    %212 = arith.mulf %211, %210 : vector<8x128xf32>
    %cst_105 = arith.constant 5.000000e-01 : f32
    %213 = vector.broadcast %cst_105 : f32 to vector<8x128xf32>
    %214 = arith.addf %212, %213 : vector<8x128xf32>
    %215 = vector.extract_strided_slice %209 {offsets = [0, 128], sizes = [8, 128], strides = [1, 1]} : vector<8x512xf32> to vector<8x128xf32>
    %cst_106 = arith.constant 5.000000e-01 : f32
    %216 = vector.broadcast %cst_106 : f32 to vector<8x128xf32>
    %217 = arith.mulf %216, %215 : vector<8x128xf32>
    %cst_107 = arith.constant 5.000000e-01 : f32
    %218 = vector.broadcast %cst_107 : f32 to vector<8x128xf32>
    %219 = arith.addf %217, %218 : vector<8x128xf32>
    %220 = vector.extract_strided_slice %209 {offsets = [0, 256], sizes = [8, 128], strides = [1, 1]} : vector<8x512xf32> to vector<8x128xf32>
    %221 = vector.extract_strided_slice %209 {offsets = [0, 384], sizes = [8, 128], strides = [1, 1]} : vector<8x512xf32> to vector<8x128xf32>
    %cst_108 = arith.constant 5.000000e-01 : f32
    %222 = vector.broadcast %cst_108 : f32 to vector<8x128xf32>
    %223 = arith.mulf %222, %221 : vector<8x128xf32>
    %cst_109 = arith.constant 5.000000e-01 : f32
    %224 = vector.broadcast %cst_109 : f32 to vector<8x128xf32>
    %225 = arith.addf %223, %224 : vector<8x128xf32>
    %226 = arith.mulf %219, %198 : vector<8x128xf32>
    %227 = arith.mulf %214, %220 : vector<8x128xf32>
    %228 = arith.addf %226, %227 : vector<8x128xf32>
    %229 = math.tanh %228 : vector<8x128xf32>
    %230 = arith.mulf %225, %229 : vector<8x128xf32>
    %c48_110 = arith.constant 48 : index
    %c0_111 = arith.constant 0 : index
    %231 = vector.load %arg13[%c48_110, %c0_111] : memref<64x128xf32, #tpu.memory_space<vmem>>, vector<8x128xf32>
    tpu.vector_store %arg13[%c48_110, %c0_111], %230 {strides = array<i32>} : memref<64x128xf32, #tpu.memory_space<vmem>>, vector<8x128xf32>,
    %c8_112 = arith.constant 8 : index
    %c0_113 = arith.constant 0 : index
    %232 = vector.load %arg14[%c8_112, %c0_113] : memref<64x128xf32, #tpu.memory_space<vmem>>, vector<8x128xf32>
    tpu.vector_store %arg14[%c8_112, %c0_113], %230 {strides = array<i32>} : memref<64x128xf32, #tpu.memory_space<vmem>>, vector<8x128xf32>,
    %c56_114 = arith.constant 56 : index
    %c0_115 = arith.constant 0 : index
    %233 = vector.load %arg16[%c56_114, %c0_115] : memref<64x512xf32, #tpu.memory_space<vmem>>, vector<8x512xf32>
    %c0_116 = arith.constant 0 : index
    %c0_117 = arith.constant 0 : index
    %234 = vector.load %arg17[%c0_116, %c0_117] : memref<64x512xf32, #tpu.memory_space<vmem>>, vector<8x512xf32>
    %235 = arith.addf %233, %234 : vector<8x512xf32>
    %236 = arith.truncf %230 : vector<8x128xf32> to vector<8x128xbf16>
    %cst_118 = arith.constant dense<0.000000e+00> : vector<8x512xf32>
    %237 = tpu.matmul %236, %20, %cst_118 {dimension_numbers = #tpu.dot_dimension_numbers<[1], [0], [0], [1], [0, 0, 1, 1], [], []>} : vector<8x128xbf16>, vector<128x512xbf16>, vector<8x512xf32> -> vector<8x512xf32>
    %238 = arith.addf %235, %237 : vector<8x512xf32>
    %239 = math.tanh %238 : vector<8x512xf32>
    %240 = vector.extract_strided_slice %239 {offsets = [0, 0], sizes = [8, 128], strides = [1, 1]} : vector<8x512xf32> to vector<8x128xf32>
    %cst_119 = arith.constant 5.000000e-01 : f32
    %241 = vector.broadcast %cst_119 : f32 to vector<8x128xf32>
    %242 = arith.mulf %241, %240 : vector<8x128xf32>
    %cst_120 = arith.constant 5.000000e-01 : f32
    %243 = vector.broadcast %cst_120 : f32 to vector<8x128xf32>
    %244 = arith.addf %242, %243 : vector<8x128xf32>
    %245 = vector.extract_strided_slice %239 {offsets = [0, 128], sizes = [8, 128], strides = [1, 1]} : vector<8x512xf32> to vector<8x128xf32>
    %cst_121 = arith.constant 5.000000e-01 : f32
    %246 = vector.broadcast %cst_121 : f32 to vector<8x128xf32>
    %247 = arith.mulf %246, %245 : vector<8x128xf32>
    %cst_122 = arith.constant 5.000000e-01 : f32
    %248 = vector.broadcast %cst_122 : f32 to vector<8x128xf32>
    %249 = arith.addf %247, %248 : vector<8x128xf32>
    %250 = vector.extract_strided_slice %239 {offsets = [0, 256], sizes = [8, 128], strides = [1, 1]} : vector<8x512xf32> to vector<8x128xf32>
    %251 = vector.extract_strided_slice %239 {offsets = [0, 384], sizes = [8, 128], strides = [1, 1]} : vector<8x512xf32> to vector<8x128xf32>
    %cst_123 = arith.constant 5.000000e-01 : f32
    %252 = vector.broadcast %cst_123 : f32 to vector<8x128xf32>
    %253 = arith.mulf %252, %251 : vector<8x128xf32>
    %cst_124 = arith.constant 5.000000e-01 : f32
    %254 = vector.broadcast %cst_124 : f32 to vector<8x128xf32>
    %255 = arith.addf %253, %254 : vector<8x128xf32>
    %256 = arith.mulf %249, %228 : vector<8x128xf32>
    %257 = arith.mulf %244, %250 : vector<8x128xf32>
    %258 = arith.addf %256, %257 : vector<8x128xf32>
    %259 = math.tanh %258 : vector<8x128xf32>
    %260 = arith.mulf %255, %259 : vector<8x128xf32>
    %c56_125 = arith.constant 56 : index
    %c0_126 = arith.constant 0 : index
    %261 = vector.load %arg13[%c56_125, %c0_126] : memref<64x128xf32, #tpu.memory_space<vmem>>, vector<8x128xf32>
    tpu.vector_store %arg13[%c56_125, %c0_126], %260 {strides = array<i32>} : memref<64x128xf32, #tpu.memory_space<vmem>>, vector<8x128xf32>,
    %c0_127 = arith.constant 0 : index
    %c0_128 = arith.constant 0 : index
    %262 = vector.load %arg14[%c0_127, %c0_128] : memref<64x128xf32, #tpu.memory_space<vmem>>, vector<8x128xf32>
    tpu.vector_store %arg14[%c0_127, %c0_128], %260 {strides = array<i32>} : memref<64x128xf32, #tpu.memory_space<vmem>>, vector<8x128xf32>,
    %c0_i32_129 = arith.constant 0 : i32
    %263 = tpu.memref_slice %arg25[%c0_i32_129] : memref<5x!tpu.dma_semaphore, #tpu.memory_space<semaphore_mem>> -> memref<1x!tpu.dma_semaphore, #tpu.memory_space<semaphore_mem>>
    %264 = tpu.memref_squeeze %263 : memref<1x!tpu.dma_semaphore, #tpu.memory_space<semaphore_mem>> -> memref<!tpu.dma_semaphore, #tpu.memory_space<semaphore_mem>>
    tpu.wait_dma2 semaphore(%264 : memref<!tpu.dma_semaphore, #tpu.memory_space<semaphore_mem>>) src(%arg5 : memref<128x512xbf16, #tpu.memory_space<any>>) dst(%arg20 : memref<128x512xbf16, #tpu.memory_space<vmem>>)
    %c1_i32_130 = arith.constant 1 : i32
    %265 = tpu.memref_slice %arg25[%c1_i32_130] : memref<5x!tpu.dma_semaphore, #tpu.memory_space<semaphore_mem>> -> memref<1x!tpu.dma_semaphore, #tpu.memory_space<semaphore_mem>>
    %266 = tpu.memref_squeeze %265 : memref<1x!tpu.dma_semaphore, #tpu.memory_space<semaphore_mem>> -> memref<!tpu.dma_semaphore, #tpu.memory_space<semaphore_mem>>
    tpu.wait_dma2 semaphore(%266 : memref<!tpu.dma_semaphore, #tpu.memory_space<semaphore_mem>>) src(%arg6 : memref<128x512xbf16, #tpu.memory_space<any>>) dst(%arg21 : memref<128x512xbf16, #tpu.memory_space<vmem>>)
    %c2_i32_131 = arith.constant 2 : i32
    %267 = tpu.memref_slice %arg25[%c2_i32_131] : memref<5x!tpu.dma_semaphore, #tpu.memory_space<semaphore_mem>> -> memref<1x!tpu.dma_semaphore, #tpu.memory_space<semaphore_mem>>
    %268 = tpu.memref_squeeze %267 : memref<1x!tpu.dma_semaphore, #tpu.memory_space<semaphore_mem>> -> memref<!tpu.dma_semaphore, #tpu.memory_space<semaphore_mem>>
    tpu.wait_dma2 semaphore(%268 : memref<!tpu.dma_semaphore, #tpu.memory_space<semaphore_mem>>) src(%arg7 : memref<128x512xbf16, #tpu.memory_space<any>>) dst(%arg22 : memref<128x512xbf16, #tpu.memory_space<vmem>>)
    %c0_132 = arith.constant 0 : index
    %c0_133 = arith.constant 0 : index
    %269 = vector.load %arg13[%c0_132, %c0_133] : memref<64x128xf32, #tpu.memory_space<vmem>>, vector<64x128xf32>
    %270 = arith.truncf %269 : vector<64x128xf32> to vector<64x128xbf16>
    %c0_134 = arith.constant 0 : index
    %c0_135 = arith.constant 0 : index
    %271 = vector.load %arg20[%c0_134, %c0_135] : memref<128x512xbf16, #tpu.memory_space<vmem>>, vector<128x512xbf16>
    %cst_136 = arith.constant dense<0.000000e+00> : vector<64x512xf32>
    %272 = tpu.matmul %270, %271, %cst_136 {dimension_numbers = #tpu.dot_dimension_numbers<[1], [0], [0], [1], [0, 0, 1, 1], [], []>} : vector<64x128xbf16>, vector<128x512xbf16>, vector<64x512xf32> -> vector<64x512xf32>
    %c0_137 = arith.constant 0 : index
    %c0_138 = arith.constant 0 : index
    %273 = vector.load %arg14[%c0_137, %c0_138] : memref<64x128xf32, #tpu.memory_space<vmem>>, vector<64x128xf32>
    %274 = arith.truncf %273 : vector<64x128xf32> to vector<64x128xbf16>
    %c0_139 = arith.constant 0 : index
    %c0_140 = arith.constant 0 : index
    %275 = vector.load %arg21[%c0_139, %c0_140] : memref<128x512xbf16, #tpu.memory_space<vmem>>, vector<128x512xbf16>
    %cst_141 = arith.constant dense<0.000000e+00> : vector<64x512xf32>
    %276 = tpu.matmul %274, %275, %cst_141 {dimension_numbers = #tpu.dot_dimension_numbers<[1], [0], [0], [1], [0, 0, 1, 1], [], []>} : vector<64x128xbf16>, vector<128x512xbf16>, vector<64x512xf32> -> vector<64x512xf32>
    %277 = arith.addf %272, %276 : vector<64x512xf32>
    %c0_142 = arith.constant 0 : index
    %c0_143 = arith.constant 0 : index
    %278 = vector.load %arg8[%c0_142, %c0_143] : memref<1x512xf32, #tpu.memory_space<vmem>>, vector<1x512xf32>
    %279 = vector.broadcast %278 : vector<1x512xf32> to vector<64x512xf32>
    %280 = arith.addf %277, %279 : vector<64x512xf32>
    %c0_144 = arith.constant 0 : index
    %c0_145 = arith.constant 0 : index
    %281 = vector.load %arg18[%c0_144, %c0_145] : memref<64x512xf32, #tpu.memory_space<vmem>>, vector<64x512xf32>
    tpu.vector_store %arg18[%c0_144, %c0_145], %280 {strides = array<i32>} : memref<64x512xf32, #tpu.memory_space<vmem>>, vector<64x512xf32>,
    %c0_146 = arith.constant 0 : index
    %c0_147 = arith.constant 0 : index
    %282 = vector.load %arg22[%c0_146, %c0_147] : memref<128x512xbf16, #tpu.memory_space<vmem>>, vector<128x512xbf16>
    %cst_148 = arith.constant 0.000000e+00 : f32
    %283 = vector.broadcast %cst_148 : f32 to vector<8x128xf32>
    %cst_149 = arith.constant 0.000000e+00 : f32
    %284 = vector.broadcast %cst_149 : f32 to vector<8x128xf32>
    %c0_150 = arith.constant 0 : index
    %c0_151 = arith.constant 0 : index
    %285 = vector.load %arg18[%c0_150, %c0_151] : memref<64x512xf32, #tpu.memory_space<vmem>>, vector<8x512xf32>
    %286 = arith.truncf %283 : vector<8x128xf32> to vector<8x128xbf16>
    %cst_152 = arith.constant dense<0.000000e+00> : vector<8x512xf32>
    %287 = tpu.matmul %286, %282, %cst_152 {dimension_numbers = #tpu.dot_dimension_numbers<[1], [0], [0], [1], [0, 0, 1, 1], [], []>} : vector<8x128xbf16>, vector<128x512xbf16>, vector<8x512xf32> -> vector<8x512xf32>
    %288 = arith.addf %285, %287 : vector<8x512xf32>
    %289 = math.tanh %288 : vector<8x512xf32>
    %290 = vector.extract_strided_slice %289 {offsets = [0, 0], sizes = [8, 128], strides = [1, 1]} : vector<8x512xf32> to vector<8x128xf32>
    %cst_153 = arith.constant 5.000000e-01 : f32
    %291 = vector.broadcast %cst_153 : f32 to vector<8x128xf32>
    %292 = arith.mulf %291, %290 : vector<8x128xf32>
    %cst_154 = arith.constant 5.000000e-01 : f32
    %293 = vector.broadcast %cst_154 : f32 to vector<8x128xf32>
    %294 = arith.addf %292, %293 : vector<8x128xf32>
    %295 = vector.extract_strided_slice %289 {offsets = [0, 128], sizes = [8, 128], strides = [1, 1]} : vector<8x512xf32> to vector<8x128xf32>
    %cst_155 = arith.constant 5.000000e-01 : f32
    %296 = vector.broadcast %cst_155 : f32 to vector<8x128xf32>
    %297 = arith.mulf %296, %295 : vector<8x128xf32>
    %cst_156 = arith.constant 5.000000e-01 : f32
    %298 = vector.broadcast %cst_156 : f32 to vector<8x128xf32>
    %299 = arith.addf %297, %298 : vector<8x128xf32>
    %300 = vector.extract_strided_slice %289 {offsets = [0, 256], sizes = [8, 128], strides = [1, 1]} : vector<8x512xf32> to vector<8x128xf32>
    %301 = vector.extract_strided_slice %289 {offsets = [0, 384], sizes = [8, 128], strides = [1, 1]} : vector<8x512xf32> to vector<8x128xf32>
    %cst_157 = arith.constant 5.000000e-01 : f32
    %302 = vector.broadcast %cst_157 : f32 to vector<8x128xf32>
    %303 = arith.mulf %302, %301 : vector<8x128xf32>
    %cst_158 = arith.constant 5.000000e-01 : f32
    %304 = vector.broadcast %cst_158 : f32 to vector<8x128xf32>
    %305 = arith.addf %303, %304 : vector<8x128xf32>
    %306 = arith.mulf %299, %284 : vector<8x128xf32>
    %307 = arith.mulf %294, %300 : vector<8x128xf32>
    %308 = arith.addf %306, %307 : vector<8x128xf32>
    %309 = math.tanh %308 : vector<8x128xf32>
    %310 = arith.mulf %305, %309 : vector<8x128xf32>
    %c0_159 = arith.constant 0 : index
    %c0_160 = arith.constant 0 : index
    %311 = vector.load %arg15[%c0_159, %c0_160] : memref<64x128xf32, #tpu.memory_space<vmem>>, vector<8x128xf32>
    tpu.vector_store %arg15[%c0_159, %c0_160], %310 {strides = array<i32>} : memref<64x128xf32, #tpu.memory_space<vmem>>, vector<8x128xf32>,
    %c8_161 = arith.constant 8 : index
    %c0_162 = arith.constant 0 : index
    %312 = vector.load %arg18[%c8_161, %c0_162] : memref<64x512xf32, #tpu.memory_space<vmem>>, vector<8x512xf32>
    %313 = arith.truncf %310 : vector<8x128xf32> to vector<8x128xbf16>
    %cst_163 = arith.constant dense<0.000000e+00> : vector<8x512xf32>
    %314 = tpu.matmul %313, %282, %cst_163 {dimension_numbers = #tpu.dot_dimension_numbers<[1], [0], [0], [1], [0, 0, 1, 1], [], []>} : vector<8x128xbf16>, vector<128x512xbf16>, vector<8x512xf32> -> vector<8x512xf32>
    %315 = arith.addf %312, %314 : vector<8x512xf32>
    %316 = math.tanh %315 : vector<8x512xf32>
    %317 = vector.extract_strided_slice %316 {offsets = [0, 0], sizes = [8, 128], strides = [1, 1]} : vector<8x512xf32> to vector<8x128xf32>
    %cst_164 = arith.constant 5.000000e-01 : f32
    %318 = vector.broadcast %cst_164 : f32 to vector<8x128xf32>
    %319 = arith.mulf %318, %317 : vector<8x128xf32>
    %cst_165 = arith.constant 5.000000e-01 : f32
    %320 = vector.broadcast %cst_165 : f32 to vector<8x128xf32>
    %321 = arith.addf %319, %320 : vector<8x128xf32>
    %322 = vector.extract_strided_slice %316 {offsets = [0, 128], sizes = [8, 128], strides = [1, 1]} : vector<8x512xf32> to vector<8x128xf32>
    %cst_166 = arith.constant 5.000000e-01 : f32
    %323 = vector.broadcast %cst_166 : f32 to vector<8x128xf32>
    %324 = arith.mulf %323, %322 : vector<8x128xf32>
    %cst_167 = arith.constant 5.000000e-01 : f32
    %325 = vector.broadcast %cst_167 : f32 to vector<8x128xf32>
    %326 = arith.addf %324, %325 : vector<8x128xf32>
    %327 = vector.extract_strided_slice %316 {offsets = [0, 256], sizes = [8, 128], strides = [1, 1]} : vector<8x512xf32> to vector<8x128xf32>
    %328 = vector.extract_strided_slice %316 {offsets = [0, 384], sizes = [8, 128], strides = [1, 1]} : vector<8x512xf32> to vector<8x128xf32>
    %cst_168 = arith.constant 5.000000e-01 : f32
    %329 = vector.broadcast %cst_168 : f32 to vector<8x128xf32>
    %330 = arith.mulf %329, %328 : vector<8x128xf32>
    %cst_169 = arith.constant 5.000000e-01 : f32
    %331 = vector.broadcast %cst_169 : f32 to vector<8x128xf32>
    %332 = arith.addf %330, %331 : vector<8x128xf32>
    %333 = arith.mulf %326, %308 : vector<8x128xf32>
    %334 = arith.mulf %321, %327 : vector<8x128xf32>
    %335 = arith.addf %333, %334 : vector<8x128xf32>
    %336 = math.tanh %335 : vector<8x128xf32>
    %337 = arith.mulf %332, %336 : vector<8x128xf32>
    %c8_170 = arith.constant 8 : index
    %c0_171 = arith.constant 0 : index
    %338 = vector.load %arg15[%c8_170, %c0_171] : memref<64x128xf32, #tpu.memory_space<vmem>>, vector<8x128xf32>
    tpu.vector_store %arg15[%c8_170, %c0_171], %337 {strides = array<i32>} : memref<64x128xf32, #tpu.memory_space<vmem>>, vector<8x128xf32>,
    %c16_172 = arith.constant 16 : index
    %c0_173 = arith.constant 0 : index
    %339 = vector.load %arg18[%c16_172, %c0_173] : memref<64x512xf32, #tpu.memory_space<vmem>>, vector<8x512xf32>
    %340 = arith.truncf %337 : vector<8x128xf32> to vector<8x128xbf16>
    %cst_174 = arith.constant dense<0.000000e+00> : vector<8x512xf32>
    %341 = tpu.matmul %340, %282, %cst_174 {dimension_numbers = #tpu.dot_dimension_numbers<[1], [0], [0], [1], [0, 0, 1, 1], [], []>} : vector<8x128xbf16>, vector<128x512xbf16>, vector<8x512xf32> -> vector<8x512xf32>
    %342 = arith.addf %339, %341 : vector<8x512xf32>
    %343 = math.tanh %342 : vector<8x512xf32>
    %344 = vector.extract_strided_slice %343 {offsets = [0, 0], sizes = [8, 128], strides = [1, 1]} : vector<8x512xf32> to vector<8x128xf32>
    %cst_175 = arith.constant 5.000000e-01 : f32
    %345 = vector.broadcast %cst_175 : f32 to vector<8x128xf32>
    %346 = arith.mulf %345, %344 : vector<8x128xf32>
    %cst_176 = arith.constant 5.000000e-01 : f32
    %347 = vector.broadcast %cst_176 : f32 to vector<8x128xf32>
    %348 = arith.addf %346, %347 : vector<8x128xf32>
    %349 = vector.extract_strided_slice %343 {offsets = [0, 128], sizes = [8, 128], strides = [1, 1]} : vector<8x512xf32> to vector<8x128xf32>
    %cst_177 = arith.constant 5.000000e-01 : f32
    %350 = vector.broadcast %cst_177 : f32 to vector<8x128xf32>
    %351 = arith.mulf %350, %349 : vector<8x128xf32>
    %cst_178 = arith.constant 5.000000e-01 : f32
    %352 = vector.broadcast %cst_178 : f32 to vector<8x128xf32>
    %353 = arith.addf %351, %352 : vector<8x128xf32>
    %354 = vector.extract_strided_slice %343 {offsets = [0, 256], sizes = [8, 128], strides = [1, 1]} : vector<8x512xf32> to vector<8x128xf32>
    %355 = vector.extract_strided_slice %343 {offsets = [0, 384], sizes = [8, 128], strides = [1, 1]} : vector<8x512xf32> to vector<8x128xf32>
    %cst_179 = arith.constant 5.000000e-01 : f32
    %356 = vector.broadcast %cst_179 : f32 to vector<8x128xf32>
    %357 = arith.mulf %356, %355 : vector<8x128xf32>
    %cst_180 = arith.constant 5.000000e-01 : f32
    %358 = vector.broadcast %cst_180 : f32 to vector<8x128xf32>
    %359 = arith.addf %357, %358 : vector<8x128xf32>
    %360 = arith.mulf %353, %335 : vector<8x128xf32>
    %361 = arith.mulf %348, %354 : vector<8x128xf32>
    %362 = arith.addf %360, %361 : vector<8x128xf32>
    %363 = math.tanh %362 : vector<8x128xf32>
    %364 = arith.mulf %359, %363 : vector<8x128xf32>
    %c16_181 = arith.constant 16 : index
    %c0_182 = arith.constant 0 : index
    %365 = vector.load %arg15[%c16_181, %c0_182] : memref<64x128xf32, #tpu.memory_space<vmem>>, vector<8x128xf32>
    tpu.vector_store %arg15[%c16_181, %c0_182], %364 {strides = array<i32>} : memref<64x128xf32, #tpu.memory_space<vmem>>, vector<8x128xf32>,
    %c24_183 = arith.constant 24 : index
    %c0_184 = arith.constant 0 : index
    %366 = vector.load %arg18[%c24_183, %c0_184] : memref<64x512xf32, #tpu.memory_space<vmem>>, vector<8x512xf32>
    %367 = arith.truncf %364 : vector<8x128xf32> to vector<8x128xbf16>
    %cst_185 = arith.constant dense<0.000000e+00> : vector<8x512xf32>
    %368 = tpu.matmul %367, %282, %cst_185 {dimension_numbers = #tpu.dot_dimension_numbers<[1], [0], [0], [1], [0, 0, 1, 1], [], []>} : vector<8x128xbf16>, vector<128x512xbf16>, vector<8x512xf32> -> vector<8x512xf32>
    %369 = arith.addf %366, %368 : vector<8x512xf32>
    %370 = math.tanh %369 : vector<8x512xf32>
    %371 = vector.extract_strided_slice %370 {offsets = [0, 0], sizes = [8, 128], strides = [1, 1]} : vector<8x512xf32> to vector<8x128xf32>
    %cst_186 = arith.constant 5.000000e-01 : f32
    %372 = vector.broadcast %cst_186 : f32 to vector<8x128xf32>
    %373 = arith.mulf %372, %371 : vector<8x128xf32>
    %cst_187 = arith.constant 5.000000e-01 : f32
    %374 = vector.broadcast %cst_187 : f32 to vector<8x128xf32>
    %375 = arith.addf %373, %374 : vector<8x128xf32>
    %376 = vector.extract_strided_slice %370 {offsets = [0, 128], sizes = [8, 128], strides = [1, 1]} : vector<8x512xf32> to vector<8x128xf32>
    %cst_188 = arith.constant 5.000000e-01 : f32
    %377 = vector.broadcast %cst_188 : f32 to vector<8x128xf32>
    %378 = arith.mulf %377, %376 : vector<8x128xf32>
    %cst_189 = arith.constant 5.000000e-01 : f32
    %379 = vector.broadcast %cst_189 : f32 to vector<8x128xf32>
    %380 = arith.addf %378, %379 : vector<8x128xf32>
    %381 = vector.extract_strided_slice %370 {offsets = [0, 256], sizes = [8, 128], strides = [1, 1]} : vector<8x512xf32> to vector<8x128xf32>
    %382 = vector.extract_strided_slice %370 {offsets = [0, 384], sizes = [8, 128], strides = [1, 1]} : vector<8x512xf32> to vector<8x128xf32>
    %cst_190 = arith.constant 5.000000e-01 : f32
    %383 = vector.broadcast %cst_190 : f32 to vector<8x128xf32>
    %384 = arith.mulf %383, %382 : vector<8x128xf32>
    %cst_191 = arith.constant 5.000000e-01 : f32
    %385 = vector.broadcast %cst_191 : f32 to vector<8x128xf32>
    %386 = arith.addf %384, %385 : vector<8x128xf32>
    %387 = arith.mulf %380, %362 : vector<8x128xf32>
    %388 = arith.mulf %375, %381 : vector<8x128xf32>
    %389 = arith.addf %387, %388 : vector<8x128xf32>
    %390 = math.tanh %389 : vector<8x128xf32>
    %391 = arith.mulf %386, %390 : vector<8x128xf32>
    %c24_192 = arith.constant 24 : index
    %c0_193 = arith.constant 0 : index
    %392 = vector.load %arg15[%c24_192, %c0_193] : memref<64x128xf32, #tpu.memory_space<vmem>>, vector<8x128xf32>
    tpu.vector_store %arg15[%c24_192, %c0_193], %391 {strides = array<i32>} : memref<64x128xf32, #tpu.memory_space<vmem>>, vector<8x128xf32>,
    %c32_194 = arith.constant 32 : index
    %c0_195 = arith.constant 0 : index
    %393 = vector.load %arg18[%c32_194, %c0_195] : memref<64x512xf32, #tpu.memory_space<vmem>>, vector<8x512xf32>
    %394 = arith.truncf %391 : vector<8x128xf32> to vector<8x128xbf16>
    %cst_196 = arith.constant dense<0.000000e+00> : vector<8x512xf32>
    %395 = tpu.matmul %394, %282, %cst_196 {dimension_numbers = #tpu.dot_dimension_numbers<[1], [0], [0], [1], [0, 0, 1, 1], [], []>} : vector<8x128xbf16>, vector<128x512xbf16>, vector<8x512xf32> -> vector<8x512xf32>
    %396 = arith.addf %393, %395 : vector<8x512xf32>
    %397 = math.tanh %396 : vector<8x512xf32>
    %398 = vector.extract_strided_slice %397 {offsets = [0, 0], sizes = [8, 128], strides = [1, 1]} : vector<8x512xf32> to vector<8x128xf32>
    %cst_197 = arith.constant 5.000000e-01 : f32
    %399 = vector.broadcast %cst_197 : f32 to vector<8x128xf32>
    %400 = arith.mulf %399, %398 : vector<8x128xf32>
    %cst_198 = arith.constant 5.000000e-01 : f32
    %401 = vector.broadcast %cst_198 : f32 to vector<8x128xf32>
    %402 = arith.addf %400, %401 : vector<8x128xf32>
    %403 = vector.extract_strided_slice %397 {offsets = [0, 128], sizes = [8, 128], strides = [1, 1]} : vector<8x512xf32> to vector<8x128xf32>
    %cst_199 = arith.constant 5.000000e-01 : f32
    %404 = vector.broadcast %cst_199 : f32 to vector<8x128xf32>
    %405 = arith.mulf %404, %403 : vector<8x128xf32>
    %cst_200 = arith.constant 5.000000e-01 : f32
    %406 = vector.broadcast %cst_200 : f32 to vector<8x128xf32>
    %407 = arith.addf %405, %406 : vector<8x128xf32>
    %408 = vector.extract_strided_slice %397 {offsets = [0, 256], sizes = [8, 128], strides = [1, 1]} : vector<8x512xf32> to vector<8x128xf32>
    %409 = vector.extract_strided_slice %397 {offsets = [0, 384], sizes = [8, 128], strides = [1, 1]} : vector<8x512xf32> to vector<8x128xf32>
    %cst_201 = arith.constant 5.000000e-01 : f32
    %410 = vector.broadcast %cst_201 : f32 to vector<8x128xf32>
    %411 = arith.mulf %410, %409 : vector<8x128xf32>
    %cst_202 = arith.constant 5.000000e-01 : f32
    %412 = vector.broadcast %cst_202 : f32 to vector<8x128xf32>
    %413 = arith.addf %411, %412 : vector<8x128xf32>
    %414 = arith.mulf %407, %389 : vector<8x128xf32>
    %415 = arith.mulf %402, %408 : vector<8x128xf32>
    %416 = arith.addf %414, %415 : vector<8x128xf32>
    %417 = math.tanh %416 : vector<8x128xf32>
    %418 = arith.mulf %413, %417 : vector<8x128xf32>
    %c32_203 = arith.constant 32 : index
    %c0_204 = arith.constant 0 : index
    %419 = vector.load %arg15[%c32_203, %c0_204] : memref<64x128xf32, #tpu.memory_space<vmem>>, vector<8x128xf32>
    tpu.vector_store %arg15[%c32_203, %c0_204], %418 {strides = array<i32>} : memref<64x128xf32, #tpu.memory_space<vmem>>, vector<8x128xf32>,
    %c40_205 = arith.constant 40 : index
    %c0_206 = arith.constant 0 : index
    %420 = vector.load %arg18[%c40_205, %c0_206] : memref<64x512xf32, #tpu.memory_space<vmem>>, vector<8x512xf32>
    %421 = arith.truncf %418 : vector<8x128xf32> to vector<8x128xbf16>
    %cst_207 = arith.constant dense<0.000000e+00> : vector<8x512xf32>
    %422 = tpu.matmul %421, %282, %cst_207 {dimension_numbers = #tpu.dot_dimension_numbers<[1], [0], [0], [1], [0, 0, 1, 1], [], []>} : vector<8x128xbf16>, vector<128x512xbf16>, vector<8x512xf32> -> vector<8x512xf32>
    %423 = arith.addf %420, %422 : vector<8x512xf32>
    %424 = math.tanh %423 : vector<8x512xf32>
    %425 = vector.extract_strided_slice %424 {offsets = [0, 0], sizes = [8, 128], strides = [1, 1]} : vector<8x512xf32> to vector<8x128xf32>
    %cst_208 = arith.constant 5.000000e-01 : f32
    %426 = vector.broadcast %cst_208 : f32 to vector<8x128xf32>
    %427 = arith.mulf %426, %425 : vector<8x128xf32>
    %cst_209 = arith.constant 5.000000e-01 : f32
    %428 = vector.broadcast %cst_209 : f32 to vector<8x128xf32>
    %429 = arith.addf %427, %428 : vector<8x128xf32>
    %430 = vector.extract_strided_slice %424 {offsets = [0, 128], sizes = [8, 128], strides = [1, 1]} : vector<8x512xf32> to vector<8x128xf32>
    %cst_210 = arith.constant 5.000000e-01 : f32
    %431 = vector.broadcast %cst_210 : f32 to vector<8x128xf32>
    %432 = arith.mulf %431, %430 : vector<8x128xf32>
    %cst_211 = arith.constant 5.000000e-01 : f32
    %433 = vector.broadcast %cst_211 : f32 to vector<8x128xf32>
    %434 = arith.addf %432, %433 : vector<8x128xf32>
    %435 = vector.extract_strided_slice %424 {offsets = [0, 256], sizes = [8, 128], strides = [1, 1]} : vector<8x512xf32> to vector<8x128xf32>
    %436 = vector.extract_strided_slice %424 {offsets = [0, 384], sizes = [8, 128], strides = [1, 1]} : vector<8x512xf32> to vector<8x128xf32>
    %cst_212 = arith.constant 5.000000e-01 : f32
    %437 = vector.broadcast %cst_212 : f32 to vector<8x128xf32>
    %438 = arith.mulf %437, %436 : vector<8x128xf32>
    %cst_213 = arith.constant 5.000000e-01 : f32
    %439 = vector.broadcast %cst_213 : f32 to vector<8x128xf32>
    %440 = arith.addf %438, %439 : vector<8x128xf32>
    %441 = arith.mulf %434, %416 : vector<8x128xf32>
    %442 = arith.mulf %429, %435 : vector<8x128xf32>
    %443 = arith.addf %441, %442 : vector<8x128xf32>
    %444 = math.tanh %443 : vector<8x128xf32>
    %445 = arith.mulf %440, %444 : vector<8x128xf32>
    %c40_214 = arith.constant 40 : index
    %c0_215 = arith.constant 0 : index
    %446 = vector.load %arg15[%c40_214, %c0_215] : memref<64x128xf32, #tpu.memory_space<vmem>>, vector<8x128xf32>
    tpu.vector_store %arg15[%c40_214, %c0_215], %445 {strides = array<i32>} : memref<64x128xf32, #tpu.memory_space<vmem>>, vector<8x128xf32>,
    %c48_216 = arith.constant 48 : index
    %c0_217 = arith.constant 0 : index
    %447 = vector.load %arg18[%c48_216, %c0_217] : memref<64x512xf32, #tpu.memory_space<vmem>>, vector<8x512xf32>
    %448 = arith.truncf %445 : vector<8x128xf32> to vector<8x128xbf16>
    %cst_218 = arith.constant dense<0.000000e+00> : vector<8x512xf32>
    %449 = tpu.matmul %448, %282, %cst_218 {dimension_numbers = #tpu.dot_dimension_numbers<[1], [0], [0], [1], [0, 0, 1, 1], [], []>} : vector<8x128xbf16>, vector<128x512xbf16>, vector<8x512xf32> -> vector<8x512xf32>
    %450 = arith.addf %447, %449 : vector<8x512xf32>
    %451 = math.tanh %450 : vector<8x512xf32>
    %452 = vector.extract_strided_slice %451 {offsets = [0, 0], sizes = [8, 128], strides = [1, 1]} : vector<8x512xf32> to vector<8x128xf32>
    %cst_219 = arith.constant 5.000000e-01 : f32
    %453 = vector.broadcast %cst_219 : f32 to vector<8x128xf32>
    %454 = arith.mulf %453, %452 : vector<8x128xf32>
    %cst_220 = arith.constant 5.000000e-01 : f32
    %455 = vector.broadcast %cst_220 : f32 to vector<8x128xf32>
    %456 = arith.addf %454, %455 : vector<8x128xf32>
    %457 = vector.extract_strided_slice %451 {offsets = [0, 128], sizes = [8, 128], strides = [1, 1]} : vector<8x512xf32> to vector<8x128xf32>
    %cst_221 = arith.constant 5.000000e-01 : f32
    %458 = vector.broadcast %cst_221 : f32 to vector<8x128xf32>
    %459 = arith.mulf %458, %457 : vector<8x128xf32>
    %cst_222 = arith.constant 5.000000e-01 : f32
    %460 = vector.broadcast %cst_222 : f32 to vector<8x128xf32>
    %461 = arith.addf %459, %460 : vector<8x128xf32>
    %462 = vector.extract_strided_slice %451 {offsets = [0, 256], sizes = [8, 128], strides = [1, 1]} : vector<8x512xf32> to vector<8x128xf32>
    %463 = vector.extract_strided_slice %451 {offsets = [0, 384], sizes = [8, 128], strides = [1, 1]} : vector<8x512xf32> to vector<8x128xf32>
    %cst_223 = arith.constant 5.000000e-01 : f32
    %464 = vector.broadcast %cst_223 : f32 to vector<8x128xf32>
    %465 = arith.mulf %464, %463 : vector<8x128xf32>
    %cst_224 = arith.constant 5.000000e-01 : f32
    %466 = vector.broadcast %cst_224 : f32 to vector<8x128xf32>
    %467 = arith.addf %465, %466 : vector<8x128xf32>
    %468 = arith.mulf %461, %443 : vector<8x128xf32>
    %469 = arith.mulf %456, %462 : vector<8x128xf32>
    %470 = arith.addf %468, %469 : vector<8x128xf32>
    %471 = math.tanh %470 : vector<8x128xf32>
    %472 = arith.mulf %467, %471 : vector<8x128xf32>
    %c48_225 = arith.constant 48 : index
    %c0_226 = arith.constant 0 : index
    %473 = vector.load %arg15[%c48_225, %c0_226] : memref<64x128xf32, #tpu.memory_space<vmem>>, vector<8x128xf32>
    tpu.vector_store %arg15[%c48_225, %c0_226], %472 {strides = array<i32>} : memref<64x128xf32, #tpu.memory_space<vmem>>, vector<8x128xf32>,
    %c56_227 = arith.constant 56 : index
    %c0_228 = arith.constant 0 : index
    %474 = vector.load %arg18[%c56_227, %c0_228] : memref<64x512xf32, #tpu.memory_space<vmem>>, vector<8x512xf32>
    %475 = arith.truncf %472 : vector<8x128xf32> to vector<8x128xbf16>
    %cst_229 = arith.constant dense<0.000000e+00> : vector<8x512xf32>
    %476 = tpu.matmul %475, %282, %cst_229 {dimension_numbers = #tpu.dot_dimension_numbers<[1], [0], [0], [1], [0, 0, 1, 1], [], []>} : vector<8x128xbf16>, vector<128x512xbf16>, vector<8x512xf32> -> vector<8x512xf32>
    %477 = arith.addf %474, %476 : vector<8x512xf32>
    %478 = math.tanh %477 : vector<8x512xf32>
    %479 = vector.extract_strided_slice %478 {offsets = [0, 0], sizes = [8, 128], strides = [1, 1]} : vector<8x512xf32> to vector<8x128xf32>
    %cst_230 = arith.constant 5.000000e-01 : f32
    %480 = vector.broadcast %cst_230 : f32 to vector<8x128xf32>
    %481 = arith.mulf %480, %479 : vector<8x128xf32>
    %cst_231 = arith.constant 5.000000e-01 : f32
    %482 = vector.broadcast %cst_231 : f32 to vector<8x128xf32>
    %483 = arith.addf %481, %482 : vector<8x128xf32>
    %484 = vector.extract_strided_slice %478 {offsets = [0, 128], sizes = [8, 128], strides = [1, 1]} : vector<8x512xf32> to vector<8x128xf32>
    %cst_232 = arith.constant 5.000000e-01 : f32
    %485 = vector.broadcast %cst_232 : f32 to vector<8x128xf32>
    %486 = arith.mulf %485, %484 : vector<8x128xf32>
    %cst_233 = arith.constant 5.000000e-01 : f32
    %487 = vector.broadcast %cst_233 : f32 to vector<8x128xf32>
    %488 = arith.addf %486, %487 : vector<8x128xf32>
    %489 = vector.extract_strided_slice %478 {offsets = [0, 256], sizes = [8, 128], strides = [1, 1]} : vector<8x512xf32> to vector<8x128xf32>
    %490 = vector.extract_strided_slice %478 {offsets = [0, 384], sizes = [8, 128], strides = [1, 1]} : vector<8x512xf32> to vector<8x128xf32>
    %cst_234 = arith.constant 5.000000e-01 : f32
    %491 = vector.broadcast %cst_234 : f32 to vector<8x128xf32>
    %492 = arith.mulf %491, %490 : vector<8x128xf32>
    %cst_235 = arith.constant 5.000000e-01 : f32
    %493 = vector.broadcast %cst_235 : f32 to vector<8x128xf32>
    %494 = arith.addf %492, %493 : vector<8x128xf32>
    %495 = arith.mulf %488, %470 : vector<8x128xf32>
    %496 = arith.mulf %483, %489 : vector<8x128xf32>
    %497 = arith.addf %495, %496 : vector<8x128xf32>
    %498 = math.tanh %497 : vector<8x128xf32>
    %499 = arith.mulf %494, %498 : vector<8x128xf32>
    %c56_236 = arith.constant 56 : index
    %c0_237 = arith.constant 0 : index
    %500 = vector.load %arg15[%c56_236, %c0_237] : memref<64x128xf32, #tpu.memory_space<vmem>>, vector<8x128xf32>
    tpu.vector_store %arg15[%c56_236, %c0_237], %499 {strides = array<i32>} : memref<64x128xf32, #tpu.memory_space<vmem>>, vector<8x128xf32>,
    %c3_i32_238 = arith.constant 3 : i32
    %501 = tpu.memref_slice %arg25[%c3_i32_238] : memref<5x!tpu.dma_semaphore, #tpu.memory_space<semaphore_mem>> -> memref<1x!tpu.dma_semaphore, #tpu.memory_space<semaphore_mem>>
    %502 = tpu.memref_squeeze %501 : memref<1x!tpu.dma_semaphore, #tpu.memory_space<semaphore_mem>> -> memref<!tpu.dma_semaphore, #tpu.memory_space<semaphore_mem>>
    tpu.wait_dma2 semaphore(%502 : memref<!tpu.dma_semaphore, #tpu.memory_space<semaphore_mem>>) src(%arg9 : memref<128x512xbf16, #tpu.memory_space<any>>) dst(%arg23 : memref<128x512xbf16, #tpu.memory_space<vmem>>)
    %c4_i32_239 = arith.constant 4 : i32
    %503 = tpu.memref_slice %arg25[%c4_i32_239] : memref<5x!tpu.dma_semaphore, #tpu.memory_space<semaphore_mem>> -> memref<1x!tpu.dma_semaphore, #tpu.memory_space<semaphore_mem>>
    %504 = tpu.memref_squeeze %503 : memref<1x!tpu.dma_semaphore, #tpu.memory_space<semaphore_mem>> -> memref<!tpu.dma_semaphore, #tpu.memory_space<semaphore_mem>>
    tpu.wait_dma2 semaphore(%504 : memref<!tpu.dma_semaphore, #tpu.memory_space<semaphore_mem>>) src(%arg10 : memref<128x512xbf16, #tpu.memory_space<any>>) dst(%arg24 : memref<128x512xbf16, #tpu.memory_space<vmem>>)
    %c0_240 = arith.constant 0 : index
    %c0_241 = arith.constant 0 : index
    %505 = vector.load %arg15[%c0_240, %c0_241] : memref<64x128xf32, #tpu.memory_space<vmem>>, vector<64x128xf32>
    %506 = arith.truncf %505 : vector<64x128xf32> to vector<64x128xbf16>
    %c0_242 = arith.constant 0 : index
    %c0_243 = arith.constant 0 : index
    %507 = vector.load %arg23[%c0_242, %c0_243] : memref<128x512xbf16, #tpu.memory_space<vmem>>, vector<128x512xbf16>
    %cst_244 = arith.constant dense<0.000000e+00> : vector<64x512xf32>
    %508 = tpu.matmul %506, %507, %cst_244 {dimension_numbers = #tpu.dot_dimension_numbers<[1], [0], [0], [1], [0, 0, 1, 1], [], []>} : vector<64x128xbf16>, vector<128x512xbf16>, vector<64x512xf32> -> vector<64x512xf32>
    %c0_245 = arith.constant 0 : index
    %c0_246 = arith.constant 0 : index
    %509 = vector.load %arg11[%c0_245, %c0_246] : memref<1x512xf32, #tpu.memory_space<vmem>>, vector<1x512xf32>
    %510 = vector.broadcast %509 : vector<1x512xf32> to vector<64x512xf32>
    %511 = arith.addf %508, %510 : vector<64x512xf32>
    %c0_247 = arith.constant 0 : index
    %c0_248 = arith.constant 0 : index
    %512 = vector.load %arg19[%c0_247, %c0_248] : memref<64x512xf32, #tpu.memory_space<vmem>>, vector<64x512xf32>
    tpu.vector_store %arg19[%c0_247, %c0_248], %511 {strides = array<i32>} : memref<64x512xf32, #tpu.memory_space<vmem>>, vector<64x512xf32>,
    %513 = tpu.iota {dimensions = array<i32: 1>} : vector<8x128xi32>
    %cst_249 = arith.constant 0.000000e+00 : f32
    %514 = vector.broadcast %cst_249 : f32 to vector<8x128xf32>
    %c0_250 = arith.constant 0 : index
    %c0_251 = arith.constant 0 : index
    %515 = vector.load %arg24[%c0_250, %c0_251] : memref<128x512xbf16, #tpu.memory_space<vmem>>, vector<128x512xbf16>
    %cst_252 = arith.constant 0.000000e+00 : f32
    %516 = vector.broadcast %cst_252 : f32 to vector<8x128xf32>
    %cst_253 = arith.constant 0.000000e+00 : f32
    %517 = vector.broadcast %cst_253 : f32 to vector<8x128xf32>
    %c0_254 = arith.constant 0 : index
    %c0_255 = arith.constant 0 : index
    %518 = vector.load %arg19[%c0_254, %c0_255] : memref<64x512xf32, #tpu.memory_space<vmem>>, vector<8x512xf32>
    %519 = arith.truncf %516 : vector<8x128xf32> to vector<8x128xbf16>
    %cst_256 = arith.constant dense<0.000000e+00> : vector<8x512xf32>
    %520 = tpu.matmul %519, %515, %cst_256 {dimension_numbers = #tpu.dot_dimension_numbers<[1], [0], [0], [1], [0, 0, 1, 1], [], []>} : vector<8x128xbf16>, vector<128x512xbf16>, vector<8x512xf32> -> vector<8x512xf32>
    %521 = arith.addf %518, %520 : vector<8x512xf32>
    %522 = math.tanh %521 : vector<8x512xf32>
    %523 = vector.extract_strided_slice %522 {offsets = [0, 0], sizes = [8, 128], strides = [1, 1]} : vector<8x512xf32> to vector<8x128xf32>
    %cst_257 = arith.constant 5.000000e-01 : f32
    %524 = vector.broadcast %cst_257 : f32 to vector<8x128xf32>
    %525 = arith.mulf %524, %523 : vector<8x128xf32>
    %cst_258 = arith.constant 5.000000e-01 : f32
    %526 = vector.broadcast %cst_258 : f32 to vector<8x128xf32>
    %527 = arith.addf %525, %526 : vector<8x128xf32>
    %528 = vector.extract_strided_slice %522 {offsets = [0, 128], sizes = [8, 128], strides = [1, 1]} : vector<8x512xf32> to vector<8x128xf32>
    %cst_259 = arith.constant 5.000000e-01 : f32
    %529 = vector.broadcast %cst_259 : f32 to vector<8x128xf32>
    %530 = arith.mulf %529, %528 : vector<8x128xf32>
    %cst_260 = arith.constant 5.000000e-01 : f32
    %531 = vector.broadcast %cst_260 : f32 to vector<8x128xf32>
    %532 = arith.addf %530, %531 : vector<8x128xf32>
    %533 = vector.extract_strided_slice %522 {offsets = [0, 256], sizes = [8, 128], strides = [1, 1]} : vector<8x512xf32> to vector<8x128xf32>
    %534 = vector.extract_strided_slice %522 {offsets = [0, 384], sizes = [8, 128], strides = [1, 1]} : vector<8x512xf32> to vector<8x128xf32>
    %cst_261 = arith.constant 5.000000e-01 : f32
    %535 = vector.broadcast %cst_261 : f32 to vector<8x128xf32>
    %536 = arith.mulf %535, %534 : vector<8x128xf32>
    %cst_262 = arith.constant 5.000000e-01 : f32
    %537 = vector.broadcast %cst_262 : f32 to vector<8x128xf32>
    %538 = arith.addf %536, %537 : vector<8x128xf32>
    %539 = arith.mulf %532, %517 : vector<8x128xf32>
    %540 = arith.mulf %527, %533 : vector<8x128xf32>
    %541 = arith.addf %539, %540 : vector<8x128xf32>
    %542 = math.tanh %541 : vector<8x128xf32>
    %543 = arith.mulf %538, %542 : vector<8x128xf32>
    %c0_i32_263 = arith.constant 0 : i32
    %544 = vector.broadcast %c0_i32_263 : i32 to vector<8x128xi32>
    %545 = arith.cmpi eq, %513, %544 : vector<8x128xi32>
    %546 = vector.extract_strided_slice %543 {offsets = [0, 0], sizes = [8, 1], strides = [1, 1]} : vector<8x128xf32> to vector<8x1xf32>
    %547 = vector.shape_cast %546 : vector<8x1xf32> to vector<8x1xf32>
    %548 = vector.broadcast %547 : vector<8x1xf32> to vector<8x128xf32>
    %549 = arith.select %545, %548, %514 : vector<8x128xi1>, vector<8x128xf32>
    %c8_264 = arith.constant 8 : index
    %c0_265 = arith.constant 0 : index
    %550 = vector.load %arg19[%c8_264, %c0_265] : memref<64x512xf32, #tpu.memory_space<vmem>>, vector<8x512xf32>
    %551 = arith.truncf %543 : vector<8x128xf32> to vector<8x128xbf16>
    %cst_266 = arith.constant dense<0.000000e+00> : vector<8x512xf32>
    %552 = tpu.matmul %551, %515, %cst_266 {dimension_numbers = #tpu.dot_dimension_numbers<[1], [0], [0], [1], [0, 0, 1, 1], [], []>} : vector<8x128xbf16>, vector<128x512xbf16>, vector<8x512xf32> -> vector<8x512xf32>
    %553 = arith.addf %550, %552 : vector<8x512xf32>
    %554 = math.tanh %553 : vector<8x512xf32>
    %555 = vector.extract_strided_slice %554 {offsets = [0, 0], sizes = [8, 128], strides = [1, 1]} : vector<8x512xf32> to vector<8x128xf32>
    %cst_267 = arith.constant 5.000000e-01 : f32
    %556 = vector.broadcast %cst_267 : f32 to vector<8x128xf32>
    %557 = arith.mulf %556, %555 : vector<8x128xf32>
    %cst_268 = arith.constant 5.000000e-01 : f32
    %558 = vector.broadcast %cst_268 : f32 to vector<8x128xf32>
    %559 = arith.addf %557, %558 : vector<8x128xf32>
    %560 = vector.extract_strided_slice %554 {offsets = [0, 128], sizes = [8, 128], strides = [1, 1]} : vector<8x512xf32> to vector<8x128xf32>
    %cst_269 = arith.constant 5.000000e-01 : f32
    %561 = vector.broadcast %cst_269 : f32 to vector<8x128xf32>
    %562 = arith.mulf %561, %560 : vector<8x128xf32>
    %cst_270 = arith.constant 5.000000e-01 : f32
    %563 = vector.broadcast %cst_270 : f32 to vector<8x128xf32>
    %564 = arith.addf %562, %563 : vector<8x128xf32>
    %565 = vector.extract_strided_slice %554 {offsets = [0, 256], sizes = [8, 128], strides = [1, 1]} : vector<8x512xf32> to vector<8x128xf32>
    %566 = vector.extract_strided_slice %554 {offsets = [0, 384], sizes = [8, 128], strides = [1, 1]} : vector<8x512xf32> to vector<8x128xf32>
    %cst_271 = arith.constant 5.000000e-01 : f32
    %567 = vector.broadcast %cst_271 : f32 to vector<8x128xf32>
    %568 = arith.mulf %567, %566 : vector<8x128xf32>
    %cst_272 = arith.constant 5.000000e-01 : f32
    %569 = vector.broadcast %cst_272 : f32 to vector<8x128xf32>
    %570 = arith.addf %568, %569 : vector<8x128xf32>
    %571 = arith.mulf %564, %541 : vector<8x128xf32>
    %572 = arith.mulf %559, %565 : vector<8x128xf32>
    %573 = arith.addf %571, %572 : vector<8x128xf32>
    %574 = math.tanh %573 : vector<8x128xf32>
    %575 = arith.mulf %570, %574 : vector<8x128xf32>
    %c1_i32_273 = arith.constant 1 : i32
    %576 = vector.broadcast %c1_i32_273 : i32 to vector<8x128xi32>
    %577 = arith.cmpi eq, %513, %576 : vector<8x128xi32>
    %578 = vector.extract_strided_slice %575 {offsets = [0, 0], sizes = [8, 1], strides = [1, 1]} : vector<8x128xf32> to vector<8x1xf32>
    %579 = vector.shape_cast %578 : vector<8x1xf32> to vector<8x1xf32>
    %580 = vector.broadcast %579 : vector<8x1xf32> to vector<8x128xf32>
    %581 = arith.select %577, %580, %549 : vector<8x128xi1>, vector<8x128xf32>
    %c16_274 = arith.constant 16 : index
    %c0_275 = arith.constant 0 : index
    %582 = vector.load %arg19[%c16_274, %c0_275] : memref<64x512xf32, #tpu.memory_space<vmem>>, vector<8x512xf32>
    %583 = arith.truncf %575 : vector<8x128xf32> to vector<8x128xbf16>
    %cst_276 = arith.constant dense<0.000000e+00> : vector<8x512xf32>
    %584 = tpu.matmul %583, %515, %cst_276 {dimension_numbers = #tpu.dot_dimension_numbers<[1], [0], [0], [1], [0, 0, 1, 1], [], []>} : vector<8x128xbf16>, vector<128x512xbf16>, vector<8x512xf32> -> vector<8x512xf32>
    %585 = arith.addf %582, %584 : vector<8x512xf32>
    %586 = math.tanh %585 : vector<8x512xf32>
    %587 = vector.extract_strided_slice %586 {offsets = [0, 0], sizes = [8, 128], strides = [1, 1]} : vector<8x512xf32> to vector<8x128xf32>
    %cst_277 = arith.constant 5.000000e-01 : f32
    %588 = vector.broadcast %cst_277 : f32 to vector<8x128xf32>
    %589 = arith.mulf %588, %587 : vector<8x128xf32>
    %cst_278 = arith.constant 5.000000e-01 : f32
    %590 = vector.broadcast %cst_278 : f32 to vector<8x128xf32>
    %591 = arith.addf %589, %590 : vector<8x128xf32>
    %592 = vector.extract_strided_slice %586 {offsets = [0, 128], sizes = [8, 128], strides = [1, 1]} : vector<8x512xf32> to vector<8x128xf32>
    %cst_279 = arith.constant 5.000000e-01 : f32
    %593 = vector.broadcast %cst_279 : f32 to vector<8x128xf32>
    %594 = arith.mulf %593, %592 : vector<8x128xf32>
    %cst_280 = arith.constant 5.000000e-01 : f32
    %595 = vector.broadcast %cst_280 : f32 to vector<8x128xf32>
    %596 = arith.addf %594, %595 : vector<8x128xf32>
    %597 = vector.extract_strided_slice %586 {offsets = [0, 256], sizes = [8, 128], strides = [1, 1]} : vector<8x512xf32> to vector<8x128xf32>
    %598 = vector.extract_strided_slice %586 {offsets = [0, 384], sizes = [8, 128], strides = [1, 1]} : vector<8x512xf32> to vector<8x128xf32>
    %cst_281 = arith.constant 5.000000e-01 : f32
    %599 = vector.broadcast %cst_281 : f32 to vector<8x128xf32>
    %600 = arith.mulf %599, %598 : vector<8x128xf32>
    %cst_282 = arith.constant 5.000000e-01 : f32
    %601 = vector.broadcast %cst_282 : f32 to vector<8x128xf32>
    %602 = arith.addf %600, %601 : vector<8x128xf32>
    %603 = arith.mulf %596, %573 : vector<8x128xf32>
    %604 = arith.mulf %591, %597 : vector<8x128xf32>
    %605 = arith.addf %603, %604 : vector<8x128xf32>
    %606 = math.tanh %605 : vector<8x128xf32>
    %607 = arith.mulf %602, %606 : vector<8x128xf32>
    %c2_i32_283 = arith.constant 2 : i32
    %608 = vector.broadcast %c2_i32_283 : i32 to vector<8x128xi32>
    %609 = arith.cmpi eq, %513, %608 : vector<8x128xi32>
    %610 = vector.extract_strided_slice %607 {offsets = [0, 0], sizes = [8, 1], strides = [1, 1]} : vector<8x128xf32> to vector<8x1xf32>
    %611 = vector.shape_cast %610 : vector<8x1xf32> to vector<8x1xf32>
    %612 = vector.broadcast %611 : vector<8x1xf32> to vector<8x128xf32>
    %613 = arith.select %609, %612, %581 : vector<8x128xi1>, vector<8x128xf32>
    %c24_284 = arith.constant 24 : index
    %c0_285 = arith.constant 0 : index
    %614 = vector.load %arg19[%c24_284, %c0_285] : memref<64x512xf32, #tpu.memory_space<vmem>>, vector<8x512xf32>
    %615 = arith.truncf %607 : vector<8x128xf32> to vector<8x128xbf16>
    %cst_286 = arith.constant dense<0.000000e+00> : vector<8x512xf32>
    %616 = tpu.matmul %615, %515, %cst_286 {dimension_numbers = #tpu.dot_dimension_numbers<[1], [0], [0], [1], [0, 0, 1, 1], [], []>} : vector<8x128xbf16>, vector<128x512xbf16>, vector<8x512xf32> -> vector<8x512xf32>
    %617 = arith.addf %614, %616 : vector<8x512xf32>
    %618 = math.tanh %617 : vector<8x512xf32>
    %619 = vector.extract_strided_slice %618 {offsets = [0, 0], sizes = [8, 128], strides = [1, 1]} : vector<8x512xf32> to vector<8x128xf32>
    %cst_287 = arith.constant 5.000000e-01 : f32
    %620 = vector.broadcast %cst_287 : f32 to vector<8x128xf32>
    %621 = arith.mulf %620, %619 : vector<8x128xf32>
    %cst_288 = arith.constant 5.000000e-01 : f32
    %622 = vector.broadcast %cst_288 : f32 to vector<8x128xf32>
    %623 = arith.addf %621, %622 : vector<8x128xf32>
    %624 = vector.extract_strided_slice %618 {offsets = [0, 128], sizes = [8, 128], strides = [1, 1]} : vector<8x512xf32> to vector<8x128xf32>
    %cst_289 = arith.constant 5.000000e-01 : f32
    %625 = vector.broadcast %cst_289 : f32 to vector<8x128xf32>
    %626 = arith.mulf %625, %624 : vector<8x128xf32>
    %cst_290 = arith.constant 5.000000e-01 : f32
    %627 = vector.broadcast %cst_290 : f32 to vector<8x128xf32>
    %628 = arith.addf %626, %627 : vector<8x128xf32>
    %629 = vector.extract_strided_slice %618 {offsets = [0, 256], sizes = [8, 128], strides = [1, 1]} : vector<8x512xf32> to vector<8x128xf32>
    %630 = vector.extract_strided_slice %618 {offsets = [0, 384], sizes = [8, 128], strides = [1, 1]} : vector<8x512xf32> to vector<8x128xf32>
    %cst_291 = arith.constant 5.000000e-01 : f32
    %631 = vector.broadcast %cst_291 : f32 to vector<8x128xf32>
    %632 = arith.mulf %631, %630 : vector<8x128xf32>
    %cst_292 = arith.constant 5.000000e-01 : f32
    %633 = vector.broadcast %cst_292 : f32 to vector<8x128xf32>
    %634 = arith.addf %632, %633 : vector<8x128xf32>
    %635 = arith.mulf %628, %605 : vector<8x128xf32>
    %636 = arith.mulf %623, %629 : vector<8x128xf32>
    %637 = arith.addf %635, %636 : vector<8x128xf32>
    %638 = math.tanh %637 : vector<8x128xf32>
    %639 = arith.mulf %634, %638 : vector<8x128xf32>
    %c3_i32_293 = arith.constant 3 : i32
    %640 = vector.broadcast %c3_i32_293 : i32 to vector<8x128xi32>
    %641 = arith.cmpi eq, %513, %640 : vector<8x128xi32>
    %642 = vector.extract_strided_slice %639 {offsets = [0, 0], sizes = [8, 1], strides = [1, 1]} : vector<8x128xf32> to vector<8x1xf32>
    %643 = vector.shape_cast %642 : vector<8x1xf32> to vector<8x1xf32>
    %644 = vector.broadcast %643 : vector<8x1xf32> to vector<8x128xf32>
    %645 = arith.select %641, %644, %613 : vector<8x128xi1>, vector<8x128xf32>
    %c32_294 = arith.constant 32 : index
    %c0_295 = arith.constant 0 : index
    %646 = vector.load %arg19[%c32_294, %c0_295] : memref<64x512xf32, #tpu.memory_space<vmem>>, vector<8x512xf32>
    %647 = arith.truncf %639 : vector<8x128xf32> to vector<8x128xbf16>
    %cst_296 = arith.constant dense<0.000000e+00> : vector<8x512xf32>
    %648 = tpu.matmul %647, %515, %cst_296 {dimension_numbers = #tpu.dot_dimension_numbers<[1], [0], [0], [1], [0, 0, 1, 1], [], []>} : vector<8x128xbf16>, vector<128x512xbf16>, vector<8x512xf32> -> vector<8x512xf32>
    %649 = arith.addf %646, %648 : vector<8x512xf32>
    %650 = math.tanh %649 : vector<8x512xf32>
    %651 = vector.extract_strided_slice %650 {offsets = [0, 0], sizes = [8, 128], strides = [1, 1]} : vector<8x512xf32> to vector<8x128xf32>
    %cst_297 = arith.constant 5.000000e-01 : f32
    %652 = vector.broadcast %cst_297 : f32 to vector<8x128xf32>
    %653 = arith.mulf %652, %651 : vector<8x128xf32>
    %cst_298 = arith.constant 5.000000e-01 : f32
    %654 = vector.broadcast %cst_298 : f32 to vector<8x128xf32>
    %655 = arith.addf %653, %654 : vector<8x128xf32>
    %656 = vector.extract_strided_slice %650 {offsets = [0, 128], sizes = [8, 128], strides = [1, 1]} : vector<8x512xf32> to vector<8x128xf32>
    %cst_299 = arith.constant 5.000000e-01 : f32
    %657 = vector.broadcast %cst_299 : f32 to vector<8x128xf32>
    %658 = arith.mulf %657, %656 : vector<8x128xf32>
    %cst_300 = arith.constant 5.000000e-01 : f32
    %659 = vector.broadcast %cst_300 : f32 to vector<8x128xf32>
    %660 = arith.addf %658, %659 : vector<8x128xf32>
    %661 = vector.extract_strided_slice %650 {offsets = [0, 256], sizes = [8, 128], strides = [1, 1]} : vector<8x512xf32> to vector<8x128xf32>
    %662 = vector.extract_strided_slice %650 {offsets = [0, 384], sizes = [8, 128], strides = [1, 1]} : vector<8x512xf32> to vector<8x128xf32>
    %cst_301 = arith.constant 5.000000e-01 : f32
    %663 = vector.broadcast %cst_301 : f32 to vector<8x128xf32>
    %664 = arith.mulf %663, %662 : vector<8x128xf32>
    %cst_302 = arith.constant 5.000000e-01 : f32
    %665 = vector.broadcast %cst_302 : f32 to vector<8x128xf32>
    %666 = arith.addf %664, %665 : vector<8x128xf32>
    %667 = arith.mulf %660, %637 : vector<8x128xf32>
    %668 = arith.mulf %655, %661 : vector<8x128xf32>
    %669 = arith.addf %667, %668 : vector<8x128xf32>
    %670 = math.tanh %669 : vector<8x128xf32>
    %671 = arith.mulf %666, %670 : vector<8x128xf32>
    %c4_i32_303 = arith.constant 4 : i32
    %672 = vector.broadcast %c4_i32_303 : i32 to vector<8x128xi32>
    %673 = arith.cmpi eq, %513, %672 : vector<8x128xi32>
    %674 = vector.extract_strided_slice %671 {offsets = [0, 0], sizes = [8, 1], strides = [1, 1]} : vector<8x128xf32> to vector<8x1xf32>
    %675 = vector.shape_cast %674 : vector<8x1xf32> to vector<8x1xf32>
    %676 = vector.broadcast %675 : vector<8x1xf32> to vector<8x128xf32>
    %677 = arith.select %673, %676, %645 : vector<8x128xi1>, vector<8x128xf32>
    %c40_304 = arith.constant 40 : index
    %c0_305 = arith.constant 0 : index
    %678 = vector.load %arg19[%c40_304, %c0_305] : memref<64x512xf32, #tpu.memory_space<vmem>>, vector<8x512xf32>
    %679 = arith.truncf %671 : vector<8x128xf32> to vector<8x128xbf16>
    %cst_306 = arith.constant dense<0.000000e+00> : vector<8x512xf32>
    %680 = tpu.matmul %679, %515, %cst_306 {dimension_numbers = #tpu.dot_dimension_numbers<[1], [0], [0], [1], [0, 0, 1, 1], [], []>} : vector<8x128xbf16>, vector<128x512xbf16>, vector<8x512xf32> -> vector<8x512xf32>
    %681 = arith.addf %678, %680 : vector<8x512xf32>
    %682 = math.tanh %681 : vector<8x512xf32>
    %683 = vector.extract_strided_slice %682 {offsets = [0, 0], sizes = [8, 128], strides = [1, 1]} : vector<8x512xf32> to vector<8x128xf32>
    %cst_307 = arith.constant 5.000000e-01 : f32
    %684 = vector.broadcast %cst_307 : f32 to vector<8x128xf32>
    %685 = arith.mulf %684, %683 : vector<8x128xf32>
    %cst_308 = arith.constant 5.000000e-01 : f32
    %686 = vector.broadcast %cst_308 : f32 to vector<8x128xf32>
    %687 = arith.addf %685, %686 : vector<8x128xf32>
    %688 = vector.extract_strided_slice %682 {offsets = [0, 128], sizes = [8, 128], strides = [1, 1]} : vector<8x512xf32> to vector<8x128xf32>
    %cst_309 = arith.constant 5.000000e-01 : f32
    %689 = vector.broadcast %cst_309 : f32 to vector<8x128xf32>
    %690 = arith.mulf %689, %688 : vector<8x128xf32>
    %cst_310 = arith.constant 5.000000e-01 : f32
    %691 = vector.broadcast %cst_310 : f32 to vector<8x128xf32>
    %692 = arith.addf %690, %691 : vector<8x128xf32>
    %693 = vector.extract_strided_slice %682 {offsets = [0, 256], sizes = [8, 128], strides = [1, 1]} : vector<8x512xf32> to vector<8x128xf32>
    %694 = vector.extract_strided_slice %682 {offsets = [0, 384], sizes = [8, 128], strides = [1, 1]} : vector<8x512xf32> to vector<8x128xf32>
    %cst_311 = arith.constant 5.000000e-01 : f32
    %695 = vector.broadcast %cst_311 : f32 to vector<8x128xf32>
    %696 = arith.mulf %695, %694 : vector<8x128xf32>
    %cst_312 = arith.constant 5.000000e-01 : f32
    %697 = vector.broadcast %cst_312 : f32 to vector<8x128xf32>
    %698 = arith.addf %696, %697 : vector<8x128xf32>
    %699 = arith.mulf %692, %669 : vector<8x128xf32>
    %700 = arith.mulf %687, %693 : vector<8x128xf32>
    %701 = arith.addf %699, %700 : vector<8x128xf32>
    %702 = math.tanh %701 : vector<8x128xf32>
    %703 = arith.mulf %698, %702 : vector<8x128xf32>
    %c5_i32 = arith.constant 5 : i32
    %704 = vector.broadcast %c5_i32 : i32 to vector<8x128xi32>
    %705 = arith.cmpi eq, %513, %704 : vector<8x128xi32>
    %706 = vector.extract_strided_slice %703 {offsets = [0, 0], sizes = [8, 1], strides = [1, 1]} : vector<8x128xf32> to vector<8x1xf32>
    %707 = vector.shape_cast %706 : vector<8x1xf32> to vector<8x1xf32>
    %708 = vector.broadcast %707 : vector<8x1xf32> to vector<8x128xf32>
    %709 = arith.select %705, %708, %677 : vector<8x128xi1>, vector<8x128xf32>
    %c48_313 = arith.constant 48 : index
    %c0_314 = arith.constant 0 : index
    %710 = vector.load %arg19[%c48_313, %c0_314] : memref<64x512xf32, #tpu.memory_space<vmem>>, vector<8x512xf32>
    %711 = arith.truncf %703 : vector<8x128xf32> to vector<8x128xbf16>
    %cst_315 = arith.constant dense<0.000000e+00> : vector<8x512xf32>
    %712 = tpu.matmul %711, %515, %cst_315 {dimension_numbers = #tpu.dot_dimension_numbers<[1], [0], [0], [1], [0, 0, 1, 1], [], []>} : vector<8x128xbf16>, vector<128x512xbf16>, vector<8x512xf32> -> vector<8x512xf32>
    %713 = arith.addf %710, %712 : vector<8x512xf32>
    %714 = math.tanh %713 : vector<8x512xf32>
    %715 = vector.extract_strided_slice %714 {offsets = [0, 0], sizes = [8, 128], strides = [1, 1]} : vector<8x512xf32> to vector<8x128xf32>
    %cst_316 = arith.constant 5.000000e-01 : f32
    %716 = vector.broadcast %cst_316 : f32 to vector<8x128xf32>
    %717 = arith.mulf %716, %715 : vector<8x128xf32>
    %cst_317 = arith.constant 5.000000e-01 : f32
    %718 = vector.broadcast %cst_317 : f32 to vector<8x128xf32>
    %719 = arith.addf %717, %718 : vector<8x128xf32>
    %720 = vector.extract_strided_slice %714 {offsets = [0, 128], sizes = [8, 128], strides = [1, 1]} : vector<8x512xf32> to vector<8x128xf32>
    %cst_318 = arith.constant 5.000000e-01 : f32
    %721 = vector.broadcast %cst_318 : f32 to vector<8x128xf32>
    %722 = arith.mulf %721, %720 : vector<8x128xf32>
    %cst_319 = arith.constant 5.000000e-01 : f32
    %723 = vector.broadcast %cst_319 : f32 to vector<8x128xf32>
    %724 = arith.addf %722, %723 : vector<8x128xf32>
    %725 = vector.extract_strided_slice %714 {offsets = [0, 256], sizes = [8, 128], strides = [1, 1]} : vector<8x512xf32> to vector<8x128xf32>
    %726 = vector.extract_strided_slice %714 {offsets = [0, 384], sizes = [8, 128], strides = [1, 1]} : vector<8x512xf32> to vector<8x128xf32>
    %cst_320 = arith.constant 5.000000e-01 : f32
    %727 = vector.broadcast %cst_320 : f32 to vector<8x128xf32>
    %728 = arith.mulf %727, %726 : vector<8x128xf32>
    %cst_321 = arith.constant 5.000000e-01 : f32
    %729 = vector.broadcast %cst_321 : f32 to vector<8x128xf32>
    %730 = arith.addf %728, %729 : vector<8x128xf32>
    %731 = arith.mulf %724, %701 : vector<8x128xf32>
    %732 = arith.mulf %719, %725 : vector<8x128xf32>
    %733 = arith.addf %731, %732 : vector<8x128xf32>
    %734 = math.tanh %733 : vector<8x128xf32>
    %735 = arith.mulf %730, %734 : vector<8x128xf32>
    %c6_i32 = arith.constant 6 : i32
    %736 = vector.broadcast %c6_i32 : i32 to vector<8x128xi32>
    %737 = arith.cmpi eq, %513, %736 : vector<8x128xi32>
    %738 = vector.extract_strided_slice %735 {offsets = [0, 0], sizes = [8, 1], strides = [1, 1]} : vector<8x128xf32> to vector<8x1xf32>
    %739 = vector.shape_cast %738 : vector<8x1xf32> to vector<8x1xf32>
    %740 = vector.broadcast %739 : vector<8x1xf32> to vector<8x128xf32>
    %741 = arith.select %737, %740, %709 : vector<8x128xi1>, vector<8x128xf32>
    %c56_322 = arith.constant 56 : index
    %c0_323 = arith.constant 0 : index
    %742 = vector.load %arg19[%c56_322, %c0_323] : memref<64x512xf32, #tpu.memory_space<vmem>>, vector<8x512xf32>
    %743 = arith.truncf %735 : vector<8x128xf32> to vector<8x128xbf16>
    %cst_324 = arith.constant dense<0.000000e+00> : vector<8x512xf32>
    %744 = tpu.matmul %743, %515, %cst_324 {dimension_numbers = #tpu.dot_dimension_numbers<[1], [0], [0], [1], [0, 0, 1, 1], [], []>} : vector<8x128xbf16>, vector<128x512xbf16>, vector<8x512xf32> -> vector<8x512xf32>
    %745 = arith.addf %742, %744 : vector<8x512xf32>
    %746 = math.tanh %745 : vector<8x512xf32>
    %747 = vector.extract_strided_slice %746 {offsets = [0, 0], sizes = [8, 128], strides = [1, 1]} : vector<8x512xf32> to vector<8x128xf32>
    %cst_325 = arith.constant 5.000000e-01 : f32
    %748 = vector.broadcast %cst_325 : f32 to vector<8x128xf32>
    %749 = arith.mulf %748, %747 : vector<8x128xf32>
    %cst_326 = arith.constant 5.000000e-01 : f32
    %750 = vector.broadcast %cst_326 : f32 to vector<8x128xf32>
    %751 = arith.addf %749, %750 : vector<8x128xf32>
    %752 = vector.extract_strided_slice %746 {offsets = [0, 128], sizes = [8, 128], strides = [1, 1]} : vector<8x512xf32> to vector<8x128xf32>
    %cst_327 = arith.constant 5.000000e-01 : f32
    %753 = vector.broadcast %cst_327 : f32 to vector<8x128xf32>
    %754 = arith.mulf %753, %752 : vector<8x128xf32>
    %cst_328 = arith.constant 5.000000e-01 : f32
    %755 = vector.broadcast %cst_328 : f32 to vector<8x128xf32>
    %756 = arith.addf %754, %755 : vector<8x128xf32>
    %757 = vector.extract_strided_slice %746 {offsets = [0, 256], sizes = [8, 128], strides = [1, 1]} : vector<8x512xf32> to vector<8x128xf32>
    %758 = vector.extract_strided_slice %746 {offsets = [0, 384], sizes = [8, 128], strides = [1, 1]} : vector<8x512xf32> to vector<8x128xf32>
    %cst_329 = arith.constant 5.000000e-01 : f32
    %759 = vector.broadcast %cst_329 : f32 to vector<8x128xf32>
    %760 = arith.mulf %759, %758 : vector<8x128xf32>
    %cst_330 = arith.constant 5.000000e-01 : f32
    %761 = vector.broadcast %cst_330 : f32 to vector<8x128xf32>
    %762 = arith.addf %760, %761 : vector<8x128xf32>
    %763 = arith.mulf %756, %733 : vector<8x128xf32>
    %764 = arith.mulf %751, %757 : vector<8x128xf32>
    %765 = arith.addf %763, %764 : vector<8x128xf32>
    %766 = math.tanh %765 : vector<8x128xf32>
    %767 = arith.mulf %762, %766 : vector<8x128xf32>
    %c7_i32 = arith.constant 7 : i32
    %768 = vector.broadcast %c7_i32 : i32 to vector<8x128xi32>
    %769 = arith.cmpi eq, %513, %768 : vector<8x128xi32>
    %770 = vector.extract_strided_slice %767 {offsets = [0, 0], sizes = [8, 1], strides = [1, 1]} : vector<8x128xf32> to vector<8x1xf32>
    %771 = vector.shape_cast %770 : vector<8x1xf32> to vector<8x1xf32>
    %772 = vector.broadcast %771 : vector<8x1xf32> to vector<8x128xf32>
    %773 = arith.select %769, %772, %741 : vector<8x128xi1>, vector<8x128xf32>
    %c0_331 = arith.constant 0 : index
    %c0_332 = arith.constant 0 : index
    %774 = vector.load %arg12[%c0_331, %c0_332] : memref<8x128xf32, #tpu.memory_space<vmem>>, vector<8x128xf32>
    tpu.vector_store %arg12[%c0_331, %c0_332], %773 {strides = array<i32>} : memref<8x128xf32, #tpu.memory_space<vmem>>, vector<8x128xf32>,
    return
  }
}

</mosaic_0001>

<llo_original>
// kernel: model_1_3_forward.1
$region0: #{model_1_3_forward.1}
  #allocation0 [shape = 'u32[]', space=smem, size = 0x4, offset = 0x4, fixed_abs, tag = 'smem constant byte address 0x4 - core index']
  #allocation1 [shape = 'u32[144,128]{1,0:T(1,128)}', space=vmem, size = 0x12000, scoped, tag = 'internal scratch']
  #allocation2 [shape = 'f32[64,128]{1,0:T(8,128)}', space=vmem, size = 0x8000, scoped, tag = 'scratch operand']
  #allocation3 [shape = 'f32[64,128]{1,0:T(8,128)}', space=vmem, size = 0x8000, scoped, tag = 'scratch operand']
  #allocation4 [shape = 'f32[64,128]{1,0:T(8,128)}', space=vmem, size = 0x8000, scoped, tag = 'scratch operand']
  #allocation5 [shape = 'f32[64,512]{1,0:T(8,128)}', space=vmem, size = 0x20000, scoped, tag = 'scratch operand']
  #allocation6 [shape = 'f32[64,512]{1,0:T(8,128)}', space=vmem, size = 0x20000, scoped, tag = 'scratch operand']
  #allocation7 [shape = 'f32[64,512]{1,0:T(8,128)}', space=vmem, size = 0x20000, scoped, tag = 'scratch operand']
  #allocation8 [shape = 'f32[64,512]{1,0:T(8,128)}', space=vmem, size = 0x20000, scoped, tag = 'scratch operand']
  #allocation9 [shape = 'bf16[128,512]{1,0:T(16,128)(2,1)}', space=vmem, size = 0x20000, scoped, tag = 'scratch operand']
  #allocation10 [shape = 'bf16[128,512]{1,0:T(16,128)(2,1)}', space=vmem, size = 0x20000, scoped, tag = 'scratch operand']
  #allocation11 [shape = 'bf16[128,512]{1,0:T(16,128)(2,1)}', space=vmem, size = 0x20000, scoped, tag = 'scratch operand']
  #allocation12 [shape = 'bf16[128,512]{1,0:T(16,128)(2,1)}', space=vmem, size = 0x20000, scoped, tag = 'scratch operand']
  #allocation13 [shape = 'bf16[128,512]{1,0:T(16,128)(2,1)}', space=vmem, size = 0x20000, scoped, tag = 'scratch operand']
  #allocation14 [shape = 's32[5]{0}', space=sflag, size = 0x14, scoped, tag = 'scratch operand']
  #allocation15 [shape = 's32[]', space=sflag, size = 0x4, offset = 0, fixed_abs, tag = 'sflag constant byte address 0x0 - dummy sync flag']
  #allocation16 [shape = 's32[]', space=sflag, size = 0x4, offset = 0, fixed_abs, tag = 'sflag constant byte address 0x0 - dummy sync flag']
  #allocation17 [shape = 's32[]', space=sflag, size = 0x4, offset = 0, fixed_abs, tag = 'sflag constant byte address 0x0 - dummy sync flag']
  #allocation18 [shape = 's32[]', space=sflag, size = 0x4, offset = 0, fixed_abs, tag = 'sflag constant byte address 0x0 - dummy sync flag']
  #allocation19 [shape = 's32[]', space=sflag, size = 0x4, offset = 0, fixed_abs, tag = 'sflag constant byte address 0x0 - dummy sync flag']
  %s0 = inlined_call_operand.vmem [shape: bf16[64,128], index: 0, kind: input, shape index: {}]
  %s1 = inlined_call_operand.vmem [shape: bf16[128,512], index: 1, kind: input, shape index: {}]
  %s2 = inlined_call_operand.vmem [shape: bf16[128,512], index: 2, kind: input, shape index: {}]
  %s3 = inlined_call_operand.vmem [shape: bf16[128,512], index: 3, kind: input, shape index: {}]
  %s4 = inlined_call_operand.vmem [shape: f32[1,512], index: 4, kind: input, shape index: {}]
  %s5 = inlined_call_operand.vmem [shape: bf16[128,512], index: 5, kind: input, shape index: {}]
  %s6 = inlined_call_operand.vmem [shape: bf16[128,512], index: 6, kind: input, shape index: {}]
  %s7 = inlined_call_operand.vmem [shape: bf16[128,512], index: 7, kind: input, shape index: {}]
  %s8 = inlined_call_operand.vmem [shape: f32[1,512], index: 8, kind: input, shape index: {}]
  %s9 = inlined_call_operand.vmem [shape: bf16[128,512], index: 9, kind: input, shape index: {}]
  %s10 = inlined_call_operand.vmem [shape: bf16[128,512], index: 10, kind: input, shape index: {}]
  %s11 = inlined_call_operand.vmem [shape: f32[1,512], index: 11, kind: input, shape index: {}]
  %s12 = inlined_call_operand.vmem [shape: f32[8,128], index: 12, kind: output, shape index: {}]
  %s13 = sld [smem:[#allocation0]]
  $region223: #{model_1_3_forward.1} parent=0
    _
  %s15 = ssub.s32 1, %s13
  %s16 = scalar_select 0, %s15, %s13
  // Predicated region
  $region2: #{model_1_3_forward.1} parent=0 // pred_check
    _
  $region3: #{model_1_3_forward.1} parent=0 // pred_check_branch
    %18 = sbr.rel (0) target = $region5
  $region4: #{model_1_3_forward.1} parent=0 // pred_region
    _
  $region5: #{model_1_3_forward.1} parent=0 // pred_fallthru
    _
  // Predicated region
  $region6: #{model_1_3_forward.1} parent=0 // pred_check
    _
  $region7: #{model_1_3_forward.1} parent=0 // pred_check_branch
    %20 = sbr.rel (0) target = $region9
  $region8: #{model_1_3_forward.1} parent=0 // pred_region
    _
  $region9: #{model_1_3_forward.1} parent=0 // pred_fallthru
    _
  // Predicated region
  $region10: #{model_1_3_forward.1} parent=0 // pred_check
    _
  $region11: #{model_1_3_forward.1} parent=0 // pred_check_branch
    %22 = sbr.rel (0) target = $region13
  $region12: #{model_1_3_forward.1} parent=0 // pred_region
    _
  $region13: #{model_1_3_forward.1} parent=0 // pred_fallthru
    _
  // Predicated region
  $region14: #{model_1_3_forward.1} parent=0 // pred_check
    _
  $region15: #{model_1_3_forward.1} parent=0 // pred_check_branch
    %24 = sbr.rel (0) target = $region17
  $region16: #{model_1_3_forward.1} parent=0 // pred_region
    _
  $region17: #{model_1_3_forward.1} parent=0 // pred_fallthru
    _
  // Predicated region
  $region18: #{model_1_3_forward.1} parent=0 // pred_check
    _
  $region19: #{model_1_3_forward.1} parent=0 // pred_check_branch
    %26 = sbr.rel (0) target = $region21
  $region20: #{model_1_3_forward.1} parent=0 // pred_region
    _
  $region21: #{model_1_3_forward.1} parent=0 // pred_fallthru
    _
  // Predicated region
  $region22: #{model_1_3_forward.1} parent=0 // pred_check
    _
  $region23: #{model_1_3_forward.1} parent=0 // pred_check_branch
    %28 = sbr.rel (0) target = $region25
  $region24: #{model_1_3_forward.1} parent=0 // pred_region
    _
  $region25: #{model_1_3_forward.1} parent=0 // pred_fallthru
    _
  // Predicated region
  $region26: #{model_1_3_forward.1} parent=0 // pred_check
    _
  $region27: #{model_1_3_forward.1} parent=0 // pred_check_branch
    %30 = sbr.rel (0) target = $region29
  $region28: #{model_1_3_forward.1} parent=0 // pred_region
    _
  $region29: #{model_1_3_forward.1} parent=0 // pred_fallthru
    _
  %p33 = scmp.lt.u32.totalorder 4, 8
  %p34 = pneg %p33
  // Predicated region
  $region30: #{model_1_3_forward.1} parent=0 // pred_check
    _
  $region31: #{model_1_3_forward.1} parent=0 // pred_check_branch
    %36 = sbr.rel (%p33) target = $region33
  $region32: #{model_1_3_forward.1} parent=0 // pred_region
    %s177 = sand.u32 4, 7
    %p178 = scmp.eq.s32.totalorder %s177, 0
    %p179 = pneg %p178
    // Predicated region
    $region45: #{model_1_3_forward.1} parent=32 // pred_check
      _
    $region46: #{model_1_3_forward.1} parent=32 // pred_check_branch
      %181 = sbr.rel (%p178) target = $region48
    $region47: #{model_1_3_forward.1} parent=32 // pred_region
      %s182 = sand.u32 4, 7
      %s183 = ssub.s32 4, %s182
      %s184 = scalar_lea.vmem %s5, %s183
      %s185 = ssub.s32 4, %s182
      %s186 = scalar_lea.vmem [#allocation9], %s185
      loop: start=0, step=1, limit=1
      $region49: #{model_1_3_forward.1} parent=47 // loop_pre_header
        _
      $region50: #{model_1_3_forward.1} parent=47 // loop_header
        %s188 = sphi 0, %s192
        %p189 = scmp.ge.s32.totalorder %s188, 1
        %s193 = sphi %s5, %s5
        %s194 = sphi [#allocation9], [#allocation9]
      $region51: #{model_1_3_forward.1} parent=47 // loop_header_branch
        %191 = sbr.rel (%p189) target = $region55
      $region52: #{model_1_3_forward.1} parent=47 // loop_body
        _
      $region53: #{model_1_3_forward.1} parent=47 // loop_footer
        %s192 = sadd.s32 1, %s188
      $region54: #{model_1_3_forward.1} parent=47 // loop_footer_branch
        %187 = sbr.rel target = $region50
      $region55: #{model_1_3_forward.1} parent=47 // loop_exit
        _
      %s195 = sshllo.u32 0, %s182
      loop: start=0, step=1, limit=1
      $region56: #{model_1_3_forward.1} parent=47 // loop_pre_header
        _
      $region57: #{model_1_3_forward.1} parent=47 // loop_header
        %s197 = sphi 0, %s201
        %p198 = scmp.ge.s32.totalorder %s197, 1
        %s202 = sphi %s184, %s184
        %s203 = sphi %s186, %s186
      $region58: #{model_1_3_forward.1} parent=47 // loop_header_branch
        %200 = sbr.rel (%p198) target = $region62
      $region59: #{model_1_3_forward.1} parent=47 // loop_body
        %v204 = vld [vmem:[%s202] sm:%s195]
        %205 = vst [vmem:[%s203] sm:%s195] %v204
        %v206 = vld [vmem:[%s202 + $0x10] sm:%s195]
        %207 = vst [vmem:[%s203 + $0x4] sm:%s195] %v206
        %v208 = vld [vmem:[%s202 + $0x4] sm:%s195]
        %209 = vst [vmem:[%s203 + $0x8] sm:%s195] %v208
        %v210 = vld [vmem:[%s202 + $0x14] sm:%s195]
        %211 = vst [vmem:[%s203 + $0xc] sm:%s195] %v210
        %v212 = vld [vmem:[%s202 + $0x8] sm:%s195]
        %213 = vst [vmem:[%s203 + $0x10] sm:%s195] %v212
        %v214 = vld [vmem:[%s202 + $0x18] sm:%s195]
        %215 = vst [vmem:[%s203 + $0x14] sm:%s195] %v214
        %v216 = vld [vmem:[%s202 + $0xc] sm:%s195]
        %217 = vst [vmem:[%s203 + $0x18] sm:%s195] %v216
        %v218 = vld [vmem:[%s202 + $0x1c] sm:%s195]
        %219 = vst [vmem:[%s203 + $0x1c] sm:%s195] %v218
        %v220 = vld [vmem:[%s202 + $0x20] sm:%s195]
        %221 = vst [vmem:[%s203 + $0x20] sm:%s195] %v220
        %v222 = vld [vmem:[%s202 + $0x30] sm:%s195]
        %223 = vst [vmem:[%s203 + $0x24] sm:%s195] %v222
        %v224 = vld [vmem:[%s202 + $0x24] sm:%s195]
        %225 = vst [vmem:[%s203 + $0x28] sm:%s195] %v224
        %v226 = vld [vmem:[%s202 + $0x34] sm:%s195]
        %227 = vst [vmem:[%s203 + $0x2c] sm:%s195] %v226
        %v228 = vld [vmem:[%s202 + $0x28] sm:%s195]
        %229 = vst [vmem:[%s203 + $0x30] sm:%s195] %v228
        %v230 = vld [vmem:[%s202 + $0x38] sm:%s195]
        %231 = vst [vmem:[%s203 + $0x34] sm:%s195] %v230
        %v232 = vld [vmem:[%s202 + $0x2c] sm:%s195]
        %233 = vst [vmem:[%s203 + $0x38] sm:%s195] %v232
        %v234 = vld [vmem:[%s202 + $0x3c] sm:%s195]
        %235 = vst [vmem:[%s203 + $0x3c] sm:%s195] %v234
        %v236 = vld [vmem:[%s202 + $0x40] sm:%s195]
        %237 = vst [vmem:[%s203 + $0x40] sm:%s195] %v236
        %v238 = vld [vmem:[%s202 + $0x50] sm:%s195]
        %239 = vst [vmem:[%s203 + $0x44] sm:%s195] %v238
        %v240 = vld [vmem:[%s202 + $0x44] sm:%s195]
        %241 = vst [vmem:[%s203 + $0x48] sm:%s195] %v240
        %v242 = vld [vmem:[%s202 + $0x54] sm:%s195]
        %243 = vst [vmem:[%s203 + $0x4c] sm:%s195] %v242
        %v244 = vld [vmem:[%s202 + $0x48] sm:%s195]
        %245 = vst [vmem:[%s203 + $0x50] sm:%s195] %v244
        %v246 = vld [vmem:[%s202 + $0x58] sm:%s195]
        %247 = vst [vmem:[%s203 + $0x54] sm:%s195] %v246
        %v248 = vld [vmem:[%s202 + $0x4c] sm:%s195]
        %249 = vst [vmem:[%s203 + $0x58] sm:%s195] %v248
        %v250 = vld [vmem:[%s202 + $0x5c] sm:%s195]
        %251 = vst [vmem:[%s203 + $0x5c] sm:%s195] %v250
        %v252 = vld [vmem:[%s202 + $0x60] sm:%s195]
        %253 = vst [vmem:[%s203 + $0x60] sm:%s195] %v252
        %v254 = vld [vmem:[%s202 + $0x70] sm:%s195]
        %255 = vst [vmem:[%s203 + $0x64] sm:%s195] %v254
        %v256 = vld [vmem:[%s202 + $0x64] sm:%s195]
        %257 = vst [vmem:[%s203 + $0x68] sm:%s195] %v256
        %v258 = vld [vmem:[%s202 + $0x74] sm:%s195]
        %259 = vst [vmem:[%s203 + $0x6c] sm:%s195] %v258
        %v260 = vld [vmem:[%s202 + $0x68] sm:%s195]
        %261 = vst [vmem:[%s203 + $0x70] sm:%s195] %v260
        %v262 = vld [vmem:[%s202 + $0x78] sm:%s195]
        %263 = vst [vmem:[%s203 + $0x74] sm:%s195] %v262
        %v264 = vld [vmem:[%s202 + $0x6c] sm:%s195]
        %265 = vst [vmem:[%s203 + $0x78] sm:%s195] %v264
        %v266 = vld [vmem:[%s202 + $0x7c] sm:%s195]
        %267 = vst [vmem:[%s203 + $0x7c] sm:%s195] %v266
        %v268 = vld [vmem:[%s202 + $0x80] sm:%s195]
        %269 = vst [vmem:[%s203 + $0x80] sm:%s195] %v268
        %v270 = vld [vmem:[%s202 + $0x90] sm:%s195]
        %271 = vst [vmem:[%s203 + $0x84] sm:%s195] %v270
        %v272 = vld [vmem:[%s202 + $0x84] sm:%s195]
        %273 = vst [vmem:[%s203 + $0x88] sm:%s195] %v272
        %v274 = vld [vmem:[%s202 + $0x94] sm:%s195]
        %275 = vst [vmem:[%s203 + $0x8c] sm:%s195] %v274
        %v276 = vld [vmem:[%s202 + $0x88] sm:%s195]
        %277 = vst [vmem:[%s203 + $0x90] sm:%s195] %v276
        %v278 = vld [vmem:[%s202 + $0x98] sm:%s195]
        %279 = vst [vmem:[%s203 + $0x94] sm:%s195] %v278
        %v280 = vld [vmem:[%s202 + $0x8c] sm:%s195]
        %281 = vst [vmem:[%s203 + $0x98] sm:%s195] %v280
        %v282 = vld [vmem:[%s202 + $0x9c] sm:%s195]
        %283 = vst [vmem:[%s203 + $0x9c] sm:%s195] %v282
        %v284 = vld [vmem:[%s202 + $0xa0] sm:%s195]
        %285 = vst [vmem:[%s203 + $0xa0] sm:%s195] %v284
        %v286 = vld [vmem:[%s202 + $0xb0] sm:%s195]
        %287 = vst [vmem:[%s203 + $0xa4] sm:%s195] %v286
        %v288 = vld [vmem:[%s202 + $0xa4] sm:%s195]
        %289 = vst [vmem:[%s203 + $0xa8] sm:%s195] %v288
        %v290 = vld [vmem:[%s202 + $0xb4] sm:%s195]
        %291 = vst [vmem:[%s203 + $0xac] sm:%s195] %v290
        %v292 = vld [vmem:[%s202 + $0xa8] sm:%s195]
        %293 = vst [vmem:[%s203 + $0xb0] sm:%s195] %v292
        %v294 = vld [vmem:[%s202 + $0xb8] sm:%s195]
        %295 = vst [vmem:[%s203 + $0xb4] sm:%s195] %v294
        %v296 = vld [vmem:[%s202 + $0xac] sm:%s195]
        %297 = vst [vmem:[%s203 + $0xb8] sm:%s195] %v296
        %v298 = vld [vmem:[%s202 + $0xbc] sm:%s195]
        %299 = vst [vmem:[%s203 + $0xbc] sm:%s195] %v298
        %v300 = vld [vmem:[%s202 + $0xc0] sm:%s195]
        %301 = vst [vmem:[%s203 + $0xc0] sm:%s195] %v300
        %v302 = vld [vmem:[%s202 + $0xd0] sm:%s195]
        %303 = vst [vmem:[%s203 + $0xc4] sm:%s195] %v302
        %v304 = vld [vmem:[%s202 + $0xc4] sm:%s195]
        %305 = vst [vmem:[%s203 + $0xc8] sm:%s195] %v304
        %v306 = vld [vmem:[%s202 + $0xd4] sm:%s195]
        %307 = vst [vmem:[%s203 + $0xcc] sm:%s195] %v306
        %v308 = vld [vmem:[%s202 + $0xc8] sm:%s195]
        %309 = vst [vmem:[%s203 + $0xd0] sm:%s195] %v308
        %v310 = vld [vmem:[%s202 + $0xd8] sm:%s195]
        %311 = vst [vmem:[%s203 + $0xd4] sm:%s195] %v310
        %v312 = vld [vmem:[%s202 + $0xcc] sm:%s195]
        %313 = vst [vmem:[%s203 + $0xd8] sm:%s195] %v312
        %v314 = vld [vmem:[%s202 + $0xdc] sm:%s195]
        %315 = vst [vmem:[%s203 + $0xdc] sm:%s195] %v314
        %v316 = vld [vmem:[%s202 + $0xe0] sm:%s195]
        %317 = vst [vmem:[%s203 + $0xe0] sm:%s195] %v316
        %v318 = vld [vmem:[%s202 + $0xf0] sm:%s195]
        %319 = vst [vmem:[%s203 + $0xe4] sm:%s195] %v318
        %v320 = vld [vmem:[%s202 + $0xe4] sm:%s195]
        %321 = vst [vmem:[%s203 + $0xe8] sm:%s195] %v320
        %v322 = vld [vmem:[%s202 + $0xf4] sm:%s195]
        %323 = vst [vmem:[%s203 + $0xec] sm:%s195] %v322
        %v324 = vld [vmem:[%s202 + $0xe8] sm:%s195]
        %325 = vst [vmem:[%s203 + $0xf0] sm:%s195] %v324
        %v326 = vld [vmem:[%s202 + $0xf8] sm:%s195]
        %327 = vst [vmem:[%s203 + $0xf4] sm:%s195] %v326
        %v328 = vld [vmem:[%s202 + $0xec] sm:%s195]
        %329 = vst [vmem:[%s203 + $0xf8] sm:%s195] %v328
        %v330 = vld [vmem:[%s202 + $0xfc] sm:%s195]
        %331 = vst [vmem:[%s203 + $0xfc] sm:%s195] %v330
      $region60: #{model_1_3_forward.1} parent=47 // loop_footer
        %s201 = sadd.s32 1, %s197
      $region61: #{model_1_3_forward.1} parent=47 // loop_footer_branch
        %196 = sbr.rel target = $region57
      $region62: #{model_1_3_forward.1} parent=47 // loop_exit
        _
    $region48: #{model_1_3_forward.1} parent=32 // pred_fallthru
      _
  $region33: #{model_1_3_forward.1} parent=0 // pred_fallthru
    _
  // Predicated region
  $region34: #{model_1_3_forward.1} parent=0 // pred_check
    %p37 = pneg %p33
  $region35: #{model_1_3_forward.1} parent=0 // pred_check_branch
    %39 = sbr.rel (%p37) target = $region37
  $region36: #{model_1_3_forward.1} parent=0 // pred_region
    %s40 = sshllo.u32 0, 4
    loop: start=0, step=1, limit=1
    $region38: #{model_1_3_forward.1} parent=36 // loop_pre_header
      _
    $region39: #{model_1_3_forward.1} parent=36 // loop_header
      %s42 = sphi 0, %s46
      %p43 = scmp.ge.s32.totalorder %s42, 1
      %s47 = sphi %s5, %s5
      %s48 = sphi [#allocation9], [#allocation9]
    $region40: #{model_1_3_forward.1} parent=36 // loop_header_branch
      %45 = sbr.rel (%p43) target = $region44
    $region41: #{model_1_3_forward.1} parent=36 // loop_body
      %v49 = vld [vmem:[%s47] sm:%s40]
      %50 = vst [vmem:[%s48] sm:%s40] %v49
      %v51 = vld [vmem:[%s47 + $0x10] sm:%s40]
      %52 = vst [vmem:[%s48 + $0x4] sm:%s40] %v51
      %v53 = vld [vmem:[%s47 + $0x4] sm:%s40]
      %54 = vst [vmem:[%s48 + $0x8] sm:%s40] %v53
      %v55 = vld [vmem:[%s47 + $0x14] sm:%s40]
      %56 = vst [vmem:[%s48 + $0xc] sm:%s40] %v55
      %v57 = vld [vmem:[%s47 + $0x8] sm:%s40]
      %58 = vst [vmem:[%s48 + $0x10] sm:%s40] %v57
      %v59 = vld [vmem:[%s47 + $0x18] sm:%s40]
      %60 = vst [vmem:[%s48 + $0x14] sm:%s40] %v59
      %v61 = vld [vmem:[%s47 + $0xc] sm:%s40]
      %62 = vst [vmem:[%s48 + $0x18] sm:%s40] %v61
      %v63 = vld [vmem:[%s47 + $0x1c] sm:%s40]
      %64 = vst [vmem:[%s48 + $0x1c] sm:%s40] %v63
      %v65 = vld [vmem:[%s47 + $0x20] sm:%s40]
      %66 = vst [vmem:[%s48 + $0x20] sm:%s40] %v65
      %v67 = vld [vmem:[%s47 + $0x30] sm:%s40]
      %68 = vst [vmem:[%s48 + $0x24] sm:%s40] %v67
      %v69 = vld [vmem:[%s47 + $0x24] sm:%s40]
      %70 = vst [vmem:[%s48 + $0x28] sm:%s40] %v69
      %v71 = vld [vmem:[%s47 + $0x34] sm:%s40]
      %72 = vst [vmem:[%s48 + $0x2c] sm:%s40] %v71
      %v73 = vld [vmem:[%s47 + $0x28] sm:%s40]
      %74 = vst [vmem:[%s48 + $0x30] sm:%s40] %v73
      %v75 = vld [vmem:[%s47 + $0x38] sm:%s40]
      %76 = vst [vmem:[%s48 + $0x34] sm:%s40] %v75
      %v77 = vld [vmem:[%s47 + $0x2c] sm:%s40]
      %78 = vst [vmem:[%s48 + $0x38] sm:%s40] %v77
      %v79 = vld [vmem:[%s47 + $0x3c] sm:%s40]
      %80 = vst [vmem:[%s48 + $0x3c] sm:%s40] %v79
      %v81 = vld [vmem:[%s47 + $0x40] sm:%s40]
      %82 = vst [vmem:[%s48 + $0x40] sm:%s40] %v81
      %v83 = vld [vmem:[%s47 + $0x50] sm:%s40]
      %84 = vst [vmem:[%s48 + $0x44] sm:%s40] %v83
      %v85 = vld [vmem:[%s47 + $0x44] sm:%s40]
      %86 = vst [vmem:[%s48 + $0x48] sm:%s40] %v85
      %v87 = vld [vmem:[%s47 + $0x54] sm:%s40]
      %88 = vst [vmem:[%s48 + $0x4c] sm:%s40] %v87
      %v89 = vld [vmem:[%s47 + $0x48] sm:%s40]
      %90 = vst [vmem:[%s48 + $0x50] sm:%s40] %v89
      %v91 = vld [vmem:[%s47 + $0x58] sm:%s40]
      %92 = vst [vmem:[%s48 + $0x54] sm:%s40] %v91
      %v93 = vld [vmem:[%s47 + $0x4c] sm:%s40]
      %94 = vst [vmem:[%s48 + $0x58] sm:%s40] %v93
      %v95 = vld [vmem:[%s47 + $0x5c] sm:%s40]
      %96 = vst [vmem:[%s48 + $0x5c] sm:%s40] %v95
      %v97 = vld [vmem:[%s47 + $0x60] sm:%s40]
      %98 = vst [vmem:[%s48 + $0x60] sm:%s40] %v97
      %v99 = vld [vmem:[%s47 + $0x70] sm:%s40]
      %100 = vst [vmem:[%s48 + $0x64] sm:%s40] %v99
      %v101 = vld [vmem:[%s47 + $0x64] sm:%s40]
      %102 = vst [vmem:[%s48 + $0x68] sm:%s40] %v101
      %v103 = vld [vmem:[%s47 + $0x74] sm:%s40]
      %104 = vst [vmem:[%s48 + $0x6c] sm:%s40] %v103
      %v105 = vld [vmem:[%s47 + $0x68] sm:%s40]
      %106 = vst [vmem:[%s48 + $0x70] sm:%s40] %v105
      %v107 = vld [vmem:[%s47 + $0x78] sm:%s40]
      %108 = vst [vmem:[%s48 + $0x74] sm:%s40] %v107
      %v109 = vld [vmem:[%s47 + $0x6c] sm:%s40]
      %110 = vst [vmem:[%s48 + $0x78] sm:%s40] %v109
      %v111 = vld [vmem:[%s47 + $0x7c] sm:%s40]
      %112 = vst [vmem:[%s48 + $0x7c] sm:%s40] %v111
      %v113 = vld [vmem:[%s47 + $0x80] sm:%s40]
      %114 = vst [vmem:[%s48 + $0x80] sm:%s40] %v113
      %v115 = vld [vmem:[%s47 + $0x90] sm:%s40]
      %116 = vst [vmem:[%s48 + $0x84] sm:%s40] %v115
      %v117 = vld [vmem:[%s47 + $0x84] sm:%s40]
      %118 = vst [vmem:[%s48 + $0x88] sm:%s40] %v117
      %v119 = vld [vmem:[%s47 + $0x94] sm:%s40]
      %120 = vst [vmem:[%s48 + $0x8c] sm:%s40] %v119
      %v121 = vld [vmem:[%s47 + $0x88] sm:%s40]
      %122 = vst [vmem:[%s48 + $0x90] sm:%s40] %v121
      %v123 = vld [vmem:[%s47 + $0x98] sm:%s40]
      %124 = vst [vmem:[%s48 + $0x94] sm:%s40] %v123
      %v125 = vld [vmem:[%s47 + $0x8c] sm:%s40]
      %126 = vst [vmem:[%s48 + $0x98] sm:%s40] %v125
      %v127 = vld [vmem:[%s47 + $0x9c] sm:%s40]
      %128 = vst [vmem:[%s48 + $0x9c] sm:%s40] %v127
      %v129 = vld [vmem:[%s47 + $0xa0] sm:%s40]
      %130 = vst [vmem:[%s48 + $0xa0] sm:%s40] %v129
      %v131 = vld [vmem:[%s47 + $0xb0] sm:%s40]
      %132 = vst [vmem:[%s48 + $0xa4] sm:%s40] %v131
      %v133 = vld [vmem:[%s47 + $0xa4] sm:%s40]
      %134 = vst [vmem:[%s48 + $0xa8] sm:%s40] %v133
      %v135 = vld [vmem:[%s47 + $0xb4] sm:%s40]
      %136 = vst [vmem:[%s48 + $0xac] sm:%s40] %v135
      %v137 = vld [vmem:[%s47 + $0xa8] sm:%s40]
      %138 = vst [vmem:[%s48 + $0xb0] sm:%s40] %v137
      %v139 = vld [vmem:[%s47 + $0xb8] sm:%s40]
      %140 = vst [vmem:[%s48 + $0xb4] sm:%s40] %v139
      %v141 = vld [vmem:[%s47 + $0xac] sm:%s40]
      %142 = vst [vmem:[%s48 + $0xb8] sm:%s40] %v141
      %v143 = vld [vmem:[%s47 + $0xbc] sm:%s40]
      %144 = vst [vmem:[%s48 + $0xbc] sm:%s40] %v143
      %v145 = vld [vmem:[%s47 + $0xc0] sm:%s40]
      %146 = vst [vmem:[%s48 + $0xc0] sm:%s40] %v145
      %v147 = vld [vmem:[%s47 + $0xd0] sm:%s40]
      %148 = vst [vmem:[%s48 + $0xc4] sm:%s40] %v147
      %v149 = vld [vmem:[%s47 + $0xc4] sm:%s40]
      %150 = vst [vmem:[%s48 + $0xc8] sm:%s40] %v149
      %v151 = vld [vmem:[%s47 + $0xd4] sm:%s40]
      %152 = vst [vmem:[%s48 + $0xcc] sm:%s40] %v151
      %v153 = vld [vmem:[%s47 + $0xc8] sm:%s40]
      %154 = vst [vmem:[%s48 + $0xd0] sm:%s40] %v153
      %v155 = vld [vmem:[%s47 + $0xd8] sm:%s40]
      %156 = vst [vmem:[%s48 + $0xd4] sm:%s40] %v155
      %v157 = vld [vmem:[%s47 + $0xcc] sm:%s40]
      %158 = vst [vmem:[%s48 + $0xd8] sm:%s40] %v157
      %v159 = vld [vmem:[%s47 + $0xdc] sm:%s40]
      %160 = vst [vmem:[%s48 + $0xdc] sm:%s40] %v159
      %v161 = vld [vmem:[%s47 + $0xe0] sm:%s40]
      %162 = vst [vmem:[%s48 + $0xe0] sm:%s40] %v161
      %v163 = vld [vmem:[%s47 + $0xf0] sm:%s40]
      %164 = vst [vmem:[%s48 + $0xe4] sm:%s40] %v163
      %v165 = vld [vmem:[%s47 + $0xe4] sm:%s40]
      %166 = vst [vmem:[%s48 + $0xe8] sm:%s40] %v165
      %v167 = vld [vmem:[%s47 + $0xf4] sm:%s40]
      %168 = vst [vmem:[%s48 + $0xec] sm:%s40] %v167
      %v169 = vld [vmem:[%s47 + $0xe8] sm:%s40]
      %170 = vst [vmem:[%s48 + $0xf0] sm:%s40] %v169
      %v171 = vld [vmem:[%s47 + $0xf8] sm:%s40]
      %172 = vst [vmem:[%s48 + $0xf4] sm:%s40] %v171
      %v173 = vld [vmem:[%s47 + $0xec] sm:%s40]
      %174 = vst [vmem:[%s48 + $0xf8] sm:%s40] %v173
      %v175 = vld [vmem:[%s47 + $0xfc] sm:%s40]
      %176 = vst [vmem:[%s48 + $0xfc] sm:%s40] %v175
    $region42: #{model_1_3_forward.1} parent=36 // loop_footer
      %s46 = sadd.s32 1, %s42
    $region43: #{model_1_3_forward.1} parent=36 // loop_footer_branch
      %41 = sbr.rel target = $region39
    $region44: #{model_1_3_forward.1} parent=36 // loop_exit
      _
  $region37: #{model_1_3_forward.1} parent=0 // pred_fallthru
    _
  // Predicated region
  $region63: #{model_1_3_forward.1} parent=0 // pred_check
    _
  $region64: #{model_1_3_forward.1} parent=0 // pred_check_branch
    %334 = sbr.rel (0) target = $region66
  $region65: #{model_1_3_forward.1} parent=0 // pred_region
    %335 = vsyncadd [#allocation14], 4096
  $region66: #{model_1_3_forward.1} parent=0 // pred_fallthru
    _
  %s336 = scalar_lea.sflag [#allocation14], 1
  %p338 = scmp.lt.u32.totalorder 4, 8
  %p339 = pneg %p338
  // Predicated region
  $region67: #{model_1_3_forward.1} parent=0 // pred_check
    _
  $region68: #{model_1_3_forward.1} parent=0 // pred_check_branch
    %341 = sbr.rel (%p338) target = $region70
  $region69: #{model_1_3_forward.1} parent=0 // pred_region
    %s482 = sand.u32 4, 7
    %p483 = scmp.eq.s32.totalorder %s482, 0
    %p484 = pneg %p483
    // Predicated region
    $region82: #{model_1_3_forward.1} parent=69 // pred_check
      _
    $region83: #{model_1_3_forward.1} parent=69 // pred_check_branch
      %486 = sbr.rel (%p483) target = $region85
    $region84: #{model_1_3_forward.1} parent=69 // pred_region
      %s487 = sand.u32 4, 7
      %s488 = ssub.s32 4, %s487
      %s489 = scalar_lea.vmem %s6, %s488
      %s490 = ssub.s32 4, %s487
      %s491 = scalar_lea.vmem [#allocation10], %s490
      loop: start=0, step=1, limit=1
      $region86: #{model_1_3_forward.1} parent=84 // loop_pre_header
        _
      $region87: #{model_1_3_forward.1} parent=84 // loop_header
        %s493 = sphi 0, %s497
        %p494 = scmp.ge.s32.totalorder %s493, 1
        %s498 = sphi %s6, %s6
        %s499 = sphi [#allocation10], [#allocation10]
      $region88: #{model_1_3_forward.1} parent=84 // loop_header_branch
        %496 = sbr.rel (%p494) target = $region92
      $region89: #{model_1_3_forward.1} parent=84 // loop_body
        _
      $region90: #{model_1_3_forward.1} parent=84 // loop_footer
        %s497 = sadd.s32 1, %s493
      $region91: #{model_1_3_forward.1} parent=84 // loop_footer_branch
        %492 = sbr.rel target = $region87
      $region92: #{model_1_3_forward.1} parent=84 // loop_exit
        _
      %s500 = sshllo.u32 0, %s487
      loop: start=0, step=1, limit=1
      $region93: #{model_1_3_forward.1} parent=84 // loop_pre_header
        _
      $region94: #{model_1_3_forward.1} parent=84 // loop_header
        %s502 = sphi 0, %s506
        %p503 = scmp.ge.s32.totalorder %s502, 1
        %s507 = sphi %s489, %s489
        %s508 = sphi %s491, %s491
      $region95: #{model_1_3_forward.1} parent=84 // loop_header_branch
        %505 = sbr.rel (%p503) target = $region99
      $region96: #{model_1_3_forward.1} parent=84 // loop_body
        %v509 = vld [vmem:[%s507] sm:%s500]
        %510 = vst [vmem:[%s508] sm:%s500] %v509
        %v511 = vld [vmem:[%s507 + $0x10] sm:%s500]
        %512 = vst [vmem:[%s508 + $0x4] sm:%s500] %v511
        %v513 = vld [vmem:[%s507 + $0x4] sm:%s500]
        %514 = vst [vmem:[%s508 + $0x8] sm:%s500] %v513
        %v515 = vld [vmem:[%s507 + $0x14] sm:%s500]
        %516 = vst [vmem:[%s508 + $0xc] sm:%s500] %v515
        %v517 = vld [vmem:[%s507 + $0x8] sm:%s500]
        %518 = vst [vmem:[%s508 + $0x10] sm:%s500] %v517
        %v519 = vld [vmem:[%s507 + $0x18] sm:%s500]
        %520 = vst [vmem:[%s508 + $0x14] sm:%s500] %v519
        %v521 = vld [vmem:[%s507 + $0xc] sm:%s500]
        %522 = vst [vmem:[%s508 + $0x18] sm:%s500] %v521
        %v523 = vld [vmem:[%s507 + $0x1c] sm:%s500]
        %524 = vst [vmem:[%s508 + $0x1c] sm:%s500] %v523
        %v525 = vld [vmem:[%s507 + $0x20] sm:%s500]
        %526 = vst [vmem:[%s508 + $0x20] sm:%s500] %v525
        %v527 = vld [vmem:[%s507 + $0x30] sm:%s500]
        %528 = vst [vmem:[%s508 + $0x24] sm:%s500] %v527
        %v529 = vld [vmem:[%s507 + $0x24] sm:%s500]
        %530 = vst [vmem:[%s508 + $0x28] sm:%s500] %v529
        %v531 = vld [vmem:[%s507 + $0x34] sm:%s500]
        %532 = vst [vmem:[%s508 + $0x2c] sm:%s500] %v531
        %v533 = vld [vmem:[%s507 + $0x28] sm:%s500]
        %534 = vst [vmem:[%s508 + $0x30] sm:%s500] %v533
        %v535 = vld [vmem:[%s507 + $0x38] sm:%s500]
        %536 = vst [vmem:[%s508 + $0x34] sm:%s500] %v535
        %v537 = vld [vmem:[%s507 + $0x2c] sm:%s500]
        %538 = vst [vmem:[%s508 + $0x38] sm:%s500] %v537
        %v539 = vld [vmem:[%s507 + $0x3c] sm:%s500]
        %540 = vst [vmem:[%s508 + $0x3c] sm:%s500] %v539
        %v541 = vld [vmem:[%s507 + $0x40] sm:%s500]
        %542 = vst [vmem:[%s508 + $0x40] sm:%s500] %v541
        %v543 = vld [vmem:[%s507 + $0x50] sm:%s500]
        %544 = vst [vmem:[%s508 + $0x44] sm:%s500] %v543
        %v545 = vld [vmem:[%s507 + $0x44] sm:%s500]
        %546 = vst [vmem:[%s508 + $0x48] sm:%s500] %v545
        %v547 = vld [vmem:[%s507 + $0x54] sm:%s500]
        %548 = vst [vmem:[%s508 + $0x4c] sm:%s500] %v547
        %v549 = vld [vmem:[%s507 + $0x48] sm:%s500]
        %550 = vst [vmem:[%s508 + $0x50] sm:%s500] %v549
        %v551 = vld [vmem:[%s507 + $0x58] sm:%s500]
        %552 = vst [vmem:[%s508 + $0x54] sm:%s500] %v551
        %v553 = vld [vmem:[%s507 + $0x4c] sm:%s500]
        %554 = vst [vmem:[%s508 + $0x58] sm:%s500] %v553
        %v555 = vld [vmem:[%s507 + $0x5c] sm:%s500]
        %556 = vst [vmem:[%s508 + $0x5c] sm:%s500] %v555
        %v557 = vld [vmem:[%s507 + $0x60] sm:%s500]
        %558 = vst [vmem:[%s508 + $0x60] sm:%s500] %v557
        %v559 = vld [vmem:[%s507 + $0x70] sm:%s500]
        %560 = vst [vmem:[%s508 + $0x64] sm:%s500] %v559
        %v561 = vld [vmem:[%s507 + $0x64] sm:%s500]
        %562 = vst [vmem:[%s508 + $0x68] sm:%s500] %v561
        %v563 = vld [vmem:[%s507 + $0x74] sm:%s500]
        %564 = vst [vmem:[%s508 + $0x6c] sm:%s500] %v563
        %v565 = vld [vmem:[%s507 + $0x68] sm:%s500]
        %566 = vst [vmem:[%s508 + $0x70] sm:%s500] %v565
        %v567 = vld [vmem:[%s507 + $0x78] sm:%s500]
        %568 = vst [vmem:[%s508 + $0x74] sm:%s500] %v567
        %v569 = vld [vmem:[%s507 + $0x6c] sm:%s500]
        %570 = vst [vmem:[%s508 + $0x78] sm:%s500] %v569
        %v571 = vld [vmem:[%s507 + $0x7c] sm:%s500]
        %572 = vst [vmem:[%s508 + $0x7c] sm:%s500] %v571
        %v573 = vld [vmem:[%s507 + $0x80] sm:%s500]
        %574 = vst [vmem:[%s508 + $0x80] sm:%s500] %v573
        %v575 = vld [vmem:[%s507 + $0x90] sm:%s500]
        %576 = vst [vmem:[%s508 + $0x84] sm:%s500] %v575
        %v577 = vld [vmem:[%s507 + $0x84] sm:%s500]
        %578 = vst [vmem:[%s508 + $0x88] sm:%s500] %v577
        %v579 = vld [vmem:[%s507 + $0x94] sm:%s500]
        %580 = vst [vmem:[%s508 + $0x8c] sm:%s500] %v579
        %v581 = vld [vmem:[%s507 + $0x88] sm:%s500]
        %582 = vst [vmem:[%s508 + $0x90] sm:%s500] %v581
        %v583 = vld [vmem:[%s507 + $0x98] sm:%s500]
        %584 = vst [vmem:[%s508 + $0x94] sm:%s500] %v583
        %v585 = vld [vmem:[%s507 + $0x8c] sm:%s500]
        %586 = vst [vmem:[%s508 + $0x98] sm:%s500] %v585
        %v587 = vld [vmem:[%s507 + $0x9c] sm:%s500]
        %588 = vst [vmem:[%s508 + $0x9c] sm:%s500] %v587
        %v589 = vld [vmem:[%s507 + $0xa0] sm:%s500]
        %590 = vst [vmem:[%s508 + $0xa0] sm:%s500] %v589
        %v591 = vld [vmem:[%s507 + $0xb0] sm:%s500]
        %592 = vst [vmem:[%s508 + $0xa4] sm:%s500] %v591
        %v593 = vld [vmem:[%s507 + $0xa4] sm:%s500]
        %594 = vst [vmem:[%s508 + $0xa8] sm:%s500] %v593
        %v595 = vld [vmem:[%s507 + $0xb4] sm:%s500]
        %596 = vst [vmem:[%s508 + $0xac] sm:%s500] %v595
        %v597 = vld [vmem:[%s507 + $0xa8] sm:%s500]
        %598 = vst [vmem:[%s508 + $0xb0] sm:%s500] %v597
        %v599 = vld [vmem:[%s507 + $0xb8] sm:%s500]
        %600 = vst [vmem:[%s508 + $0xb4] sm:%s500] %v599
        %v601 = vld [vmem:[%s507 + $0xac] sm:%s500]
        %602 = vst [vmem:[%s508 + $0xb8] sm:%s500] %v601
        %v603 = vld [vmem:[%s507 + $0xbc] sm:%s500]
        %604 = vst [vmem:[%s508 + $0xbc] sm:%s500] %v603
        %v605 = vld [vmem:[%s507 + $0xc0] sm:%s500]
        %606 = vst [vmem:[%s508 + $0xc0] sm:%s500] %v605
        %v607 = vld [vmem:[%s507 + $0xd0] sm:%s500]
        %608 = vst [vmem:[%s508 + $0xc4] sm:%s500] %v607
        %v609 = vld [vmem:[%s507 + $0xc4] sm:%s500]
        %610 = vst [vmem:[%s508 + $0xc8] sm:%s500] %v609
        %v611 = vld [vmem:[%s507 + $0xd4] sm:%s500]
        %612 = vst [vmem:[%s508 + $0xcc] sm:%s500] %v611
        %v613 = vld [vmem:[%s507 + $0xc8] sm:%s500]
        %614 = vst [vmem:[%s508 + $0xd0] sm:%s500] %v613
        %v615 = vld [vmem:[%s507 + $0xd8] sm:%s500]
        %616 = vst [vmem:[%s508 + $0xd4] sm:%s500] %v615
        %v617 = vld [vmem:[%s507 + $0xcc] sm:%s500]
        %618 = vst [vmem:[%s508 + $0xd8] sm:%s500] %v617
        %v619 = vld [vmem:[%s507 + $0xdc] sm:%s500]
        %620 = vst [vmem:[%s508 + $0xdc] sm:%s500] %v619
        %v621 = vld [vmem:[%s507 + $0xe0] sm:%s500]
        %622 = vst [vmem:[%s508 + $0xe0] sm:%s500] %v621
        %v623 = vld [vmem:[%s507 + $0xf0] sm:%s500]
        %624 = vst [vmem:[%s508 + $0xe4] sm:%s500] %v623
        %v625 = vld [vmem:[%s507 + $0xe4] sm:%s500]
        %626 = vst [vmem:[%s508 + $0xe8] sm:%s500] %v625
        %v627 = vld [vmem:[%s507 + $0xf4] sm:%s500]
        %628 = vst [vmem:[%s508 + $0xec] sm:%s500] %v627
        %v629 = vld [vmem:[%s507 + $0xe8] sm:%s500]
        %630 = vst [vmem:[%s508 + $0xf0] sm:%s500] %v629
        %v631 = vld [vmem:[%s507 + $0xf8] sm:%s500]
        %632 = vst [vmem:[%s508 + $0xf4] sm:%s500] %v631
        %v633 = vld [vmem:[%s507 + $0xec] sm:%s500]
        %634 = vst [vmem:[%s508 + $0xf8] sm:%s500] %v633
        %v635 = vld [vmem:[%s507 + $0xfc] sm:%s500]
        %636 = vst [vmem:[%s508 + $0xfc] sm:%s500] %v635
      $region97: #{model_1_3_forward.1} parent=84 // loop_footer
        %s506 = sadd.s32 1, %s502
      $region98: #{model_1_3_forward.1} parent=84 // loop_footer_branch
        %501 = sbr.rel target = $region94
      $region99: #{model_1_3_forward.1} parent=84 // loop_exit
        _
    $region85: #{model_1_3_forward.1} parent=69 // pred_fallthru
      _
  $region70: #{model_1_3_forward.1} parent=0 // pred_fallthru
    _
  // Predicated region
  $region71: #{model_1_3_forward.1} parent=0 // pred_check
    %p342 = pneg %p338
  $region72: #{model_1_3_forward.1} parent=0 // pred_check_branch
    %344 = sbr.rel (%p342) target = $region74
  $region73: #{model_1_3_forward.1} parent=0 // pred_region
    %s345 = sshllo.u32 0, 4
    loop: start=0, step=1, limit=1
    $region75: #{model_1_3_forward.1} parent=73 // loop_pre_header
      _
    $region76: #{model_1_3_forward.1} parent=73 // loop_header
      %s347 = sphi 0, %s351
      %p348 = scmp.ge.s32.totalorder %s347, 1
      %s352 = sphi %s6, %s6
      %s353 = sphi [#allocation10], [#allocation10]
    $region77: #{model_1_3_forward.1} parent=73 // loop_header_branch
      %350 = sbr.rel (%p348) target = $region81
    $region78: #{model_1_3_forward.1} parent=73 // loop_body
      %v354 = vld [vmem:[%s352] sm:%s345]
      %355 = vst [vmem:[%s353] sm:%s345] %v354
      %v356 = vld [vmem:[%s352 + $0x10] sm:%s345]
      %357 = vst [vmem:[%s353 + $0x4] sm:%s345] %v356
      %v358 = vld [vmem:[%s352 + $0x4] sm:%s345]
      %359 = vst [vmem:[%s353 + $0x8] sm:%s345] %v358
      %v360 = vld [vmem:[%s352 + $0x14] sm:%s345]
      %361 = vst [vmem:[%s353 + $0xc] sm:%s345] %v360
      %v362 = vld [vmem:[%s352 + $0x8] sm:%s345]
      %363 = vst [vmem:[%s353 + $0x10] sm:%s345] %v362
      %v364 = vld [vmem:[%s352 + $0x18] sm:%s345]
      %365 = vst [vmem:[%s353 + $0x14] sm:%s345] %v364
      %v366 = vld [vmem:[%s352 + $0xc] sm:%s345]
      %367 = vst [vmem:[%s353 + $0x18] sm:%s345] %v366
      %v368 = vld [vmem:[%s352 + $0x1c] sm:%s345]
      %369 = vst [vmem:[%s353 + $0x1c] sm:%s345] %v368
      %v370 = vld [vmem:[%s352 + $0x20] sm:%s345]
      %371 = vst [vmem:[%s353 + $0x20] sm:%s345] %v370
      %v372 = vld [vmem:[%s352 + $0x30] sm:%s345]
      %373 = vst [vmem:[%s353 + $0x24] sm:%s345] %v372
      %v374 = vld [vmem:[%s352 + $0x24] sm:%s345]
      %375 = vst [vmem:[%s353 + $0x28] sm:%s345] %v374
      %v376 = vld [vmem:[%s352 + $0x34] sm:%s345]
      %377 = vst [vmem:[%s353 + $0x2c] sm:%s345] %v376
      %v378 = vld [vmem:[%s352 + $0x28] sm:%s345]
      %379 = vst [vmem:[%s353 + $0x30] sm:%s345] %v378
      %v380 = vld [vmem:[%s352 + $0x38] sm:%s345]
      %381 = vst [vmem:[%s353 + $0x34] sm:%s345] %v380
      %v382 = vld [vmem:[%s352 + $0x2c] sm:%s345]
      %383 = vst [vmem:[%s353 + $0x38] sm:%s345] %v382
      %v384 = vld [vmem:[%s352 + $0x3c] sm:%s345]
      %385 = vst [vmem:[%s353 + $0x3c] sm:%s345] %v384
      %v386 = vld [vmem:[%s352 + $0x40] sm:%s345]
      %387 = vst [vmem:[%s353 + $0x40] sm:%s345] %v386
      %v388 = vld [vmem:[%s352 + $0x50] sm:%s345]
      %389 = vst [vmem:[%s353 + $0x44] sm:%s345] %v388
      %v390 = vld [vmem:[%s352 + $0x44] sm:%s345]
      %391 = vst [vmem:[%s353 + $0x48] sm:%s345] %v390
      %v392 = vld [vmem:[%s352 + $0x54] sm:%s345]
      %393 = vst [vmem:[%s353 + $0x4c] sm:%s345] %v392
      %v394 = vld [vmem:[%s352 + $0x48] sm:%s345]
      %395 = vst [vmem:[%s353 + $0x50] sm:%s345] %v394
      %v396 = vld [vmem:[%s352 + $0x58] sm:%s345]
      %397 = vst [vmem:[%s353 + $0x54] sm:%s345] %v396
      %v398 = vld [vmem:[%s352 + $0x4c] sm:%s345]
      %399 = vst [vmem:[%s353 + $0x58] sm:%s345] %v398
      %v400 = vld [vmem:[%s352 + $0x5c] sm:%s345]
      %401 = vst [vmem:[%s353 + $0x5c] sm:%s345] %v400
      %v402 = vld [vmem:[%s352 + $0x60] sm:%s345]
      %403 = vst [vmem:[%s353 + $0x60] sm:%s345] %v402
      %v404 = vld [vmem:[%s352 + $0x70] sm:%s345]
      %405 = vst [vmem:[%s353 + $0x64] sm:%s345] %v404
      %v406 = vld [vmem:[%s352 + $0x64] sm:%s345]
      %407 = vst [vmem:[%s353 + $0x68] sm:%s345] %v406
      %v408 = vld [vmem:[%s352 + $0x74] sm:%s345]
      %409 = vst [vmem:[%s353 + $0x6c] sm:%s345] %v408
      %v410 = vld [vmem:[%s352 + $0x68] sm:%s345]
      %411 = vst [vmem:[%s353 + $0x70] sm:%s345] %v410
      %v412 = vld [vmem:[%s352 + $0x78] sm:%s345]
      %413 = vst [vmem:[%s353 + $0x74] sm:%s345] %v412
      %v414 = vld [vmem:[%s352 + $0x6c] sm:%s345]
      %415 = vst [vmem:[%s353 + $0x78] sm:%s345] %v414
      %v416 = vld [vmem:[%s352 + $0x7c] sm:%s345]
      %417 = vst [vmem:[%s353 + $0x7c] sm:%s345] %v416
      %v418 = vld [vmem:[%s352 + $0x80] sm:%s345]
      %419 = vst [vmem:[%s353 + $0x80] sm:%s345] %v418
      %v420 = vld [vmem:[%s352 + $0x90] sm:%s345]
      %421 = vst [vmem:[%s353 + $0x84] sm:%s345] %v420
      %v422 = vld [vmem:[%s352 + $0x84] sm:%s345]
      %423 = vst [vmem:[%s353 + $0x88] sm:%s345] %v422
      %v424 = vld [vmem:[%s352 + $0x94] sm:%s345]
      %425 = vst [vmem:[%s353 + $0x8c] sm:%s345] %v424
      %v426 = vld [vmem:[%s352 + $0x88] sm:%s345]
      %427 = vst [vmem:[%s353 + $0x90] sm:%s345] %v426
      %v428 = vld [vmem:[%s352 + $0x98] sm:%s345]
      %429 = vst [vmem:[%s353 + $0x94] sm:%s345] %v428
      %v430 = vld [vmem:[%s352 + $0x8c] sm:%s345]
      %431 = vst [vmem:[%s353 + $0x98] sm:%s345] %v430
      %v432 = vld [vmem:[%s352 + $0x9c] sm:%s345]
      %433 = vst [vmem:[%s353 + $0x9c] sm:%s345] %v432
      %v434 = vld [vmem:[%s352 + $0xa0] sm:%s345]
      %435 = vst [vmem:[%s353 + $0xa0] sm:%s345] %v434
      %v436 = vld [vmem:[%s352 + $0xb0] sm:%s345]
      %437 = vst [vmem:[%s353 + $0xa4] sm:%s345] %v436
      %v438 = vld [vmem:[%s352 + $0xa4] sm:%s345]
      %439 = vst [vmem:[%s353 + $0xa8] sm:%s345] %v438
      %v440 = vld [vmem:[%s352 + $0xb4] sm:%s345]
      %441 = vst [vmem:[%s353 + $0xac] sm:%s345] %v440
      %v442 = vld [vmem:[%s352 + $0xa8] sm:%s345]
      %443 = vst [vmem:[%s353 + $0xb0] sm:%s345] %v442
      %v444 = vld [vmem:[%s352 + $0xb8] sm:%s345]
      %445 = vst [vmem:[%s353 + $0xb4] sm:%s345] %v444
      %v446 = vld [vmem:[%s352 + $0xac] sm:%s345]
      %447 = vst [vmem:[%s353 + $0xb8] sm:%s345] %v446
      %v448 = vld [vmem:[%s352 + $0xbc] sm:%s345]
      %449 = vst [vmem:[%s353 + $0xbc] sm:%s345] %v448
      %v450 = vld [vmem:[%s352 + $0xc0] sm:%s345]
      %451 = vst [vmem:[%s353 + $0xc0] sm:%s345] %v450
      %v452 = vld [vmem:[%s352 + $0xd0] sm:%s345]
      %453 = vst [vmem:[%s353 + $0xc4] sm:%s345] %v452
      %v454 = vld [vmem:[%s352 + $0xc4] sm:%s345]
      %455 = vst [vmem:[%s353 + $0xc8] sm:%s345] %v454
      %v456 = vld [vmem:[%s352 + $0xd4] sm:%s345]
      %457 = vst [vmem:[%s353 + $0xcc] sm:%s345] %v456
      %v458 = vld [vmem:[%s352 + $0xc8] sm:%s345]
      %459 = vst [vmem:[%s353 + $0xd0] sm:%s345] %v458
      %v460 = vld [vmem:[%s352 + $0xd8] sm:%s345]
      %461 = vst [vmem:[%s353 + $0xd4] sm:%s345] %v460
      %v462 = vld [vmem:[%s352 + $0xcc] sm:%s345]
      %463 = vst [vmem:[%s353 + $0xd8] sm:%s345] %v462
      %v464 = vld [vmem:[%s352 + $0xdc] sm:%s345]
      %465 = vst [vmem:[%s353 + $0xdc] sm:%s345] %v464
      %v466 = vld [vmem:[%s352 + $0xe0] sm:%s345]
      %467 = vst [vmem:[%s353 + $0xe0] sm:%s345] %v466
      %v468 = vld [vmem:[%s352 + $0xf0] sm:%s345]
      %469 = vst [vmem:[%s353 + $0xe4] sm:%s345] %v468
      %v470 = vld [vmem:[%s352 + $0xe4] sm:%s345]
      %471 = vst [vmem:[%s353 + $0xe8] sm:%s345] %v470
      %v472 = vld [vmem:[%s352 + $0xf4] sm:%s345]
      %473 = vst [vmem:[%s353 + $0xec] sm:%s345] %v472
      %v474 = vld [vmem:[%s352 + $0xe8] sm:%s345]
      %475 = vst [vmem:[%s353 + $0xf0] sm:%s345] %v474
      %v476 = vld [vmem:[%s352 + $0xf8] sm:%s345]
      %477 = vst [vmem:[%s353 + $0xf4] sm:%s345] %v476
      %v478 = vld [vmem:[%s352 + $0xec] sm:%s345]
      %479 = vst [vmem:[%s353 + $0xf8] sm:%s345] %v478
      %v480 = vld [vmem:[%s352 + $0xfc] sm:%s345]
      %481 = vst [vmem:[%s353 + $0xfc] sm:%s345] %v480
    $region79: #{model_1_3_forward.1} parent=73 // loop_footer
      %s351 = sadd.s32 1, %s347
    $region80: #{model_1_3_forward.1} parent=73 // loop_footer_branch
      %346 = sbr.rel target = $region76
    $region81: #{model_1_3_forward.1} parent=73 // loop_exit
      _
  $region74: #{model_1_3_forward.1} parent=0 // pred_fallthru
    _
  // Predicated region
  $region100: #{model_1_3_forward.1} parent=0 // pred_check
    _
  $region101: #{model_1_3_forward.1} parent=0 // pred_check_branch
    %639 = sbr.rel (0) target = $region103
  $region102: #{model_1_3_forward.1} parent=0 // pred_region
    %640 = vsyncadd %s336, 4096
  $region103: #{model_1_3_forward.1} parent=0 // pred_fallthru
    _
  %s641 = scalar_lea.sflag [#allocation14], 2
  %p643 = scmp.lt.u32.totalorder 4, 8
  %p644 = pneg %p643
  // Predicated region
  $region104: #{model_1_3_forward.1} parent=0 // pred_check
    _
  $region105: #{model_1_3_forward.1} parent=0 // pred_check_branch
    %646 = sbr.rel (%p643) target = $region107
  $region106: #{model_1_3_forward.1} parent=0 // pred_region
    %s787 = sand.u32 4, 7
    %p788 = scmp.eq.s32.totalorder %s787, 0
    %p789 = pneg %p788
    // Predicated region
    $region119: #{model_1_3_forward.1} parent=106 // pred_check
      _
    $region120: #{model_1_3_forward.1} parent=106 // pred_check_branch
      %791 = sbr.rel (%p788) target = $region122
    $region121: #{model_1_3_forward.1} parent=106 // pred_region
      %s792 = sand.u32 4, 7
      %s793 = ssub.s32 4, %s792
      %s794 = scalar_lea.vmem %s7, %s793
      %s795 = ssub.s32 4, %s792
      %s796 = scalar_lea.vmem [#allocation11], %s795
      loop: start=0, step=1, limit=1
      $region123: #{model_1_3_forward.1} parent=121 // loop_pre_header
        _
      $region124: #{model_1_3_forward.1} parent=121 // loop_header
        %s798 = sphi 0, %s802
        %p799 = scmp.ge.s32.totalorder %s798, 1
        %s803 = sphi %s7, %s7
        %s804 = sphi [#allocation11], [#allocation11]
      $region125: #{model_1_3_forward.1} parent=121 // loop_header_branch
        %801 = sbr.rel (%p799) target = $region129
      $region126: #{model_1_3_forward.1} parent=121 // loop_body
        _
      $region127: #{model_1_3_forward.1} parent=121 // loop_footer
        %s802 = sadd.s32 1, %s798
      $region128: #{model_1_3_forward.1} parent=121 // loop_footer_branch
        %797 = sbr.rel target = $region124
      $region129: #{model_1_3_forward.1} parent=121 // loop_exit
        _
      %s805 = sshllo.u32 0, %s792
      loop: start=0, step=1, limit=1
      $region130: #{model_1_3_forward.1} parent=121 // loop_pre_header
        _
      $region131: #{model_1_3_forward.1} parent=121 // loop_header
        %s807 = sphi 0, %s811
        %p808 = scmp.ge.s32.totalorder %s807, 1
        %s812 = sphi %s794, %s794
        %s813 = sphi %s796, %s796
      $region132: #{model_1_3_forward.1} parent=121 // loop_header_branch
        %810 = sbr.rel (%p808) target = $region136
      $region133: #{model_1_3_forward.1} parent=121 // loop_body
        %v814 = vld [vmem:[%s812] sm:%s805]
        %815 = vst [vmem:[%s813] sm:%s805] %v814
        %v816 = vld [vmem:[%s812 + $0x10] sm:%s805]
        %817 = vst [vmem:[%s813 + $0x4] sm:%s805] %v816
        %v818 = vld [vmem:[%s812 + $0x4] sm:%s805]
        %819 = vst [vmem:[%s813 + $0x8] sm:%s805] %v818
        %v820 = vld [vmem:[%s812 + $0x14] sm:%s805]
        %821 = vst [vmem:[%s813 + $0xc] sm:%s805] %v820
        %v822 = vld [vmem:[%s812 + $0x8] sm:%s805]
        %823 = vst [vmem:[%s813 + $0x10] sm:%s805] %v822
        %v824 = vld [vmem:[%s812 + $0x18] sm:%s805]
        %825 = vst [vmem:[%s813 + $0x14] sm:%s805] %v824
        %v826 = vld [vmem:[%s812 + $0xc] sm:%s805]
        %827 = vst [vmem:[%s813 + $0x18] sm:%s805] %v826
        %v828 = vld [vmem:[%s812 + $0x1c] sm:%s805]
        %829 = vst [vmem:[%s813 + $0x1c] sm:%s805] %v828
        %v830 = vld [vmem:[%s812 + $0x20] sm:%s805]
        %831 = vst [vmem:[%s813 + $0x20] sm:%s805] %v830
        %v832 = vld [vmem:[%s812 + $0x30] sm:%s805]
        %833 = vst [vmem:[%s813 + $0x24] sm:%s805] %v832
        %v834 = vld [vmem:[%s812 + $0x24] sm:%s805]
        %835 = vst [vmem:[%s813 + $0x28] sm:%s805] %v834
        %v836 = vld [vmem:[%s812 + $0x34] sm:%s805]
        %837 = vst [vmem:[%s813 + $0x2c] sm:%s805] %v836
        %v838 = vld [vmem:[%s812 + $0x28] sm:%s805]
        %839 = vst [vmem:[%s813 + $0x30] sm:%s805] %v838
        %v840 = vld [vmem:[%s812 + $0x38] sm:%s805]
        %841 = vst [vmem:[%s813 + $0x34] sm:%s805] %v840
        %v842 = vld [vmem:[%s812 + $0x2c] sm:%s805]
        %843 = vst [vmem:[%s813 + $0x38] sm:%s805] %v842
        %v844 = vld [vmem:[%s812 + $0x3c] sm:%s805]
        %845 = vst [vmem:[%s813 + $0x3c] sm:%s805] %v844
        %v846 = vld [vmem:[%s812 + $0x40] sm:%s805]
        %847 = vst [vmem:[%s813 + $0x40] sm:%s805] %v846
        %v848 = vld [vmem:[%s812 + $0x50] sm:%s805]
        %849 = vst [vmem:[%s813 + $0x44] sm:%s805] %v848
        %v850 = vld [vmem:[%s812 + $0x44] sm:%s805]
        %851 = vst [vmem:[%s813 + $0x48] sm:%s805] %v850
        %v852 = vld [vmem:[%s812 + $0x54] sm:%s805]
        %853 = vst [vmem:[%s813 + $0x4c] sm:%s805] %v852
        %v854 = vld [vmem:[%s812 + $0x48] sm:%s805]
        %855 = vst [vmem:[%s813 + $0x50] sm:%s805] %v854
        %v856 = vld [vmem:[%s812 + $0x58] sm:%s805]
        %857 = vst [vmem:[%s813 + $0x54] sm:%s805] %v856
        %v858 = vld [vmem:[%s812 + $0x4c] sm:%s805]
        %859 = vst [vmem:[%s813 + $0x58] sm:%s805] %v858
        %v860 = vld [vmem:[%s812 + $0x5c] sm:%s805]
        %861 = vst [vmem:[%s813 + $0x5c] sm:%s805] %v860
        %v862 = vld [vmem:[%s812 + $0x60] sm:%s805]
        %863 = vst [vmem:[%s813 + $0x60] sm:%s805] %v862
        %v864 = vld [vmem:[%s812 + $0x70] sm:%s805]
        %865 = vst [vmem:[%s813 + $0x64] sm:%s805] %v864
        %v866 = vld [vmem:[%s812 + $0x64] sm:%s805]
        %867 = vst [vmem:[%s813 + $0x68] sm:%s805] %v866
        %v868 = vld [vmem:[%s812 + $0x74] sm:%s805]
        %869 = vst [vmem:[%s813 + $0x6c] sm:%s805] %v868
        %v870 = vld [vmem:[%s812 + $0x68] sm:%s805]
        %871 = vst [vmem:[%s813 + $0x70] sm:%s805] %v870
        %v872 = vld [vmem:[%s812 + $0x78] sm:%s805]
        %873 = vst [vmem:[%s813 + $0x74] sm:%s805] %v872
        %v874 = vld [vmem:[%s812 + $0x6c] sm:%s805]
        %875 = vst [vmem:[%s813 + $0x78] sm:%s805] %v874
        %v876 = vld [vmem:[%s812 + $0x7c] sm:%s805]
        %877 = vst [vmem:[%s813 + $0x7c] sm:%s805] %v876
        %v878 = vld [vmem:[%s812 + $0x80] sm:%s805]
        %879 = vst [vmem:[%s813 + $0x80] sm:%s805] %v878
        %v880 = vld [vmem:[%s812 + $0x90] sm:%s805]
        %881 = vst [vmem:[%s813 + $0x84] sm:%s805] %v880
        %v882 = vld [vmem:[%s812 + $0x84] sm:%s805]
        %883 = vst [vmem:[%s813 + $0x88] sm:%s805] %v882
        %v884 = vld [vmem:[%s812 + $0x94] sm:%s805]
        %885 = vst [vmem:[%s813 + $0x8c] sm:%s805] %v884
        %v886 = vld [vmem:[%s812 + $0x88] sm:%s805]
        %887 = vst [vmem:[%s813 + $0x90] sm:%s805] %v886
        %v888 = vld [vmem:[%s812 + $0x98] sm:%s805]
        %889 = vst [vmem:[%s813 + $0x94] sm:%s805] %v888
        %v890 = vld [vmem:[%s812 + $0x8c] sm:%s805]
        %891 = vst [vmem:[%s813 + $0x98] sm:%s805] %v890
        %v892 = vld [vmem:[%s812 + $0x9c] sm:%s805]
        %893 = vst [vmem:[%s813 + $0x9c] sm:%s805] %v892
        %v894 = vld [vmem:[%s812 + $0xa0] sm:%s805]
        %895 = vst [vmem:[%s813 + $0xa0] sm:%s805] %v894
        %v896 = vld [vmem:[%s812 + $0xb0] sm:%s805]
        %897 = vst [vmem:[%s813 + $0xa4] sm:%s805] %v896
        %v898 = vld [vmem:[%s812 + $0xa4] sm:%s805]
        %899 = vst [vmem:[%s813 + $0xa8] sm:%s805] %v898
        %v900 = vld [vmem:[%s812 + $0xb4] sm:%s805]
        %901 = vst [vmem:[%s813 + $0xac] sm:%s805] %v900
        %v902 = vld [vmem:[%s812 + $0xa8] sm:%s805]
        %903 = vst [vmem:[%s813 + $0xb0] sm:%s805] %v902
        %v904 = vld [vmem:[%s812 + $0xb8] sm:%s805]
        %905 = vst [vmem:[%s813 + $0xb4] sm:%s805] %v904
        %v906 = vld [vmem:[%s812 + $0xac] sm:%s805]
        %907 = vst [vmem:[%s813 + $0xb8] sm:%s805] %v906
        %v908 = vld [vmem:[%s812 + $0xbc] sm:%s805]
        %909 = vst [vmem:[%s813 + $0xbc] sm:%s805] %v908
        %v910 = vld [vmem:[%s812 + $0xc0] sm:%s805]
        %911 = vst [vmem:[%s813 + $0xc0] sm:%s805] %v910
        %v912 = vld [vmem:[%s812 + $0xd0] sm:%s805]
        %913 = vst [vmem:[%s813 + $0xc4] sm:%s805] %v912
        %v914 = vld [vmem:[%s812 + $0xc4] sm:%s805]
        %915 = vst [vmem:[%s813 + $0xc8] sm:%s805] %v914
        %v916 = vld [vmem:[%s812 + $0xd4] sm:%s805]
        %917 = vst [vmem:[%s813 + $0xcc] sm:%s805] %v916
        %v918 = vld [vmem:[%s812 + $0xc8] sm:%s805]
        %919 = vst [vmem:[%s813 + $0xd0] sm:%s805] %v918
        %v920 = vld [vmem:[%s812 + $0xd8] sm:%s805]
        %921 = vst [vmem:[%s813 + $0xd4] sm:%s805] %v920
        %v922 = vld [vmem:[%s812 + $0xcc] sm:%s805]
        %923 = vst [vmem:[%s813 + $0xd8] sm:%s805] %v922
        %v924 = vld [vmem:[%s812 + $0xdc] sm:%s805]
        %925 = vst [vmem:[%s813 + $0xdc] sm:%s805] %v924
        %v926 = vld [vmem:[%s812 + $0xe0] sm:%s805]
        %927 = vst [vmem:[%s813 + $0xe0] sm:%s805] %v926
        %v928 = vld [vmem:[%s812 + $0xf0] sm:%s805]
        %929 = vst [vmem:[%s813 + $0xe4] sm:%s805] %v928
        %v930 = vld [vmem:[%s812 + $0xe4] sm:%s805]
        %931 = vst [vmem:[%s813 + $0xe8] sm:%s805] %v930
        %v932 = vld [vmem:[%s812 + $0xf4] sm:%s805]
        %933 = vst [vmem:[%s813 + $0xec] sm:%s805] %v932
        %v934 = vld [vmem:[%s812 + $0xe8] sm:%s805]
        %935 = vst [vmem:[%s813 + $0xf0] sm:%s805] %v934
        %v936 = vld [vmem:[%s812 + $0xf8] sm:%s805]
        %937 = vst [vmem:[%s813 + $0xf4] sm:%s805] %v936
        %v938 = vld [vmem:[%s812 + $0xec] sm:%s805]
        %939 = vst [vmem:[%s813 + $0xf8] sm:%s805] %v938
        %v940 = vld [vmem:[%s812 + $0xfc] sm:%s805]
        %941 = vst [vmem:[%s813 + $0xfc] sm:%s805] %v940
      $region134: #{model_1_3_forward.1} parent=121 // loop_footer
        %s811 = sadd.s32 1, %s807
      $region135: #{model_1_3_forward.1} parent=121 // loop_footer_branch
        %806 = sbr.rel target = $region131
      $region136: #{model_1_3_forward.1} parent=121 // loop_exit
        _
    $region122: #{model_1_3_forward.1} parent=106 // pred_fallthru
      _
  $region107: #{model_1_3_forward.1} parent=0 // pred_fallthru
    _
  // Predicated region
  $region108: #{model_1_3_forward.1} parent=0 // pred_check
    %p647 = pneg %p643
  $region109: #{model_1_3_forward.1} parent=0 // pred_check_branch
    %649 = sbr.rel (%p647) target = $region111
  $region110: #{model_1_3_forward.1} parent=0 // pred_region
    %s650 = sshllo.u32 0, 4
    loop: start=0, step=1, limit=1
    $region112: #{model_1_3_forward.1} parent=110 // loop_pre_header
      _
    $region113: #{model_1_3_forward.1} parent=110 // loop_header
      %s652 = sphi 0, %s656
      %p653 = scmp.ge.s32.totalorder %s652, 1
      %s657 = sphi %s7, %s7
      %s658 = sphi [#allocation11], [#allocation11]
    $region114: #{model_1_3_forward.1} parent=110 // loop_header_branch
      %655 = sbr.rel (%p653) target = $region118
    $region115: #{model_1_3_forward.1} parent=110 // loop_body
      %v659 = vld [vmem:[%s657] sm:%s650]
      %660 = vst [vmem:[%s658] sm:%s650] %v659
      %v661 = vld [vmem:[%s657 + $0x10] sm:%s650]
      %662 = vst [vmem:[%s658 + $0x4] sm:%s650] %v661
      %v663 = vld [vmem:[%s657 + $0x4] sm:%s650]
      %664 = vst [vmem:[%s658 + $0x8] sm:%s650] %v663
      %v665 = vld [vmem:[%s657 + $0x14] sm:%s650]
      %666 = vst [vmem:[%s658 + $0xc] sm:%s650] %v665
      %v667 = vld [vmem:[%s657 + $0x8] sm:%s650]
      %668 = vst [vmem:[%s658 + $0x10] sm:%s650] %v667
      %v669 = vld [vmem:[%s657 + $0x18] sm:%s650]
      %670 = vst [vmem:[%s658 + $0x14] sm:%s650] %v669
      %v671 = vld [vmem:[%s657 + $0xc] sm:%s650]
      %672 = vst [vmem:[%s658 + $0x18] sm:%s650] %v671
      %v673 = vld [vmem:[%s657 + $0x1c] sm:%s650]
      %674 = vst [vmem:[%s658 + $0x1c] sm:%s650] %v673
      %v675 = vld [vmem:[%s657 + $0x20] sm:%s650]
      %676 = vst [vmem:[%s658 + $0x20] sm:%s650] %v675
      %v677 = vld [vmem:[%s657 + $0x30] sm:%s650]
      %678 = vst [vmem:[%s658 + $0x24] sm:%s650] %v677
      %v679 = vld [vmem:[%s657 + $0x24] sm:%s650]
      %680 = vst [vmem:[%s658 + $0x28] sm:%s650] %v679
      %v681 = vld [vmem:[%s657 + $0x34] sm:%s650]
      %682 = vst [vmem:[%s658 + $0x2c] sm:%s650] %v681
      %v683 = vld [vmem:[%s657 + $0x28] sm:%s650]
      %684 = vst [vmem:[%s658 + $0x30] sm:%s650] %v683
      %v685 = vld [vmem:[%s657 + $0x38] sm:%s650]
      %686 = vst [vmem:[%s658 + $0x34] sm:%s650] %v685
      %v687 = vld [vmem:[%s657 + $0x2c] sm:%s650]
      %688 = vst [vmem:[%s658 + $0x38] sm:%s650] %v687
      %v689 = vld [vmem:[%s657 + $0x3c] sm:%s650]
      %690 = vst [vmem:[%s658 + $0x3c] sm:%s650] %v689
      %v691 = vld [vmem:[%s657 + $0x40] sm:%s650]
      %692 = vst [vmem:[%s658 + $0x40] sm:%s650] %v691
      %v693 = vld [vmem:[%s657 + $0x50] sm:%s650]
      %694 = vst [vmem:[%s658 + $0x44] sm:%s650] %v693
      %v695 = vld [vmem:[%s657 + $0x44] sm:%s650]
      %696 = vst [vmem:[%s658 + $0x48] sm:%s650] %v695
      %v697 = vld [vmem:[%s657 + $0x54] sm:%s650]
      %698 = vst [vmem:[%s658 + $0x4c] sm:%s650] %v697
      %v699 = vld [vmem:[%s657 + $0x48] sm:%s650]
      %700 = vst [vmem:[%s658 + $0x50] sm:%s650] %v699
      %v701 = vld [vmem:[%s657 + $0x58] sm:%s650]
      %702 = vst [vmem:[%s658 + $0x54] sm:%s650] %v701
      %v703 = vld [vmem:[%s657 + $0x4c] sm:%s650]
      %704 = vst [vmem:[%s658 + $0x58] sm:%s650] %v703
      %v705 = vld [vmem:[%s657 + $0x5c] sm:%s650]
      %706 = vst [vmem:[%s658 + $0x5c] sm:%s650] %v705
      %v707 = vld [vmem:[%s657 + $0x60] sm:%s650]
      %708 = vst [vmem:[%s658 + $0x60] sm:%s650] %v707
      %v709 = vld [vmem:[%s657 + $0x70] sm:%s650]
      %710 = vst [vmem:[%s658 + $0x64] sm:%s650] %v709
      %v711 = vld [vmem:[%s657 + $0x64] sm:%s650]
      %712 = vst [vmem:[%s658 + $0x68] sm:%s650] %v711
      %v713 = vld [vmem:[%s657 + $0x74] sm:%s650]
      %714 = vst [vmem:[%s658 + $0x6c] sm:%s650] %v713
      %v715 = vld [vmem:[%s657 + $0x68] sm:%s650]
      %716 = vst [vmem:[%s658 + $0x70] sm:%s650] %v715
      %v717 = vld [vmem:[%s657 + $0x78] sm:%s650]
      %718 = vst [vmem:[%s658 + $0x74] sm:%s650] %v717
      %v719 = vld [vmem:[%s657 + $0x6c] sm:%s650]
      %720 = vst [vmem:[%s658 + $0x78] sm:%s650] %v719
      %v721 = vld [vmem:[%s657 + $0x7c] sm:%s650]
      %722 = vst [vmem:[%s658 + $0x7c] sm:%s650] %v721
      %v723 = vld [vmem:[%s657 + $0x80] sm:%s650]
      %724 = vst [vmem:[%s658 + $0x80] sm:%s650] %v723
      %v725 = vld [vmem:[%s657 + $0x90] sm:%s650]
      %726 = vst [vmem:[%s658 + $0x84] sm:%s650] %v725
      %v727 = vld [vmem:[%s657 + $0x84] sm:%s650]
      %728 = vst [vmem:[%s658 + $0x88] sm:%s650] %v727
      %v729 = vld [vmem:[%s657 + $0x94] sm:%s650]
      %730 = vst [vmem:[%s658 + $0x8c] sm:%s650] %v729
      %v731 = vld [vmem:[%s657 + $0x88] sm:%s650]
      %732 = vst [vmem:[%s658 + $0x90] sm:%s650] %v731
      %v733 = vld [vmem:[%s657 + $0x98] sm:%s650]
      %734 = vst [vmem:[%s658 + $0x94] sm:%s650] %v733
      %v735 = vld [vmem:[%s657 + $0x8c] sm:%s650]
      %736 = vst [vmem:[%s658 + $0x98] sm:%s650] %v735
      %v737 = vld [vmem:[%s657 + $0x9c] sm:%s650]
      %738 = vst [vmem:[%s658 + $0x9c] sm:%s650] %v737
      %v739 = vld [vmem:[%s657 + $0xa0] sm:%s650]
      %740 = vst [vmem:[%s658 + $0xa0] sm:%s650] %v739
      %v741 = vld [vmem:[%s657 + $0xb0] sm:%s650]
      %742 = vst [vmem:[%s658 + $0xa4] sm:%s650] %v741
      %v743 = vld [vmem:[%s657 + $0xa4] sm:%s650]
      %744 = vst [vmem:[%s658 + $0xa8] sm:%s650] %v743
      %v745 = vld [vmem:[%s657 + $0xb4] sm:%s650]
      %746 = vst [vmem:[%s658 + $0xac] sm:%s650] %v745
      %v747 = vld [vmem:[%s657 + $0xa8] sm:%s650]
      %748 = vst [vmem:[%s658 + $0xb0] sm:%s650] %v747
      %v749 = vld [vmem:[%s657 + $0xb8] sm:%s650]
      %750 = vst [vmem:[%s658 + $0xb4] sm:%s650] %v749
      %v751 = vld [vmem:[%s657 + $0xac] sm:%s650]
      %752 = vst [vmem:[%s658 + $0xb8] sm:%s650] %v751
      %v753 = vld [vmem:[%s657 + $0xbc] sm:%s650]
      %754 = vst [vmem:[%s658 + $0xbc] sm:%s650] %v753
      %v755 = vld [vmem:[%s657 + $0xc0] sm:%s650]
      %756 = vst [vmem:[%s658 + $0xc0] sm:%s650] %v755
      %v757 = vld [vmem:[%s657 + $0xd0] sm:%s650]
      %758 = vst [vmem:[%s658 + $0xc4] sm:%s650] %v757
      %v759 = vld [vmem:[%s657 + $0xc4] sm:%s650]
      %760 = vst [vmem:[%s658 + $0xc8] sm:%s650] %v759
      %v761 = vld [vmem:[%s657 + $0xd4] sm:%s650]
      %762 = vst [vmem:[%s658 + $0xcc] sm:%s650] %v761
      %v763 = vld [vmem:[%s657 + $0xc8] sm:%s650]
      %764 = vst [vmem:[%s658 + $0xd0] sm:%s650] %v763
      %v765 = vld [vmem:[%s657 + $0xd8] sm:%s650]
      %766 = vst [vmem:[%s658 + $0xd4] sm:%s650] %v765
      %v767 = vld [vmem:[%s657 + $0xcc] sm:%s650]
      %768 = vst [vmem:[%s658 + $0xd8] sm:%s650] %v767
      %v769 = vld [vmem:[%s657 + $0xdc] sm:%s650]
      %770 = vst [vmem:[%s658 + $0xdc] sm:%s650] %v769
      %v771 = vld [vmem:[%s657 + $0xe0] sm:%s650]
      %772 = vst [vmem:[%s658 + $0xe0] sm:%s650] %v771
      %v773 = vld [vmem:[%s657 + $0xf0] sm:%s650]
      %774 = vst [vmem:[%s658 + $0xe4] sm:%s650] %v773
      %v775 = vld [vmem:[%s657 + $0xe4] sm:%s650]
      %776 = vst [vmem:[%s658 + $0xe8] sm:%s650] %v775
      %v777 = vld [vmem:[%s657 + $0xf4] sm:%s650]
      %778 = vst [vmem:[%s658 + $0xec] sm:%s650] %v777
      %v779 = vld [vmem:[%s657 + $0xe8] sm:%s650]
      %780 = vst [vmem:[%s658 + $0xf0] sm:%s650] %v779
      %v781 = vld [vmem:[%s657 + $0xf8] sm:%s650]
      %782 = vst [vmem:[%s658 + $0xf4] sm:%s650] %v781
      %v783 = vld [vmem:[%s657 + $0xec] sm:%s650]
      %784 = vst [vmem:[%s658 + $0xf8] sm:%s650] %v783
      %v785 = vld [vmem:[%s657 + $0xfc] sm:%s650]
      %786 = vst [vmem:[%s658 + $0xfc] sm:%s650] %v785
    $region116: #{model_1_3_forward.1} parent=110 // loop_footer
      %s656 = sadd.s32 1, %s652
    $region117: #{model_1_3_forward.1} parent=110 // loop_footer_branch
      %651 = sbr.rel target = $region113
    $region118: #{model_1_3_forward.1} parent=110 // loop_exit
      _
  $region111: #{model_1_3_forward.1} parent=0 // pred_fallthru
    _
  // Predicated region
  $region137: #{model_1_3_forward.1} parent=0 // pred_check
    _
  $region138: #{model_1_3_forward.1} parent=0 // pred_check_branch
    %944 = sbr.rel (0) target = $region140
  $region139: #{model_1_3_forward.1} parent=0 // pred_region
    %945 = vsyncadd %s641, 4096
  $region140: #{model_1_3_forward.1} parent=0 // pred_fallthru
    _
  %s946 = scalar_lea.sflag [#allocation14], 3
  %p948 = scmp.lt.u32.totalorder 4, 8
  %p949 = pneg %p948
  // Predicated region
  $region141: #{model_1_3_forward.1} parent=0 // pred_check
    _
  $region142: #{model_1_3_forward.1} parent=0 // pred_check_branch
    %951 = sbr.rel (%p948) target = $region144
  $region143: #{model_1_3_forward.1} parent=0 // pred_region
    %s1092 = sand.u32 4, 7
    %p1093 = scmp.eq.s32.totalorder %s1092, 0
    %p1094 = pneg %p1093
    // Predicated region
    $region156: #{model_1_3_forward.1} parent=143 // pred_check
      _
    $region157: #{model_1_3_forward.1} parent=143 // pred_check_branch
      %1096 = sbr.rel (%p1093) target = $region159
    $region158: #{model_1_3_forward.1} parent=143 // pred_region
      %s1097 = sand.u32 4, 7
      %s1098 = ssub.s32 4, %s1097
      %s1099 = scalar_lea.vmem %s9, %s1098
      %s1100 = ssub.s32 4, %s1097
      %s1101 = scalar_lea.vmem [#allocation12], %s1100
      loop: start=0, step=1, limit=1
      $region160: #{model_1_3_forward.1} parent=158 // loop_pre_header
        _
      $region161: #{model_1_3_forward.1} parent=158 // loop_header
        %s1103 = sphi 0, %s1107
        %p1104 = scmp.ge.s32.totalorder %s1103, 1
        %s1108 = sphi %s9, %s9
        %s1109 = sphi [#allocation12], [#allocation12]
      $region162: #{model_1_3_forward.1} parent=158 // loop_header_branch
        %1106 = sbr.rel (%p1104) target = $region166
      $region163: #{model_1_3_forward.1} parent=158 // loop_body
        _
      $region164: #{model_1_3_forward.1} parent=158 // loop_footer
        %s1107 = sadd.s32 1, %s1103
      $region165: #{model_1_3_forward.1} parent=158 // loop_footer_branch
        %1102 = sbr.rel target = $region161
      $region166: #{model_1_3_forward.1} parent=158 // loop_exit
        _
      %s1110 = sshllo.u32 0, %s1097
      loop: start=0, step=1, limit=1
      $region167: #{model_1_3_forward.1} parent=158 // loop_pre_header
        _
      $region168: #{model_1_3_forward.1} parent=158 // loop_header
        %s1112 = sphi 0, %s1116
        %p1113 = scmp.ge.s32.totalorder %s1112, 1
        %s1117 = sphi %s1099, %s1099
        %s1118 = sphi %s1101, %s1101
      $region169: #{model_1_3_forward.1} parent=158 // loop_header_branch
        %1115 = sbr.rel (%p1113) target = $region173
      $region170: #{model_1_3_forward.1} parent=158 // loop_body
        %v1119 = vld [vmem:[%s1117] sm:%s1110]
        %1120 = vst [vmem:[%s1118] sm:%s1110] %v1119
        %v1121 = vld [vmem:[%s1117 + $0x10] sm:%s1110]
        %1122 = vst [vmem:[%s1118 + $0x4] sm:%s1110] %v1121
        %v1123 = vld [vmem:[%s1117 + $0x4] sm:%s1110]
        %1124 = vst [vmem:[%s1118 + $0x8] sm:%s1110] %v1123
        %v1125 = vld [vmem:[%s1117 + $0x14] sm:%s1110]
        %1126 = vst [vmem:[%s1118 + $0xc] sm:%s1110] %v1125
        %v1127 = vld [vmem:[%s1117 + $0x8] sm:%s1110]
        %1128 = vst [vmem:[%s1118 + $0x10] sm:%s1110] %v1127
        %v1129 = vld [vmem:[%s1117 + $0x18] sm:%s1110]
        %1130 = vst [vmem:[%s1118 + $0x14] sm:%s1110] %v1129
        %v1131 = vld [vmem:[%s1117 + $0xc] sm:%s1110]
        %1132 = vst [vmem:[%s1118 + $0x18] sm:%s1110] %v1131
        %v1133 = vld [vmem:[%s1117 + $0x1c] sm:%s1110]
        %1134 = vst [vmem:[%s1118 + $0x1c] sm:%s1110] %v1133
        %v1135 = vld [vmem:[%s1117 + $0x20] sm:%s1110]
        %1136 = vst [vmem:[%s1118 + $0x20] sm:%s1110] %v1135
        %v1137 = vld [vmem:[%s1117 + $0x30] sm:%s1110]
        %1138 = vst [vmem:[%s1118 + $0x24] sm:%s1110] %v1137
        %v1139 = vld [vmem:[%s1117 + $0x24] sm:%s1110]
        %1140 = vst [vmem:[%s1118 + $0x28] sm:%s1110] %v1139
        %v1141 = vld [vmem:[%s1117 + $0x34] sm:%s1110]
        %1142 = vst [vmem:[%s1118 + $0x2c] sm:%s1110] %v1141
        %v1143 = vld [vmem:[%s1117 + $0x28] sm:%s1110]
        %1144 = vst [vmem:[%s1118 + $0x30] sm:%s1110] %v1143
        %v1145 = vld [vmem:[%s1117 + $0x38] sm:%s1110]
        %1146 = vst [vmem:[%s1118 + $0x34] sm:%s1110] %v1145
        %v1147 = vld [vmem:[%s1117 + $0x2c] sm:%s1110]
        %1148 = vst [vmem:[%s1118 + $0x38] sm:%s1110] %v1147
        %v1149 = vld [vmem:[%s1117 + $0x3c] sm:%s1110]
        %1150 = vst [vmem:[%s1118 + $0x3c] sm:%s1110] %v1149
        %v1151 = vld [vmem:[%s1117 + $0x40] sm:%s1110]
        %1152 = vst [vmem:[%s1118 + $0x40] sm:%s1110] %v1151
        %v1153 = vld [vmem:[%s1117 + $0x50] sm:%s1110]
        %1154 = vst [vmem:[%s1118 + $0x44] sm:%s1110] %v1153
        %v1155 = vld [vmem:[%s1117 + $0x44] sm:%s1110]
        %1156 = vst [vmem:[%s1118 + $0x48] sm:%s1110] %v1155
        %v1157 = vld [vmem:[%s1117 + $0x54] sm:%s1110]
        %1158 = vst [vmem:[%s1118 + $0x4c] sm:%s1110] %v1157
        %v1159 = vld [vmem:[%s1117 + $0x48] sm:%s1110]
        %1160 = vst [vmem:[%s1118 + $0x50] sm:%s1110] %v1159
        %v1161 = vld [vmem:[%s1117 + $0x58] sm:%s1110]
        %1162 = vst [vmem:[%s1118 + $0x54] sm:%s1110] %v1161
        %v1163 = vld [vmem:[%s1117 + $0x4c] sm:%s1110]
        %1164 = vst [vmem:[%s1118 + $0x58] sm:%s1110] %v1163
        %v1165 = vld [vmem:[%s1117 + $0x5c] sm:%s1110]
        %1166 = vst [vmem:[%s1118 + $0x5c] sm:%s1110] %v1165
        %v1167 = vld [vmem:[%s1117 + $0x60] sm:%s1110]
        %1168 = vst [vmem:[%s1118 + $0x60] sm:%s1110] %v1167
        %v1169 = vld [vmem:[%s1117 + $0x70] sm:%s1110]
        %1170 = vst [vmem:[%s1118 + $0x64] sm:%s1110] %v1169
        %v1171 = vld [vmem:[%s1117 + $0x64] sm:%s1110]
        %1172 = vst [vmem:[%s1118 + $0x68] sm:%s1110] %v1171
        %v1173 = vld [vmem:[%s1117 + $0x74] sm:%s1110]
        %1174 = vst [vmem:[%s1118 + $0x6c] sm:%s1110] %v1173
        %v1175 = vld [vmem:[%s1117 + $0x68] sm:%s1110]
        %1176 = vst [vmem:[%s1118 + $0x70] sm:%s1110] %v1175
        %v1177 = vld [vmem:[%s1117 + $0x78] sm:%s1110]
        %1178 = vst [vmem:[%s1118 + $0x74] sm:%s1110] %v1177
        %v1179 = vld [vmem:[%s1117 + $0x6c] sm:%s1110]
        %1180 = vst [vmem:[%s1118 + $0x78] sm:%s1110] %v1179
        %v1181 = vld [vmem:[%s1117 + $0x7c] sm:%s1110]
        %1182 = vst [vmem:[%s1118 + $0x7c] sm:%s1110] %v1181
        %v1183 = vld [vmem:[%s1117 + $0x80] sm:%s1110]
        %1184 = vst [vmem:[%s1118 + $0x80] sm:%s1110] %v1183
        %v1185 = vld [vmem:[%s1117 + $0x90] sm:%s1110]
        %1186 = vst [vmem:[%s1118 + $0x84] sm:%s1110] %v1185
        %v1187 = vld [vmem:[%s1117 + $0x84] sm:%s1110]
        %1188 = vst [vmem:[%s1118 + $0x88] sm:%s1110] %v1187
        %v1189 = vld [vmem:[%s1117 + $0x94] sm:%s1110]
        %1190 = vst [vmem:[%s1118 + $0x8c] sm:%s1110] %v1189
        %v1191 = vld [vmem:[%s1117 + $0x88] sm:%s1110]
        %1192 = vst [vmem:[%s1118 + $0x90] sm:%s1110] %v1191
        %v1193 = vld [vmem:[%s1117 + $0x98] sm:%s1110]
        %1194 = vst [vmem:[%s1118 + $0x94] sm:%s1110] %v1193
        %v1195 = vld [vmem:[%s1117 + $0x8c] sm:%s1110]
        %1196 = vst [vmem:[%s1118 + $0x98] sm:%s1110] %v1195
        %v1197 = vld [vmem:[%s1117 + $0x9c] sm:%s1110]
        %1198 = vst [vmem:[%s1118 + $0x9c] sm:%s1110] %v1197
        %v1199 = vld [vmem:[%s1117 + $0xa0] sm:%s1110]
        %1200 = vst [vmem:[%s1118 + $0xa0] sm:%s1110] %v1199
        %v1201 = vld [vmem:[%s1117 + $0xb0] sm:%s1110]
        %1202 = vst [vmem:[%s1118 + $0xa4] sm:%s1110] %v1201
        %v1203 = vld [vmem:[%s1117 + $0xa4] sm:%s1110]
        %1204 = vst [vmem:[%s1118 + $0xa8] sm:%s1110] %v1203
        %v1205 = vld [vmem:[%s1117 + $0xb4] sm:%s1110]
        %1206 = vst [vmem:[%s1118 + $0xac] sm:%s1110] %v1205
        %v1207 = vld [vmem:[%s1117 + $0xa8] sm:%s1110]
        %1208 = vst [vmem:[%s1118 + $0xb0] sm:%s1110] %v1207
        %v1209 = vld [vmem:[%s1117 + $0xb8] sm:%s1110]
        %1210 = vst [vmem:[%s1118 + $0xb4] sm:%s1110] %v1209
        %v1211 = vld [vmem:[%s1117 + $0xac] sm:%s1110]
        %1212 = vst [vmem:[%s1118 + $0xb8] sm:%s1110] %v1211
        %v1213 = vld [vmem:[%s1117 + $0xbc] sm:%s1110]
        %1214 = vst [vmem:[%s1118 + $0xbc] sm:%s1110] %v1213
        %v1215 = vld [vmem:[%s1117 + $0xc0] sm:%s1110]
        %1216 = vst [vmem:[%s1118 + $0xc0] sm:%s1110] %v1215
        %v1217 = vld [vmem:[%s1117 + $0xd0] sm:%s1110]
        %1218 = vst [vmem:[%s1118 + $0xc4] sm:%s1110] %v1217
        %v1219 = vld [vmem:[%s1117 + $0xc4] sm:%s1110]
        %1220 = vst [vmem:[%s1118 + $0xc8] sm:%s1110] %v1219
        %v1221 = vld [vmem:[%s1117 + $0xd4] sm:%s1110]
        %1222 = vst [vmem:[%s1118 + $0xcc] sm:%s1110] %v1221
        %v1223 = vld [vmem:[%s1117 + $0xc8] sm:%s1110]
        %1224 = vst [vmem:[%s1118 + $0xd0] sm:%s1110] %v1223
        %v1225 = vld [vmem:[%s1117 + $0xd8] sm:%s1110]
        %1226 = vst [vmem:[%s1118 + $0xd4] sm:%s1110] %v1225
        %v1227 = vld [vmem:[%s1117 + $0xcc] sm:%s1110]
        %1228 = vst [vmem:[%s1118 + $0xd8] sm:%s1110] %v1227
        %v1229 = vld [vmem:[%s1117 + $0xdc] sm:%s1110]
        %1230 = vst [vmem:[%s1118 + $0xdc] sm:%s1110] %v1229
        %v1231 = vld [vmem:[%s1117 + $0xe0] sm:%s1110]
        %1232 = vst [vmem:[%s1118 + $0xe0] sm:%s1110] %v1231
        %v1233 = vld [vmem:[%s1117 + $0xf0] sm:%s1110]
        %1234 = vst [vmem:[%s1118 + $0xe4] sm:%s1110] %v1233
        %v1235 = vld [vmem:[%s1117 + $0xe4] sm:%s1110]
        %1236 = vst [vmem:[%s1118 + $0xe8] sm:%s1110] %v1235
        %v1237 = vld [vmem:[%s1117 + $0xf4] sm:%s1110]
        %1238 = vst [vmem:[%s1118 + $0xec] sm:%s1110] %v1237
        %v1239 = vld [vmem:[%s1117 + $0xe8] sm:%s1110]
        %1240 = vst [vmem:[%s1118 + $0xf0] sm:%s1110] %v1239
        %v1241 = vld [vmem:[%s1117 + $0xf8] sm:%s1110]
        %1242 = vst [vmem:[%s1118 + $0xf4] sm:%s1110] %v1241
        %v1243 = vld [vmem:[%s1117 + $0xec] sm:%s1110]
        %1244 = vst [vmem:[%s1118 + $0xf8] sm:%s1110] %v1243
        %v1245 = vld [vmem:[%s1117 + $0xfc] sm:%s1110]
        %1246 = vst [vmem:[%s1118 + $0xfc] sm:%s1110] %v1245
      $region171: #{model_1_3_forward.1} parent=158 // loop_footer
        %s1116 = sadd.s32 1, %s1112
      $region172: #{model_1_3_forward.1} parent=158 // loop_footer_branch
        %1111 = sbr.rel target = $region168
      $region173: #{model_1_3_forward.1} parent=158 // loop_exit
        _
    $region159: #{model_1_3_forward.1} parent=143 // pred_fallthru
      _
  $region144: #{model_1_3_forward.1} parent=0 // pred_fallthru
    _
  // Predicated region
  $region145: #{model_1_3_forward.1} parent=0 // pred_check
    %p952 = pneg %p948
  $region146: #{model_1_3_forward.1} parent=0 // pred_check_branch
    %954 = sbr.rel (%p952) target = $region148
  $region147: #{model_1_3_forward.1} parent=0 // pred_region
    %s955 = sshllo.u32 0, 4
    loop: start=0, step=1, limit=1
    $region149: #{model_1_3_forward.1} parent=147 // loop_pre_header
      _
    $region150: #{model_1_3_forward.1} parent=147 // loop_header
      %s957 = sphi 0, %s961
      %p958 = scmp.ge.s32.totalorder %s957, 1
      %s962 = sphi %s9, %s9
      %s963 = sphi [#allocation12], [#allocation12]
    $region151: #{model_1_3_forward.1} parent=147 // loop_header_branch
      %960 = sbr.rel (%p958) target = $region155
    $region152: #{model_1_3_forward.1} parent=147 // loop_body
      %v964 = vld [vmem:[%s962] sm:%s955]
      %965 = vst [vmem:[%s963] sm:%s955] %v964
      %v966 = vld [vmem:[%s962 + $0x10] sm:%s955]
      %967 = vst [vmem:[%s963 + $0x4] sm:%s955] %v966
      %v968 = vld [vmem:[%s962 + $0x4] sm:%s955]
      %969 = vst [vmem:[%s963 + $0x8] sm:%s955] %v968
      %v970 = vld [vmem:[%s962 + $0x14] sm:%s955]
      %971 = vst [vmem:[%s963 + $0xc] sm:%s955] %v970
      %v972 = vld [vmem:[%s962 + $0x8] sm:%s955]
      %973 = vst [vmem:[%s963 + $0x10] sm:%s955] %v972
      %v974 = vld [vmem:[%s962 + $0x18] sm:%s955]
      %975 = vst [vmem:[%s963 + $0x14] sm:%s955] %v974
      %v976 = vld [vmem:[%s962 + $0xc] sm:%s955]
      %977 = vst [vmem:[%s963 + $0x18] sm:%s955] %v976
      %v978 = vld [vmem:[%s962 + $0x1c] sm:%s955]
      %979 = vst [vmem:[%s963 + $0x1c] sm:%s955] %v978
      %v980 = vld [vmem:[%s962 + $0x20] sm:%s955]
      %981 = vst [vmem:[%s963 + $0x20] sm:%s955] %v980
      %v982 = vld [vmem:[%s962 + $0x30] sm:%s955]
      %983 = vst [vmem:[%s963 + $0x24] sm:%s955] %v982
      %v984 = vld [vmem:[%s962 + $0x24] sm:%s955]
      %985 = vst [vmem:[%s963 + $0x28] sm:%s955] %v984
      %v986 = vld [vmem:[%s962 + $0x34] sm:%s955]
      %987 = vst [vmem:[%s963 + $0x2c] sm:%s955] %v986
      %v988 = vld [vmem:[%s962 + $0x28] sm:%s955]
      %989 = vst [vmem:[%s963 + $0x30] sm:%s955] %v988
      %v990 = vld [vmem:[%s962 + $0x38] sm:%s955]
      %991 = vst [vmem:[%s963 + $0x34] sm:%s955] %v990
      %v992 = vld [vmem:[%s962 + $0x2c] sm:%s955]
      %993 = vst [vmem:[%s963 + $0x38] sm:%s955] %v992
      %v994 = vld [vmem:[%s962 + $0x3c] sm:%s955]
      %995 = vst [vmem:[%s963 + $0x3c] sm:%s955] %v994
      %v996 = vld [vmem:[%s962 + $0x40] sm:%s955]
      %997 = vst [vmem:[%s963 + $0x40] sm:%s955] %v996
      %v998 = vld [vmem:[%s962 + $0x50] sm:%s955]
      %999 = vst [vmem:[%s963 + $0x44] sm:%s955] %v998
      %v1000 = vld [vmem:[%s962 + $0x44] sm:%s955]
      %1001 = vst [vmem:[%s963 + $0x48] sm:%s955] %v1000
      %v1002 = vld [vmem:[%s962 + $0x54] sm:%s955]
      %1003 = vst [vmem:[%s963 + $0x4c] sm:%s955] %v1002
      %v1004 = vld [vmem:[%s962 + $0x48] sm:%s955]
      %1005 = vst [vmem:[%s963 + $0x50] sm:%s955] %v1004
      %v1006 = vld [vmem:[%s962 + $0x58] sm:%s955]
      %1007 = vst [vmem:[%s963 + $0x54] sm:%s955] %v1006
      %v1008 = vld [vmem:[%s962 + $0x4c] sm:%s955]
      %1009 = vst [vmem:[%s963 + $0x58] sm:%s955] %v1008
      %v1010 = vld [vmem:[%s962 + $0x5c] sm:%s955]
      %1011 = vst [vmem:[%s963 + $0x5c] sm:%s955] %v1010
      %v1012 = vld [vmem:[%s962 + $0x60] sm:%s955]
      %1013 = vst [vmem:[%s963 + $0x60] sm:%s955] %v1012
      %v1014 = vld [vmem:[%s962 + $0x70] sm:%s955]
      %1015 = vst [vmem:[%s963 + $0x64] sm:%s955] %v1014
      %v1016 = vld [vmem:[%s962 + $0x64] sm:%s955]
      %1017 = vst [vmem:[%s963 + $0x68] sm:%s955] %v1016
      %v1018 = vld [vmem:[%s962 + $0x74] sm:%s955]
      %1019 = vst [vmem:[%s963 + $0x6c] sm:%s955] %v1018
      %v1020 = vld [vmem:[%s962 + $0x68] sm:%s955]
      %1021 = vst [vmem:[%s963 + $0x70] sm:%s955] %v1020
      %v1022 = vld [vmem:[%s962 + $0x78] sm:%s955]
      %1023 = vst [vmem:[%s963 + $0x74] sm:%s955] %v1022
      %v1024 = vld [vmem:[%s962 + $0x6c] sm:%s955]
      %1025 = vst [vmem:[%s963 + $0x78] sm:%s955] %v1024
      %v1026 = vld [vmem:[%s962 + $0x7c] sm:%s955]
      %1027 = vst [vmem:[%s963 + $0x7c] sm:%s955] %v1026
      %v1028 = vld [vmem:[%s962 + $0x80] sm:%s955]
      %1029 = vst [vmem:[%s963 + $0x80] sm:%s955] %v1028
      %v1030 = vld [vmem:[%s962 + $0x90] sm:%s955]
      %1031 = vst [vmem:[%s963 + $0x84] sm:%s955] %v1030
      %v1032 = vld [vmem:[%s962 + $0x84] sm:%s955]
      %1033 = vst [vmem:[%s963 + $0x88] sm:%s955] %v1032
      %v1034 = vld [vmem:[%s962 + $0x94] sm:%s955]
      %1035 = vst [vmem:[%s963 + $0x8c] sm:%s955] %v1034
      %v1036 = vld [vmem:[%s962 + $0x88] sm:%s955]
      %1037 = vst [vmem:[%s963 + $0x90] sm:%s955] %v1036
      %v1038 = vld [vmem:[%s962 + $0x98] sm:%s955]
      %1039 = vst [vmem:[%s963 + $0x94] sm:%s955] %v1038
      %v1040 = vld [vmem:[%s962 + $0x8c] sm:%s955]
      %1041 = vst [vmem:[%s963 + $0x98] sm:%s955] %v1040
      %v1042 = vld [vmem:[%s962 + $0x9c] sm:%s955]
      %1043 = vst [vmem:[%s963 + $0x9c] sm:%s955] %v1042
      %v1044 = vld [vmem:[%s962 + $0xa0] sm:%s955]
      %1045 = vst [vmem:[%s963 + $0xa0] sm:%s955] %v1044
      %v1046 = vld [vmem:[%s962 + $0xb0] sm:%s955]
      %1047 = vst [vmem:[%s963 + $0xa4] sm:%s955] %v1046
      %v1048 = vld [vmem:[%s962 + $0xa4] sm:%s955]
      %1049 = vst [vmem:[%s963 + $0xa8] sm:%s955] %v1048
      %v1050 = vld [vmem:[%s962 + $0xb4] sm:%s955]
      %1051 = vst [vmem:[%s963 + $0xac] sm:%s955] %v1050
      %v1052 = vld [vmem:[%s962 + $0xa8] sm:%s955]
      %1053 = vst [vmem:[%s963 + $0xb0] sm:%s955] %v1052
      %v1054 = vld [vmem:[%s962 + $0xb8] sm:%s955]
      %1055 = vst [vmem:[%s963 + $0xb4] sm:%s955] %v1054
      %v1056 = vld [vmem:[%s962 + $0xac] sm:%s955]
      %1057 = vst [vmem:[%s963 + $0xb8] sm:%s955] %v1056
      %v1058 = vld [vmem:[%s962 + $0xbc] sm:%s955]
      %1059 = vst [vmem:[%s963 + $0xbc] sm:%s955] %v1058
      %v1060 = vld [vmem:[%s962 + $0xc0] sm:%s955]
      %1061 = vst [vmem:[%s963 + $0xc0] sm:%s955] %v1060
      %v1062 = vld [vmem:[%s962 + $0xd0] sm:%s955]
      %1063 = vst [vmem:[%s963 + $0xc4] sm:%s955] %v1062
      %v1064 = vld [vmem:[%s962 + $0xc4] sm:%s955]
      %1065 = vst [vmem:[%s963 + $0xc8] sm:%s955] %v1064
      %v1066 = vld [vmem:[%s962 + $0xd4] sm:%s955]
      %1067 = vst [vmem:[%s963 + $0xcc] sm:%s955] %v1066
      %v1068 = vld [vmem:[%s962 + $0xc8] sm:%s955]
      %1069 = vst [vmem:[%s963 + $0xd0] sm:%s955] %v1068
      %v1070 = vld [vmem:[%s962 + $0xd8] sm:%s955]
      %1071 = vst [vmem:[%s963 + $0xd4] sm:%s955] %v1070
      %v1072 = vld [vmem:[%s962 + $0xcc] sm:%s955]
      %1073 = vst [vmem:[%s963 + $0xd8] sm:%s955] %v1072
      %v1074 = vld [vmem:[%s962 + $0xdc] sm:%s955]
      %1075 = vst [vmem:[%s963 + $0xdc] sm:%s955] %v1074
      %v1076 = vld [vmem:[%s962 + $0xe0] sm:%s955]
      %1077 = vst [vmem:[%s963 + $0xe0] sm:%s955] %v1076
      %v1078 = vld [vmem:[%s962 + $0xf0] sm:%s955]
      %1079 = vst [vmem:[%s963 + $0xe4] sm:%s955] %v1078
      %v1080 = vld [vmem:[%s962 + $0xe4] sm:%s955]
      %1081 = vst [vmem:[%s963 + $0xe8] sm:%s955] %v1080
      %v1082 = vld [vmem:[%s962 + $0xf4] sm:%s955]
      %1083 = vst [vmem:[%s963 + $0xec] sm:%s955] %v1082
      %v1084 = vld [vmem:[%s962 + $0xe8] sm:%s955]
      %1085 = vst [vmem:[%s963 + $0xf0] sm:%s955] %v1084
      %v1086 = vld [vmem:[%s962 + $0xf8] sm:%s955]
      %1087 = vst [vmem:[%s963 + $0xf4] sm:%s955] %v1086
      %v1088 = vld [vmem:[%s962 + $0xec] sm:%s955]
      %1089 = vst [vmem:[%s963 + $0xf8] sm:%s955] %v1088
      %v1090 = vld [vmem:[%s962 + $0xfc] sm:%s955]
      %1091 = vst [vmem:[%s963 + $0xfc] sm:%s955] %v1090
    $region153: #{model_1_3_forward.1} parent=147 // loop_footer
      %s961 = sadd.s32 1, %s957
    $region154: #{model_1_3_forward.1} parent=147 // loop_footer_branch
      %956 = sbr.rel target = $region150
    $region155: #{model_1_3_forward.1} parent=147 // loop_exit
      _
  $region148: #{model_1_3_forward.1} parent=0 // pred_fallthru
    _
  // Predicated region
  $region174: #{model_1_3_forward.1} parent=0 // pred_check
    _
  $region175: #{model_1_3_forward.1} parent=0 // pred_check_branch
    %1249 = sbr.rel (0) target = $region177
  $region176: #{model_1_3_forward.1} parent=0 // pred_region
    %1250 = vsyncadd %s946, 4096
  $region177: #{model_1_3_forward.1} parent=0 // pred_fallthru
    _
  %s1251 = scalar_lea.sflag [#allocation14], 4
  %p1253 = scmp.lt.u32.totalorder 4, 8
  %p1254 = pneg %p1253
  // Predicated region
  $region178: #{model_1_3_forward.1} parent=0 // pred_check
    _
  $region179: #{model_1_3_forward.1} parent=0 // pred_check_branch
    %1256 = sbr.rel (%p1253) target = $region181
  $region180: #{model_1_3_forward.1} parent=0 // pred_region
    %s1397 = sand.u32 4, 7
    %p1398 = scmp.eq.s32.totalorder %s1397, 0
    %p1399 = pneg %p1398
    // Predicated region
    $region193: #{model_1_3_forward.1} parent=180 // pred_check
      _
    $region194: #{model_1_3_forward.1} parent=180 // pred_check_branch
      %1401 = sbr.rel (%p1398) target = $region196
    $region195: #{model_1_3_forward.1} parent=180 // pred_region
      %s1402 = sand.u32 4, 7
      %s1403 = ssub.s32 4, %s1402
      %s1404 = scalar_lea.vmem %s10, %s1403
      %s1405 = ssub.s32 4, %s1402
      %s1406 = scalar_lea.vmem [#allocation13], %s1405
      loop: start=0, step=1, limit=1
      $region197: #{model_1_3_forward.1} parent=195 // loop_pre_header
        _
      $region198: #{model_1_3_forward.1} parent=195 // loop_header
        %s1408 = sphi 0, %s1412
        %p1409 = scmp.ge.s32.totalorder %s1408, 1
        %s1413 = sphi %s10, %s10
        %s1414 = sphi [#allocation13], [#allocation13]
      $region199: #{model_1_3_forward.1} parent=195 // loop_header_branch
        %1411 = sbr.rel (%p1409) target = $region203
      $region200: #{model_1_3_forward.1} parent=195 // loop_body
        _
      $region201: #{model_1_3_forward.1} parent=195 // loop_footer
        %s1412 = sadd.s32 1, %s1408
      $region202: #{model_1_3_forward.1} parent=195 // loop_footer_branch
        %1407 = sbr.rel target = $region198
      $region203: #{model_1_3_forward.1} parent=195 // loop_exit
        _
      %s1415 = sshllo.u32 0, %s1402
      loop: start=0, step=1, limit=1
      $region204: #{model_1_3_forward.1} parent=195 // loop_pre_header
        _
      $region205: #{model_1_3_forward.1} parent=195 // loop_header
        %s1417 = sphi 0, %s1421
        %p1418 = scmp.ge.s32.totalorder %s1417, 1
        %s1422 = sphi %s1404, %s1404
        %s1423 = sphi %s1406, %s1406
      $region206: #{model_1_3_forward.1} parent=195 // loop_header_branch
        %1420 = sbr.rel (%p1418) target = $region210
      $region207: #{model_1_3_forward.1} parent=195 // loop_body
        %v1424 = vld [vmem:[%s1422] sm:%s1415]
        %1425 = vst [vmem:[%s1423] sm:%s1415] %v1424
        %v1426 = vld [vmem:[%s1422 + $0x10] sm:%s1415]
        %1427 = vst [vmem:[%s1423 + $0x4] sm:%s1415] %v1426
        %v1428 = vld [vmem:[%s1422 + $0x4] sm:%s1415]
        %1429 = vst [vmem:[%s1423 + $0x8] sm:%s1415] %v1428
        %v1430 = vld [vmem:[%s1422 + $0x14] sm:%s1415]
        %1431 = vst [vmem:[%s1423 + $0xc] sm:%s1415] %v1430
        %v1432 = vld [vmem:[%s1422 + $0x8] sm:%s1415]
        %1433 = vst [vmem:[%s1423 + $0x10] sm:%s1415] %v1432
        %v1434 = vld [vmem:[%s1422 + $0x18] sm:%s1415]
        %1435 = vst [vmem:[%s1423 + $0x14] sm:%s1415] %v1434
        %v1436 = vld [vmem:[%s1422 + $0xc] sm:%s1415]
        %1437 = vst [vmem:[%s1423 + $0x18] sm:%s1415] %v1436
        %v1438 = vld [vmem:[%s1422 + $0x1c] sm:%s1415]
        %1439 = vst [vmem:[%s1423 + $0x1c] sm:%s1415] %v1438
        %v1440 = vld [vmem:[%s1422 + $0x20] sm:%s1415]
        %1441 = vst [vmem:[%s1423 + $0x20] sm:%s1415] %v1440
        %v1442 = vld [vmem:[%s1422 + $0x30] sm:%s1415]
        %1443 = vst [vmem:[%s1423 + $0x24] sm:%s1415] %v1442
        %v1444 = vld [vmem:[%s1422 + $0x24] sm:%s1415]
        %1445 = vst [vmem:[%s1423 + $0x28] sm:%s1415] %v1444
        %v1446 = vld [vmem:[%s1422 + $0x34] sm:%s1415]
        %1447 = vst [vmem:[%s1423 + $0x2c] sm:%s1415] %v1446
        %v1448 = vld [vmem:[%s1422 + $0x28] sm:%s1415]
        %1449 = vst [vmem:[%s1423 + $0x30] sm:%s1415] %v1448
        %v1450 = vld [vmem:[%s1422 + $0x38] sm:%s1415]
        %1451 = vst [vmem:[%s1423 + $0x34] sm:%s1415] %v1450
        %v1452 = vld [vmem:[%s1422 + $0x2c] sm:%s1415]
        %1453 = vst [vmem:[%s1423 + $0x38] sm:%s1415] %v1452
        %v1454 = vld [vmem:[%s1422 + $0x3c] sm:%s1415]
        %1455 = vst [vmem:[%s1423 + $0x3c] sm:%s1415] %v1454
        %v1456 = vld [vmem:[%s1422 + $0x40] sm:%s1415]
        %1457 = vst [vmem:[%s1423 + $0x40] sm:%s1415] %v1456
        %v1458 = vld [vmem:[%s1422 + $0x50] sm:%s1415]
        %1459 = vst [vmem:[%s1423 + $0x44] sm:%s1415] %v1458
        %v1460 = vld [vmem:[%s1422 + $0x44] sm:%s1415]
        %1461 = vst [vmem:[%s1423 + $0x48] sm:%s1415] %v1460
        %v1462 = vld [vmem:[%s1422 + $0x54] sm:%s1415]
        %1463 = vst [vmem:[%s1423 + $0x4c] sm:%s1415] %v1462
        %v1464 = vld [vmem:[%s1422 + $0x48] sm:%s1415]
        %1465 = vst [vmem:[%s1423 + $0x50] sm:%s1415] %v1464
        %v1466 = vld [vmem:[%s1422 + $0x58] sm:%s1415]
        %1467 = vst [vmem:[%s1423 + $0x54] sm:%s1415] %v1466
        %v1468 = vld [vmem:[%s1422 + $0x4c] sm:%s1415]
        %1469 = vst [vmem:[%s1423 + $0x58] sm:%s1415] %v1468
        %v1470 = vld [vmem:[%s1422 + $0x5c] sm:%s1415]
        %1471 = vst [vmem:[%s1423 + $0x5c] sm:%s1415] %v1470
        %v1472 = vld [vmem:[%s1422 + $0x60] sm:%s1415]
        %1473 = vst [vmem:[%s1423 + $0x60] sm:%s1415] %v1472
        %v1474 = vld [vmem:[%s1422 + $0x70] sm:%s1415]
        %1475 = vst [vmem:[%s1423 + $0x64] sm:%s1415] %v1474
        %v1476 = vld [vmem:[%s1422 + $0x64] sm:%s1415]
        %1477 = vst [vmem:[%s1423 + $0x68] sm:%s1415] %v1476
        %v1478 = vld [vmem:[%s1422 + $0x74] sm:%s1415]
        %1479 = vst [vmem:[%s1423 + $0x6c] sm:%s1415] %v1478
        %v1480 = vld [vmem:[%s1422 + $0x68] sm:%s1415]
        %1481 = vst [vmem:[%s1423 + $0x70] sm:%s1415] %v1480
        %v1482 = vld [vmem:[%s1422 + $0x78] sm:%s1415]
        %1483 = vst [vmem:[%s1423 + $0x74] sm:%s1415] %v1482
        %v1484 = vld [vmem:[%s1422 + $0x6c] sm:%s1415]
        %1485 = vst [vmem:[%s1423 + $0x78] sm:%s1415] %v1484
        %v1486 = vld [vmem:[%s1422 + $0x7c] sm:%s1415]
        %1487 = vst [vmem:[%s1423 + $0x7c] sm:%s1415] %v1486
        %v1488 = vld [vmem:[%s1422 + $0x80] sm:%s1415]
        %1489 = vst [vmem:[%s1423 + $0x80] sm:%s1415] %v1488
        %v1490 = vld [vmem:[%s1422 + $0x90] sm:%s1415]
        %1491 = vst [vmem:[%s1423 + $0x84] sm:%s1415] %v1490
        %v1492 = vld [vmem:[%s1422 + $0x84] sm:%s1415]
        %1493 = vst [vmem:[%s1423 + $0x88] sm:%s1415] %v1492
        %v1494 = vld [vmem:[%s1422 + $0x94] sm:%s1415]
        %1495 = vst [vmem:[%s1423 + $0x8c] sm:%s1415] %v1494
        %v1496 = vld [vmem:[%s1422 + $0x88] sm:%s1415]
        %1497 = vst [vmem:[%s1423 + $0x90] sm:%s1415] %v1496
        %v1498 = vld [vmem:[%s1422 + $0x98] sm:%s1415]
        %1499 = vst [vmem:[%s1423 + $0x94] sm:%s1415] %v1498
        %v1500 = vld [vmem:[%s1422 + $0x8c] sm:%s1415]
        %1501 = vst [vmem:[%s1423 + $0x98] sm:%s1415] %v1500
        %v1502 = vld [vmem:[%s1422 + $0x9c] sm:%s1415]
        %1503 = vst [vmem:[%s1423 + $0x9c] sm:%s1415] %v1502
        %v1504 = vld [vmem:[%s1422 + $0xa0] sm:%s1415]
        %1505 = vst [vmem:[%s1423 + $0xa0] sm:%s1415] %v1504
        %v1506 = vld [vmem:[%s1422 + $0xb0] sm:%s1415]
        %1507 = vst [vmem:[%s1423 + $0xa4] sm:%s1415] %v1506
        %v1508 = vld [vmem:[%s1422 + $0xa4] sm:%s1415]
        %1509 = vst [vmem:[%s1423 + $0xa8] sm:%s1415] %v1508
        %v1510 = vld [vmem:[%s1422 + $0xb4] sm:%s1415]
        %1511 = vst [vmem:[%s1423 + $0xac] sm:%s1415] %v1510
        %v1512 = vld [vmem:[%s1422 + $0xa8] sm:%s1415]
        %1513 = vst [vmem:[%s1423 + $0xb0] sm:%s1415] %v1512
        %v1514 = vld [vmem:[%s1422 + $0xb8] sm:%s1415]
        %1515 = vst [vmem:[%s1423 + $0xb4] sm:%s1415] %v1514
        %v1516 = vld [vmem:[%s1422 + $0xac] sm:%s1415]
        %1517 = vst [vmem:[%s1423 + $0xb8] sm:%s1415] %v1516
        %v1518 = vld [vmem:[%s1422 + $0xbc] sm:%s1415]
        %1519 = vst [vmem:[%s1423 + $0xbc] sm:%s1415] %v1518
        %v1520 = vld [vmem:[%s1422 + $0xc0] sm:%s1415]
        %1521 = vst [vmem:[%s1423 + $0xc0] sm:%s1415] %v1520
        %v1522 = vld [vmem:[%s1422 + $0xd0] sm:%s1415]
        %1523 = vst [vmem:[%s1423 + $0xc4] sm:%s1415] %v1522
        %v1524 = vld [vmem:[%s1422 + $0xc4] sm:%s1415]
        %1525 = vst [vmem:[%s1423 + $0xc8] sm:%s1415] %v1524
        %v1526 = vld [vmem:[%s1422 + $0xd4] sm:%s1415]
        %1527 = vst [vmem:[%s1423 + $0xcc] sm:%s1415] %v1526
        %v1528 = vld [vmem:[%s1422 + $0xc8] sm:%s1415]
        %1529 = vst [vmem:[%s1423 + $0xd0] sm:%s1415] %v1528
        %v1530 = vld [vmem:[%s1422 + $0xd8] sm:%s1415]
        %1531 = vst [vmem:[%s1423 + $0xd4] sm:%s1415] %v1530
        %v1532 = vld [vmem:[%s1422 + $0xcc] sm:%s1415]
        %1533 = vst [vmem:[%s1423 + $0xd8] sm:%s1415] %v1532
        %v1534 = vld [vmem:[%s1422 + $0xdc] sm:%s1415]
        %1535 = vst [vmem:[%s1423 + $0xdc] sm:%s1415] %v1534
        %v1536 = vld [vmem:[%s1422 + $0xe0] sm:%s1415]
        %1537 = vst [vmem:[%s1423 + $0xe0] sm:%s1415] %v1536
        %v1538 = vld [vmem:[%s1422 + $0xf0] sm:%s1415]
        %1539 = vst [vmem:[%s1423 + $0xe4] sm:%s1415] %v1538
        %v1540 = vld [vmem:[%s1422 + $0xe4] sm:%s1415]
        %1541 = vst [vmem:[%s1423 + $0xe8] sm:%s1415] %v1540
        %v1542 = vld [vmem:[%s1422 + $0xf4] sm:%s1415]
        %1543 = vst [vmem:[%s1423 + $0xec] sm:%s1415] %v1542
        %v1544 = vld [vmem:[%s1422 + $0xe8] sm:%s1415]
        %1545 = vst [vmem:[%s1423 + $0xf0] sm:%s1415] %v1544
        %v1546 = vld [vmem:[%s1422 + $0xf8] sm:%s1415]
        %1547 = vst [vmem:[%s1423 + $0xf4] sm:%s1415] %v1546
        %v1548 = vld [vmem:[%s1422 + $0xec] sm:%s1415]
        %1549 = vst [vmem:[%s1423 + $0xf8] sm:%s1415] %v1548
        %v1550 = vld [vmem:[%s1422 + $0xfc] sm:%s1415]
        %1551 = vst [vmem:[%s1423 + $0xfc] sm:%s1415] %v1550
      $region208: #{model_1_3_forward.1} parent=195 // loop_footer
        %s1421 = sadd.s32 1, %s1417
      $region209: #{model_1_3_forward.1} parent=195 // loop_footer_branch
        %1416 = sbr.rel target = $region205
      $region210: #{model_1_3_forward.1} parent=195 // loop_exit
        _
    $region196: #{model_1_3_forward.1} parent=180 // pred_fallthru
      _
  $region181: #{model_1_3_forward.1} parent=0 // pred_fallthru
    _
  // Predicated region
  $region182: #{model_1_3_forward.1} parent=0 // pred_check
    %p1257 = pneg %p1253
  $region183: #{model_1_3_forward.1} parent=0 // pred_check_branch
    %1259 = sbr.rel (%p1257) target = $region185
  $region184: #{model_1_3_forward.1} parent=0 // pred_region
    %s1260 = sshllo.u32 0, 4
    loop: start=0, step=1, limit=1
    $region186: #{model_1_3_forward.1} parent=184 // loop_pre_header
      _
    $region187: #{model_1_3_forward.1} parent=184 // loop_header
      %s1262 = sphi 0, %s1266
      %p1263 = scmp.ge.s32.totalorder %s1262, 1
      %s1267 = sphi %s10, %s10
      %s1268 = sphi [#allocation13], [#allocation13]
    $region188: #{model_1_3_forward.1} parent=184 // loop_header_branch
      %1265 = sbr.rel (%p1263) target = $region192
    $region189: #{model_1_3_forward.1} parent=184 // loop_body
      %v1269 = vld [vmem:[%s1267] sm:%s1260]
      %1270 = vst [vmem:[%s1268] sm:%s1260] %v1269
      %v1271 = vld [vmem:[%s1267 + $0x10] sm:%s1260]
      %1272 = vst [vmem:[%s1268 + $0x4] sm:%s1260] %v1271
      %v1273 = vld [vmem:[%s1267 + $0x4] sm:%s1260]
      %1274 = vst [vmem:[%s1268 + $0x8] sm:%s1260] %v1273
      %v1275 = vld [vmem:[%s1267 + $0x14] sm:%s1260]
      %1276 = vst [vmem:[%s1268 + $0xc] sm:%s1260] %v1275
      %v1277 = vld [vmem:[%s1267 + $0x8] sm:%s1260]
      %1278 = vst [vmem:[%s1268 + $0x10] sm:%s1260] %v1277
      %v1279 = vld [vmem:[%s1267 + $0x18] sm:%s1260]
      %1280 = vst [vmem:[%s1268 + $0x14] sm:%s1260] %v1279
      %v1281 = vld [vmem:[%s1267 + $0xc] sm:%s1260]
      %1282 = vst [vmem:[%s1268 + $0x18] sm:%s1260] %v1281
      %v1283 = vld [vmem:[%s1267 + $0x1c] sm:%s1260]
      %1284 = vst [vmem:[%s1268 + $0x1c] sm:%s1260] %v1283
      %v1285 = vld [vmem:[%s1267 + $0x20] sm:%s1260]
      %1286 = vst [vmem:[%s1268 + $0x20] sm:%s1260] %v1285
      %v1287 = vld [vmem:[%s1267 + $0x30] sm:%s1260]
      %1288 = vst [vmem:[%s1268 + $0x24] sm:%s1260] %v1287
      %v1289 = vld [vmem:[%s1267 + $0x24] sm:%s1260]
      %1290 = vst [vmem:[%s1268 + $0x28] sm:%s1260] %v1289
      %v1291 = vld [vmem:[%s1267 + $0x34] sm:%s1260]
      %1292 = vst [vmem:[%s1268 + $0x2c] sm:%s1260] %v1291
      %v1293 = vld [vmem:[%s1267 + $0x28] sm:%s1260]
      %1294 = vst [vmem:[%s1268 + $0x30] sm:%s1260] %v1293
      %v1295 = vld [vmem:[%s1267 + $0x38] sm:%s1260]
      %1296 = vst [vmem:[%s1268 + $0x34] sm:%s1260] %v1295
      %v1297 = vld [vmem:[%s1267 + $0x2c] sm:%s1260]
      %1298 = vst [vmem:[%s1268 + $0x38] sm:%s1260] %v1297
      %v1299 = vld [vmem:[%s1267 + $0x3c] sm:%s1260]
      %1300 = vst [vmem:[%s1268 + $0x3c] sm:%s1260] %v1299
      %v1301 = vld [vmem:[%s1267 + $0x40] sm:%s1260]
      %1302 = vst [vmem:[%s1268 + $0x40] sm:%s1260] %v1301
      %v1303 = vld [vmem:[%s1267 + $0x50] sm:%s1260]
      %1304 = vst [vmem:[%s1268 + $0x44] sm:%s1260] %v1303
      %v1305 = vld [vmem:[%s1267 + $0x44] sm:%s1260]
      %1306 = vst [vmem:[%s1268 + $0x48] sm:%s1260] %v1305
      %v1307 = vld [vmem:[%s1267 + $0x54] sm:%s1260]
      %1308 = vst [vmem:[%s1268 + $0x4c] sm:%s1260] %v1307
      %v1309 = vld [vmem:[%s1267 + $0x48] sm:%s1260]
      %1310 = vst [vmem:[%s1268 + $0x50] sm:%s1260] %v1309
      %v1311 = vld [vmem:[%s1267 + $0x58] sm:%s1260]
      %1312 = vst [vmem:[%s1268 + $0x54] sm:%s1260] %v1311
      %v1313 = vld [vmem:[%s1267 + $0x4c] sm:%s1260]
      %1314 = vst [vmem:[%s1268 + $0x58] sm:%s1260] %v1313
      %v1315 = vld [vmem:[%s1267 + $0x5c] sm:%s1260]
      %1316 = vst [vmem:[%s1268 + $0x5c] sm:%s1260] %v1315
      %v1317 = vld [vmem:[%s1267 + $0x60] sm:%s1260]
      %1318 = vst [vmem:[%s1268 + $0x60] sm:%s1260] %v1317
      %v1319 = vld [vmem:[%s1267 + $0x70] sm:%s1260]
      %1320 = vst [vmem:[%s1268 + $0x64] sm:%s1260] %v1319
      %v1321 = vld [vmem:[%s1267 + $0x64] sm:%s1260]
      %1322 = vst [vmem:[%s1268 + $0x68] sm:%s1260] %v1321
      %v1323 = vld [vmem:[%s1267 + $0x74] sm:%s1260]
      %1324 = vst [vmem:[%s1268 + $0x6c] sm:%s1260] %v1323
      %v1325 = vld [vmem:[%s1267 + $0x68] sm:%s1260]
      %1326 = vst [vmem:[%s1268 + $0x70] sm:%s1260] %v1325
      %v1327 = vld [vmem:[%s1267 + $0x78] sm:%s1260]
      %1328 = vst [vmem:[%s1268 + $0x74] sm:%s1260] %v1327
      %v1329 = vld [vmem:[%s1267 + $0x6c] sm:%s1260]
      %1330 = vst [vmem:[%s1268 + $0x78] sm:%s1260] %v1329
      %v1331 = vld [vmem:[%s1267 + $0x7c] sm:%s1260]
      %1332 = vst [vmem:[%s1268 + $0x7c] sm:%s1260] %v1331
      %v1333 = vld [vmem:[%s1267 + $0x80] sm:%s1260]
      %1334 = vst [vmem:[%s1268 + $0x80] sm:%s1260] %v1333
      %v1335 = vld [vmem:[%s1267 + $0x90] sm:%s1260]
      %1336 = vst [vmem:[%s1268 + $0x84] sm:%s1260] %v1335
      %v1337 = vld [vmem:[%s1267 + $0x84] sm:%s1260]
      %1338 = vst [vmem:[%s1268 + $0x88] sm:%s1260] %v1337
      %v1339 = vld [vmem:[%s1267 + $0x94] sm:%s1260]
      %1340 = vst [vmem:[%s1268 + $0x8c] sm:%s1260] %v1339
      %v1341 = vld [vmem:[%s1267 + $0x88] sm:%s1260]
      %1342 = vst [vmem:[%s1268 + $0x90] sm:%s1260] %v1341
      %v1343 = vld [vmem:[%s1267 + $0x98] sm:%s1260]
      %1344 = vst [vmem:[%s1268 + $0x94] sm:%s1260] %v1343
      %v1345 = vld [vmem:[%s1267 + $0x8c] sm:%s1260]
      %1346 = vst [vmem:[%s1268 + $0x98] sm:%s1260] %v1345
      %v1347 = vld [vmem:[%s1267 + $0x9c] sm:%s1260]
      %1348 = vst [vmem:[%s1268 + $0x9c] sm:%s1260] %v1347
      %v1349 = vld [vmem:[%s1267 + $0xa0] sm:%s1260]
      %1350 = vst [vmem:[%s1268 + $0xa0] sm:%s1260] %v1349
      %v1351 = vld [vmem:[%s1267 + $0xb0] sm:%s1260]
      %1352 = vst [vmem:[%s1268 + $0xa4] sm:%s1260] %v1351
      %v1353 = vld [vmem:[%s1267 + $0xa4] sm:%s1260]
      %1354 = vst [vmem:[%s1268 + $0xa8] sm:%s1260] %v1353
      %v1355 = vld [vmem:[%s1267 + $0xb4] sm:%s1260]
      %1356 = vst [vmem:[%s1268 + $0xac] sm:%s1260] %v1355
      %v1357 = vld [vmem:[%s1267 + $0xa8] sm:%s1260]
      %1358 = vst [vmem:[%s1268 + $0xb0] sm:%s1260] %v1357
      %v1359 = vld [vmem:[%s1267 + $0xb8] sm:%s1260]
      %1360 = vst [vmem:[%s1268 + $0xb4] sm:%s1260] %v1359
      %v1361 = vld [vmem:[%s1267 + $0xac] sm:%s1260]
      %1362 = vst [vmem:[%s1268 + $0xb8] sm:%s1260] %v1361
      %v1363 = vld [vmem:[%s1267 + $0xbc] sm:%s1260]
      %1364 = vst [vmem:[%s1268 + $0xbc] sm:%s1260] %v1363
      %v1365 = vld [vmem:[%s1267 + $0xc0] sm:%s1260]
      %1366 = vst [vmem:[%s1268 + $0xc0] sm:%s1260] %v1365
      %v1367 = vld [vmem:[%s1267 + $0xd0] sm:%s1260]
      %1368 = vst [vmem:[%s1268 + $0xc4] sm:%s1260] %v1367
      %v1369 = vld [vmem:[%s1267 + $0xc4] sm:%s1260]
      %1370 = vst [vmem:[%s1268 + $0xc8] sm:%s1260] %v1369
      %v1371 = vld [vmem:[%s1267 + $0xd4] sm:%s1260]
      %1372 = vst [vmem:[%s1268 + $0xcc] sm:%s1260] %v1371
      %v1373 = vld [vmem:[%s1267 + $0xc8] sm:%s1260]
      %1374 = vst [vmem:[%s1268 + $0xd0] sm:%s1260] %v1373
      %v1375 = vld [vmem:[%s1267 + $0xd8] sm:%s1260]
      %1376 = vst [vmem:[%s1268 + $0xd4] sm:%s1260] %v1375
      %v1377 = vld [vmem:[%s1267 + $0xcc] sm:%s1260]
      %1378 = vst [vmem:[%s1268 + $0xd8] sm:%s1260] %v1377
      %v1379 = vld [vmem:[%s1267 + $0xdc] sm:%s1260]
      %1380 = vst [vmem:[%s1268 + $0xdc] sm:%s1260] %v1379
      %v1381 = vld [vmem:[%s1267 + $0xe0] sm:%s1260]
      %1382 = vst [vmem:[%s1268 + $0xe0] sm:%s1260] %v1381
      %v1383 = vld [vmem:[%s1267 + $0xf0] sm:%s1260]
      %1384 = vst [vmem:[%s1268 + $0xe4] sm:%s1260] %v1383
      %v1385 = vld [vmem:[%s1267 + $0xe4] sm:%s1260]
      %1386 = vst [vmem:[%s1268 + $0xe8] sm:%s1260] %v1385
      %v1387 = vld [vmem:[%s1267 + $0xf4] sm:%s1260]
      %1388 = vst [vmem:[%s1268 + $0xec] sm:%s1260] %v1387
      %v1389 = vld [vmem:[%s1267 + $0xe8] sm:%s1260]
      %1390 = vst [vmem:[%s1268 + $0xf0] sm:%s1260] %v1389
      %v1391 = vld [vmem:[%s1267 + $0xf8] sm:%s1260]
      %1392 = vst [vmem:[%s1268 + $0xf4] sm:%s1260] %v1391
      %v1393 = vld [vmem:[%s1267 + $0xec] sm:%s1260]
      %1394 = vst [vmem:[%s1268 + $0xf8] sm:%s1260] %v1393
      %v1395 = vld [vmem:[%s1267 + $0xfc] sm:%s1260]
      %1396 = vst [vmem:[%s1268 + $0xfc] sm:%s1260] %v1395
    $region190: #{model_1_3_forward.1} parent=184 // loop_footer
      %s1266 = sadd.s32 1, %s1262
    $region191: #{model_1_3_forward.1} parent=184 // loop_footer_branch
      %1261 = sbr.rel target = $region187
    $region192: #{model_1_3_forward.1} parent=184 // loop_exit
      _
  $region185: #{model_1_3_forward.1} parent=0 // pred_fallthru
    _
  // Predicated region
  $region211: #{model_1_3_forward.1} parent=0 // pred_check
    _
  $region212: #{model_1_3_forward.1} parent=0 // pred_check_branch
    %1554 = sbr.rel (0) target = $region214
  $region213: #{model_1_3_forward.1} parent=0 // pred_region
    %1555 = vsyncadd %s1251, 4096
  $region214: #{model_1_3_forward.1} parent=0 // pred_fallthru
    _
  %v1556 = vld [vmem:[%s0] sm:$0xf]
  %v1557 = vld [vmem:[%s0 + $0x4] sm:$0xf]
  %v1558 = vld [vmem:[%s0 + $0x8] sm:$0xf]
  %v1559 = vld [vmem:[%s0 + $0xc] sm:$0xf]
  %v1560 = vld [vmem:[%s0 + $0x10] sm:$0xf]
  %v1561 = vld [vmem:[%s0 + $0x14] sm:$0xf]
  %v1562 = vld [vmem:[%s0 + $0x18] sm:$0xf]
  %v1563 = vld [vmem:[%s0 + $0x1c] sm:$0xf]
  %v1564 = vld [vmem:[%s1] sm:$0xff]
  %v1565 = vld [vmem:[%s1 + $0x8] sm:$0xff]
  %v1566 = vld [vmem:[%s1 + $0x10] sm:$0xff]
  %v1567 = vld [vmem:[%s1 + $0x18] sm:$0xff]
  %v1568 = vld [vmem:[%s1 + $0x20] sm:$0xff]
  %v1569 = vld [vmem:[%s1 + $0x28] sm:$0xff]
  %v1570 = vld [vmem:[%s1 + $0x30] sm:$0xff]
  %v1571 = vld [vmem:[%s1 + $0x38] sm:$0xff]
  %v1572 = vld [vmem:[%s1 + $0x40] sm:$0xff]
  %v1573 = vld [vmem:[%s1 + $0x48] sm:$0xff]
  %v1574 = vld [vmem:[%s1 + $0x50] sm:$0xff]
  %v1575 = vld [vmem:[%s1 + $0x58] sm:$0xff]
  %v1576 = vld [vmem:[%s1 + $0x60] sm:$0xff]
  %v1577 = vld [vmem:[%s1 + $0x68] sm:$0xff]
  %v1578 = vld [vmem:[%s1 + $0x70] sm:$0xff]
  %v1579 = vld [vmem:[%s1 + $0x78] sm:$0xff]
  %v1580 = vld [vmem:[%s1 + $0x80] sm:$0xff]
  %v1581 = vld [vmem:[%s1 + $0x88] sm:$0xff]
  %v1582 = vld [vmem:[%s1 + $0x90] sm:$0xff]
  %v1583 = vld [vmem:[%s1 + $0x98] sm:$0xff]
  %v1584 = vld [vmem:[%s1 + $0xa0] sm:$0xff]
  %v1585 = vld [vmem:[%s1 + $0xa8] sm:$0xff]
  %v1586 = vld [vmem:[%s1 + $0xb0] sm:$0xff]
  %v1587 = vld [vmem:[%s1 + $0xb8] sm:$0xff]
  %v1588 = vld [vmem:[%s1 + $0xc0] sm:$0xff]
  %v1589 = vld [vmem:[%s1 + $0xc8] sm:$0xff]
  %v1590 = vld [vmem:[%s1 + $0xd0] sm:$0xff]
  %v1591 = vld [vmem:[%s1 + $0xd8] sm:$0xff]
  %v1592 = vld [vmem:[%s1 + $0xe0] sm:$0xff]
  %v1593 = vld [vmem:[%s1 + $0xe8] sm:$0xff]
  %v1594 = vld [vmem:[%s1 + $0xf0] sm:$0xff]
  %v1595 = vld [vmem:[%s1 + $0xf8] sm:$0xff]
  %v1596 = vld [vmem:[%s4] sm:$0xf]
  %v1598 = vlaneseq
  %v1599 = vshrl.u32 %v1598, 7
  %v1600 = vsub.s32 0, %v1599
  %v1601 = vrot.slane %v1596, %v1600
  %v1602 = vlaneseq
  %v1603 = vshrl.u32 %v1602, 7
  %v1604 = vsub.s32 1, %v1603
  %v1605 = vrot.slane %v1596, %v1604
  %v1606 = vlaneseq
  %v1607 = vshrl.u32 %v1606, 7
  %v1608 = vsub.s32 2, %v1607
  %v1609 = vrot.slane %v1596, %v1608
  %v1610 = vlaneseq
  %v1611 = vshrl.u32 %v1610, 7
  %v1612 = vsub.s32 3, %v1611
  %v1613 = vrot.slane %v1596, %v1612
  %v1626 = vunpack.c.l.b16 %v1556
  %v1627 = vunpack.c.l.b16 %v1557
  %v1628 = vunpack.c.l.b16 %v1558
  %v1629 = vunpack.c.l.b16 %v1559
  %v1630 = vunpack.c.l.b16 %v1560
  %v1631 = vunpack.c.l.b16 %v1561
  %v1632 = vunpack.c.l.b16 %v1562
  %v1633 = vunpack.c.l.b16 %v1563
  %v1634 = vpack.c.b16 %v1627, %v1626
  %v1635 = vpack.c.b16 %v1629, %v1628
  %v1636 = vpack.c.b16 %v1631, %v1630
  %v1637 = vpack.c.b16 %v1633, %v1632
  %v1674 = vunpack.c.l.b16 %v1564
  %v1675 = vunpack.c.h.b16 %v1564
  %v1676 = vunpack.c.l.b16 %v1565
  %v1677 = vunpack.c.h.b16 %v1565
  %v1678 = vunpack.c.l.b16 %v1566
  %v1679 = vunpack.c.h.b16 %v1566
  %v1680 = vunpack.c.l.b16 %v1567
  %v1681 = vunpack.c.h.b16 %v1567
  %v1682 = vunpack.c.l.b16 %v1568
  %v1683 = vunpack.c.h.b16 %v1568
  %v1684 = vunpack.c.l.b16 %v1569
  %v1685 = vunpack.c.h.b16 %v1569
  %v1686 = vunpack.c.l.b16 %v1570
  %v1687 = vunpack.c.h.b16 %v1570
  %v1688 = vunpack.c.l.b16 %v1571
  %v1689 = vunpack.c.h.b16 %v1571
  %v1690 = vunpack.c.l.b16 %v1572
  %v1691 = vunpack.c.h.b16 %v1572
  %v1692 = vunpack.c.l.b16 %v1573
  %v1693 = vunpack.c.h.b16 %v1573
  %v1694 = vunpack.c.l.b16 %v1574
  %v1695 = vunpack.c.h.b16 %v1574
  %v1696 = vunpack.c.l.b16 %v1575
  %v1697 = vunpack.c.h.b16 %v1575
  %v1698 = vunpack.c.l.b16 %v1576
  %v1699 = vunpack.c.h.b16 %v1576
  %v1700 = vunpack.c.l.b16 %v1577
  %v1701 = vunpack.c.h.b16 %v1577
  %v1702 = vunpack.c.l.b16 %v1578
  %v1703 = vunpack.c.h.b16 %v1578
  %v1704 = vunpack.c.l.b16 %v1579
  %v1705 = vunpack.c.h.b16 %v1579
  %v1706 = vunpack.c.l.b16 %v1580
  %v1707 = vunpack.c.h.b16 %v1580
  %v1708 = vunpack.c.l.b16 %v1581
  %v1709 = vunpack.c.h.b16 %v1581
  %v1710 = vunpack.c.l.b16 %v1582
  %v1711 = vunpack.c.h.b16 %v1582
  %v1712 = vunpack.c.l.b16 %v1583
  %v1713 = vunpack.c.h.b16 %v1583
  %v1714 = vunpack.c.l.b16 %v1584
  %v1715 = vunpack.c.h.b16 %v1584
  %v1716 = vunpack.c.l.b16 %v1585
  %v1717 = vunpack.c.h.b16 %v1585
  %v1718 = vunpack.c.l.b16 %v1586
  %v1719 = vunpack.c.h.b16 %v1586
  %v1720 = vunpack.c.l.b16 %v1587
  %v1721 = vunpack.c.h.b16 %v1587
  %v1722 = vunpack.c.l.b16 %v1588
  %v1723 = vunpack.c.h.b16 %v1588
  %v1724 = vunpack.c.l.b16 %v1589
  %v1725 = vunpack.c.h.b16 %v1589
  %v1726 = vunpack.c.l.b16 %v1590
  %v1727 = vunpack.c.h.b16 %v1590
  %v1728 = vunpack.c.l.b16 %v1591
  %v1729 = vunpack.c.h.b16 %v1591
  %v1730 = vunpack.c.l.b16 %v1592
  %v1731 = vunpack.c.h.b16 %v1592
  %v1732 = vunpack.c.l.b16 %v1593
  %v1733 = vunpack.c.h.b16 %v1593
  %v1734 = vunpack.c.l.b16 %v1594
  %v1735 = vunpack.c.h.b16 %v1594
  %v1736 = vunpack.c.l.b16 %v1595
  %v1737 = vunpack.c.h.b16 %v1595
  %v1738 = vpack.c.b16 %v1678, %v1674
  %v1739 = vpack.c.b16 %v1679, %v1675
  %v1740 = vpack.c.b16 %v1680, %v1676
  %v1741 = vpack.c.b16 %v1681, %v1677
  %v1742 = vpack.c.b16 %v1686, %v1682
  %v1743 = vpack.c.b16 %v1687, %v1683
  %v1744 = vpack.c.b16 %v1688, %v1684
  %v1745 = vpack.c.b16 %v1689, %v1685
  %v1746 = vpack.c.b16 %v1694, %v1690
  %v1747 = vpack.c.b16 %v1695, %v1691
  %v1748 = vpack.c.b16 %v1696, %v1692
  %v1749 = vpack.c.b16 %v1697, %v1693
  %v1750 = vpack.c.b16 %v1702, %v1698
  %v1751 = vpack.c.b16 %v1703, %v1699
  %v1752 = vpack.c.b16 %v1704, %v1700
  %v1753 = vpack.c.b16 %v1705, %v1701
  %v1754 = vpack.c.b16 %v1710, %v1706
  %v1755 = vpack.c.b16 %v1711, %v1707
  %v1756 = vpack.c.b16 %v1712, %v1708
  %v1757 = vpack.c.b16 %v1713, %v1709
  %v1758 = vpack.c.b16 %v1718, %v1714
  %v1759 = vpack.c.b16 %v1719, %v1715
  %v1760 = vpack.c.b16 %v1720, %v1716
  %v1761 = vpack.c.b16 %v1721, %v1717
  %v1762 = vpack.c.b16 %v1726, %v1722
  %v1763 = vpack.c.b16 %v1727, %v1723
  %v1764 = vpack.c.b16 %v1728, %v1724
  %v1765 = vpack.c.b16 %v1729, %v1725
  %v1766 = vpack.c.b16 %v1734, %v1730
  %v1767 = vpack.c.b16 %v1735, %v1731
  %v1768 = vpack.c.b16 %v1736, %v1732
  %v1769 = vpack.c.b16 %v1737, %v1733
  %1802 = vmatprep.subr.bf16.mxu0 %v1739
  %1803 = vmatpush1.bf16.msra.mxu0 %v1738
  %1804 = vmatprep.subr.bf16.mxu0 %v1743
  %1805 = vmatpush1.bf16.msra.mxu0 %v1742
  %1806 = vmatprep.subr.bf16.mxu0 %v1747
  %1807 = vmatpush1.bf16.msra.mxu0 %v1746
  %1808 = vmatprep.subr.bf16.mxu0 %v1751
  %1809 = vmatpush1.bf16.msra.mxu0 %v1750
  %1810 = vmatprep.subr.bf16.mxu0 %v1755
  %1811 = vmatpush1.bf16.msra.mxu0 %v1754
  %1812 = vmatprep.subr.bf16.mxu0 %v1759
  %1813 = vmatpush1.bf16.msra.mxu0 %v1758
  %1814 = vmatprep.subr.bf16.mxu0 %v1763
  %1815 = vmatpush1.bf16.msra.mxu0 %v1762
  %1816 = vmatprep.subr.bf16.mxu0 %v1767
  %1817 = vmatpush1.bf16.msra.mxu0 %v1766
  %1818 = vmatprep.subr.bf16.mxu0 0
  %1819 = vmatpush1.bf16.msra.mxu0 0
  %1820 = vmatprep.subr.bf16.mxu0 0
  %1821 = vmatpush1.bf16.msra.mxu0 0
  %1822 = vmatprep.subr.bf16.mxu0 0
  %1823 = vmatpush1.bf16.msra.mxu0 0
  %1824 = vmatprep.subr.bf16.mxu0 0
  %1825 = vmatpush1.bf16.msra.mxu0 0
  %1826 = vmatprep.subr.bf16.mxu0 0
  %1827 = vmatpush1.bf16.msra.mxu0 0
  %1828 = vmatprep.subr.bf16.mxu0 0
  %1829 = vmatpush1.bf16.msra.mxu0 0
  %1830 = vmatprep.subr.bf16.mxu0 0
  %1831 = vmatpush1.bf16.msra.mxu0 0
  %1832 = vmatprep.subr.bf16.mxu0 0
  %1833 = vmatpush1.bf16.msra.mxu0 0
  %1834 = vmatprep.mubr.bf16.mxu0 0
  %1835 = vmatmul.mubr.bf16.gmra.mrb[0].mxu0 %v1634
  %v1836 = vpop.f32.mrb[0].mxu0
  %v1837 = vadd.f32 %v1601, %v1836
  %v1838 = vpop.f32.mrb[0].mxu0
  %v1839 = vadd.f32 %v1605, %v1838
  %v1840 = vpop.f32.mrb[0].mxu0
  %v1841 = vadd.f32 %v1601, %v1840
  %v1842 = vpop.f32.mrb[0].mxu0
  %v1843 = vadd.f32 %v1605, %v1842
  %1844 = vmatprep.mubr.bf16.mxu0 0
  %1845 = vmatmul.mubr.bf16.gmra.mrb[0].mxu0 %v1635
  %v1846 = vpop.f32.mrb[0].mxu0
  %v1847 = vadd.f32 %v1601, %v1846
  %v1848 = vpop.f32.mrb[0].mxu0
  %v1849 = vadd.f32 %v1605, %v1848
  %v1850 = vpop.f32.mrb[0].mxu0
  %v1851 = vadd.f32 %v1601, %v1850
  %v1852 = vpop.f32.mrb[0].mxu0
  %v1853 = vadd.f32 %v1605, %v1852
  %1854 = vmatprep.mubr.bf16.mxu0 0
  %1855 = vmatmul.mubr.bf16.gmra.mrb[0].mxu0 %v1636
  %v1856 = vpop.f32.mrb[0].mxu0
  %v1857 = vadd.f32 %v1601, %v1856
  %v1858 = vpop.f32.mrb[0].mxu0
  %v1859 = vadd.f32 %v1605, %v1858
  %v1860 = vpop.f32.mrb[0].mxu0
  %v1861 = vadd.f32 %v1601, %v1860
  %v1862 = vpop.f32.mrb[0].mxu0
  %v1863 = vadd.f32 %v1605, %v1862
  %1864 = vmatprep.mubr.bf16.mxu0 0
  %1865 = vmatmul.mubr.bf16.gmra.mrb[0].mxu0 %v1637
  %v1866 = vpop.f32.mrb[0].mxu0
  %v1867 = vadd.f32 %v1601, %v1866
  %v1868 = vpop.f32.mrb[0].mxu0
  %v1869 = vadd.f32 %v1605, %v1868
  %v1870 = vpop.f32.mrb[0].mxu0
  %v1871 = vadd.f32 %v1601, %v1870
  %v1872 = vpop.f32.mrb[0].mxu0
  %v1873 = vadd.f32 %v1605, %v1872
  %1874 = vdwg.mxu0
  %1875 = vmatprep.subr.bf16.mxu0 %v1741
  %1876 = vmatpush1.bf16.msra.mxu0 %v1740
  %1877 = vmatprep.subr.bf16.mxu0 %v1745
  %1878 = vmatpush1.bf16.msra.mxu0 %v1744
  %1879 = vmatprep.subr.bf16.mxu0 %v1749
  %1880 = vmatpush1.bf16.msra.mxu0 %v1748
  %1881 = vmatprep.subr.bf16.mxu0 %v1753
  %1882 = vmatpush1.bf16.msra.mxu0 %v1752
  %1883 = vmatprep.subr.bf16.mxu0 %v1757
  %1884 = vmatpush1.bf16.msra.mxu0 %v1756
  %1885 = vmatprep.subr.bf16.mxu0 %v1761
  %1886 = vmatpush1.bf16.msra.mxu0 %v1760
  %1887 = vmatprep.subr.bf16.mxu0 %v1765
  %1888 = vmatpush1.bf16.msra.mxu0 %v1764
  %1889 = vmatprep.subr.bf16.mxu0 %v1769
  %1890 = vmatpush1.bf16.msra.mxu0 %v1768
  %1891 = vmatprep.subr.bf16.mxu0 0
  %1892 = vmatpush1.bf16.msra.mxu0 0
  %1893 = vmatprep.subr.bf16.mxu0 0
  %1894 = vmatpush1.bf16.msra.mxu0 0
  %1895 = vmatprep.subr.bf16.mxu0 0
  %1896 = vmatpush1.bf16.msra.mxu0 0
  %1897 = vmatprep.subr.bf16.mxu0 0
  %1898 = vmatpush1.bf16.msra.mxu0 0
  %1899 = vmatprep.subr.bf16.mxu0 0
  %1900 = vmatpush1.bf16.msra.mxu0 0
  %1901 = vmatprep.subr.bf16.mxu0 0
  %1902 = vmatpush1.bf16.msra.mxu0 0
  %1903 = vmatprep.subr.bf16.mxu0 0
  %1904 = vmatpush1.bf16.msra.mxu0 0
  %1905 = vmatprep.subr.bf16.mxu0 0
  %1906 = vmatpush1.bf16.msra.mxu0 0
  %1907 = vmatprep.mubr.bf16.mxu0 0
  %1908 = vmatmul.mubr.bf16.gmra.mrb[0].mxu0 %v1634
  %v1909 = vpop.f32.mrb[0].mxu0
  %v1910 = vadd.f32 %v1609, %v1909
  %v1911 = vpop.f32.mrb[0].mxu0
  %v1912 = vadd.f32 %v1613, %v1911
  %v1913 = vpop.f32.mrb[0].mxu0
  %v1914 = vadd.f32 %v1609, %v1913
  %v1915 = vpop.f32.mrb[0].mxu0
  %v1916 = vadd.f32 %v1613, %v1915
  %1917 = vmatprep.mubr.bf16.mxu0 0
  %1918 = vmatmul.mubr.bf16.gmra.mrb[0].mxu0 %v1635
  %v1919 = vpop.f32.mrb[0].mxu0
  %v1920 = vadd.f32 %v1609, %v1919
  %v1921 = vpop.f32.mrb[0].mxu0
  %v1922 = vadd.f32 %v1613, %v1921
  %v1923 = vpop.f32.mrb[0].mxu0
  %v1924 = vadd.f32 %v1609, %v1923
  %v1925 = vpop.f32.mrb[0].mxu0
  %v1926 = vadd.f32 %v1613, %v1925
  %1927 = vmatprep.mubr.bf16.mxu0 0
  %1928 = vmatmul.mubr.bf16.gmra.mrb[0].mxu0 %v1636
  %v1929 = vpop.f32.mrb[0].mxu0
  %v1930 = vadd.f32 %v1609, %v1929
  %v1931 = vpop.f32.mrb[0].mxu0
  %v1932 = vadd.f32 %v1613, %v1931
  %v1933 = vpop.f32.mrb[0].mxu0
  %v1934 = vadd.f32 %v1609, %v1933
  %v1935 = vpop.f32.mrb[0].mxu0
  %v1936 = vadd.f32 %v1613, %v1935
  %1937 = vmatprep.mubr.bf16.mxu0 0
  %1938 = vmatmul.mubr.bf16.gmra.mrb[0].mxu0 %v1637
  %v1939 = vpop.f32.mrb[0].mxu0
  %v1940 = vadd.f32 %v1609, %v1939
  %v1941 = vpop.f32.mrb[0].mxu0
  %v1942 = vadd.f32 %v1613, %v1941
  %v1943 = vpop.f32.mrb[0].mxu0
  %v1944 = vadd.f32 %v1609, %v1943
  %v1945 = vpop.f32.mrb[0].mxu0
  %v1946 = vadd.f32 %v1613, %v1945
  %1947 = vdwg.mxu0
  %1948 = vst [vmem:[#allocation5] sm:$0xff] %v1837
  %1949 = vst [vmem:[#allocation5 + $0x8] sm:$0xff] %v1839
  %1950 = vst [vmem:[#allocation5 + $0x10] sm:$0xff] %v1910
  %1951 = vst [vmem:[#allocation5 + $0x18] sm:$0xff] %v1912
  %1952 = vst [vmem:[#allocation5 + $0x20] sm:$0xff] %v1841
  %1953 = vst [vmem:[#allocation5 + $0x28] sm:$0xff] %v1843
  %1954 = vst [vmem:[#allocation5 + $0x30] sm:$0xff] %v1914
  %1955 = vst [vmem:[#allocation5 + $0x38] sm:$0xff] %v1916
  %1956 = vst [vmem:[#allocation5 + $0x40] sm:$0xff] %v1847
  %1957 = vst [vmem:[#allocation5 + $0x48] sm:$0xff] %v1849
  %1958 = vst [vmem:[#allocation5 + $0x50] sm:$0xff] %v1920
  %1959 = vst [vmem:[#allocation5 + $0x58] sm:$0xff] %v1922
  %1960 = vst [vmem:[#allocation5 + $0x60] sm:$0xff] %v1851
  %1961 = vst [vmem:[#allocation5 + $0x68] sm:$0xff] %v1853
  %1962 = vst [vmem:[#allocation5 + $0x70] sm:$0xff] %v1924
  %1963 = vst [vmem:[#allocation5 + $0x78] sm:$0xff] %v1926
  %1964 = vst [vmem:[#allocation5 + $0x80] sm:$0xff] %v1857
  %1965 = vst [vmem:[#allocation5 + $0x88] sm:$0xff] %v1859
  %1966 = vst [vmem:[#allocation5 + $0x90] sm:$0xff] %v1930
  %1967 = vst [vmem:[#allocation5 + $0x98] sm:$0xff] %v1932
  %1968 = vst [vmem:[#allocation5 + $0xa0] sm:$0xff] %v1861
  %1969 = vst [vmem:[#allocation5 + $0xa8] sm:$0xff] %v1863
  %1970 = vst [vmem:[#allocation5 + $0xb0] sm:$0xff] %v1934
  %1971 = vst [vmem:[#allocation5 + $0xb8] sm:$0xff] %v1936
  %1972 = vst [vmem:[#allocation5 + $0xc0] sm:$0xff] %v1867
  %1973 = vst [vmem:[#allocation5 + $0xc8] sm:$0xff] %v1869
  %1974 = vst [vmem:[#allocation5 + $0xd0] sm:$0xff] %v1940
  %1975 = vst [vmem:[#allocation5 + $0xd8] sm:$0xff] %v1942
  %1976 = vst [vmem:[#allocation5 + $0xe0] sm:$0xff] %v1871
  %1977 = vst [vmem:[#allocation5 + $0xe8] sm:$0xff] %v1873
  %1978 = vst [vmem:[#allocation5 + $0xf0] sm:$0xff] %v1944
  %1979 = vst [vmem:[#allocation5 + $0xf8] sm:$0xff] %v1946
  %v1980 = vld [vmem:[%s2] sm:$0xff]
  %v1981 = vld [vmem:[%s2 + $0x8] sm:$0xff]
  %v1982 = vld [vmem:[%s2 + $0x10] sm:$0xff]
  %v1983 = vld [vmem:[%s2 + $0x18] sm:$0xff]
  %v1984 = vld [vmem:[%s2 + $0x20] sm:$0xff]
  %v1985 = vld [vmem:[%s2 + $0x28] sm:$0xff]
  %v1986 = vld [vmem:[%s2 + $0x30] sm:$0xff]
  %v1987 = vld [vmem:[%s2 + $0x38] sm:$0xff]
  %v1988 = vld [vmem:[%s2 + $0x40] sm:$0xff]
  %v1989 = vld [vmem:[%s2 + $0x48] sm:$0xff]
  %v1990 = vld [vmem:[%s2 + $0x50] sm:$0xff]
  %v1991 = vld [vmem:[%s2 + $0x58] sm:$0xff]
  %v1992 = vld [vmem:[%s2 + $0x60] sm:$0xff]
  %v1993 = vld [vmem:[%s2 + $0x68] sm:$0xff]
  %v1994 = vld [vmem:[%s2 + $0x70] sm:$0xff]
  %v1995 = vld [vmem:[%s2 + $0x78] sm:$0xff]
  %v1996 = vld [vmem:[%s2 + $0x80] sm:$0xff]
  %v1997 = vld [vmem:[%s2 + $0x88] sm:$0xff]
  %v1998 = vld [vmem:[%s2 + $0x90] sm:$0xff]
  %v1999 = vld [vmem:[%s2 + $0x98] sm:$0xff]
  %v2000 = vld [vmem:[%s2 + $0xa0] sm:$0xff]
  %v2001 = vld [vmem:[%s2 + $0xa8] sm:$0xff]
  %v2002 = vld [vmem:[%s2 + $0xb0] sm:$0xff]
  %v2003 = vld [vmem:[%s2 + $0xb8] sm:$0xff]
  %v2004 = vld [vmem:[%s2 + $0xc0] sm:$0xff]
  %v2005 = vld [vmem:[%s2 + $0xc8] sm:$0xff]
  %v2006 = vld [vmem:[%s2 + $0xd0] sm:$0xff]
  %v2007 = vld [vmem:[%s2 + $0xd8] sm:$0xff]
  %v2008 = vld [vmem:[%s2 + $0xe0] sm:$0xff]
  %v2009 = vld [vmem:[%s2 + $0xe8] sm:$0xff]
  %v2010 = vld [vmem:[%s2 + $0xf0] sm:$0xff]
  %v2011 = vld [vmem:[%s2 + $0xf8] sm:$0xff]
  %v2044 = vunpack.c.l.b16 %v1980
  %v2045 = vunpack.c.h.b16 %v1980
  %v2046 = vunpack.c.l.b16 %v1981
  %v2047 = vunpack.c.h.b16 %v1981
  %v2048 = vunpack.c.l.b16 %v1982
  %v2049 = vunpack.c.h.b16 %v1982
  %v2050 = vunpack.c.l.b16 %v1983
  %v2051 = vunpack.c.h.b16 %v1983
  %v2052 = vunpack.c.l.b16 %v1984
  %v2053 = vunpack.c.h.b16 %v1984
  %v2054 = vunpack.c.l.b16 %v1985
  %v2055 = vunpack.c.h.b16 %v1985
  %v2056 = vunpack.c.l.b16 %v1986
  %v2057 = vunpack.c.h.b16 %v1986
  %v2058 = vunpack.c.l.b16 %v1987
  %v2059 = vunpack.c.h.b16 %v1987
  %v2060 = vunpack.c.l.b16 %v1988
  %v2061 = vunpack.c.h.b16 %v1988
  %v2062 = vunpack.c.l.b16 %v1989
  %v2063 = vunpack.c.h.b16 %v1989
  %v2064 = vunpack.c.l.b16 %v1990
  %v2065 = vunpack.c.h.b16 %v1990
  %v2066 = vunpack.c.l.b16 %v1991
  %v2067 = vunpack.c.h.b16 %v1991
  %v2068 = vunpack.c.l.b16 %v1992
  %v2069 = vunpack.c.h.b16 %v1992
  %v2070 = vunpack.c.l.b16 %v1993
  %v2071 = vunpack.c.h.b16 %v1993
  %v2072 = vunpack.c.l.b16 %v1994
  %v2073 = vunpack.c.h.b16 %v1994
  %v2074 = vunpack.c.l.b16 %v1995
  %v2075 = vunpack.c.h.b16 %v1995
  %v2076 = vunpack.c.l.b16 %v1996
  %v2077 = vunpack.c.h.b16 %v1996
  %v2078 = vunpack.c.l.b16 %v1997
  %v2079 = vunpack.c.h.b16 %v1997
  %v2080 = vunpack.c.l.b16 %v1998
  %v2081 = vunpack.c.h.b16 %v1998
  %v2082 = vunpack.c.l.b16 %v1999
  %v2083 = vunpack.c.h.b16 %v1999
  %v2084 = vunpack.c.l.b16 %v2000
  %v2085 = vunpack.c.h.b16 %v2000
  %v2086 = vunpack.c.l.b16 %v2001
  %v2087 = vunpack.c.h.b16 %v2001
  %v2088 = vunpack.c.l.b16 %v2002
  %v2089 = vunpack.c.h.b16 %v2002
  %v2090 = vunpack.c.l.b16 %v2003
  %v2091 = vunpack.c.h.b16 %v2003
  %v2092 = vunpack.c.l.b16 %v2004
  %v2093 = vunpack.c.h.b16 %v2004
  %v2094 = vunpack.c.l.b16 %v2005
  %v2095 = vunpack.c.h.b16 %v2005
  %v2096 = vunpack.c.l.b16 %v2006
  %v2097 = vunpack.c.h.b16 %v2006
  %v2098 = vunpack.c.l.b16 %v2007
  %v2099 = vunpack.c.h.b16 %v2007
  %v2100 = vunpack.c.l.b16 %v2008
  %v2101 = vunpack.c.h.b16 %v2008
  %v2102 = vunpack.c.l.b16 %v2009
  %v2103 = vunpack.c.h.b16 %v2009
  %v2104 = vunpack.c.l.b16 %v2010
  %v2105 = vunpack.c.h.b16 %v2010
  %v2106 = vunpack.c.l.b16 %v2011
  %v2107 = vunpack.c.h.b16 %v2011
  %v2108 = vpack.c.b16 %v2048, %v2044
  %v2109 = vpack.c.b16 %v2049, %v2045
  %v2110 = vpack.c.b16 %v2050, %v2046
  %v2111 = vpack.c.b16 %v2051, %v2047
  %v2112 = vpack.c.b16 %v2056, %v2052
  %v2113 = vpack.c.b16 %v2057, %v2053
  %v2114 = vpack.c.b16 %v2058, %v2054
  %v2115 = vpack.c.b16 %v2059, %v2055
  %v2116 = vpack.c.b16 %v2064, %v2060
  %v2117 = vpack.c.b16 %v2065, %v2061
  %v2118 = vpack.c.b16 %v2066, %v2062
  %v2119 = vpack.c.b16 %v2067, %v2063
  %v2120 = vpack.c.b16 %v2072, %v2068
  %v2121 = vpack.c.b16 %v2073, %v2069
  %v2122 = vpack.c.b16 %v2074, %v2070
  %v2123 = vpack.c.b16 %v2075, %v2071
  %v2124 = vpack.c.b16 %v2080, %v2076
  %v2125 = vpack.c.b16 %v2081, %v2077
  %v2126 = vpack.c.b16 %v2082, %v2078
  %v2127 = vpack.c.b16 %v2083, %v2079
  %v2128 = vpack.c.b16 %v2088, %v2084
  %v2129 = vpack.c.b16 %v2089, %v2085
  %v2130 = vpack.c.b16 %v2090, %v2086
  %v2131 = vpack.c.b16 %v2091, %v2087
  %v2132 = vpack.c.b16 %v2096, %v2092
  %v2133 = vpack.c.b16 %v2097, %v2093
  %v2134 = vpack.c.b16 %v2098, %v2094
  %v2135 = vpack.c.b16 %v2099, %v2095
  %v2136 = vpack.c.b16 %v2104, %v2100
  %v2137 = vpack.c.b16 %v2105, %v2101
  %v2138 = vpack.c.b16 %v2106, %v2102
  %v2139 = vpack.c.b16 %v2107, %v2103
  %2172 = vmatprep.subr.bf16.mxu0 %v2109
  %2173 = vmatpush1.bf16.msra.mxu0 %v2108
  %2174 = vmatprep.subr.bf16.mxu0 %v2113
  %2175 = vmatpush1.bf16.msra.mxu0 %v2112
  %2176 = vmatprep.subr.bf16.mxu0 %v2117
  %2177 = vmatpush1.bf16.msra.mxu0 %v2116
  %2178 = vmatprep.subr.bf16.mxu0 %v2121
  %2179 = vmatpush1.bf16.msra.mxu0 %v2120
  %2180 = vmatprep.subr.bf16.mxu0 %v2125
  %2181 = vmatpush1.bf16.msra.mxu0 %v2124
  %2182 = vmatprep.subr.bf16.mxu0 %v2129
  %2183 = vmatpush1.bf16.msra.mxu0 %v2128
  %2184 = vmatprep.subr.bf16.mxu0 %v2133
  %2185 = vmatpush1.bf16.msra.mxu0 %v2132
  %2186 = vmatprep.subr.bf16.mxu0 %v2137
  %2187 = vmatpush1.bf16.msra.mxu0 %v2136
  %2188 = vmatprep.subr.bf16.mxu0 0
  %2189 = vmatpush1.bf16.msra.mxu0 0
  %2190 = vmatprep.subr.bf16.mxu0 0
  %2191 = vmatpush1.bf16.msra.mxu0 0
  %2192 = vmatprep.subr.bf16.mxu0 0
  %2193 = vmatpush1.bf16.msra.mxu0 0
  %2194 = vmatprep.subr.bf16.mxu0 0
  %2195 = vmatpush1.bf16.msra.mxu0 0
  %2196 = vmatprep.subr.bf16.mxu0 0
  %2197 = vmatpush1.bf16.msra.mxu0 0
  %2198 = vmatprep.subr.bf16.mxu0 0
  %2199 = vmatpush1.bf16.msra.mxu0 0
  %2200 = vmatprep.subr.bf16.mxu0 0
  %2201 = vmatpush1.bf16.msra.mxu0 0
  %2202 = vmatprep.subr.bf16.mxu0 0
  %2203 = vmatpush1.bf16.msra.mxu0 0
  %2204 = vmatprep.mubr.bf16.mxu0 0
  %2205 = vmatmul.mubr.bf16.gmra.mrb[0].mxu0 %v1634
  %v2206 = vpop.f32.mrb[0].mxu0
  %v2207 = vadd.f32 0.0, %v2206
  %v2208 = vpop.f32.mrb[0].mxu0
  %v2209 = vadd.f32 0.0, %v2208
  %v2210 = vpop.f32.mrb[0].mxu0
  %v2211 = vadd.f32 0.0, %v2210
  %v2212 = vpop.f32.mrb[0].mxu0
  %v2213 = vadd.f32 0.0, %v2212
  %2214 = vmatprep.mubr.bf16.mxu0 0
  %2215 = vmatmul.mubr.bf16.gmra.mrb[0].mxu0 %v1635
  %v2216 = vpop.f32.mrb[0].mxu0
  %v2217 = vadd.f32 0.0, %v2216
  %v2218 = vpop.f32.mrb[0].mxu0
  %v2219 = vadd.f32 0.0, %v2218
  %v2220 = vpop.f32.mrb[0].mxu0
  %v2221 = vadd.f32 0.0, %v2220
  %v2222 = vpop.f32.mrb[0].mxu0
  %v2223 = vadd.f32 0.0, %v2222
  %2224 = vmatprep.mubr.bf16.mxu0 0
  %2225 = vmatmul.mubr.bf16.gmra.mrb[0].mxu0 %v1636
  %v2226 = vpop.f32.mrb[0].mxu0
  %v2227 = vadd.f32 0.0, %v2226
  %v2228 = vpop.f32.mrb[0].mxu0
  %v2229 = vadd.f32 0.0, %v2228
  %v2230 = vpop.f32.mrb[0].mxu0
  %v2231 = vadd.f32 0.0, %v2230
  %v2232 = vpop.f32.mrb[0].mxu0
  %v2233 = vadd.f32 0.0, %v2232
  %2234 = vmatprep.mubr.bf16.mxu0 0
  %2235 = vmatmul.mubr.bf16.gmra.mrb[0].mxu0 %v1637
  %v2236 = vpop.f32.mrb[0].mxu0
  %v2237 = vadd.f32 0.0, %v2236
  %v2238 = vpop.f32.mrb[0].mxu0
  %v2239 = vadd.f32 0.0, %v2238
  %v2240 = vpop.f32.mrb[0].mxu0
  %v2241 = vadd.f32 0.0, %v2240
  %v2242 = vpop.f32.mrb[0].mxu0
  %v2243 = vadd.f32 0.0, %v2242
  %2244 = vdwg.mxu0
  %2245 = vmatprep.subr.bf16.mxu0 %v2111
  %2246 = vmatpush1.bf16.msra.mxu0 %v2110
  %2247 = vmatprep.subr.bf16.mxu0 %v2115
  %2248 = vmatpush1.bf16.msra.mxu0 %v2114
  %2249 = vmatprep.subr.bf16.mxu0 %v2119
  %2250 = vmatpush1.bf16.msra.mxu0 %v2118
  %2251 = vmatprep.subr.bf16.mxu0 %v2123
  %2252 = vmatpush1.bf16.msra.mxu0 %v2122
  %2253 = vmatprep.subr.bf16.mxu0 %v2127
  %2254 = vmatpush1.bf16.msra.mxu0 %v2126
  %2255 = vmatprep.subr.bf16.mxu0 %v2131
  %2256 = vmatpush1.bf16.msra.mxu0 %v2130
  %2257 = vmatprep.subr.bf16.mxu0 %v2135
  %2258 = vmatpush1.bf16.msra.mxu0 %v2134
  %2259 = vmatprep.subr.bf16.mxu0 %v2139
  %2260 = vmatpush1.bf16.msra.mxu0 %v2138
  %2261 = vmatprep.subr.bf16.mxu0 0
  %2262 = vmatpush1.bf16.msra.mxu0 0
  %2263 = vmatprep.subr.bf16.mxu0 0
  %2264 = vmatpush1.bf16.msra.mxu0 0
  %2265 = vmatprep.subr.bf16.mxu0 0
  %2266 = vmatpush1.bf16.msra.mxu0 0
  %2267 = vmatprep.subr.bf16.mxu0 0
  %2268 = vmatpush1.bf16.msra.mxu0 0
  %2269 = vmatprep.subr.bf16.mxu0 0
  %2270 = vmatpush1.bf16.msra.mxu0 0
  %2271 = vmatprep.subr.bf16.mxu0 0
  %2272 = vmatpush1.bf16.msra.mxu0 0
  %2273 = vmatprep.subr.bf16.mxu0 0
  %2274 = vmatpush1.bf16.msra.mxu0 0
  %2275 = vmatprep.subr.bf16.mxu0 0
  %2276 = vmatpush1.bf16.msra.mxu0 0
  %2277 = vmatprep.mubr.bf16.mxu0 0
  %2278 = vmatmul.mubr.bf16.gmra.mrb[0].mxu0 %v1634
  %v2279 = vpop.f32.mrb[0].mxu0
  %v2280 = vadd.f32 0.0, %v2279
  %v2281 = vpop.f32.mrb[0].mxu0
  %v2282 = vadd.f32 0.0, %v2281
  %v2283 = vpop.f32.mrb[0].mxu0
  %v2284 = vadd.f32 0.0, %v2283
  %v2285 = vpop.f32.mrb[0].mxu0
  %v2286 = vadd.f32 0.0, %v2285
  %2287 = vmatprep.mubr.bf16.mxu0 0
  %2288 = vmatmul.mubr.bf16.gmra.mrb[0].mxu0 %v1635
  %v2289 = vpop.f32.mrb[0].mxu0
  %v2290 = vadd.f32 0.0, %v2289
  %v2291 = vpop.f32.mrb[0].mxu0
  %v2292 = vadd.f32 0.0, %v2291
  %v2293 = vpop.f32.mrb[0].mxu0
  %v2294 = vadd.f32 0.0, %v2293
  %v2295 = vpop.f32.mrb[0].mxu0
  %v2296 = vadd.f32 0.0, %v2295
  %2297 = vmatprep.mubr.bf16.mxu0 0
  %2298 = vmatmul.mubr.bf16.gmra.mrb[0].mxu0 %v1636
  %v2299 = vpop.f32.mrb[0].mxu0
  %v2300 = vadd.f32 0.0, %v2299
  %v2301 = vpop.f32.mrb[0].mxu0
  %v2302 = vadd.f32 0.0, %v2301
  %v2303 = vpop.f32.mrb[0].mxu0
  %v2304 = vadd.f32 0.0, %v2303
  %v2305 = vpop.f32.mrb[0].mxu0
  %v2306 = vadd.f32 0.0, %v2305
  %2307 = vmatprep.mubr.bf16.mxu0 0
  %2308 = vmatmul.mubr.bf16.gmra.mrb[0].mxu0 %v1637
  %v2309 = vpop.f32.mrb[0].mxu0
  %v2310 = vadd.f32 0.0, %v2309
  %v2311 = vpop.f32.mrb[0].mxu0
  %v2312 = vadd.f32 0.0, %v2311
  %v2313 = vpop.f32.mrb[0].mxu0
  %v2314 = vadd.f32 0.0, %v2313
  %v2315 = vpop.f32.mrb[0].mxu0
  %v2316 = vadd.f32 0.0, %v2315
  %2317 = vdwg.mxu0
  %2318 = vst [vmem:[#allocation6] sm:$0xff] %v2207
  %2319 = vst [vmem:[#allocation6 + $0x8] sm:$0xff] %v2209
  %2320 = vst [vmem:[#allocation6 + $0x10] sm:$0xff] %v2280
  %2321 = vst [vmem:[#allocation6 + $0x18] sm:$0xff] %v2282
  %2322 = vst [vmem:[#allocation6 + $0x20] sm:$0xff] %v2211
  %2323 = vst [vmem:[#allocation6 + $0x28] sm:$0xff] %v2213
  %2324 = vst [vmem:[#allocation6 + $0x30] sm:$0xff] %v2284
  %2325 = vst [vmem:[#allocation6 + $0x38] sm:$0xff] %v2286
  %2326 = vst [vmem:[#allocation6 + $0x40] sm:$0xff] %v2217
  %2327 = vst [vmem:[#allocation6 + $0x48] sm:$0xff] %v2219
  %2328 = vst [vmem:[#allocation6 + $0x50] sm:$0xff] %v2290
  %2329 = vst [vmem:[#allocation6 + $0x58] sm:$0xff] %v2292
  %2330 = vst [vmem:[#allocation6 + $0x60] sm:$0xff] %v2221
  %2331 = vst [vmem:[#allocation6 + $0x68] sm:$0xff] %v2223
  %2332 = vst [vmem:[#allocation6 + $0x70] sm:$0xff] %v2294
  %2333 = vst [vmem:[#allocation6 + $0x78] sm:$0xff] %v2296
  %2334 = vst [vmem:[#allocation6 + $0x80] sm:$0xff] %v2227
  %2335 = vst [vmem:[#allocation6 + $0x88] sm:$0xff] %v2229
  %2336 = vst [vmem:[#allocation6 + $0x90] sm:$0xff] %v2300
  %2337 = vst [vmem:[#allocation6 + $0x98] sm:$0xff] %v2302
  %2338 = vst [vmem:[#allocation6 + $0xa0] sm:$0xff] %v2231
  %2339 = vst [vmem:[#allocation6 + $0xa8] sm:$0xff] %v2233
  %2340 = vst [vmem:[#allocation6 + $0xb0] sm:$0xff] %v2304
  %2341 = vst [vmem:[#allocation6 + $0xb8] sm:$0xff] %v2306
  %2342 = vst [vmem:[#allocation6 + $0xc0] sm:$0xff] %v2237
  %2343 = vst [vmem:[#allocation6 + $0xc8] sm:$0xff] %v2239
  %2344 = vst [vmem:[#allocation6 + $0xd0] sm:$0xff] %v2310
  %2345 = vst [vmem:[#allocation6 + $0xd8] sm:$0xff] %v2312
  %2346 = vst [vmem:[#allocation6 + $0xe0] sm:$0xff] %v2241
  %2347 = vst [vmem:[#allocation6 + $0xe8] sm:$0xff] %v2243
  %2348 = vst [vmem:[#allocation6 + $0xf0] sm:$0xff] %v2314
  %2349 = vst [vmem:[#allocation6 + $0xf8] sm:$0xff] %v2316
  %v2350 = vld [vmem:[%s3] sm:$0xff]
  %v2351 = vld [vmem:[%s3 + $0x8] sm:$0xff]
  %v2352 = vld [vmem:[%s3 + $0x10] sm:$0xff]
  %v2353 = vld [vmem:[%s3 + $0x18] sm:$0xff]
  %v2354 = vld [vmem:[%s3 + $0x20] sm:$0xff]
  %v2355 = vld [vmem:[%s3 + $0x28] sm:$0xff]
  %v2356 = vld [vmem:[%s3 + $0x30] sm:$0xff]
  %v2357 = vld [vmem:[%s3 + $0x38] sm:$0xff]
  %v2358 = vld [vmem:[%s3 + $0x40] sm:$0xff]
  %v2359 = vld [vmem:[%s3 + $0x48] sm:$0xff]
  %v2360 = vld [vmem:[%s3 + $0x50] sm:$0xff]
  %v2361 = vld [vmem:[%s3 + $0x58] sm:$0xff]
  %v2362 = vld [vmem:[%s3 + $0x60] sm:$0xff]
  %v2363 = vld [vmem:[%s3 + $0x68] sm:$0xff]
  %v2364 = vld [vmem:[%s3 + $0x70] sm:$0xff]
  %v2365 = vld [vmem:[%s3 + $0x78] sm:$0xff]
  %v2366 = vld [vmem:[%s3 + $0x80] sm:$0xff]
  %v2367 = vld [vmem:[%s3 + $0x88] sm:$0xff]
  %v2368 = vld [vmem:[%s3 + $0x90] sm:$0xff]
  %v2369 = vld [vmem:[%s3 + $0x98] sm:$0xff]
  %v2370 = vld [vmem:[%s3 + $0xa0] sm:$0xff]
  %v2371 = vld [vmem:[%s3 + $0xa8] sm:$0xff]
  %v2372 = vld [vmem:[%s3 + $0xb0] sm:$0xff]
  %v2373 = vld [vmem:[%s3 + $0xb8] sm:$0xff]
  %v2374 = vld [vmem:[%s3 + $0xc0] sm:$0xff]
  %v2375 = vld [vmem:[%s3 + $0xc8] sm:$0xff]
  %v2376 = vld [vmem:[%s3 + $0xd0] sm:$0xff]
  %v2377 = vld [vmem:[%s3 + $0xd8] sm:$0xff]
  %v2378 = vld [vmem:[%s3 + $0xe0] sm:$0xff]
  %v2379 = vld [vmem:[%s3 + $0xe8] sm:$0xff]
  %v2380 = vld [vmem:[%s3 + $0xf0] sm:$0xff]
  %v2381 = vld [vmem:[%s3 + $0xf8] sm:$0xff]
  %v2382 = vld [vmem:[#allocation5] sm:$0xff]
  %v2383 = vld [vmem:[#allocation5 + $0x8] sm:$0xff]
  %v2384 = vld [vmem:[#allocation5 + $0x10] sm:$0xff]
  %v2385 = vld [vmem:[#allocation5 + $0x18] sm:$0xff]
  %v2386 = vld [vmem:[#allocation6 + $0xe0] sm:$0xff]
  %v2387 = vld [vmem:[#allocation6 + $0xe8] sm:$0xff]
  %v2388 = vld [vmem:[#allocation6 + $0xf0] sm:$0xff]
  %v2389 = vld [vmem:[#allocation6 + $0xf8] sm:$0xff]
  %v2390 = vadd.f32 %v2382, %v2386
  %v2391 = vadd.f32 %v2383, %v2387
  %v2392 = vadd.f32 %v2384, %v2388
  %v2393 = vadd.f32 %v2385, %v2389
  %v2426 = vunpack.c.l.b16 %v2350
  %v2427 = vunpack.c.h.b16 %v2350
  %v2428 = vunpack.c.l.b16 %v2351
  %v2429 = vunpack.c.h.b16 %v2351
  %v2430 = vunpack.c.l.b16 %v2352
  %v2431 = vunpack.c.h.b16 %v2352
  %v2432 = vunpack.c.l.b16 %v2353
  %v2433 = vunpack.c.h.b16 %v2353
  %v2434 = vunpack.c.l.b16 %v2354
  %v2435 = vunpack.c.h.b16 %v2354
  %v2436 = vunpack.c.l.b16 %v2355
  %v2437 = vunpack.c.h.b16 %v2355
  %v2438 = vunpack.c.l.b16 %v2356
  %v2439 = vunpack.c.h.b16 %v2356
  %v2440 = vunpack.c.l.b16 %v2357
  %v2441 = vunpack.c.h.b16 %v2357
  %v2442 = vunpack.c.l.b16 %v2358
  %v2443 = vunpack.c.h.b16 %v2358
  %v2444 = vunpack.c.l.b16 %v2359
  %v2445 = vunpack.c.h.b16 %v2359
  %v2446 = vunpack.c.l.b16 %v2360
  %v2447 = vunpack.c.h.b16 %v2360
  %v2448 = vunpack.c.l.b16 %v2361
  %v2449 = vunpack.c.h.b16 %v2361
  %v2450 = vunpack.c.l.b16 %v2362
  %v2451 = vunpack.c.h.b16 %v2362
  %v2452 = vunpack.c.l.b16 %v2363
  %v2453 = vunpack.c.h.b16 %v2363
  %v2454 = vunpack.c.l.b16 %v2364
  %v2455 = vunpack.c.h.b16 %v2364
  %v2456 = vunpack.c.l.b16 %v2365
  %v2457 = vunpack.c.h.b16 %v2365
  %v2458 = vunpack.c.l.b16 %v2366
  %v2459 = vunpack.c.h.b16 %v2366
  %v2460 = vunpack.c.l.b16 %v2367
  %v2461 = vunpack.c.h.b16 %v2367
  %v2462 = vunpack.c.l.b16 %v2368
  %v2463 = vunpack.c.h.b16 %v2368
  %v2464 = vunpack.c.l.b16 %v2369
  %v2465 = vunpack.c.h.b16 %v2369
  %v2466 = vunpack.c.l.b16 %v2370
  %v2467 = vunpack.c.h.b16 %v2370
  %v2468 = vunpack.c.l.b16 %v2371
  %v2469 = vunpack.c.h.b16 %v2371
  %v2470 = vunpack.c.l.b16 %v2372
  %v2471 = vunpack.c.h.b16 %v2372
  %v2472 = vunpack.c.l.b16 %v2373
  %v2473 = vunpack.c.h.b16 %v2373
  %v2474 = vunpack.c.l.b16 %v2374
  %v2475 = vunpack.c.h.b16 %v2374
  %v2476 = vunpack.c.l.b16 %v2375
  %v2477 = vunpack.c.h.b16 %v2375
  %v2478 = vunpack.c.l.b16 %v2376
  %v2479 = vunpack.c.h.b16 %v2376
  %v2480 = vunpack.c.l.b16 %v2377
  %v2481 = vunpack.c.h.b16 %v2377
  %v2482 = vunpack.c.l.b16 %v2378
  %v2483 = vunpack.c.h.b16 %v2378
  %v2484 = vunpack.c.l.b16 %v2379
  %v2485 = vunpack.c.h.b16 %v2379
  %v2486 = vunpack.c.l.b16 %v2380
  %v2487 = vunpack.c.h.b16 %v2380
  %v2488 = vunpack.c.l.b16 %v2381
  %v2489 = vunpack.c.h.b16 %v2381
  %v2490 = vpack.c.b16 %v2430, %v2426
  %v2491 = vpack.c.b16 %v2431, %v2427
  %v2492 = vpack.c.b16 %v2432, %v2428
  %v2493 = vpack.c.b16 %v2433, %v2429
  %v2494 = vpack.c.b16 %v2438, %v2434
  %v2495 = vpack.c.b16 %v2439, %v2435
  %v2496 = vpack.c.b16 %v2440, %v2436
  %v2497 = vpack.c.b16 %v2441, %v2437
  %v2498 = vpack.c.b16 %v2446, %v2442
  %v2499 = vpack.c.b16 %v2447, %v2443
  %v2500 = vpack.c.b16 %v2448, %v2444
  %v2501 = vpack.c.b16 %v2449, %v2445
  %v2502 = vpack.c.b16 %v2454, %v2450
  %v2503 = vpack.c.b16 %v2455, %v2451
  %v2504 = vpack.c.b16 %v2456, %v2452
  %v2505 = vpack.c.b16 %v2457, %v2453
  %v2506 = vpack.c.b16 %v2462, %v2458
  %v2507 = vpack.c.b16 %v2463, %v2459
  %v2508 = vpack.c.b16 %v2464, %v2460
  %v2509 = vpack.c.b16 %v2465, %v2461
  %v2510 = vpack.c.b16 %v2470, %v2466
  %v2511 = vpack.c.b16 %v2471, %v2467
  %v2512 = vpack.c.b16 %v2472, %v2468
  %v2513 = vpack.c.b16 %v2473, %v2469
  %v2514 = vpack.c.b16 %v2478, %v2474
  %v2515 = vpack.c.b16 %v2479, %v2475
  %v2516 = vpack.c.b16 %v2480, %v2476
  %v2517 = vpack.c.b16 %v2481, %v2477
  %v2518 = vpack.c.b16 %v2486, %v2482
  %v2519 = vpack.c.b16 %v2487, %v2483
  %v2520 = vpack.c.b16 %v2488, %v2484
  %v2521 = vpack.c.b16 %v2489, %v2485
  %2554 = vmatprep.subr.bf16.mxu0 %v2491
  %2555 = vmatpush1.bf16.msra.mxu0 %v2490
  %2556 = vmatprep.subr.bf16.mxu0 %v2495
  %2557 = vmatpush1.bf16.msra.mxu0 %v2494
  %2558 = vmatprep.subr.bf16.mxu0 %v2499
  %2559 = vmatpush1.bf16.msra.mxu0 %v2498
  %2560 = vmatprep.subr.bf16.mxu0 %v2503
  %2561 = vmatpush1.bf16.msra.mxu0 %v2502
  %2562 = vmatprep.subr.bf16.mxu0 %v2507
  %2563 = vmatpush1.bf16.msra.mxu0 %v2506
  %2564 = vmatprep.subr.bf16.mxu0 %v2511
  %2565 = vmatpush1.bf16.msra.mxu0 %v2510
  %2566 = vmatprep.subr.bf16.mxu0 %v2515
  %2567 = vmatpush1.bf16.msra.mxu0 %v2514
  %2568 = vmatprep.subr.bf16.mxu0 %v2519
  %2569 = vmatpush1.bf16.msra.mxu0 %v2518
  %2570 = vmatprep.subr.bf16.mxu0 0
  %2571 = vmatpush1.bf16.msra.mxu0 0
  %2572 = vmatprep.subr.bf16.mxu0 0
  %2573 = vmatpush1.bf16.msra.mxu0 0
  %2574 = vmatprep.subr.bf16.mxu0 0
  %2575 = vmatpush1.bf16.msra.mxu0 0
  %2576 = vmatprep.subr.bf16.mxu0 0
  %2577 = vmatpush1.bf16.msra.mxu0 0
  %2578 = vmatprep.subr.bf16.mxu0 0
  %2579 = vmatpush1.bf16.msra.mxu0 0
  %2580 = vmatprep.subr.bf16.mxu0 0
  %2581 = vmatpush1.bf16.msra.mxu0 0
  %2582 = vmatprep.subr.bf16.mxu0 0
  %2583 = vmatpush1.bf16.msra.mxu0 0
  %2584 = vmatprep.subr.bf16.mxu0 0
  %2585 = vmatpush1.bf16.msra.mxu0 0
  %2586 = vmatprep.mubr.bf16.mxu0 0
  %2587 = vmatmul.mubr.bf16.gmra.mrb[0].mxu0 0
  %v2588 = vpop.f32.mrb[0].mxu0
  %v2589 = vadd.f32 0.0, %v2588
  %v2590 = vpop.f32.mrb[0].mxu0
  %v2591 = vadd.f32 0.0, %v2590
  %v2592 = vpop.f32.mrb[0].mxu0
  %v2593 = vpop.f32.mrb[0].mxu0
  %2594 = vdwg.mxu0
  %2595 = vmatprep.subr.bf16.mxu0 %v2493
  %2596 = vmatpush1.bf16.msra.mxu0 %v2492
  %2597 = vmatprep.subr.bf16.mxu0 %v2497
  %2598 = vmatpush1.bf16.msra.mxu0 %v2496
  %2599 = vmatprep.subr.bf16.mxu0 %v2501
  %2600 = vmatpush1.bf16.msra.mxu0 %v2500
  %2601 = vmatprep.subr.bf16.mxu0 %v2505
  %2602 = vmatpush1.bf16.msra.mxu0 %v2504
  %2603 = vmatprep.subr.bf16.mxu0 %v2509
  %2604 = vmatpush1.bf16.msra.mxu0 %v2508
  %2605 = vmatprep.subr.bf16.mxu0 %v2513
  %2606 = vmatpush1.bf16.msra.mxu0 %v2512
  %2607 = vmatprep.subr.bf16.mxu0 %v2517
  %2608 = vmatpush1.bf16.msra.mxu0 %v2516
  %2609 = vmatprep.subr.bf16.mxu0 %v2521
  %2610 = vmatpush1.bf16.msra.mxu0 %v2520
  %2611 = vmatprep.subr.bf16.mxu0 0
  %2612 = vmatpush1.bf16.msra.mxu0 0
  %2613 = vmatprep.subr.bf16.mxu0 0
  %2614 = vmatpush1.bf16.msra.mxu0 0
  %2615 = vmatprep.subr.bf16.mxu0 0
  %2616 = vmatpush1.bf16.msra.mxu0 0
  %2617 = vmatprep.subr.bf16.mxu0 0
  %2618 = vmatpush1.bf16.msra.mxu0 0
  %2619 = vmatprep.subr.bf16.mxu0 0
  %2620 = vmatpush1.bf16.msra.mxu0 0
  %2621 = vmatprep.subr.bf16.mxu0 0
  %2622 = vmatpush1.bf16.msra.mxu0 0
  %2623 = vmatprep.subr.bf16.mxu0 0
  %2624 = vmatpush1.bf16.msra.mxu0 0
  %2625 = vmatprep.subr.bf16.mxu0 0
  %2626 = vmatpush1.bf16.msra.mxu0 0
  %2627 = vmatprep.mubr.bf16.mxu0 0
  %2628 = vmatmul.mubr.bf16.gmra.mrb[0].mxu0 0
  %v2629 = vpop.f32.mrb[0].mxu0
  %v2630 = vadd.f32 0.0, %v2629
  %v2631 = vpop.f32.mrb[0].mxu0
  %v2632 = vadd.f32 0.0, %v2631
  %v2633 = vpop.f32.mrb[0].mxu0
  %v2634 = vpop.f32.mrb[0].mxu0
  %2635 = vdwg.mxu0
  %v2636 = vadd.f32 %v2390, %v2589
  %v2637 = vadd.f32 %v2391, %v2591
  %v2638 = vadd.f32 %v2392, %v2630
  %v2639 = vadd.f32 %v2393, %v2632
  %v2640 = vtanh.pop %v2636
  %v2641 = vtanh.pop %v2637
  %v2642 = vtanh.pop %v2638
  %v2643 = vtanh.pop %v2639
  %v2644 = vmul.f32 %v2640, 0.5
  %v2645 = vadd.f32 %v2644, 0.5
  %v2646 = vmul.f32 %v2641, 0.5
  %v2647 = vadd.f32 %v2646, 0.5
  %v2648 = vmul.f32 %v2643, 0.5
  %v2649 = vadd.f32 %v2648, 0.5
  %v2650 = vmul.f32 %v2647, 0.0
  %v2651 = vmul.f32 %v2645, %v2642
  %v2652 = vadd.f32 %v2650, %v2651
  %v2653 = vtanh.pop %v2652
  %v2654 = vmul.f32 %v2649, %v2653
  %2655 = vst [vmem:[#allocation2] sm:$0xff] %v2654
  %2656 = vst [vmem:[#allocation3 + $0x38] sm:$0xff] %v2654
  %v2657 = vld [vmem:[#allocation5 + $0x20] sm:$0xff]
  %v2658 = vld [vmem:[#allocation5 + $0x28] sm:$0xff]
  %v2659 = vld [vmem:[#allocation5 + $0x30] sm:$0xff]
  %v2660 = vld [vmem:[#allocation5 + $0x38] sm:$0xff]
  %v2661 = vld [vmem:[#allocation6 + $0xc0] sm:$0xff]
  %v2662 = vld [vmem:[#allocation6 + $0xc8] sm:$0xff]
  %v2663 = vld [vmem:[#allocation6 + $0xd0] sm:$0xff]
  %v2664 = vld [vmem:[#allocation6 + $0xd8] sm:$0xff]
  %v2665 = vadd.f32 %v2657, %v2661
  %v2666 = vadd.f32 %v2658, %v2662
  %v2667 = vadd.f32 %v2659, %v2663
  %v2668 = vadd.f32 %v2660, %v2664
  %v2669 = vpack.c.bf16 %v2654, %v2654
  %2670 = vmatprep.subr.bf16.mxu0 %v2491
  %2671 = vmatpush1.bf16.msra.mxu0 %v2490
  %2672 = vmatprep.subr.bf16.mxu0 %v2495
  %2673 = vmatpush1.bf16.msra.mxu0 %v2494
  %2674 = vmatprep.subr.bf16.mxu0 %v2499
  %2675 = vmatpush1.bf16.msra.mxu0 %v2498
  %2676 = vmatprep.subr.bf16.mxu0 %v2503
  %2677 = vmatpush1.bf16.msra.mxu0 %v2502
  %2678 = vmatprep.subr.bf16.mxu0 %v2507
  %2679 = vmatpush1.bf16.msra.mxu0 %v2506
  %2680 = vmatprep.subr.bf16.mxu0 %v2511
  %2681 = vmatpush1.bf16.msra.mxu0 %v2510
  %2682 = vmatprep.subr.bf16.mxu0 %v2515
  %2683 = vmatpush1.bf16.msra.mxu0 %v2514
  %2684 = vmatprep.subr.bf16.mxu0 %v2519
  %2685 = vmatpush1.bf16.msra.mxu0 %v2518
  %2686 = vmatprep.subr.bf16.mxu0 0
  %2687 = vmatpush1.bf16.msra.mxu0 0
  %2688 = vmatprep.subr.bf16.mxu0 0
  %2689 = vmatpush1.bf16.msra.mxu0 0
  %2690 = vmatprep.subr.bf16.mxu0 0
  %2691 = vmatpush1.bf16.msra.mxu0 0
  %2692 = vmatprep.subr.bf16.mxu0 0
  %2693 = vmatpush1.bf16.msra.mxu0 0
  %2694 = vmatprep.subr.bf16.mxu0 0
  %2695 = vmatpush1.bf16.msra.mxu0 0
  %2696 = vmatprep.subr.bf16.mxu0 0
  %2697 = vmatpush1.bf16.msra.mxu0 0
  %2698 = vmatprep.subr.bf16.mxu0 0
  %2699 = vmatpush1.bf16.msra.mxu0 0
  %2700 = vmatprep.subr.bf16.mxu0 0
  %2701 = vmatpush1.bf16.msra.mxu0 0
  %2702 = vmatprep.mubr.bf16.mxu0 0
  %2703 = vmatmul.mubr.bf16.gmra.mrb[0].mxu0 %v2669
  %v2704 = vpop.f32.mrb[0].mxu0
  %v2705 = vadd.f32 0.0, %v2704
  %v2706 = vpop.f32.mrb[0].mxu0
  %v2707 = vadd.f32 0.0, %v2706
  %v2708 = vpop.f32.mrb[0].mxu0
  %v2709 = vpop.f32.mrb[0].mxu0
  %2710 = vdwg.mxu0
  %2711 = vmatprep.subr.bf16.mxu0 %v2493
  %2712 = vmatpush1.bf16.msra.mxu0 %v2492
  %2713 = vmatprep.subr.bf16.mxu0 %v2497
  %2714 = vmatpush1.bf16.msra.mxu0 %v2496
  %2715 = vmatprep.subr.bf16.mxu0 %v2501
  %2716 = vmatpush1.bf16.msra.mxu0 %v2500
  %2717 = vmatprep.subr.bf16.mxu0 %v2505
  %2718 = vmatpush1.bf16.msra.mxu0 %v2504
  %2719 = vmatprep.subr.bf16.mxu0 %v2509
  %2720 = vmatpush1.bf16.msra.mxu0 %v2508
  %2721 = vmatprep.subr.bf16.mxu0 %v2513
  %2722 = vmatpush1.bf16.msra.mxu0 %v2512
  %2723 = vmatprep.subr.bf16.mxu0 %v2517
  %2724 = vmatpush1.bf16.msra.mxu0 %v2516
  %2725 = vmatprep.subr.bf16.mxu0 %v2521
  %2726 = vmatpush1.bf16.msra.mxu0 %v2520
  %2727 = vmatprep.subr.bf16.mxu0 0
  %2728 = vmatpush1.bf16.msra.mxu0 0
  %2729 = vmatprep.subr.bf16.mxu0 0
  %2730 = vmatpush1.bf16.msra.mxu0 0
  %2731 = vmatprep.subr.bf16.mxu0 0
  %2732 = vmatpush1.bf16.msra.mxu0 0
  %2733 = vmatprep.subr.bf16.mxu0 0
  %2734 = vmatpush1.bf16.msra.mxu0 0
  %2735 = vmatprep.subr.bf16.mxu0 0
  %2736 = vmatpush1.bf16.msra.mxu0 0
  %2737 = vmatprep.subr.bf16.mxu0 0
  %2738 = vmatpush1.bf16.msra.mxu0 0
  %2739 = vmatprep.subr.bf16.mxu0 0
  %2740 = vmatpush1.bf16.msra.mxu0 0
  %2741 = vmatprep.subr.bf16.mxu0 0
  %2742 = vmatpush1.bf16.msra.mxu0 0
  %2743 = vmatprep.mubr.bf16.mxu0 0
  %2744 = vmatmul.mubr.bf16.gmra.mrb[0].mxu0 %v2669
  %v2745 = vpop.f32.mrb[0].mxu0
  %v2746 = vadd.f32 0.0, %v2745
  %v2747 = vpop.f32.mrb[0].mxu0
  %v2748 = vadd.f32 0.0, %v2747
  %v2749 = vpop.f32.mrb[0].mxu0
  %v2750 = vpop.f32.mrb[0].mxu0
  %2751 = vdwg.mxu0
  %v2752 = vadd.f32 %v2665, %v2705
  %v2753 = vadd.f32 %v2666, %v2707
  %v2754 = vadd.f32 %v2667, %v2746
  %v2755 = vadd.f32 %v2668, %v2748
  %v2756 = vtanh.pop %v2752
  %v2757 = vtanh.pop %v2753
  %v2758 = vtanh.pop %v2754
  %v2759 = vtanh.pop %v2755
  %v2760 = vmul.f32 %v2756, 0.5
  %v2761 = vadd.f32 %v2760, 0.5
  %v2762 = vmul.f32 %v2757, 0.5
  %v2763 = vadd.f32 %v2762, 0.5
  %v2764 = vmul.f32 %v2759, 0.5
  %v2765 = vadd.f32 %v2764, 0.5
  %v2766 = vmul.f32 %v2763, %v2652
  %v2767 = vmul.f32 %v2761, %v2758
  %v2768 = vadd.f32 %v2766, %v2767
  %v2769 = vtanh.pop %v2768
  %v2770 = vmul.f32 %v2765, %v2769
  %2771 = vst [vmem:[#allocation2 + $0x8] sm:$0xff] %v2770
  %2772 = vst [vmem:[#allocation3 + $0x30] sm:$0xff] %v2770
  %v2773 = vld [vmem:[#allocation5 + $0x40] sm:$0xff]
  %v2774 = vld [vmem:[#allocation5 + $0x48] sm:$0xff]
  %v2775 = vld [vmem:[#allocation5 + $0x50] sm:$0xff]
  %v2776 = vld [vmem:[#allocation5 + $0x58] sm:$0xff]
  %v2777 = vld [vmem:[#allocation6 + $0xa0] sm:$0xff]
  %v2778 = vld [vmem:[#allocation6 + $0xa8] sm:$0xff]
  %v2779 = vld [vmem:[#allocation6 + $0xb0] sm:$0xff]
  %v2780 = vld [vmem:[#allocation6 + $0xb8] sm:$0xff]
  %v2781 = vadd.f32 %v2773, %v2777
  %v2782 = vadd.f32 %v2774, %v2778
  %v2783 = vadd.f32 %v2775, %v2779
  %v2784 = vadd.f32 %v2776, %v2780
  %v2785 = vpack.c.bf16 %v2770, %v2770
  %2786 = vmatprep.subr.bf16.mxu0 %v2491
  %2787 = vmatpush1.bf16.msra.mxu0 %v2490
  %2788 = vmatprep.subr.bf16.mxu0 %v2495
  %2789 = vmatpush1.bf16.msra.mxu0 %v2494
  %2790 = vmatprep.subr.bf16.mxu0 %v2499
  %2791 = vmatpush1.bf16.msra.mxu0 %v2498
  %2792 = vmatprep.subr.bf16.mxu0 %v2503
  %2793 = vmatpush1.bf16.msra.mxu0 %v2502
  %2794 = vmatprep.subr.bf16.mxu0 %v2507
  %2795 = vmatpush1.bf16.msra.mxu0 %v2506
  %2796 = vmatprep.subr.bf16.mxu0 %v2511
  %2797 = vmatpush1.bf16.msra.mxu0 %v2510
  %2798 = vmatprep.subr.bf16.mxu0 %v2515
  %2799 = vmatpush1.bf16.msra.mxu0 %v2514
  %2800 = vmatprep.subr.bf16.mxu0 %v2519
  %2801 = vmatpush1.bf16.msra.mxu0 %v2518
  %2802 = vmatprep.subr.bf16.mxu0 0
  %2803 = vmatpush1.bf16.msra.mxu0 0
  %2804 = vmatprep.subr.bf16.mxu0 0
  %2805 = vmatpush1.bf16.msra.mxu0 0
  %2806 = vmatprep.subr.bf16.mxu0 0
  %2807 = vmatpush1.bf16.msra.mxu0 0
  %2808 = vmatprep.subr.bf16.mxu0 0
  %2809 = vmatpush1.bf16.msra.mxu0 0
  %2810 = vmatprep.subr.bf16.mxu0 0
  %2811 = vmatpush1.bf16.msra.mxu0 0
  %2812 = vmatprep.subr.bf16.mxu0 0
  %2813 = vmatpush1.bf16.msra.mxu0 0
  %2814 = vmatprep.subr.bf16.mxu0 0
  %2815 = vmatpush1.bf16.msra.mxu0 0
  %2816 = vmatprep.subr.bf16.mxu0 0
  %2817 = vmatpush1.bf16.msra.mxu0 0
  %2818 = vmatprep.mubr.bf16.mxu0 0
  %2819 = vmatmul.mubr.bf16.gmra.mrb[0].mxu0 %v2785
  %v2820 = vpop.f32.mrb[0].mxu0
  %v2821 = vadd.f32 0.0, %v2820
  %v2822 = vpop.f32.mrb[0].mxu0
  %v2823 = vadd.f32 0.0, %v2822
  %v2824 = vpop.f32.mrb[0].mxu0
  %v2825 = vpop.f32.mrb[0].mxu0
  %2826 = vdwg.mxu0
  %2827 = vmatprep.subr.bf16.mxu0 %v2493
  %2828 = vmatpush1.bf16.msra.mxu0 %v2492
  %2829 = vmatprep.subr.bf16.mxu0 %v2497
  %2830 = vmatpush1.bf16.msra.mxu0 %v2496
  %2831 = vmatprep.subr.bf16.mxu0 %v2501
  %2832 = vmatpush1.bf16.msra.mxu0 %v2500
  %2833 = vmatprep.subr.bf16.mxu0 %v2505
  %2834 = vmatpush1.bf16.msra.mxu0 %v2504
  %2835 = vmatprep.subr.bf16.mxu0 %v2509
  %2836 = vmatpush1.bf16.msra.mxu0 %v2508
  %2837 = vmatprep.subr.bf16.mxu0 %v2513
  %2838 = vmatpush1.bf16.msra.mxu0 %v2512
  %2839 = vmatprep.subr.bf16.mxu0 %v2517
  %2840 = vmatpush1.bf16.msra.mxu0 %v2516
  %2841 = vmatprep.subr.bf16.mxu0 %v2521
  %2842 = vmatpush1.bf16.msra.mxu0 %v2520
  %2843 = vmatprep.subr.bf16.mxu0 0
  %2844 = vmatpush1.bf16.msra.mxu0 0
  %2845 = vmatprep.subr.bf16.mxu0 0
  %2846 = vmatpush1.bf16.msra.mxu0 0
  %2847 = vmatprep.subr.bf16.mxu0 0
  %2848 = vmatpush1.bf16.msra.mxu0 0
  %2849 = vmatprep.subr.bf16.mxu0 0
  %2850 = vmatpush1.bf16.msra.mxu0 0
  %2851 = vmatprep.subr.bf16.mxu0 0
  %2852 = vmatpush1.bf16.msra.mxu0 0
  %2853 = vmatprep.subr.bf16.mxu0 0
  %2854 = vmatpush1.bf16.msra.mxu0 0
  %2855 = vmatprep.subr.bf16.mxu0 0
  %2856 = vmatpush1.bf16.msra.mxu0 0
  %2857 = vmatprep.subr.bf16.mxu0 0
  %2858 = vmatpush1.bf16.msra.mxu0 0
  %2859 = vmatprep.mubr.bf16.mxu0 0
  %2860 = vmatmul.mubr.bf16.gmra.mrb[0].mxu0 %v2785
  %v2861 = vpop.f32.mrb[0].mxu0
  %v2862 = vadd.f32 0.0, %v2861
  %v2863 = vpop.f32.mrb[0].mxu0
  %v2864 = vadd.f32 0.0, %v2863
  %v2865 = vpop.f32.mrb[0].mxu0
  %v2866 = vpop.f32.mrb[0].mxu0
  %2867 = vdwg.mxu0
  %v2868 = vadd.f32 %v2781, %v2821
  %v2869 = vadd.f32 %v2782, %v2823
  %v2870 = vadd.f32 %v2783, %v2862
  %v2871 = vadd.f32 %v2784, %v2864
  %v2872 = vtanh.pop %v2868
  %v2873 = vtanh.pop %v2869
  %v2874 = vtanh.pop %v2870
  %v2875 = vtanh.pop %v2871
  %v2876 = vmul.f32 %v2872, 0.5
  %v2877 = vadd.f32 %v2876, 0.5
  %v2878 = vmul.f32 %v2873, 0.5
  %v2879 = vadd.f32 %v2878, 0.5
  %v2880 = vmul.f32 %v2875, 0.5
  %v2881 = vadd.f32 %v2880, 0.5
  %v2882 = vmul.f32 %v2879, %v2768
  %v2883 = vmul.f32 %v2877, %v2874
  %v2884 = vadd.f32 %v2882, %v2883
  %v2885 = vtanh.pop %v2884
  %v2886 = vmul.f32 %v2881, %v2885
  %2887 = vst [vmem:[#allocation2 + $0x10] sm:$0xff] %v2886
  %2888 = vst [vmem:[#allocation3 + $0x28] sm:$0xff] %v2886
  %v2889 = vld [vmem:[#allocation5 + $0x60] sm:$0xff]
  %v2890 = vld [vmem:[#allocation5 + $0x68] sm:$0xff]
  %v2891 = vld [vmem:[#allocation5 + $0x70] sm:$0xff]
  %v2892 = vld [vmem:[#allocation5 + $0x78] sm:$0xff]
  %v2893 = vld [vmem:[#allocation6 + $0x80] sm:$0xff]
  %v2894 = vld [vmem:[#allocation6 + $0x88] sm:$0xff]
  %v2895 = vld [vmem:[#allocation6 + $0x90] sm:$0xff]
  %v2896 = vld [vmem:[#allocation6 + $0x98] sm:$0xff]
  %v2897 = vadd.f32 %v2889, %v2893
  %v2898 = vadd.f32 %v2890, %v2894
  %v2899 = vadd.f32 %v2891, %v2895
  %v2900 = vadd.f32 %v2892, %v2896
  %v2901 = vpack.c.bf16 %v2886, %v2886
  %2902 = vmatprep.subr.bf16.mxu0 %v2491
  %2903 = vmatpush1.bf16.msra.mxu0 %v2490
  %2904 = vmatprep.subr.bf16.mxu0 %v2495
  %2905 = vmatpush1.bf16.msra.mxu0 %v2494
  %2906 = vmatprep.subr.bf16.mxu0 %v2499
  %2907 = vmatpush1.bf16.msra.mxu0 %v2498
  %2908 = vmatprep.subr.bf16.mxu0 %v2503
  %2909 = vmatpush1.bf16.msra.mxu0 %v2502
  %2910 = vmatprep.subr.bf16.mxu0 %v2507
  %2911 = vmatpush1.bf16.msra.mxu0 %v2506
  %2912 = vmatprep.subr.bf16.mxu0 %v2511
  %2913 = vmatpush1.bf16.msra.mxu0 %v2510
  %2914 = vmatprep.subr.bf16.mxu0 %v2515
  %2915 = vmatpush1.bf16.msra.mxu0 %v2514
  %2916 = vmatprep.subr.bf16.mxu0 %v2519
  %2917 = vmatpush1.bf16.msra.mxu0 %v2518
  %2918 = vmatprep.subr.bf16.mxu0 0
  %2919 = vmatpush1.bf16.msra.mxu0 0
  %2920 = vmatprep.subr.bf16.mxu0 0
  %2921 = vmatpush1.bf16.msra.mxu0 0
  %2922 = vmatprep.subr.bf16.mxu0 0
  %2923 = vmatpush1.bf16.msra.mxu0 0
  %2924 = vmatprep.subr.bf16.mxu0 0
  %2925 = vmatpush1.bf16.msra.mxu0 0
  %2926 = vmatprep.subr.bf16.mxu0 0
  %2927 = vmatpush1.bf16.msra.mxu0 0
  %2928 = vmatprep.subr.bf16.mxu0 0
  %2929 = vmatpush1.bf16.msra.mxu0 0
  %2930 = vmatprep.subr.bf16.mxu0 0
  %2931 = vmatpush1.bf16.msra.mxu0 0
  %2932 = vmatprep.subr.bf16.mxu0 0
  %2933 = vmatpush1.bf16.msra.mxu0 0
  %2934 = vmatprep.mubr.bf16.mxu0 0
  %2935 = vmatmul.mubr.bf16.gmra.mrb[0].mxu0 %v2901
  %v2936 = vpop.f32.mrb[0].mxu0
  %v2937 = vadd.f32 0.0, %v2936
  %v2938 = vpop.f32.mrb[0].mxu0
  %v2939 = vadd.f32 0.0, %v2938
  %v2940 = vpop.f32.mrb[0].mxu0
  %v2941 = vpop.f32.mrb[0].mxu0
  %2942 = vdwg.mxu0
  %2943 = vmatprep.subr.bf16.mxu0 %v2493
  %2944 = vmatpush1.bf16.msra.mxu0 %v2492
  %2945 = vmatprep.subr.bf16.mxu0 %v2497
  %2946 = vmatpush1.bf16.msra.mxu0 %v2496
  %2947 = vmatprep.subr.bf16.mxu0 %v2501
  %2948 = vmatpush1.bf16.msra.mxu0 %v2500
  %2949 = vmatprep.subr.bf16.mxu0 %v2505
  %2950 = vmatpush1.bf16.msra.mxu0 %v2504
  %2951 = vmatprep.subr.bf16.mxu0 %v2509
  %2952 = vmatpush1.bf16.msra.mxu0 %v2508
  %2953 = vmatprep.subr.bf16.mxu0 %v2513
  %2954 = vmatpush1.bf16.msra.mxu0 %v2512
  %2955 = vmatprep.subr.bf16.mxu0 %v2517
  %2956 = vmatpush1.bf16.msra.mxu0 %v2516
  %2957 = vmatprep.subr.bf16.mxu0 %v2521
  %2958 = vmatpush1.bf16.msra.mxu0 %v2520
  %2959 = vmatprep.subr.bf16.mxu0 0
  %2960 = vmatpush1.bf16.msra.mxu0 0
  %2961 = vmatprep.subr.bf16.mxu0 0
  %2962 = vmatpush1.bf16.msra.mxu0 0
  %2963 = vmatprep.subr.bf16.mxu0 0
  %2964 = vmatpush1.bf16.msra.mxu0 0
  %2965 = vmatprep.subr.bf16.mxu0 0
  %2966 = vmatpush1.bf16.msra.mxu0 0
  %2967 = vmatprep.subr.bf16.mxu0 0
  %2968 = vmatpush1.bf16.msra.mxu0 0
  %2969 = vmatprep.subr.bf16.mxu0 0
  %2970 = vmatpush1.bf16.msra.mxu0 0
  %2971 = vmatprep.subr.bf16.mxu0 0
  %2972 = vmatpush1.bf16.msra.mxu0 0
  %2973 = vmatprep.subr.bf16.mxu0 0
  %2974 = vmatpush1.bf16.msra.mxu0 0
  %2975 = vmatprep.mubr.bf16.mxu0 0
  %2976 = vmatmul.mubr.bf16.gmra.mrb[0].mxu0 %v2901
  %v2977 = vpop.f32.mrb[0].mxu0
  %v2978 = vadd.f32 0.0, %v2977
  %v2979 = vpop.f32.mrb[0].mxu0
  %v2980 = vadd.f32 0.0, %v2979
  %v2981 = vpop.f32.mrb[0].mxu0
  %v2982 = vpop.f32.mrb[0].mxu0
  %2983 = vdwg.mxu0
  %v2984 = vadd.f32 %v2897, %v2937
  %v2985 = vadd.f32 %v2898, %v2939
  %v2986 = vadd.f32 %v2899, %v2978
  %v2987 = vadd.f32 %v2900, %v2980
  %v2988 = vtanh.pop %v2984
  %v2989 = vtanh.pop %v2985
  %v2990 = vtanh.pop %v2986
  %v2991 = vtanh.pop %v2987
  %v2992 = vmul.f32 %v2988, 0.5
  %v2993 = vadd.f32 %v2992, 0.5
  %v2994 = vmul.f32 %v2989, 0.5
  %v2995 = vadd.f32 %v2994, 0.5
  %v2996 = vmul.f32 %v2991, 0.5
  %v2997 = vadd.f32 %v2996, 0.5
  %v2998 = vmul.f32 %v2995, %v2884
  %v2999 = vmul.f32 %v2993, %v2990
  %v3000 = vadd.f32 %v2998, %v2999
  %v3001 = vtanh.pop %v3000
  %v3002 = vmul.f32 %v2997, %v3001
  %3003 = vst [vmem:[#allocation2 + $0x18] sm:$0xff] %v3002
  %3004 = vst [vmem:[#allocation3 + $0x20] sm:$0xff] %v3002
  %v3005 = vld [vmem:[#allocation5 + $0x80] sm:$0xff]
  %v3006 = vld [vmem:[#allocation5 + $0x88] sm:$0xff]
  %v3007 = vld [vmem:[#allocation5 + $0x90] sm:$0xff]
  %v3008 = vld [vmem:[#allocation5 + $0x98] sm:$0xff]
  %v3009 = vld [vmem:[#allocation6 + $0x60] sm:$0xff]
  %v3010 = vld [vmem:[#allocation6 + $0x68] sm:$0xff]
  %v3011 = vld [vmem:[#allocation6 + $0x70] sm:$0xff]
  %v3012 = vld [vmem:[#allocation6 + $0x78] sm:$0xff]
  %v3013 = vadd.f32 %v3005, %v3009
  %v3014 = vadd.f32 %v3006, %v3010
  %v3015 = vadd.f32 %v3007, %v3011
  %v3016 = vadd.f32 %v3008, %v3012
  %v3017 = vpack.c.bf16 %v3002, %v3002
  %3018 = vmatprep.subr.bf16.mxu0 %v2491
  %3019 = vmatpush1.bf16.msra.mxu0 %v2490
  %3020 = vmatprep.subr.bf16.mxu0 %v2495
  %3021 = vmatpush1.bf16.msra.mxu0 %v2494
  %3022 = vmatprep.subr.bf16.mxu0 %v2499
  %3023 = vmatpush1.bf16.msra.mxu0 %v2498
  %3024 = vmatprep.subr.bf16.mxu0 %v2503
  %3025 = vmatpush1.bf16.msra.mxu0 %v2502
  %3026 = vmatprep.subr.bf16.mxu0 %v2507
  %3027 = vmatpush1.bf16.msra.mxu0 %v2506
  %3028 = vmatprep.subr.bf16.mxu0 %v2511
  %3029 = vmatpush1.bf16.msra.mxu0 %v2510
  %3030 = vmatprep.subr.bf16.mxu0 %v2515
  %3031 = vmatpush1.bf16.msra.mxu0 %v2514
  %3032 = vmatprep.subr.bf16.mxu0 %v2519
  %3033 = vmatpush1.bf16.msra.mxu0 %v2518
  %3034 = vmatprep.subr.bf16.mxu0 0
  %3035 = vmatpush1.bf16.msra.mxu0 0
  %3036 = vmatprep.subr.bf16.mxu0 0
  %3037 = vmatpush1.bf16.msra.mxu0 0
  %3038 = vmatprep.subr.bf16.mxu0 0
  %3039 = vmatpush1.bf16.msra.mxu0 0
  %3040 = vmatprep.subr.bf16.mxu0 0
  %3041 = vmatpush1.bf16.msra.mxu0 0
  %3042 = vmatprep.subr.bf16.mxu0 0
  %3043 = vmatpush1.bf16.msra.mxu0 0
  %3044 = vmatprep.subr.bf16.mxu0 0
  %3045 = vmatpush1.bf16.msra.mxu0 0
  %3046 = vmatprep.subr.bf16.mxu0 0
  %3047 = vmatpush1.bf16.msra.mxu0 0
  %3048 = vmatprep.subr.bf16.mxu0 0
  %3049 = vmatpush1.bf16.msra.mxu0 0
  %3050 = vmatprep.mubr.bf16.mxu0 0
  %3051 = vmatmul.mubr.bf16.gmra.mrb[0].mxu0 %v3017
  %v3052 = vpop.f32.mrb[0].mxu0
  %v3053 = vadd.f32 0.0, %v3052
  %v3054 = vpop.f32.mrb[0].mxu0
  %v3055 = vadd.f32 0.0, %v3054
  %v3056 = vpop.f32.mrb[0].mxu0
  %v3057 = vpop.f32.mrb[0].mxu0
  %3058 = vdwg.mxu0
  %3059 = vmatprep.subr.bf16.mxu0 %v2493
  %3060 = vmatpush1.bf16.msra.mxu0 %v2492
  %3061 = vmatprep.subr.bf16.mxu0 %v2497
  %3062 = vmatpush1.bf16.msra.mxu0 %v2496
  %3063 = vmatprep.subr.bf16.mxu0 %v2501
  %3064 = vmatpush1.bf16.msra.mxu0 %v2500
  %3065 = vmatprep.subr.bf16.mxu0 %v2505
  %3066 = vmatpush1.bf16.msra.mxu0 %v2504
  %3067 = vmatprep.subr.bf16.mxu0 %v2509
  %3068 = vmatpush1.bf16.msra.mxu0 %v2508
  %3069 = vmatprep.subr.bf16.mxu0 %v2513
  %3070 = vmatpush1.bf16.msra.mxu0 %v2512
  %3071 = vmatprep.subr.bf16.mxu0 %v2517
  %3072 = vmatpush1.bf16.msra.mxu0 %v2516
  %3073 = vmatprep.subr.bf16.mxu0 %v2521
  %3074 = vmatpush1.bf16.msra.mxu0 %v2520
  %3075 = vmatprep.subr.bf16.mxu0 0
  %3076 = vmatpush1.bf16.msra.mxu0 0
  %3077 = vmatprep.subr.bf16.mxu0 0
  %3078 = vmatpush1.bf16.msra.mxu0 0
  %3079 = vmatprep.subr.bf16.mxu0 0
  %3080 = vmatpush1.bf16.msra.mxu0 0
  %3081 = vmatprep.subr.bf16.mxu0 0
  %3082 = vmatpush1.bf16.msra.mxu0 0
  %3083 = vmatprep.subr.bf16.mxu0 0
  %3084 = vmatpush1.bf16.msra.mxu0 0
  %3085 = vmatprep.subr.bf16.mxu0 0
  %3086 = vmatpush1.bf16.msra.mxu0 0
  %3087 = vmatprep.subr.bf16.mxu0 0
  %3088 = vmatpush1.bf16.msra.mxu0 0
  %3089 = vmatprep.subr.bf16.mxu0 0
  %3090 = vmatpush1.bf16.msra.mxu0 0
  %3091 = vmatprep.mubr.bf16.mxu0 0
  %3092 = vmatmul.mubr.bf16.gmra.mrb[0].mxu0 %v3017
  %v3093 = vpop.f32.mrb[0].mxu0
  %v3094 = vadd.f32 0.0, %v3093
  %v3095 = vpop.f32.mrb[0].mxu0
  %v3096 = vadd.f32 0.0, %v3095
  %v3097 = vpop.f32.mrb[0].mxu0
  %v3098 = vpop.f32.mrb[0].mxu0
  %3099 = vdwg.mxu0
  %v3100 = vadd.f32 %v3013, %v3053
  %v3101 = vadd.f32 %v3014, %v3055
  %v3102 = vadd.f32 %v3015, %v3094
  %v3103 = vadd.f32 %v3016, %v3096
  %v3104 = vtanh.pop %v3100
  %v3105 = vtanh.pop %v3101
  %v3106 = vtanh.pop %v3102
  %v3107 = vtanh.pop %v3103
  %v3108 = vmul.f32 %v3104, 0.5
  %v3109 = vadd.f32 %v3108, 0.5
  %v3110 = vmul.f32 %v3105, 0.5
  %v3111 = vadd.f32 %v3110, 0.5
  %v3112 = vmul.f32 %v3107, 0.5
  %v3113 = vadd.f32 %v3112, 0.5
  %v3114 = vmul.f32 %v3111, %v3000
  %v3115 = vmul.f32 %v3109, %v3106
  %v3116 = vadd.f32 %v3114, %v3115
  %v3117 = vtanh.pop %v3116
  %v3118 = vmul.f32 %v3113, %v3117
  %3119 = vst [vmem:[#allocation2 + $0x20] sm:$0xff] %v3118
  %3120 = vst [vmem:[#allocation3 + $0x18] sm:$0xff] %v3118
  %v3121 = vld [vmem:[#allocation5 + $0xa0] sm:$0xff]
  %v3122 = vld [vmem:[#allocation5 + $0xa8] sm:$0xff]
  %v3123 = vld [vmem:[#allocation5 + $0xb0] sm:$0xff]
  %v3124 = vld [vmem:[#allocation5 + $0xb8] sm:$0xff]
  %v3125 = vld [vmem:[#allocation6 + $0x40] sm:$0xff]
  %v3126 = vld [vmem:[#allocation6 + $0x48] sm:$0xff]
  %v3127 = vld [vmem:[#allocation6 + $0x50] sm:$0xff]
  %v3128 = vld [vmem:[#allocation6 + $0x58] sm:$0xff]
  %v3129 = vadd.f32 %v3121, %v3125
  %v3130 = vadd.f32 %v3122, %v3126
  %v3131 = vadd.f32 %v3123, %v3127
  %v3132 = vadd.f32 %v3124, %v3128
  %v3133 = vpack.c.bf16 %v3118, %v3118
  %3134 = vmatprep.subr.bf16.mxu0 %v2491
  %3135 = vmatpush1.bf16.msra.mxu0 %v2490
  %3136 = vmatprep.subr.bf16.mxu0 %v2495
  %3137 = vmatpush1.bf16.msra.mxu0 %v2494
  %3138 = vmatprep.subr.bf16.mxu0 %v2499
  %3139 = vmatpush1.bf16.msra.mxu0 %v2498
  %3140 = vmatprep.subr.bf16.mxu0 %v2503
  %3141 = vmatpush1.bf16.msra.mxu0 %v2502
  %3142 = vmatprep.subr.bf16.mxu0 %v2507
  %3143 = vmatpush1.bf16.msra.mxu0 %v2506
  %3144 = vmatprep.subr.bf16.mxu0 %v2511
  %3145 = vmatpush1.bf16.msra.mxu0 %v2510
  %3146 = vmatprep.subr.bf16.mxu0 %v2515
  %3147 = vmatpush1.bf16.msra.mxu0 %v2514
  %3148 = vmatprep.subr.bf16.mxu0 %v2519
  %3149 = vmatpush1.bf16.msra.mxu0 %v2518
  %3150 = vmatprep.subr.bf16.mxu0 0
  %3151 = vmatpush1.bf16.msra.mxu0 0
  %3152 = vmatprep.subr.bf16.mxu0 0
  %3153 = vmatpush1.bf16.msra.mxu0 0
  %3154 = vmatprep.subr.bf16.mxu0 0
  %3155 = vmatpush1.bf16.msra.mxu0 0
  %3156 = vmatprep.subr.bf16.mxu0 0
  %3157 = vmatpush1.bf16.msra.mxu0 0
  %3158 = vmatprep.subr.bf16.mxu0 0
  %3159 = vmatpush1.bf16.msra.mxu0 0
  %3160 = vmatprep.subr.bf16.mxu0 0
  %3161 = vmatpush1.bf16.msra.mxu0 0
  %3162 = vmatprep.subr.bf16.mxu0 0
  %3163 = vmatpush1.bf16.msra.mxu0 0
  %3164 = vmatprep.subr.bf16.mxu0 0
  %3165 = vmatpush1.bf16.msra.mxu0 0
  %3166 = vmatprep.mubr.bf16.mxu0 0
  %3167 = vmatmul.mubr.bf16.gmra.mrb[0].mxu0 %v3133
  %v3168 = vpop.f32.mrb[0].mxu0
  %v3169 = vadd.f32 0.0, %v3168
  %v3170 = vpop.f32.mrb[0].mxu0
  %v3171 = vadd.f32 0.0, %v3170
  %v3172 = vpop.f32.mrb[0].mxu0
  %v3173 = vpop.f32.mrb[0].mxu0
  %3174 = vdwg.mxu0
  %3175 = vmatprep.subr.bf16.mxu0 %v2493
  %3176 = vmatpush1.bf16.msra.mxu0 %v2492
  %3177 = vmatprep.subr.bf16.mxu0 %v2497
  %3178 = vmatpush1.bf16.msra.mxu0 %v2496
  %3179 = vmatprep.subr.bf16.mxu0 %v2501
  %3180 = vmatpush1.bf16.msra.mxu0 %v2500
  %3181 = vmatprep.subr.bf16.mxu0 %v2505
  %3182 = vmatpush1.bf16.msra.mxu0 %v2504
  %3183 = vmatprep.subr.bf16.mxu0 %v2509
  %3184 = vmatpush1.bf16.msra.mxu0 %v2508
  %3185 = vmatprep.subr.bf16.mxu0 %v2513
  %3186 = vmatpush1.bf16.msra.mxu0 %v2512
  %3187 = vmatprep.subr.bf16.mxu0 %v2517
  %3188 = vmatpush1.bf16.msra.mxu0 %v2516
  %3189 = vmatprep.subr.bf16.mxu0 %v2521
  %3190 = vmatpush1.bf16.msra.mxu0 %v2520
  %3191 = vmatprep.subr.bf16.mxu0 0
  %3192 = vmatpush1.bf16.msra.mxu0 0
  %3193 = vmatprep.subr.bf16.mxu0 0
  %3194 = vmatpush1.bf16.msra.mxu0 0
  %3195 = vmatprep.subr.bf16.mxu0 0
  %3196 = vmatpush1.bf16.msra.mxu0 0
  %3197 = vmatprep.subr.bf16.mxu0 0
  %3198 = vmatpush1.bf16.msra.mxu0 0
  %3199 = vmatprep.subr.bf16.mxu0 0
  %3200 = vmatpush1.bf16.msra.mxu0 0
  %3201 = vmatprep.subr.bf16.mxu0 0
  %3202 = vmatpush1.bf16.msra.mxu0 0
  %3203 = vmatprep.subr.bf16.mxu0 0
  %3204 = vmatpush1.bf16.msra.mxu0 0
  %3205 = vmatprep.subr.bf16.mxu0 0
  %3206 = vmatpush1.bf16.msra.mxu0 0
  %3207 = vmatprep.mubr.bf16.mxu0 0
  %3208 = vmatmul.mubr.bf16.gmra.mrb[0].mxu0 %v3133
  %v3209 = vpop.f32.mrb[0].mxu0
  %v3210 = vadd.f32 0.0, %v3209
  %v3211 = vpop.f32.mrb[0].mxu0
  %v3212 = vadd.f32 0.0, %v3211
  %v3213 = vpop.f32.mrb[0].mxu0
  %v3214 = vpop.f32.mrb[0].mxu0
  %3215 = vdwg.mxu0
  %v3216 = vadd.f32 %v3129, %v3169
  %v3217 = vadd.f32 %v3130, %v3171
  %v3218 = vadd.f32 %v3131, %v3210
  %v3219 = vadd.f32 %v3132, %v3212
  %v3220 = vtanh.pop %v3216
  %v3221 = vtanh.pop %v3217
  %v3222 = vtanh.pop %v3218
  %v3223 = vtanh.pop %v3219
  %v3224 = vmul.f32 %v3220, 0.5
  %v3225 = vadd.f32 %v3224, 0.5
  %v3226 = vmul.f32 %v3221, 0.5
  %v3227 = vadd.f32 %v3226, 0.5
  %v3228 = vmul.f32 %v3223, 0.5
  %v3229 = vadd.f32 %v3228, 0.5
  %v3230 = vmul.f32 %v3227, %v3116
  %v3231 = vmul.f32 %v3225, %v3222
  %v3232 = vadd.f32 %v3230, %v3231
  %v3233 = vtanh.pop %v3232
  %v3234 = vmul.f32 %v3229, %v3233
  %3235 = vst [vmem:[#allocation2 + $0x28] sm:$0xff] %v3234
  %3236 = vst [vmem:[#allocation3 + $0x10] sm:$0xff] %v3234
  %v3237 = vld [vmem:[#allocation5 + $0xc0] sm:$0xff]
  %v3238 = vld [vmem:[#allocation5 + $0xc8] sm:$0xff]
  %v3239 = vld [vmem:[#allocation5 + $0xd0] sm:$0xff]
  %v3240 = vld [vmem:[#allocation5 + $0xd8] sm:$0xff]
  %v3241 = vld [vmem:[#allocation6 + $0x20] sm:$0xff]
  %v3242 = vld [vmem:[#allocation6 + $0x28] sm:$0xff]
  %v3243 = vld [vmem:[#allocation6 + $0x30] sm:$0xff]
  %v3244 = vld [vmem:[#allocation6 + $0x38] sm:$0xff]
  %v3245 = vadd.f32 %v3237, %v3241
  %v3246 = vadd.f32 %v3238, %v3242
  %v3247 = vadd.f32 %v3239, %v3243
  %v3248 = vadd.f32 %v3240, %v3244
  %v3249 = vpack.c.bf16 %v3234, %v3234
  %3250 = vmatprep.subr.bf16.mxu0 %v2491
  %3251 = vmatpush1.bf16.msra.mxu0 %v2490
  %3252 = vmatprep.subr.bf16.mxu0 %v2495
  %3253 = vmatpush1.bf16.msra.mxu0 %v2494
  %3254 = vmatprep.subr.bf16.mxu0 %v2499
  %3255 = vmatpush1.bf16.msra.mxu0 %v2498
  %3256 = vmatprep.subr.bf16.mxu0 %v2503
  %3257 = vmatpush1.bf16.msra.mxu0 %v2502
  %3258 = vmatprep.subr.bf16.mxu0 %v2507
  %3259 = vmatpush1.bf16.msra.mxu0 %v2506
  %3260 = vmatprep.subr.bf16.mxu0 %v2511
  %3261 = vmatpush1.bf16.msra.mxu0 %v2510
  %3262 = vmatprep.subr.bf16.mxu0 %v2515
  %3263 = vmatpush1.bf16.msra.mxu0 %v2514
  %3264 = vmatprep.subr.bf16.mxu0 %v2519
  %3265 = vmatpush1.bf16.msra.mxu0 %v2518
  %3266 = vmatprep.subr.bf16.mxu0 0
  %3267 = vmatpush1.bf16.msra.mxu0 0
  %3268 = vmatprep.subr.bf16.mxu0 0
  %3269 = vmatpush1.bf16.msra.mxu0 0
  %3270 = vmatprep.subr.bf16.mxu0 0
  %3271 = vmatpush1.bf16.msra.mxu0 0
  %3272 = vmatprep.subr.bf16.mxu0 0
  %3273 = vmatpush1.bf16.msra.mxu0 0
  %3274 = vmatprep.subr.bf16.mxu0 0
  %3275 = vmatpush1.bf16.msra.mxu0 0
  %3276 = vmatprep.subr.bf16.mxu0 0
  %3277 = vmatpush1.bf16.msra.mxu0 0
  %3278 = vmatprep.subr.bf16.mxu0 0
  %3279 = vmatpush1.bf16.msra.mxu0 0
  %3280 = vmatprep.subr.bf16.mxu0 0
  %3281 = vmatpush1.bf16.msra.mxu0 0
  %3282 = vmatprep.mubr.bf16.mxu0 0
  %3283 = vmatmul.mubr.bf16.gmra.mrb[0].mxu0 %v3249
  %v3284 = vpop.f32.mrb[0].mxu0
  %v3285 = vadd.f32 0.0, %v3284
  %v3286 = vpop.f32.mrb[0].mxu0
  %v3287 = vadd.f32 0.0, %v3286
  %v3288 = vpop.f32.mrb[0].mxu0
  %v3289 = vpop.f32.mrb[0].mxu0
  %3290 = vdwg.mxu0
  %3291 = vmatprep.subr.bf16.mxu0 %v2493
  %3292 = vmatpush1.bf16.msra.mxu0 %v2492
  %3293 = vmatprep.subr.bf16.mxu0 %v2497
  %3294 = vmatpush1.bf16.msra.mxu0 %v2496
  %3295 = vmatprep.subr.bf16.mxu0 %v2501
  %3296 = vmatpush1.bf16.msra.mxu0 %v2500
  %3297 = vmatprep.subr.bf16.mxu0 %v2505
  %3298 = vmatpush1.bf16.msra.mxu0 %v2504
  %3299 = vmatprep.subr.bf16.mxu0 %v2509
  %3300 = vmatpush1.bf16.msra.mxu0 %v2508
  %3301 = vmatprep.subr.bf16.mxu0 %v2513
  %3302 = vmatpush1.bf16.msra.mxu0 %v2512
  %3303 = vmatprep.subr.bf16.mxu0 %v2517
  %3304 = vmatpush1.bf16.msra.mxu0 %v2516
  %3305 = vmatprep.subr.bf16.mxu0 %v2521
  %3306 = vmatpush1.bf16.msra.mxu0 %v2520
  %3307 = vmatprep.subr.bf16.mxu0 0
  %3308 = vmatpush1.bf16.msra.mxu0 0
  %3309 = vmatprep.subr.bf16.mxu0 0
  %3310 = vmatpush1.bf16.msra.mxu0 0
  %3311 = vmatprep.subr.bf16.mxu0 0
  %3312 = vmatpush1.bf16.msra.mxu0 0
  %3313 = vmatprep.subr.bf16.mxu0 0
  %3314 = vmatpush1.bf16.msra.mxu0 0
  %3315 = vmatprep.subr.bf16.mxu0 0
  %3316 = vmatpush1.bf16.msra.mxu0 0
  %3317 = vmatprep.subr.bf16.mxu0 0
  %3318 = vmatpush1.bf16.msra.mxu0 0
  %3319 = vmatprep.subr.bf16.mxu0 0
  %3320 = vmatpush1.bf16.msra.mxu0 0
  %3321 = vmatprep.subr.bf16.mxu0 0
  %3322 = vmatpush1.bf16.msra.mxu0 0
  %3323 = vmatprep.mubr.bf16.mxu0 0
  %3324 = vmatmul.mubr.bf16.gmra.mrb[0].mxu0 %v3249
  %v3325 = vpop.f32.mrb[0].mxu0
  %v3326 = vadd.f32 0.0, %v3325
  %v3327 = vpop.f32.mrb[0].mxu0
  %v3328 = vadd.f32 0.0, %v3327
  %v3329 = vpop.f32.mrb[0].mxu0
  %v3330 = vpop.f32.mrb[0].mxu0
  %3331 = vdwg.mxu0
  %v3332 = vadd.f32 %v3245, %v3285
  %v3333 = vadd.f32 %v3246, %v3287
  %v3334 = vadd.f32 %v3247, %v3326
  %v3335 = vadd.f32 %v3248, %v3328
  %v3336 = vtanh.pop %v3332
  %v3337 = vtanh.pop %v3333
  %v3338 = vtanh.pop %v3334
  %v3339 = vtanh.pop %v3335
  %v3340 = vmul.f32 %v3336, 0.5
  %v3341 = vadd.f32 %v3340, 0.5
  %v3342 = vmul.f32 %v3337, 0.5
  %v3343 = vadd.f32 %v3342, 0.5
  %v3344 = vmul.f32 %v3339, 0.5
  %v3345 = vadd.f32 %v3344, 0.5
  %v3346 = vmul.f32 %v3343, %v3232
  %v3347 = vmul.f32 %v3341, %v3338
  %v3348 = vadd.f32 %v3346, %v3347
  %v3349 = vtanh.pop %v3348
  %v3350 = vmul.f32 %v3345, %v3349
  %3351 = vst [vmem:[#allocation2 + $0x30] sm:$0xff] %v3350
  %3352 = vst [vmem:[#allocation3 + $0x8] sm:$0xff] %v3350
  %v3353 = vld [vmem:[#allocation5 + $0xe0] sm:$0xff]
  %v3354 = vld [vmem:[#allocation5 + $0xe8] sm:$0xff]
  %v3355 = vld [vmem:[#allocation5 + $0xf0] sm:$0xff]
  %v3356 = vld [vmem:[#allocation5 + $0xf8] sm:$0xff]
  %v3357 = vld [vmem:[#allocation6] sm:$0xff]
  %v3358 = vld [vmem:[#allocation6 + $0x8] sm:$0xff]
  %v3359 = vld [vmem:[#allocation6 + $0x10] sm:$0xff]
  %v3360 = vld [vmem:[#allocation6 + $0x18] sm:$0xff]
  %v3361 = vadd.f32 %v3353, %v3357
  %v3362 = vadd.f32 %v3354, %v3358
  %v3363 = vadd.f32 %v3355, %v3359
  %v3364 = vadd.f32 %v3356, %v3360
  %v3365 = vpack.c.bf16 %v3350, %v3350
  %3366 = vmatprep.subr.bf16.mxu0 %v2491
  %3367 = vmatpush1.bf16.msra.mxu0 %v2490
  %3368 = vmatprep.subr.bf16.mxu0 %v2495
  %3369 = vmatpush1.bf16.msra.mxu0 %v2494
  %3370 = vmatprep.subr.bf16.mxu0 %v2499
  %3371 = vmatpush1.bf16.msra.mxu0 %v2498
  %3372 = vmatprep.subr.bf16.mxu0 %v2503
  %3373 = vmatpush1.bf16.msra.mxu0 %v2502
  %3374 = vmatprep.subr.bf16.mxu0 %v2507
  %3375 = vmatpush1.bf16.msra.mxu0 %v2506
  %3376 = vmatprep.subr.bf16.mxu0 %v2511
  %3377 = vmatpush1.bf16.msra.mxu0 %v2510
  %3378 = vmatprep.subr.bf16.mxu0 %v2515
  %3379 = vmatpush1.bf16.msra.mxu0 %v2514
  %3380 = vmatprep.subr.bf16.mxu0 %v2519
  %3381 = vmatpush1.bf16.msra.mxu0 %v2518
  %3382 = vmatprep.subr.bf16.mxu0 0
  %3383 = vmatpush1.bf16.msra.mxu0 0
  %3384 = vmatprep.subr.bf16.mxu0 0
  %3385 = vmatpush1.bf16.msra.mxu0 0
  %3386 = vmatprep.subr.bf16.mxu0 0
  %3387 = vmatpush1.bf16.msra.mxu0 0
  %3388 = vmatprep.subr.bf16.mxu0 0
  %3389 = vmatpush1.bf16.msra.mxu0 0
  %3390 = vmatprep.subr.bf16.mxu0 0
  %3391 = vmatpush1.bf16.msra.mxu0 0
  %3392 = vmatprep.subr.bf16.mxu0 0
  %3393 = vmatpush1.bf16.msra.mxu0 0
  %3394 = vmatprep.subr.bf16.mxu0 0
  %3395 = vmatpush1.bf16.msra.mxu0 0
  %3396 = vmatprep.subr.bf16.mxu0 0
  %3397 = vmatpush1.bf16.msra.mxu0 0
  %3398 = vmatprep.mubr.bf16.mxu0 0
  %3399 = vmatmul.mubr.bf16.gmra.mrb[0].mxu0 %v3365
  %v3400 = vpop.f32.mrb[0].mxu0
  %v3401 = vadd.f32 0.0, %v3400
  %v3402 = vpop.f32.mrb[0].mxu0
  %v3403 = vadd.f32 0.0, %v3402
  %v3404 = vpop.f32.mrb[0].mxu0
  %v3405 = vpop.f32.mrb[0].mxu0
  %3406 = vdwg.mxu0
  %3407 = vmatprep.subr.bf16.mxu0 %v2493
  %3408 = vmatpush1.bf16.msra.mxu0 %v2492
  %3409 = vmatprep.subr.bf16.mxu0 %v2497
  %3410 = vmatpush1.bf16.msra.mxu0 %v2496
  %3411 = vmatprep.subr.bf16.mxu0 %v2501
  %3412 = vmatpush1.bf16.msra.mxu0 %v2500
  %3413 = vmatprep.subr.bf16.mxu0 %v2505
  %3414 = vmatpush1.bf16.msra.mxu0 %v2504
  %3415 = vmatprep.subr.bf16.mxu0 %v2509
  %3416 = vmatpush1.bf16.msra.mxu0 %v2508
  %3417 = vmatprep.subr.bf16.mxu0 %v2513
  %3418 = vmatpush1.bf16.msra.mxu0 %v2512
  %3419 = vmatprep.subr.bf16.mxu0 %v2517
  %3420 = vmatpush1.bf16.msra.mxu0 %v2516
  %3421 = vmatprep.subr.bf16.mxu0 %v2521
  %3422 = vmatpush1.bf16.msra.mxu0 %v2520
  %3423 = vmatprep.subr.bf16.mxu0 0
  %3424 = vmatpush1.bf16.msra.mxu0 0
  %3425 = vmatprep.subr.bf16.mxu0 0
  %3426 = vmatpush1.bf16.msra.mxu0 0
  %3427 = vmatprep.subr.bf16.mxu0 0
  %3428 = vmatpush1.bf16.msra.mxu0 0
  %3429 = vmatprep.subr.bf16.mxu0 0
  %3430 = vmatpush1.bf16.msra.mxu0 0
  %3431 = vmatprep.subr.bf16.mxu0 0
  %3432 = vmatpush1.bf16.msra.mxu0 0
  %3433 = vmatprep.subr.bf16.mxu0 0
  %3434 = vmatpush1.bf16.msra.mxu0 0
  %3435 = vmatprep.subr.bf16.mxu0 0
  %3436 = vmatpush1.bf16.msra.mxu0 0
  %3437 = vmatprep.subr.bf16.mxu0 0
  %3438 = vmatpush1.bf16.msra.mxu0 0
  %3439 = vmatprep.mubr.bf16.mxu0 0
  %3440 = vmatmul.mubr.bf16.gmra.mrb[0].mxu0 %v3365
  %v3441 = vpop.f32.mrb[0].mxu0
  %v3442 = vadd.f32 0.0, %v3441
  %v3443 = vpop.f32.mrb[0].mxu0
  %v3444 = vadd.f32 0.0, %v3443
  %v3445 = vpop.f32.mrb[0].mxu0
  %v3446 = vpop.f32.mrb[0].mxu0
  %3447 = vdwg.mxu0
  %v3448 = vadd.f32 %v3361, %v3401
  %v3449 = vadd.f32 %v3362, %v3403
  %v3450 = vadd.f32 %v3363, %v3442
  %v3451 = vadd.f32 %v3364, %v3444
  %v3452 = vtanh.pop %v3448
  %v3453 = vtanh.pop %v3449
  %v3454 = vtanh.pop %v3450
  %v3455 = vtanh.pop %v3451
  %v3456 = vmul.f32 %v3452, 0.5
  %v3457 = vadd.f32 %v3456, 0.5
  %v3458 = vmul.f32 %v3453, 0.5
  %v3459 = vadd.f32 %v3458, 0.5
  %v3460 = vmul.f32 %v3455, 0.5
  %v3461 = vadd.f32 %v3460, 0.5
  %v3462 = vmul.f32 %v3459, %v3348
  %v3463 = vmul.f32 %v3457, %v3454
  %v3464 = vadd.f32 %v3462, %v3463
  %v3465 = vtanh.pop %v3464
  %v3466 = vmul.f32 %v3461, %v3465
  %3467 = vst [vmem:[#allocation2 + $0x38] sm:$0xff] %v3466
  %3468 = vst [vmem:[#allocation3] sm:$0xff] %v3466
  %s3469 = smul.u32 4, 16
  %s3470 = smul.u32 %s3469, 4
  %s3471 = sshll.u32 %s3470, 4
  %3472 = dma.done [#allocation14], %s3471
  %s3473 = sshll.u32 %s3470, 4
  %3474 = dma.done %s336, %s3473
  %s3475 = sshll.u32 %s3470, 4
  %3476 = dma.done %s641, %s3475
  %v3477 = vld [vmem:[#allocation2] sm:$0xff]
  %v3478 = vld [vmem:[#allocation2 + $0x8] sm:$0xff]
  %v3479 = vld [vmem:[#allocation2 + $0x10] sm:$0xff]
  %v3480 = vld [vmem:[#allocation2 + $0x18] sm:$0xff]
  %v3481 = vld [vmem:[#allocation2 + $0x20] sm:$0xff]
  %v3482 = vld [vmem:[#allocation2 + $0x28] sm:$0xff]
  %v3483 = vld [vmem:[#allocation2 + $0x30] sm:$0xff]
  %v3484 = vld [vmem:[#allocation2 + $0x38] sm:$0xff]
  %v3485 = vpack.c.bf16 %v3478, %v3477
  %v3486 = vpack.c.bf16 %v3480, %v3479
  %v3487 = vpack.c.bf16 %v3482, %v3481
  %v3488 = vpack.c.bf16 %v3484, %v3483
  %v3489 = vld [vmem:[#allocation9] sm:$0xff]
  %v3490 = vld [vmem:[#allocation9 + $0x8] sm:$0xff]
  %v3491 = vld [vmem:[#allocation9 + $0x10] sm:$0xff]
  %v3492 = vld [vmem:[#allocation9 + $0x18] sm:$0xff]
  %v3493 = vld [vmem:[#allocation9 + $0x20] sm:$0xff]
  %v3494 = vld [vmem:[#allocation9 + $0x28] sm:$0xff]
  %v3495 = vld [vmem:[#allocation9 + $0x30] sm:$0xff]
  %v3496 = vld [vmem:[#allocation9 + $0x38] sm:$0xff]
  %v3497 = vld [vmem:[#allocation9 + $0x40] sm:$0xff]
  %v3498 = vld [vmem:[#allocation9 + $0x48] sm:$0xff]
  %v3499 = vld [vmem:[#allocation9 + $0x50] sm:$0xff]
  %v3500 = vld [vmem:[#allocation9 + $0x58] sm:$0xff]
  %v3501 = vld [vmem:[#allocation9 + $0x60] sm:$0xff]
  %v3502 = vld [vmem:[#allocation9 + $0x68] sm:$0xff]
  %v3503 = vld [vmem:[#allocation9 + $0x70] sm:$0xff]
  %v3504 = vld [vmem:[#allocation9 + $0x78] sm:$0xff]
  %v3505 = vld [vmem:[#allocation9 + $0x80] sm:$0xff]
  %v3506 = vld [vmem:[#allocation9 + $0x88] sm:$0xff]
  %v3507 = vld [vmem:[#allocation9 + $0x90] sm:$0xff]
  %v3508 = vld [vmem:[#allocation9 + $0x98] sm:$0xff]
  %v3509 = vld [vmem:[#allocation9 + $0xa0] sm:$0xff]
  %v3510 = vld [vmem:[#allocation9 + $0xa8] sm:$0xff]
  %v3511 = vld [vmem:[#allocation9 + $0xb0] sm:$0xff]
  %v3512 = vld [vmem:[#allocation9 + $0xb8] sm:$0xff]
  %v3513 = vld [vmem:[#allocation9 + $0xc0] sm:$0xff]
  %v3514 = vld [vmem:[#allocation9 + $0xc8] sm:$0xff]
  %v3515 = vld [vmem:[#allocation9 + $0xd0] sm:$0xff]
  %v3516 = vld [vmem:[#allocation9 + $0xd8] sm:$0xff]
  %v3517 = vld [vmem:[#allocation9 + $0xe0] sm:$0xff]
  %v3518 = vld [vmem:[#allocation9 + $0xe8] sm:$0xff]
  %v3519 = vld [vmem:[#allocation9 + $0xf0] sm:$0xff]
  %v3520 = vld [vmem:[#allocation9 + $0xf8] sm:$0xff]
  %v3521 = vld [vmem:[#allocation3] sm:$0xff]
  %v3522 = vld [vmem:[#allocation3 + $0x8] sm:$0xff]
  %v3523 = vld [vmem:[#allocation3 + $0x10] sm:$0xff]
  %v3524 = vld [vmem:[#allocation3 + $0x18] sm:$0xff]
  %v3525 = vld [vmem:[#allocation3 + $0x20] sm:$0xff]
  %v3526 = vld [vmem:[#allocation3 + $0x28] sm:$0xff]
  %v3527 = vld [vmem:[#allocation3 + $0x30] sm:$0xff]
  %v3528 = vld [vmem:[#allocation3 + $0x38] sm:$0xff]
  %v3529 = vpack.c.bf16 %v3522, %v3521
  %v3530 = vpack.c.bf16 %v3524, %v3523
  %v3531 = vpack.c.bf16 %v3526, %v3525
  %v3532 = vpack.c.bf16 %v3528, %v3527
  %v3533 = vld [vmem:[#allocation10] sm:$0xff]
  %v3534 = vld [vmem:[#allocation10 + $0x8] sm:$0xff]
  %v3535 = vld [vmem:[#allocation10 + $0x10] sm:$0xff]
  %v3536 = vld [vmem:[#allocation10 + $0x18] sm:$0xff]
  %v3537 = vld [vmem:[#allocation10 + $0x20] sm:$0xff]
  %v3538 = vld [vmem:[#allocation10 + $0x28] sm:$0xff]
  %v3539 = vld [vmem:[#allocation10 + $0x30] sm:$0xff]
  %v3540 = vld [vmem:[#allocation10 + $0x38] sm:$0xff]
  %v3541 = vld [vmem:[#allocation10 + $0x40] sm:$0xff]
  %v3542 = vld [vmem:[#allocation10 + $0x48] sm:$0xff]
  %v3543 = vld [vmem:[#allocation10 + $0x50] sm:$0xff]
  %v3544 = vld [vmem:[#allocation10 + $0x58] sm:$0xff]
  %v3545 = vld [vmem:[#allocation10 + $0x60] sm:$0xff]
  %v3546 = vld [vmem:[#allocation10 + $0x68] sm:$0xff]
  %v3547 = vld [vmem:[#allocation10 + $0x70] sm:$0xff]
  %v3548 = vld [vmem:[#allocation10 + $0x78] sm:$0xff]
  %v3549 = vld [vmem:[#allocation10 + $0x80] sm:$0xff]
  %v3550 = vld [vmem:[#allocation10 + $0x88] sm:$0xff]
  %v3551 = vld [vmem:[#allocation10 + $0x90] sm:$0xff]
  %v3552 = vld [vmem:[#allocation10 + $0x98] sm:$0xff]
  %v3553 = vld [vmem:[#allocation10 + $0xa0] sm:$0xff]
  %v3554 = vld [vmem:[#allocation10 + $0xa8] sm:$0xff]
  %v3555 = vld [vmem:[#allocation10 + $0xb0] sm:$0xff]
  %v3556 = vld [vmem:[#allocation10 + $0xb8] sm:$0xff]
  %v3557 = vld [vmem:[#allocation10 + $0xc0] sm:$0xff]
  %v3558 = vld [vmem:[#allocation10 + $0xc8] sm:$0xff]
  %v3559 = vld [vmem:[#allocation10 + $0xd0] sm:$0xff]
  %v3560 = vld [vmem:[#allocation10 + $0xd8] sm:$0xff]
  %v3561 = vld [vmem:[#allocation10 + $0xe0] sm:$0xff]
  %v3562 = vld [vmem:[#allocation10 + $0xe8] sm:$0xff]
  %v3563 = vld [vmem:[#allocation10 + $0xf0] sm:$0xff]
  %v3564 = vld [vmem:[#allocation10 + $0xf8] sm:$0xff]
  %3565 = vmatprep.subr.bf16.mxu0 %v3534
  %3566 = vmatpush1.bf16.msra.mxu0 %v3533
  %3567 = vmatprep.subr.bf16.mxu0 %v3538
  %3568 = vmatpush1.bf16.msra.mxu0 %v3537
  %3569 = vmatprep.subr.bf16.mxu0 %v3542
  %3570 = vmatpush1.bf16.msra.mxu0 %v3541
  %3571 = vmatprep.subr.bf16.mxu0 %v3546
  %3572 = vmatpush1.bf16.msra.mxu0 %v3545
  %3573 = vmatprep.subr.bf16.mxu0 %v3550
  %3574 = vmatpush1.bf16.msra.mxu0 %v3549
  %3575 = vmatprep.subr.bf16.mxu0 %v3554
  %3576 = vmatpush1.bf16.msra.mxu0 %v3553
  %3577 = vmatprep.subr.bf16.mxu0 %v3558
  %3578 = vmatpush1.bf16.msra.mxu0 %v3557
  %3579 = vmatprep.subr.bf16.mxu0 %v3562
  %3580 = vmatpush1.bf16.msra.mxu0 %v3561
  %3581 = vmatprep.subr.bf16.mxu0 0
  %3582 = vmatpush1.bf16.msra.mxu0 0
  %3583 = vmatprep.subr.bf16.mxu0 0
  %3584 = vmatpush1.bf16.msra.mxu0 0
  %3585 = vmatprep.subr.bf16.mxu0 0
  %3586 = vmatpush1.bf16.msra.mxu0 0
  %3587 = vmatprep.subr.bf16.mxu0 0
  %3588 = vmatpush1.bf16.msra.mxu0 0
  %3589 = vmatprep.subr.bf16.mxu0 0
  %3590 = vmatpush1.bf16.msra.mxu0 0
  %3591 = vmatprep.subr.bf16.mxu0 0
  %3592 = vmatpush1.bf16.msra.mxu0 0
  %3593 = vmatprep.subr.bf16.mxu0 0
  %3594 = vmatpush1.bf16.msra.mxu0 0
  %3595 = vmatprep.subr.bf16.mxu0 0
  %3596 = vmatpush1.bf16.msra.mxu0 0
  %3597 = vmatprep.mubr.bf16.mxu0 0
  %3598 = vmatmul.mubr.bf16.gmra.mrb[0].mxu0 %v3529
  %v3599 = vpop.f32.mrb[0].mxu0
  %v3600 = vadd.f32 0.0, %v3599
  %v3601 = vpop.f32.mrb[0].mxu0
  %v3602 = vadd.f32 0.0, %v3601
  %v3603 = vpop.f32.mrb[0].mxu0
  %v3604 = vadd.f32 0.0, %v3603
  %v3605 = vpop.f32.mrb[0].mxu0
  %v3606 = vadd.f32 0.0, %v3605
  %3607 = vmatprep.mubr.bf16.mxu0 0
  %3608 = vmatmul.mubr.bf16.gmra.mrb[0].mxu0 %v3530
  %v3609 = vpop.f32.mrb[0].mxu0
  %v3610 = vadd.f32 0.0, %v3609
  %v3611 = vpop.f32.mrb[0].mxu0
  %v3612 = vadd.f32 0.0, %v3611
  %v3613 = vpop.f32.mrb[0].mxu0
  %v3614 = vadd.f32 0.0, %v3613
  %v3615 = vpop.f32.mrb[0].mxu0
  %v3616 = vadd.f32 0.0, %v3615
  %3617 = vmatprep.mubr.bf16.mxu0 0
  %3618 = vmatmul.mubr.bf16.gmra.mrb[0].mxu0 %v3531
  %v3619 = vpop.f32.mrb[0].mxu0
  %v3620 = vadd.f32 0.0, %v3619
  %v3621 = vpop.f32.mrb[0].mxu0
  %v3622 = vadd.f32 0.0, %v3621
  %v3623 = vpop.f32.mrb[0].mxu0
  %v3624 = vadd.f32 0.0, %v3623
  %v3625 = vpop.f32.mrb[0].mxu0
  %v3626 = vadd.f32 0.0, %v3625
  %3627 = vmatprep.mubr.bf16.mxu0 0
  %3628 = vmatmul.mubr.bf16.gmra.mrb[0].mxu0 %v3532
  %v3629 = vpop.f32.mrb[0].mxu0
  %v3630 = vadd.f32 0.0, %v3629
  %v3631 = vpop.f32.mrb[0].mxu0
  %v3632 = vadd.f32 0.0, %v3631
  %v3633 = vpop.f32.mrb[0].mxu0
  %v3634 = vadd.f32 0.0, %v3633
  %v3635 = vpop.f32.mrb[0].mxu0
  %v3636 = vadd.f32 0.0, %v3635
  %3637 = vdwg.mxu0
  %3638 = vmatprep.subr.bf16.mxu0 %v3536
  %3639 = vmatpush1.bf16.msra.mxu0 %v3535
  %3640 = vmatprep.subr.bf16.mxu0 %v3540
  %3641 = vmatpush1.bf16.msra.mxu0 %v3539
  %3642 = vmatprep.subr.bf16.mxu0 %v3544
  %3643 = vmatpush1.bf16.msra.mxu0 %v3543
  %3644 = vmatprep.subr.bf16.mxu0 %v3548
  %3645 = vmatpush1.bf16.msra.mxu0 %v3547
  %3646 = vmatprep.subr.bf16.mxu0 %v3552
  %3647 = vmatpush1.bf16.msra.mxu0 %v3551
  %3648 = vmatprep.subr.bf16.mxu0 %v3556
  %3649 = vmatpush1.bf16.msra.mxu0 %v3555
  %3650 = vmatprep.subr.bf16.mxu0 %v3560
  %3651 = vmatpush1.bf16.msra.mxu0 %v3559
  %3652 = vmatprep.subr.bf16.mxu0 %v3564
  %3653 = vmatpush1.bf16.msra.mxu0 %v3563
  %3654 = vmatprep.subr.bf16.mxu0 0
  %3655 = vmatpush1.bf16.msra.mxu0 0
  %3656 = vmatprep.subr.bf16.mxu0 0
  %3657 = vmatpush1.bf16.msra.mxu0 0
  %3658 = vmatprep.subr.bf16.mxu0 0
  %3659 = vmatpush1.bf16.msra.mxu0 0
  %3660 = vmatprep.subr.bf16.mxu0 0
  %3661 = vmatpush1.bf16.msra.mxu0 0
  %3662 = vmatprep.subr.bf16.mxu0 0
  %3663 = vmatpush1.bf16.msra.mxu0 0
  %3664 = vmatprep.subr.bf16.mxu0 0
  %3665 = vmatpush1.bf16.msra.mxu0 0
  %3666 = vmatprep.subr.bf16.mxu0 0
  %3667 = vmatpush1.bf16.msra.mxu0 0
  %3668 = vmatprep.subr.bf16.mxu0 0
  %3669 = vmatpush1.bf16.msra.mxu0 0
  %3670 = vmatprep.mubr.bf16.mxu0 0
  %3671 = vmatmul.mubr.bf16.gmra.mrb[0].mxu0 %v3529
  %v3672 = vpop.f32.mrb[0].mxu0
  %v3673 = vadd.f32 0.0, %v3672
  %v3674 = vpop.f32.mrb[0].mxu0
  %v3675 = vadd.f32 0.0, %v3674
  %v3676 = vpop.f32.mrb[0].mxu0
  %v3677 = vadd.f32 0.0, %v3676
  %v3678 = vpop.f32.mrb[0].mxu0
  %v3679 = vadd.f32 0.0, %v3678
  %3680 = vmatprep.mubr.bf16.mxu0 0
  %3681 = vmatmul.mubr.bf16.gmra.mrb[0].mxu0 %v3530
  %v3682 = vpop.f32.mrb[0].mxu0
  %v3683 = vadd.f32 0.0, %v3682
  %v3684 = vpop.f32.mrb[0].mxu0
  %v3685 = vadd.f32 0.0, %v3684
  %v3686 = vpop.f32.mrb[0].mxu0
  %v3687 = vadd.f32 0.0, %v3686
  %v3688 = vpop.f32.mrb[0].mxu0
  %v3689 = vadd.f32 0.0, %v3688
  %3690 = vmatprep.mubr.bf16.mxu0 0
  %3691 = vmatmul.mubr.bf16.gmra.mrb[0].mxu0 %v3531
  %v3692 = vpop.f32.mrb[0].mxu0
  %v3693 = vadd.f32 0.0, %v3692
  %v3694 = vpop.f32.mrb[0].mxu0
  %v3695 = vadd.f32 0.0, %v3694
  %v3696 = vpop.f32.mrb[0].mxu0
  %v3697 = vadd.f32 0.0, %v3696
  %v3698 = vpop.f32.mrb[0].mxu0
  %v3699 = vadd.f32 0.0, %v3698
  %3700 = vmatprep.mubr.bf16.mxu0 0
  %3701 = vmatmul.mubr.bf16.gmra.mrb[0].mxu0 %v3532
  %v3702 = vpop.f32.mrb[0].mxu0
  %v3703 = vadd.f32 0.0, %v3702
  %v3704 = vpop.f32.mrb[0].mxu0
  %v3705 = vadd.f32 0.0, %v3704
  %v3706 = vpop.f32.mrb[0].mxu0
  %v3707 = vadd.f32 0.0, %v3706
  %v3708 = vpop.f32.mrb[0].mxu0
  %v3709 = vadd.f32 0.0, %v3708
  %3710 = vdwg.mxu0
  %3711 = vmatprep.subr.bf16.mxu0 %v3490
  %3712 = vmatpush1.bf16.msra.mxu0 %v3489
  %3713 = vmatprep.subr.bf16.mxu0 %v3494
  %3714 = vmatpush1.bf16.msra.mxu0 %v3493
  %3715 = vmatprep.subr.bf16.mxu0 %v3498
  %3716 = vmatpush1.bf16.msra.mxu0 %v3497
  %3717 = vmatprep.subr.bf16.mxu0 %v3502
  %3718 = vmatpush1.bf16.msra.mxu0 %v3501
  %3719 = vmatprep.subr.bf16.mxu0 %v3506
  %3720 = vmatpush1.bf16.msra.mxu0 %v3505
  %3721 = vmatprep.subr.bf16.mxu0 %v3510
  %3722 = vmatpush1.bf16.msra.mxu0 %v3509
  %3723 = vmatprep.subr.bf16.mxu0 %v3514
  %3724 = vmatpush1.bf16.msra.mxu0 %v3513
  %3725 = vmatprep.subr.bf16.mxu0 %v3518
  %3726 = vmatpush1.bf16.msra.mxu0 %v3517
  %3727 = vmatprep.subr.bf16.mxu0 0
  %3728 = vmatpush1.bf16.msra.mxu0 0
  %3729 = vmatprep.subr.bf16.mxu0 0
  %3730 = vmatpush1.bf16.msra.mxu0 0
  %3731 = vmatprep.subr.bf16.mxu0 0
  %3732 = vmatpush1.bf16.msra.mxu0 0
  %3733 = vmatprep.subr.bf16.mxu0 0
  %3734 = vmatpush1.bf16.msra.mxu0 0
  %3735 = vmatprep.subr.bf16.mxu0 0
  %3736 = vmatpush1.bf16.msra.mxu0 0
  %3737 = vmatprep.subr.bf16.mxu0 0
  %3738 = vmatpush1.bf16.msra.mxu0 0
  %3739 = vmatprep.subr.bf16.mxu0 0
  %3740 = vmatpush1.bf16.msra.mxu0 0
  %3741 = vmatprep.subr.bf16.mxu0 0
  %3742 = vmatpush1.bf16.msra.mxu0 0
  %3743 = vmatprep.mubr.bf16.mxu0 0
  %3744 = vmatmul.mubr.bf16.gmra.mrb[0].mxu0 %v3485
  %v3745 = vpop.f32.mrb[0].mxu0
  %v3746 = vadd.f32 %v3600, %v3745
  %v3747 = vpop.f32.mrb[0].mxu0
  %v3748 = vadd.f32 %v3602, %v3747
  %v3749 = vpop.f32.mrb[0].mxu0
  %v3750 = vadd.f32 %v3604, %v3749
  %v3751 = vpop.f32.mrb[0].mxu0
  %v3752 = vadd.f32 %v3606, %v3751
  %3753 = vmatprep.mubr.bf16.mxu0 0
  %3754 = vmatmul.mubr.bf16.gmra.mrb[0].mxu0 %v3486
  %v3755 = vpop.f32.mrb[0].mxu0
  %v3756 = vadd.f32 %v3610, %v3755
  %v3757 = vpop.f32.mrb[0].mxu0
  %v3758 = vadd.f32 %v3612, %v3757
  %v3759 = vpop.f32.mrb[0].mxu0
  %v3760 = vadd.f32 %v3614, %v3759
  %v3761 = vpop.f32.mrb[0].mxu0
  %v3762 = vadd.f32 %v3616, %v3761
  %3763 = vmatprep.mubr.bf16.mxu0 0
  %3764 = vmatmul.mubr.bf16.gmra.mrb[0].mxu0 %v3487
  %v3765 = vpop.f32.mrb[0].mxu0
  %v3766 = vadd.f32 %v3620, %v3765
  %v3767 = vpop.f32.mrb[0].mxu0
  %v3768 = vadd.f32 %v3622, %v3767
  %v3769 = vpop.f32.mrb[0].mxu0
  %v3770 = vadd.f32 %v3624, %v3769
  %v3771 = vpop.f32.mrb[0].mxu0
  %v3772 = vadd.f32 %v3626, %v3771
  %3773 = vmatprep.mubr.bf16.mxu0 0
  %3774 = vmatmul.mubr.bf16.gmra.mrb[0].mxu0 %v3488
  %v3775 = vpop.f32.mrb[0].mxu0
  %v3776 = vadd.f32 %v3630, %v3775
  %v3777 = vpop.f32.mrb[0].mxu0
  %v3778 = vadd.f32 %v3632, %v3777
  %v3779 = vpop.f32.mrb[0].mxu0
  %v3780 = vadd.f32 %v3634, %v3779
  %v3781 = vpop.f32.mrb[0].mxu0
  %v3782 = vadd.f32 %v3636, %v3781
  %3783 = vdwg.mxu0
  %3784 = vmatprep.subr.bf16.mxu0 %v3492
  %3785 = vmatpush1.bf16.msra.mxu0 %v3491
  %3786 = vmatprep.subr.bf16.mxu0 %v3496
  %3787 = vmatpush1.bf16.msra.mxu0 %v3495
  %3788 = vmatprep.subr.bf16.mxu0 %v3500
  %3789 = vmatpush1.bf16.msra.mxu0 %v3499
  %3790 = vmatprep.subr.bf16.mxu0 %v3504
  %3791 = vmatpush1.bf16.msra.mxu0 %v3503
  %3792 = vmatprep.subr.bf16.mxu0 %v3508
  %3793 = vmatpush1.bf16.msra.mxu0 %v3507
  %3794 = vmatprep.subr.bf16.mxu0 %v3512
  %3795 = vmatpush1.bf16.msra.mxu0 %v3511
  %3796 = vmatprep.subr.bf16.mxu0 %v3516
  %3797 = vmatpush1.bf16.msra.mxu0 %v3515
  %3798 = vmatprep.subr.bf16.mxu0 %v3520
  %3799 = vmatpush1.bf16.msra.mxu0 %v3519
  %3800 = vmatprep.subr.bf16.mxu0 0
  %3801 = vmatpush1.bf16.msra.mxu0 0
  %3802 = vmatprep.subr.bf16.mxu0 0
  %3803 = vmatpush1.bf16.msra.mxu0 0
  %3804 = vmatprep.subr.bf16.mxu0 0
  %3805 = vmatpush1.bf16.msra.mxu0 0
  %3806 = vmatprep.subr.bf16.mxu0 0
  %3807 = vmatpush1.bf16.msra.mxu0 0
  %3808 = vmatprep.subr.bf16.mxu0 0
  %3809 = vmatpush1.bf16.msra.mxu0 0
  %3810 = vmatprep.subr.bf16.mxu0 0
  %3811 = vmatpush1.bf16.msra.mxu0 0
  %3812 = vmatprep.subr.bf16.mxu0 0
  %3813 = vmatpush1.bf16.msra.mxu0 0
  %3814 = vmatprep.subr.bf16.mxu0 0
  %3815 = vmatpush1.bf16.msra.mxu0 0
  %3816 = vmatprep.mubr.bf16.mxu0 0
  %3817 = vmatmul.mubr.bf16.gmra.mrb[0].mxu0 %v3485
  %v3818 = vpop.f32.mrb[0].mxu0
  %v3819 = vadd.f32 %v3673, %v3818
  %v3820 = vpop.f32.mrb[0].mxu0
  %v3821 = vadd.f32 %v3675, %v3820
  %v3822 = vpop.f32.mrb[0].mxu0
  %v3823 = vadd.f32 %v3677, %v3822
  %v3824 = vpop.f32.mrb[0].mxu0
  %v3825 = vadd.f32 %v3679, %v3824
  %3826 = vmatprep.mubr.bf16.mxu0 0
  %3827 = vmatmul.mubr.bf16.gmra.mrb[0].mxu0 %v3486
  %v3828 = vpop.f32.mrb[0].mxu0
  %v3829 = vadd.f32 %v3683, %v3828
  %v3830 = vpop.f32.mrb[0].mxu0
  %v3831 = vadd.f32 %v3685, %v3830
  %v3832 = vpop.f32.mrb[0].mxu0
  %v3833 = vadd.f32 %v3687, %v3832
  %v3834 = vpop.f32.mrb[0].mxu0
  %v3835 = vadd.f32 %v3689, %v3834
  %3836 = vmatprep.mubr.bf16.mxu0 0
  %3837 = vmatmul.mubr.bf16.gmra.mrb[0].mxu0 %v3487
  %v3838 = vpop.f32.mrb[0].mxu0
  %v3839 = vadd.f32 %v3693, %v3838
  %v3840 = vpop.f32.mrb[0].mxu0
  %v3841 = vadd.f32 %v3695, %v3840
  %v3842 = vpop.f32.mrb[0].mxu0
  %v3843 = vadd.f32 %v3697, %v3842
  %v3844 = vpop.f32.mrb[0].mxu0
  %v3845 = vadd.f32 %v3699, %v3844
  %3846 = vmatprep.mubr.bf16.mxu0 0
  %3847 = vmatmul.mubr.bf16.gmra.mrb[0].mxu0 %v3488
  %v3848 = vpop.f32.mrb[0].mxu0
  %v3849 = vadd.f32 %v3703, %v3848
  %v3850 = vpop.f32.mrb[0].mxu0
  %v3851 = vadd.f32 %v3705, %v3850
  %v3852 = vpop.f32.mrb[0].mxu0
  %v3853 = vadd.f32 %v3707, %v3852
  %v3854 = vpop.f32.mrb[0].mxu0
  %v3855 = vadd.f32 %v3709, %v3854
  %3856 = vdwg.mxu0
  %v3857 = vld [vmem:[%s8] sm:$0xf]
  %v3859 = vlaneseq
  %v3860 = vshrl.u32 %v3859, 7
  %v3861 = vsub.s32 0, %v3860
  %v3862 = vrot.slane %v3857, %v3861
  %v3863 = vlaneseq
  %v3864 = vshrl.u32 %v3863, 7
  %v3865 = vsub.s32 1, %v3864
  %v3866 = vrot.slane %v3857, %v3865
  %v3867 = vlaneseq
  %v3868 = vshrl.u32 %v3867, 7
  %v3869 = vsub.s32 2, %v3868
  %v3870 = vrot.slane %v3857, %v3869
  %v3871 = vlaneseq
  %v3872 = vshrl.u32 %v3871, 7
  %v3873 = vsub.s32 3, %v3872
  %v3874 = vrot.slane %v3857, %v3873
  %v3879 = vadd.f32 %v3746, %v3862
  %v3880 = vadd.f32 %v3748, %v3866
  %v3881 = vadd.f32 %v3819, %v3870
  %v3882 = vadd.f32 %v3821, %v3874
  %v3883 = vadd.f32 %v3750, %v3862
  %v3884 = vadd.f32 %v3752, %v3866
  %v3885 = vadd.f32 %v3823, %v3870
  %v3886 = vadd.f32 %v3825, %v3874
  %v3887 = vadd.f32 %v3756, %v3862
  %v3888 = vadd.f32 %v3758, %v3866
  %v3889 = vadd.f32 %v3829, %v3870
  %v3890 = vadd.f32 %v3831, %v3874
  %v3891 = vadd.f32 %v3760, %v3862
  %v3892 = vadd.f32 %v3762, %v3866
  %v3893 = vadd.f32 %v3833, %v3870
  %v3894 = vadd.f32 %v3835, %v3874
  %v3895 = vadd.f32 %v3766, %v3862
  %v3896 = vadd.f32 %v3768, %v3866
  %v3897 = vadd.f32 %v3839, %v3870
  %v3898 = vadd.f32 %v3841, %v3874
  %v3899 = vadd.f32 %v3770, %v3862
  %v3900 = vadd.f32 %v3772, %v3866
  %v3901 = vadd.f32 %v3843, %v3870
  %v3902 = vadd.f32 %v3845, %v3874
  %v3903 = vadd.f32 %v3776, %v3862
  %v3904 = vadd.f32 %v3778, %v3866
  %v3905 = vadd.f32 %v3849, %v3870
  %v3906 = vadd.f32 %v3851, %v3874
  %v3907 = vadd.f32 %v3780, %v3862
  %v3908 = vadd.f32 %v3782, %v3866
  %v3909 = vadd.f32 %v3853, %v3870
  %v3910 = vadd.f32 %v3855, %v3874
  %3911 = vst [vmem:[#allocation7] sm:$0xff] %v3879
  %3912 = vst [vmem:[#allocation7 + $0x8] sm:$0xff] %v3880
  %3913 = vst [vmem:[#allocation7 + $0x10] sm:$0xff] %v3881
  %3914 = vst [vmem:[#allocation7 + $0x18] sm:$0xff] %v3882
  %3915 = vst [vmem:[#allocation7 + $0x20] sm:$0xff] %v3883
  %3916 = vst [vmem:[#allocation7 + $0x28] sm:$0xff] %v3884
  %3917 = vst [vmem:[#allocation7 + $0x30] sm:$0xff] %v3885
  %3918 = vst [vmem:[#allocation7 + $0x38] sm:$0xff] %v3886
  %3919 = vst [vmem:[#allocation7 + $0x40] sm:$0xff] %v3887
  %3920 = vst [vmem:[#allocation7 + $0x48] sm:$0xff] %v3888
  %3921 = vst [vmem:[#allocation7 + $0x50] sm:$0xff] %v3889
  %3922 = vst [vmem:[#allocation7 + $0x58] sm:$0xff] %v3890
  %3923 = vst [vmem:[#allocation7 + $0x60] sm:$0xff] %v3891
  %3924 = vst [vmem:[#allocation7 + $0x68] sm:$0xff] %v3892
  %3925 = vst [vmem:[#allocation7 + $0x70] sm:$0xff] %v3893
  %3926 = vst [vmem:[#allocation7 + $0x78] sm:$0xff] %v3894
  %3927 = vst [vmem:[#allocation7 + $0x80] sm:$0xff] %v3895
  %3928 = vst [vmem:[#allocation7 + $0x88] sm:$0xff] %v3896
  %3929 = vst [vmem:[#allocation7 + $0x90] sm:$0xff] %v3897
  %3930 = vst [vmem:[#allocation7 + $0x98] sm:$0xff] %v3898
  %3931 = vst [vmem:[#allocation7 + $0xa0] sm:$0xff] %v3899
  %3932 = vst [vmem:[#allocation7 + $0xa8] sm:$0xff] %v3900
  %3933 = vst [vmem:[#allocation7 + $0xb0] sm:$0xff] %v3901
  %3934 = vst [vmem:[#allocation7 + $0xb8] sm:$0xff] %v3902
  %3935 = vst [vmem:[#allocation7 + $0xc0] sm:$0xff] %v3903
  %3936 = vst [vmem:[#allocation7 + $0xc8] sm:$0xff] %v3904
  %3937 = vst [vmem:[#allocation7 + $0xd0] sm:$0xff] %v3905
  %3938 = vst [vmem:[#allocation7 + $0xd8] sm:$0xff] %v3906
  %3939 = vst [vmem:[#allocation7 + $0xe0] sm:$0xff] %v3907
  %3940 = vst [vmem:[#allocation7 + $0xe8] sm:$0xff] %v3908
  %3941 = vst [vmem:[#allocation7 + $0xf0] sm:$0xff] %v3909
  %3942 = vst [vmem:[#allocation7 + $0xf8] sm:$0xff] %v3910
  %v3943 = vld [vmem:[#allocation11] sm:$0xff]
  %v3944 = vld [vmem:[#allocation11 + $0x8] sm:$0xff]
  %v3945 = vld [vmem:[#allocation11 + $0x10] sm:$0xff]
  %v3946 = vld [vmem:[#allocation11 + $0x18] sm:$0xff]
  %v3947 = vld [vmem:[#allocation11 + $0x20] sm:$0xff]
  %v3948 = vld [vmem:[#allocation11 + $0x28] sm:$0xff]
  %v3949 = vld [vmem:[#allocation11 + $0x30] sm:$0xff]
  %v3950 = vld [vmem:[#allocation11 + $0x38] sm:$0xff]
  %v3951 = vld [vmem:[#allocation11 + $0x40] sm:$0xff]
  %v3952 = vld [vmem:[#allocation11 + $0x48] sm:$0xff]
  %v3953 = vld [vmem:[#allocation11 + $0x50] sm:$0xff]
  %v3954 = vld [vmem:[#allocation11 + $0x58] sm:$0xff]
  %v3955 = vld [vmem:[#allocation11 + $0x60] sm:$0xff]
  %v3956 = vld [vmem:[#allocation11 + $0x68] sm:$0xff]
  %v3957 = vld [vmem:[#allocation11 + $0x70] sm:$0xff]
  %v3958 = vld [vmem:[#allocation11 + $0x78] sm:$0xff]
  %v3959 = vld [vmem:[#allocation11 + $0x80] sm:$0xff]
  %v3960 = vld [vmem:[#allocation11 + $0x88] sm:$0xff]
  %v3961 = vld [vmem:[#allocation11 + $0x90] sm:$0xff]
  %v3962 = vld [vmem:[#allocation11 + $0x98] sm:$0xff]
  %v3963 = vld [vmem:[#allocation11 + $0xa0] sm:$0xff]
  %v3964 = vld [vmem:[#allocation11 + $0xa8] sm:$0xff]
  %v3965 = vld [vmem:[#allocation11 + $0xb0] sm:$0xff]
  %v3966 = vld [vmem:[#allocation11 + $0xb8] sm:$0xff]
  %v3967 = vld [vmem:[#allocation11 + $0xc0] sm:$0xff]
  %v3968 = vld [vmem:[#allocation11 + $0xc8] sm:$0xff]
  %v3969 = vld [vmem:[#allocation11 + $0xd0] sm:$0xff]
  %v3970 = vld [vmem:[#allocation11 + $0xd8] sm:$0xff]
  %v3971 = vld [vmem:[#allocation11 + $0xe0] sm:$0xff]
  %v3972 = vld [vmem:[#allocation11 + $0xe8] sm:$0xff]
  %v3973 = vld [vmem:[#allocation11 + $0xf0] sm:$0xff]
  %v3974 = vld [vmem:[#allocation11 + $0xf8] sm:$0xff]
  %v3975 = vld [vmem:[#allocation7] sm:$0xff]
  %v3976 = vld [vmem:[#allocation7 + $0x8] sm:$0xff]
  %v3977 = vld [vmem:[#allocation7 + $0x10] sm:$0xff]
  %v3978 = vld [vmem:[#allocation7 + $0x18] sm:$0xff]
  %3979 = vmatprep.subr.bf16.mxu0 %v3944
  %3980 = vmatpush1.bf16.msra.mxu0 %v3943
  %3981 = vmatprep.subr.bf16.mxu0 %v3948
  %3982 = vmatpush1.bf16.msra.mxu0 %v3947
  %3983 = vmatprep.subr.bf16.mxu0 %v3952
  %3984 = vmatpush1.bf16.msra.mxu0 %v3951
  %3985 = vmatprep.subr.bf16.mxu0 %v3956
  %3986 = vmatpush1.bf16.msra.mxu0 %v3955
  %3987 = vmatprep.subr.bf16.mxu0 %v3960
  %3988 = vmatpush1.bf16.msra.mxu0 %v3959
  %3989 = vmatprep.subr.bf16.mxu0 %v3964
  %3990 = vmatpush1.bf16.msra.mxu0 %v3963
  %3991 = vmatprep.subr.bf16.mxu0 %v3968
  %3992 = vmatpush1.bf16.msra.mxu0 %v3967
  %3993 = vmatprep.subr.bf16.mxu0 %v3972
  %3994 = vmatpush1.bf16.msra.mxu0 %v3971
  %3995 = vmatprep.subr.bf16.mxu0 0
  %3996 = vmatpush1.bf16.msra.mxu0 0
  %3997 = vmatprep.subr.bf16.mxu0 0
  %3998 = vmatpush1.bf16.msra.mxu0 0
  %3999 = vmatprep.subr.bf16.mxu0 0
  %4000 = vmatpush1.bf16.msra.mxu0 0
  %4001 = vmatprep.subr.bf16.mxu0 0
  %4002 = vmatpush1.bf16.msra.mxu0 0
  %4003 = vmatprep.subr.bf16.mxu0 0
  %4004 = vmatpush1.bf16.msra.mxu0 0
  %4005 = vmatprep.subr.bf16.mxu0 0
  %4006 = vmatpush1.bf16.msra.mxu0 0
  %4007 = vmatprep.subr.bf16.mxu0 0
  %4008 = vmatpush1.bf16.msra.mxu0 0
  %4009 = vmatprep.subr.bf16.mxu0 0
  %4010 = vmatpush1.bf16.msra.mxu0 0
  %4011 = vmatprep.mubr.bf16.mxu0 0
  %4012 = vmatmul.mubr.bf16.gmra.mrb[0].mxu0 0
  %v4013 = vpop.f32.mrb[0].mxu0
  %v4014 = vadd.f32 0.0, %v4013
  %v4015 = vpop.f32.mrb[0].mxu0
  %v4016 = vadd.f32 0.0, %v4015
  %v4017 = vpop.f32.mrb[0].mxu0
  %v4018 = vpop.f32.mrb[0].mxu0
  %4019 = vdwg.mxu0
  %4020 = vmatprep.subr.bf16.mxu0 %v3946
  %4021 = vmatpush1.bf16.msra.mxu0 %v3945
  %4022 = vmatprep.subr.bf16.mxu0 %v3950
  %4023 = vmatpush1.bf16.msra.mxu0 %v3949
  %4024 = vmatprep.subr.bf16.mxu0 %v3954
  %4025 = vmatpush1.bf16.msra.mxu0 %v3953
  %4026 = vmatprep.subr.bf16.mxu0 %v3958
  %4027 = vmatpush1.bf16.msra.mxu0 %v3957
  %4028 = vmatprep.subr.bf16.mxu0 %v3962
  %4029 = vmatpush1.bf16.msra.mxu0 %v3961
  %4030 = vmatprep.subr.bf16.mxu0 %v3966
  %4031 = vmatpush1.bf16.msra.mxu0 %v3965
  %4032 = vmatprep.subr.bf16.mxu0 %v3970
  %4033 = vmatpush1.bf16.msra.mxu0 %v3969
  %4034 = vmatprep.subr.bf16.mxu0 %v3974
  %4035 = vmatpush1.bf16.msra.mxu0 %v3973
  %4036 = vmatprep.subr.bf16.mxu0 0
  %4037 = vmatpush1.bf16.msra.mxu0 0
  %4038 = vmatprep.subr.bf16.mxu0 0
  %4039 = vmatpush1.bf16.msra.mxu0 0
  %4040 = vmatprep.subr.bf16.mxu0 0
  %4041 = vmatpush1.bf16.msra.mxu0 0
  %4042 = vmatprep.subr.bf16.mxu0 0
  %4043 = vmatpush1.bf16.msra.mxu0 0
  %4044 = vmatprep.subr.bf16.mxu0 0
  %4045 = vmatpush1.bf16.msra.mxu0 0
  %4046 = vmatprep.subr.bf16.mxu0 0
  %4047 = vmatpush1.bf16.msra.mxu0 0
  %4048 = vmatprep.subr.bf16.mxu0 0
  %4049 = vmatpush1.bf16.msra.mxu0 0
  %4050 = vmatprep.subr.bf16.mxu0 0
  %4051 = vmatpush1.bf16.msra.mxu0 0
  %4052 = vmatprep.mubr.bf16.mxu0 0
  %4053 = vmatmul.mubr.bf16.gmra.mrb[0].mxu0 0
  %v4054 = vpop.f32.mrb[0].mxu0
  %v4055 = vadd.f32 0.0, %v4054
  %v4056 = vpop.f32.mrb[0].mxu0
  %v4057 = vadd.f32 0.0, %v4056
  %v4058 = vpop.f32.mrb[0].mxu0
  %v4059 = vpop.f32.mrb[0].mxu0
  %4060 = vdwg.mxu0
  %v4061 = vadd.f32 %v3975, %v4014
  %v4062 = vadd.f32 %v3976, %v4016
  %v4063 = vadd.f32 %v3977, %v4055
  %v4064 = vadd.f32 %v3978, %v4057
  %v4065 = vtanh.pop %v4061
  %v4066 = vtanh.pop %v4062
  %v4067 = vtanh.pop %v4063
  %v4068 = vtanh.pop %v4064
  %v4069 = vmul.f32 %v4065, 0.5
  %v4070 = vadd.f32 %v4069, 0.5
  %v4071 = vmul.f32 %v4066, 0.5
  %v4072 = vadd.f32 %v4071, 0.5
  %v4073 = vmul.f32 %v4068, 0.5
  %v4074 = vadd.f32 %v4073, 0.5
  %v4075 = vmul.f32 %v4072, 0.0
  %v4076 = vmul.f32 %v4070, %v4067
  %v4077 = vadd.f32 %v4075, %v4076
  %v4078 = vtanh.pop %v4077
  %v4079 = vmul.f32 %v4074, %v4078
  %4080 = vst [vmem:[#allocation4] sm:$0xff] %v4079
  %v4081 = vld [vmem:[#allocation7 + $0x20] sm:$0xff]
  %v4082 = vld [vmem:[#allocation7 + $0x28] sm:$0xff]
  %v4083 = vld [vmem:[#allocation7 + $0x30] sm:$0xff]
  %v4084 = vld [vmem:[#allocation7 + $0x38] sm:$0xff]
  %v4085 = vpack.c.bf16 %v4079, %v4079
  %4086 = vmatprep.subr.bf16.mxu0 %v3944
  %4087 = vmatpush1.bf16.msra.mxu0 %v3943
  %4088 = vmatprep.subr.bf16.mxu0 %v3948
  %4089 = vmatpush1.bf16.msra.mxu0 %v3947
  %4090 = vmatprep.subr.bf16.mxu0 %v3952
  %4091 = vmatpush1.bf16.msra.mxu0 %v3951
  %4092 = vmatprep.subr.bf16.mxu0 %v3956
  %4093 = vmatpush1.bf16.msra.mxu0 %v3955
  %4094 = vmatprep.subr.bf16.mxu0 %v3960
  %4095 = vmatpush1.bf16.msra.mxu0 %v3959
  %4096 = vmatprep.subr.bf16.mxu0 %v3964
  %4097 = vmatpush1.bf16.msra.mxu0 %v3963
  %4098 = vmatprep.subr.bf16.mxu0 %v3968
  %4099 = vmatpush1.bf16.msra.mxu0 %v3967
  %4100 = vmatprep.subr.bf16.mxu0 %v3972
  %4101 = vmatpush1.bf16.msra.mxu0 %v3971
  %4102 = vmatprep.subr.bf16.mxu0 0
  %4103 = vmatpush1.bf16.msra.mxu0 0
  %4104 = vmatprep.subr.bf16.mxu0 0
  %4105 = vmatpush1.bf16.msra.mxu0 0
  %4106 = vmatprep.subr.bf16.mxu0 0
  %4107 = vmatpush1.bf16.msra.mxu0 0
  %4108 = vmatprep.subr.bf16.mxu0 0
  %4109 = vmatpush1.bf16.msra.mxu0 0
  %4110 = vmatprep.subr.bf16.mxu0 0
  %4111 = vmatpush1.bf16.msra.mxu0 0
  %4112 = vmatprep.subr.bf16.mxu0 0
  %4113 = vmatpush1.bf16.msra.mxu0 0
  %4114 = vmatprep.subr.bf16.mxu0 0
  %4115 = vmatpush1.bf16.msra.mxu0 0
  %4116 = vmatprep.subr.bf16.mxu0 0
  %4117 = vmatpush1.bf16.msra.mxu0 0
  %4118 = vmatprep.mubr.bf16.mxu0 0
  %4119 = vmatmul.mubr.bf16.gmra.mrb[0].mxu0 %v4085
  %v4120 = vpop.f32.mrb[0].mxu0
  %v4121 = vadd.f32 0.0, %v4120
  %v4122 = vpop.f32.mrb[0].mxu0
  %v4123 = vadd.f32 0.0, %v4122
  %v4124 = vpop.f32.mrb[0].mxu0
  %v4125 = vpop.f32.mrb[0].mxu0
  %4126 = vdwg.mxu0
  %4127 = vmatprep.subr.bf16.mxu0 %v3946
  %4128 = vmatpush1.bf16.msra.mxu0 %v3945
  %4129 = vmatprep.subr.bf16.mxu0 %v3950
  %4130 = vmatpush1.bf16.msra.mxu0 %v3949
  %4131 = vmatprep.subr.bf16.mxu0 %v3954
  %4132 = vmatpush1.bf16.msra.mxu0 %v3953
  %4133 = vmatprep.subr.bf16.mxu0 %v3958
  %4134 = vmatpush1.bf16.msra.mxu0 %v3957
  %4135 = vmatprep.subr.bf16.mxu0 %v3962
  %4136 = vmatpush1.bf16.msra.mxu0 %v3961
  %4137 = vmatprep.subr.bf16.mxu0 %v3966
  %4138 = vmatpush1.bf16.msra.mxu0 %v3965
  %4139 = vmatprep.subr.bf16.mxu0 %v3970
  %4140 = vmatpush1.bf16.msra.mxu0 %v3969
  %4141 = vmatprep.subr.bf16.mxu0 %v3974
  %4142 = vmatpush1.bf16.msra.mxu0 %v3973
  %4143 = vmatprep.subr.bf16.mxu0 0
  %4144 = vmatpush1.bf16.msra.mxu0 0
  %4145 = vmatprep.subr.bf16.mxu0 0
  %4146 = vmatpush1.bf16.msra.mxu0 0
  %4147 = vmatprep.subr.bf16.mxu0 0
  %4148 = vmatpush1.bf16.msra.mxu0 0
  %4149 = vmatprep.subr.bf16.mxu0 0
  %4150 = vmatpush1.bf16.msra.mxu0 0
  %4151 = vmatprep.subr.bf16.mxu0 0
  %4152 = vmatpush1.bf16.msra.mxu0 0
  %4153 = vmatprep.subr.bf16.mxu0 0
  %4154 = vmatpush1.bf16.msra.mxu0 0
  %4155 = vmatprep.subr.bf16.mxu0 0
  %4156 = vmatpush1.bf16.msra.mxu0 0
  %4157 = vmatprep.subr.bf16.mxu0 0
  %4158 = vmatpush1.bf16.msra.mxu0 0
  %4159 = vmatprep.mubr.bf16.mxu0 0
  %4160 = vmatmul.mubr.bf16.gmra.mrb[0].mxu0 %v4085
  %v4161 = vpop.f32.mrb[0].mxu0
  %v4162 = vadd.f32 0.0, %v4161
  %v4163 = vpop.f32.mrb[0].mxu0
  %v4164 = vadd.f32 0.0, %v4163
  %v4165 = vpop.f32.mrb[0].mxu0
  %v4166 = vpop.f32.mrb[0].mxu0
  %4167 = vdwg.mxu0
  %v4168 = vadd.f32 %v4081, %v4121
  %v4169 = vadd.f32 %v4082, %v4123
  %v4170 = vadd.f32 %v4083, %v4162
  %v4171 = vadd.f32 %v4084, %v4164
  %v4172 = vtanh.pop %v4168
  %v4173 = vtanh.pop %v4169
  %v4174 = vtanh.pop %v4170
  %v4175 = vtanh.pop %v4171
  %v4176 = vmul.f32 %v4172, 0.5
  %v4177 = vadd.f32 %v4176, 0.5
  %v4178 = vmul.f32 %v4173, 0.5
  %v4179 = vadd.f32 %v4178, 0.5
  %v4180 = vmul.f32 %v4175, 0.5
  %v4181 = vadd.f32 %v4180, 0.5
  %v4182 = vmul.f32 %v4179, %v4077
  %v4183 = vmul.f32 %v4177, %v4174
  %v4184 = vadd.f32 %v4182, %v4183
  %v4185 = vtanh.pop %v4184
  %v4186 = vmul.f32 %v4181, %v4185
  %4187 = vst [vmem:[#allocation4 + $0x8] sm:$0xff] %v4186
  %v4188 = vld [vmem:[#allocation7 + $0x40] sm:$0xff]
  %v4189 = vld [vmem:[#allocation7 + $0x48] sm:$0xff]
  %v4190 = vld [vmem:[#allocation7 + $0x50] sm:$0xff]
  %v4191 = vld [vmem:[#allocation7 + $0x58] sm:$0xff]
  %v4192 = vpack.c.bf16 %v4186, %v4186
  %4193 = vmatprep.subr.bf16.mxu0 %v3944
  %4194 = vmatpush1.bf16.msra.mxu0 %v3943
  %4195 = vmatprep.subr.bf16.mxu0 %v3948
  %4196 = vmatpush1.bf16.msra.mxu0 %v3947
  %4197 = vmatprep.subr.bf16.mxu0 %v3952
  %4198 = vmatpush1.bf16.msra.mxu0 %v3951
  %4199 = vmatprep.subr.bf16.mxu0 %v3956
  %4200 = vmatpush1.bf16.msra.mxu0 %v3955
  %4201 = vmatprep.subr.bf16.mxu0 %v3960
  %4202 = vmatpush1.bf16.msra.mxu0 %v3959
  %4203 = vmatprep.subr.bf16.mxu0 %v3964
  %4204 = vmatpush1.bf16.msra.mxu0 %v3963
  %4205 = vmatprep.subr.bf16.mxu0 %v3968
  %4206 = vmatpush1.bf16.msra.mxu0 %v3967
  %4207 = vmatprep.subr.bf16.mxu0 %v3972
  %4208 = vmatpush1.bf16.msra.mxu0 %v3971
  %4209 = vmatprep.subr.bf16.mxu0 0
  %4210 = vmatpush1.bf16.msra.mxu0 0
  %4211 = vmatprep.subr.bf16.mxu0 0
  %4212 = vmatpush1.bf16.msra.mxu0 0
  %4213 = vmatprep.subr.bf16.mxu0 0
  %4214 = vmatpush1.bf16.msra.mxu0 0
  %4215 = vmatprep.subr.bf16.mxu0 0
  %4216 = vmatpush1.bf16.msra.mxu0 0
  %4217 = vmatprep.subr.bf16.mxu0 0
  %4218 = vmatpush1.bf16.msra.mxu0 0
  %4219 = vmatprep.subr.bf16.mxu0 0
  %4220 = vmatpush1.bf16.msra.mxu0 0
  %4221 = vmatprep.subr.bf16.mxu0 0
  %4222 = vmatpush1.bf16.msra.mxu0 0
  %4223 = vmatprep.subr.bf16.mxu0 0
  %4224 = vmatpush1.bf16.msra.mxu0 0
  %4225 = vmatprep.mubr.bf16.mxu0 0
  %4226 = vmatmul.mubr.bf16.gmra.mrb[0].mxu0 %v4192
  %v4227 = vpop.f32.mrb[0].mxu0
  %v4228 = vadd.f32 0.0, %v4227
  %v4229 = vpop.f32.mrb[0].mxu0
  %v4230 = vadd.f32 0.0, %v4229
  %v4231 = vpop.f32.mrb[0].mxu0
  %v4232 = vpop.f32.mrb[0].mxu0
  %4233 = vdwg.mxu0
  %4234 = vmatprep.subr.bf16.mxu0 %v3946
  %4235 = vmatpush1.bf16.msra.mxu0 %v3945
  %4236 = vmatprep.subr.bf16.mxu0 %v3950
  %4237 = vmatpush1.bf16.msra.mxu0 %v3949
  %4238 = vmatprep.subr.bf16.mxu0 %v3954
  %4239 = vmatpush1.bf16.msra.mxu0 %v3953
  %4240 = vmatprep.subr.bf16.mxu0 %v3958
  %4241 = vmatpush1.bf16.msra.mxu0 %v3957
  %4242 = vmatprep.subr.bf16.mxu0 %v3962
  %4243 = vmatpush1.bf16.msra.mxu0 %v3961
  %4244 = vmatprep.subr.bf16.mxu0 %v3966
  %4245 = vmatpush1.bf16.msra.mxu0 %v3965
  %4246 = vmatprep.subr.bf16.mxu0 %v3970
  %4247 = vmatpush1.bf16.msra.mxu0 %v3969
  %4248 = vmatprep.subr.bf16.mxu0 %v3974
  %4249 = vmatpush1.bf16.msra.mxu0 %v3973
  %4250 = vmatprep.subr.bf16.mxu0 0
  %4251 = vmatpush1.bf16.msra.mxu0 0
  %4252 = vmatprep.subr.bf16.mxu0 0
  %4253 = vmatpush1.bf16.msra.mxu0 0
  %4254 = vmatprep.subr.bf16.mxu0 0
  %4255 = vmatpush1.bf16.msra.mxu0 0
  %4256 = vmatprep.subr.bf16.mxu0 0
  %4257 = vmatpush1.bf16.msra.mxu0 0
  %4258 = vmatprep.subr.bf16.mxu0 0
  %4259 = vmatpush1.bf16.msra.mxu0 0
  %4260 = vmatprep.subr.bf16.mxu0 0
  %4261 = vmatpush1.bf16.msra.mxu0 0
  %4262 = vmatprep.subr.bf16.mxu0 0
  %4263 = vmatpush1.bf16.msra.mxu0 0
  %4264 = vmatprep.subr.bf16.mxu0 0
  %4265 = vmatpush1.bf16.msra.mxu0 0
  %4266 = vmatprep.mubr.bf16.mxu0 0
  %4267 = vmatmul.mubr.bf16.gmra.mrb[0].mxu0 %v4192
  %v4268 = vpop.f32.mrb[0].mxu0
  %v4269 = vadd.f32 0.0, %v4268
  %v4270 = vpop.f32.mrb[0].mxu0
  %v4271 = vadd.f32 0.0, %v4270
  %v4272 = vpop.f32.mrb[0].mxu0
  %v4273 = vpop.f32.mrb[0].mxu0
  %4274 = vdwg.mxu0
  %v4275 = vadd.f32 %v4188, %v4228
  %v4276 = vadd.f32 %v4189, %v4230
  %v4277 = vadd.f32 %v4190, %v4269
  %v4278 = vadd.f32 %v4191, %v4271
  %v4279 = vtanh.pop %v4275
  %v4280 = vtanh.pop %v4276
  %v4281 = vtanh.pop %v4277
  %v4282 = vtanh.pop %v4278
  %v4283 = vmul.f32 %v4279, 0.5
  %v4284 = vadd.f32 %v4283, 0.5
  %v4285 = vmul.f32 %v4280, 0.5
  %v4286 = vadd.f32 %v4285, 0.5
  %v4287 = vmul.f32 %v4282, 0.5
  %v4288 = vadd.f32 %v4287, 0.5
  %v4289 = vmul.f32 %v4286, %v4184
  %v4290 = vmul.f32 %v4284, %v4281
  %v4291 = vadd.f32 %v4289, %v4290
  %v4292 = vtanh.pop %v4291
  %v4293 = vmul.f32 %v4288, %v4292
  %4294 = vst [vmem:[#allocation4 + $0x10] sm:$0xff] %v4293
  %v4295 = vld [vmem:[#allocation7 + $0x60] sm:$0xff]
  %v4296 = vld [vmem:[#allocation7 + $0x68] sm:$0xff]
  %v4297 = vld [vmem:[#allocation7 + $0x70] sm:$0xff]
  %v4298 = vld [vmem:[#allocation7 + $0x78] sm:$0xff]
  %v4299 = vpack.c.bf16 %v4293, %v4293
  %4300 = vmatprep.subr.bf16.mxu0 %v3944
  %4301 = vmatpush1.bf16.msra.mxu0 %v3943
  %4302 = vmatprep.subr.bf16.mxu0 %v3948
  %4303 = vmatpush1.bf16.msra.mxu0 %v3947
  %4304 = vmatprep.subr.bf16.mxu0 %v3952
  %4305 = vmatpush1.bf16.msra.mxu0 %v3951
  %4306 = vmatprep.subr.bf16.mxu0 %v3956
  %4307 = vmatpush1.bf16.msra.mxu0 %v3955
  %4308 = vmatprep.subr.bf16.mxu0 %v3960
  %4309 = vmatpush1.bf16.msra.mxu0 %v3959
  %4310 = vmatprep.subr.bf16.mxu0 %v3964
  %4311 = vmatpush1.bf16.msra.mxu0 %v3963
  %4312 = vmatprep.subr.bf16.mxu0 %v3968
  %4313 = vmatpush1.bf16.msra.mxu0 %v3967
  %4314 = vmatprep.subr.bf16.mxu0 %v3972
  %4315 = vmatpush1.bf16.msra.mxu0 %v3971
  %4316 = vmatprep.subr.bf16.mxu0 0
  %4317 = vmatpush1.bf16.msra.mxu0 0
  %4318 = vmatprep.subr.bf16.mxu0 0
  %4319 = vmatpush1.bf16.msra.mxu0 0
  %4320 = vmatprep.subr.bf16.mxu0 0
  %4321 = vmatpush1.bf16.msra.mxu0 0
  %4322 = vmatprep.subr.bf16.mxu0 0
  %4323 = vmatpush1.bf16.msra.mxu0 0
  %4324 = vmatprep.subr.bf16.mxu0 0
  %4325 = vmatpush1.bf16.msra.mxu0 0
  %4326 = vmatprep.subr.bf16.mxu0 0
  %4327 = vmatpush1.bf16.msra.mxu0 0
  %4328 = vmatprep.subr.bf16.mxu0 0
  %4329 = vmatpush1.bf16.msra.mxu0 0
  %4330 = vmatprep.subr.bf16.mxu0 0
  %4331 = vmatpush1.bf16.msra.mxu0 0
  %4332 = vmatprep.mubr.bf16.mxu0 0
  %4333 = vmatmul.mubr.bf16.gmra.mrb[0].mxu0 %v4299
  %v4334 = vpop.f32.mrb[0].mxu0
  %v4335 = vadd.f32 0.0, %v4334
  %v4336 = vpop.f32.mrb[0].mxu0
  %v4337 = vadd.f32 0.0, %v4336
  %v4338 = vpop.f32.mrb[0].mxu0
  %v4339 = vpop.f32.mrb[0].mxu0
  %4340 = vdwg.mxu0
  %4341 = vmatprep.subr.bf16.mxu0 %v3946
  %4342 = vmatpush1.bf16.msra.mxu0 %v3945
  %4343 = vmatprep.subr.bf16.mxu0 %v3950
  %4344 = vmatpush1.bf16.msra.mxu0 %v3949
  %4345 = vmatprep.subr.bf16.mxu0 %v3954
  %4346 = vmatpush1.bf16.msra.mxu0 %v3953
  %4347 = vmatprep.subr.bf16.mxu0 %v3958
  %4348 = vmatpush1.bf16.msra.mxu0 %v3957
  %4349 = vmatprep.subr.bf16.mxu0 %v3962
  %4350 = vmatpush1.bf16.msra.mxu0 %v3961
  %4351 = vmatprep.subr.bf16.mxu0 %v3966
  %4352 = vmatpush1.bf16.msra.mxu0 %v3965
  %4353 = vmatprep.subr.bf16.mxu0 %v3970
  %4354 = vmatpush1.bf16.msra.mxu0 %v3969
  %4355 = vmatprep.subr.bf16.mxu0 %v3974
  %4356 = vmatpush1.bf16.msra.mxu0 %v3973
  %4357 = vmatprep.subr.bf16.mxu0 0
  %4358 = vmatpush1.bf16.msra.mxu0 0
  %4359 = vmatprep.subr.bf16.mxu0 0
  %4360 = vmatpush1.bf16.msra.mxu0 0
  %4361 = vmatprep.subr.bf16.mxu0 0
  %4362 = vmatpush1.bf16.msra.mxu0 0
  %4363 = vmatprep.subr.bf16.mxu0 0
  %4364 = vmatpush1.bf16.msra.mxu0 0
  %4365 = vmatprep.subr.bf16.mxu0 0
  %4366 = vmatpush1.bf16.msra.mxu0 0
  %4367 = vmatprep.subr.bf16.mxu0 0
  %4368 = vmatpush1.bf16.msra.mxu0 0
  %4369 = vmatprep.subr.bf16.mxu0 0
  %4370 = vmatpush1.bf16.msra.mxu0 0
  %4371 = vmatprep.subr.bf16.mxu0 0
  %4372 = vmatpush1.bf16.msra.mxu0 0
  %4373 = vmatprep.mubr.bf16.mxu0 0
  %4374 = vmatmul.mubr.bf16.gmra.mrb[0].mxu0 %v4299
  %v4375 = vpop.f32.mrb[0].mxu0
  %v4376 = vadd.f32 0.0, %v4375
  %v4377 = vpop.f32.mrb[0].mxu0
  %v4378 = vadd.f32 0.0, %v4377
  %v4379 = vpop.f32.mrb[0].mxu0
  %v4380 = vpop.f32.mrb[0].mxu0
  %4381 = vdwg.mxu0
  %v4382 = vadd.f32 %v4295, %v4335
  %v4383 = vadd.f32 %v4296, %v4337
  %v4384 = vadd.f32 %v4297, %v4376
  %v4385 = vadd.f32 %v4298, %v4378
  %v4386 = vtanh.pop %v4382
  %v4387 = vtanh.pop %v4383
  %v4388 = vtanh.pop %v4384
  %v4389 = vtanh.pop %v4385
  %v4390 = vmul.f32 %v4386, 0.5
  %v4391 = vadd.f32 %v4390, 0.5
  %v4392 = vmul.f32 %v4387, 0.5
  %v4393 = vadd.f32 %v4392, 0.5
  %v4394 = vmul.f32 %v4389, 0.5
  %v4395 = vadd.f32 %v4394, 0.5
  %v4396 = vmul.f32 %v4393, %v4291
  %v4397 = vmul.f32 %v4391, %v4388
  %v4398 = vadd.f32 %v4396, %v4397
  %v4399 = vtanh.pop %v4398
  %v4400 = vmul.f32 %v4395, %v4399
  %4401 = vst [vmem:[#allocation4 + $0x18] sm:$0xff] %v4400
  %v4402 = vld [vmem:[#allocation7 + $0x80] sm:$0xff]
  %v4403 = vld [vmem:[#allocation7 + $0x88] sm:$0xff]
  %v4404 = vld [vmem:[#allocation7 + $0x90] sm:$0xff]
  %v4405 = vld [vmem:[#allocation7 + $0x98] sm:$0xff]
  %v4406 = vpack.c.bf16 %v4400, %v4400
  %4407 = vmatprep.subr.bf16.mxu0 %v3944
  %4408 = vmatpush1.bf16.msra.mxu0 %v3943
  %4409 = vmatprep.subr.bf16.mxu0 %v3948
  %4410 = vmatpush1.bf16.msra.mxu0 %v3947
  %4411 = vmatprep.subr.bf16.mxu0 %v3952
  %4412 = vmatpush1.bf16.msra.mxu0 %v3951
  %4413 = vmatprep.subr.bf16.mxu0 %v3956
  %4414 = vmatpush1.bf16.msra.mxu0 %v3955
  %4415 = vmatprep.subr.bf16.mxu0 %v3960
  %4416 = vmatpush1.bf16.msra.mxu0 %v3959
  %4417 = vmatprep.subr.bf16.mxu0 %v3964
  %4418 = vmatpush1.bf16.msra.mxu0 %v3963
  %4419 = vmatprep.subr.bf16.mxu0 %v3968
  %4420 = vmatpush1.bf16.msra.mxu0 %v3967
  %4421 = vmatprep.subr.bf16.mxu0 %v3972
  %4422 = vmatpush1.bf16.msra.mxu0 %v3971
  %4423 = vmatprep.subr.bf16.mxu0 0
  %4424 = vmatpush1.bf16.msra.mxu0 0
  %4425 = vmatprep.subr.bf16.mxu0 0
  %4426 = vmatpush1.bf16.msra.mxu0 0
  %4427 = vmatprep.subr.bf16.mxu0 0
  %4428 = vmatpush1.bf16.msra.mxu0 0
  %4429 = vmatprep.subr.bf16.mxu0 0
  %4430 = vmatpush1.bf16.msra.mxu0 0
  %4431 = vmatprep.subr.bf16.mxu0 0
  %4432 = vmatpush1.bf16.msra.mxu0 0
  %4433 = vmatprep.subr.bf16.mxu0 0
  %4434 = vmatpush1.bf16.msra.mxu0 0
  %4435 = vmatprep.subr.bf16.mxu0 0
  %4436 = vmatpush1.bf16.msra.mxu0 0
  %4437 = vmatprep.subr.bf16.mxu0 0
  %4438 = vmatpush1.bf16.msra.mxu0 0
  %4439 = vmatprep.mubr.bf16.mxu0 0
  %4440 = vmatmul.mubr.bf16.gmra.mrb[0].mxu0 %v4406
  %v4441 = vpop.f32.mrb[0].mxu0
  %v4442 = vadd.f32 0.0, %v4441
  %v4443 = vpop.f32.mrb[0].mxu0
  %v4444 = vadd.f32 0.0, %v4443
  %v4445 = vpop.f32.mrb[0].mxu0
  %v4446 = vpop.f32.mrb[0].mxu0
  %4447 = vdwg.mxu0
  %4448 = vmatprep.subr.bf16.mxu0 %v3946
  %4449 = vmatpush1.bf16.msra.mxu0 %v3945
  %4450 = vmatprep.subr.bf16.mxu0 %v3950
  %4451 = vmatpush1.bf16.msra.mxu0 %v3949
  %4452 = vmatprep.subr.bf16.mxu0 %v3954
  %4453 = vmatpush1.bf16.msra.mxu0 %v3953
  %4454 = vmatprep.subr.bf16.mxu0 %v3958
  %4455 = vmatpush1.bf16.msra.mxu0 %v3957
  %4456 = vmatprep.subr.bf16.mxu0 %v3962
  %4457 = vmatpush1.bf16.msra.mxu0 %v3961
  %4458 = vmatprep.subr.bf16.mxu0 %v3966
  %4459 = vmatpush1.bf16.msra.mxu0 %v3965
  %4460 = vmatprep.subr.bf16.mxu0 %v3970
  %4461 = vmatpush1.bf16.msra.mxu0 %v3969
  %4462 = vmatprep.subr.bf16.mxu0 %v3974
  %4463 = vmatpush1.bf16.msra.mxu0 %v3973
  %4464 = vmatprep.subr.bf16.mxu0 0
  %4465 = vmatpush1.bf16.msra.mxu0 0
  %4466 = vmatprep.subr.bf16.mxu0 0
  %4467 = vmatpush1.bf16.msra.mxu0 0
  %4468 = vmatprep.subr.bf16.mxu0 0
  %4469 = vmatpush1.bf16.msra.mxu0 0
  %4470 = vmatprep.subr.bf16.mxu0 0
  %4471 = vmatpush1.bf16.msra.mxu0 0
  %4472 = vmatprep.subr.bf16.mxu0 0
  %4473 = vmatpush1.bf16.msra.mxu0 0
  %4474 = vmatprep.subr.bf16.mxu0 0
  %4475 = vmatpush1.bf16.msra.mxu0 0
  %4476 = vmatprep.subr.bf16.mxu0 0
  %4477 = vmatpush1.bf16.msra.mxu0 0
  %4478 = vmatprep.subr.bf16.mxu0 0
  %4479 = vmatpush1.bf16.msra.mxu0 0
  %4480 = vmatprep.mubr.bf16.mxu0 0
  %4481 = vmatmul.mubr.bf16.gmra.mrb[0].mxu0 %v4406
  %v4482 = vpop.f32.mrb[0].mxu0
  %v4483 = vadd.f32 0.0, %v4482
  %v4484 = vpop.f32.mrb[0].mxu0
  %v4485 = vadd.f32 0.0, %v4484
  %v4486 = vpop.f32.mrb[0].mxu0
  %v4487 = vpop.f32.mrb[0].mxu0
  %4488 = vdwg.mxu0
  %v4489 = vadd.f32 %v4402, %v4442
  %v4490 = vadd.f32 %v4403, %v4444
  %v4491 = vadd.f32 %v4404, %v4483
  %v4492 = vadd.f32 %v4405, %v4485
  %v4493 = vtanh.pop %v4489
  %v4494 = vtanh.pop %v4490
  %v4495 = vtanh.pop %v4491
  %v4496 = vtanh.pop %v4492
  %v4497 = vmul.f32 %v4493, 0.5
  %v4498 = vadd.f32 %v4497, 0.5
  %v4499 = vmul.f32 %v4494, 0.5
  %v4500 = vadd.f32 %v4499, 0.5
  %v4501 = vmul.f32 %v4496, 0.5
  %v4502 = vadd.f32 %v4501, 0.5
  %v4503 = vmul.f32 %v4500, %v4398
  %v4504 = vmul.f32 %v4498, %v4495
  %v4505 = vadd.f32 %v4503, %v4504
  %v4506 = vtanh.pop %v4505
  %v4507 = vmul.f32 %v4502, %v4506
  %4508 = vst [vmem:[#allocation4 + $0x20] sm:$0xff] %v4507
  %v4509 = vld [vmem:[#allocation7 + $0xa0] sm:$0xff]
  %v4510 = vld [vmem:[#allocation7 + $0xa8] sm:$0xff]
  %v4511 = vld [vmem:[#allocation7 + $0xb0] sm:$0xff]
  %v4512 = vld [vmem:[#allocation7 + $0xb8] sm:$0xff]
  %v4513 = vpack.c.bf16 %v4507, %v4507
  %4514 = vmatprep.subr.bf16.mxu0 %v3944
  %4515 = vmatpush1.bf16.msra.mxu0 %v3943
  %4516 = vmatprep.subr.bf16.mxu0 %v3948
  %4517 = vmatpush1.bf16.msra.mxu0 %v3947
  %4518 = vmatprep.subr.bf16.mxu0 %v3952
  %4519 = vmatpush1.bf16.msra.mxu0 %v3951
  %4520 = vmatprep.subr.bf16.mxu0 %v3956
  %4521 = vmatpush1.bf16.msra.mxu0 %v3955
  %4522 = vmatprep.subr.bf16.mxu0 %v3960
  %4523 = vmatpush1.bf16.msra.mxu0 %v3959
  %4524 = vmatprep.subr.bf16.mxu0 %v3964
  %4525 = vmatpush1.bf16.msra.mxu0 %v3963
  %4526 = vmatprep.subr.bf16.mxu0 %v3968
  %4527 = vmatpush1.bf16.msra.mxu0 %v3967
  %4528 = vmatprep.subr.bf16.mxu0 %v3972
  %4529 = vmatpush1.bf16.msra.mxu0 %v3971
  %4530 = vmatprep.subr.bf16.mxu0 0
  %4531 = vmatpush1.bf16.msra.mxu0 0
  %4532 = vmatprep.subr.bf16.mxu0 0
  %4533 = vmatpush1.bf16.msra.mxu0 0
  %4534 = vmatprep.subr.bf16.mxu0 0
  %4535 = vmatpush1.bf16.msra.mxu0 0
  %4536 = vmatprep.subr.bf16.mxu0 0
  %4537 = vmatpush1.bf16.msra.mxu0 0
  %4538 = vmatprep.subr.bf16.mxu0 0
  %4539 = vmatpush1.bf16.msra.mxu0 0
  %4540 = vmatprep.subr.bf16.mxu0 0
  %4541 = vmatpush1.bf16.msra.mxu0 0
  %4542 = vmatprep.subr.bf16.mxu0 0
  %4543 = vmatpush1.bf16.msra.mxu0 0
  %4544 = vmatprep.subr.bf16.mxu0 0
  %4545 = vmatpush1.bf16.msra.mxu0 0
  %4546 = vmatprep.mubr.bf16.mxu0 0
  %4547 = vmatmul.mubr.bf16.gmra.mrb[0].mxu0 %v4513
  %v4548 = vpop.f32.mrb[0].mxu0
  %v4549 = vadd.f32 0.0, %v4548
  %v4550 = vpop.f32.mrb[0].mxu0
  %v4551 = vadd.f32 0.0, %v4550
  %v4552 = vpop.f32.mrb[0].mxu0
  %v4553 = vpop.f32.mrb[0].mxu0
  %4554 = vdwg.mxu0
  %4555 = vmatprep.subr.bf16.mxu0 %v3946
  %4556 = vmatpush1.bf16.msra.mxu0 %v3945
  %4557 = vmatprep.subr.bf16.mxu0 %v3950
  %4558 = vmatpush1.bf16.msra.mxu0 %v3949
  %4559 = vmatprep.subr.bf16.mxu0 %v3954
  %4560 = vmatpush1.bf16.msra.mxu0 %v3953
  %4561 = vmatprep.subr.bf16.mxu0 %v3958
  %4562 = vmatpush1.bf16.msra.mxu0 %v3957
  %4563 = vmatprep.subr.bf16.mxu0 %v3962
  %4564 = vmatpush1.bf16.msra.mxu0 %v3961
  %4565 = vmatprep.subr.bf16.mxu0 %v3966
  %4566 = vmatpush1.bf16.msra.mxu0 %v3965
  %4567 = vmatprep.subr.bf16.mxu0 %v3970
  %4568 = vmatpush1.bf16.msra.mxu0 %v3969
  %4569 = vmatprep.subr.bf16.mxu0 %v3974
  %4570 = vmatpush1.bf16.msra.mxu0 %v3973
  %4571 = vmatprep.subr.bf16.mxu0 0
  %4572 = vmatpush1.bf16.msra.mxu0 0
  %4573 = vmatprep.subr.bf16.mxu0 0
  %4574 = vmatpush1.bf16.msra.mxu0 0
  %4575 = vmatprep.subr.bf16.mxu0 0
  %4576 = vmatpush1.bf16.msra.mxu0 0
  %4577 = vmatprep.subr.bf16.mxu0 0
  %4578 = vmatpush1.bf16.msra.mxu0 0
  %4579 = vmatprep.subr.bf16.mxu0 0
  %4580 = vmatpush1.bf16.msra.mxu0 0
  %4581 = vmatprep.subr.bf16.mxu0 0
  %4582 = vmatpush1.bf16.msra.mxu0 0
  %4583 = vmatprep.subr.bf16.mxu0 0
  %4584 = vmatpush1.bf16.msra.mxu0 0
  %4585 = vmatprep.subr.bf16.mxu0 0
  %4586 = vmatpush1.bf16.msra.mxu0 0
  %4587 = vmatprep.mubr.bf16.mxu0 0
  %4588 = vmatmul.mubr.bf16.gmra.mrb[0].mxu0 %v4513
  %v4589 = vpop.f32.mrb[0].mxu0
  %v4590 = vadd.f32 0.0, %v4589
  %v4591 = vpop.f32.mrb[0].mxu0
  %v4592 = vadd.f32 0.0, %v4591
  %v4593 = vpop.f32.mrb[0].mxu0
  %v4594 = vpop.f32.mrb[0].mxu0
  %4595 = vdwg.mxu0
  %v4596 = vadd.f32 %v4509, %v4549
  %v4597 = vadd.f32 %v4510, %v4551
  %v4598 = vadd.f32 %v4511, %v4590
  %v4599 = vadd.f32 %v4512, %v4592
  %v4600 = vtanh.pop %v4596
  %v4601 = vtanh.pop %v4597
  %v4602 = vtanh.pop %v4598
  %v4603 = vtanh.pop %v4599
  %v4604 = vmul.f32 %v4600, 0.5
  %v4605 = vadd.f32 %v4604, 0.5
  %v4606 = vmul.f32 %v4601, 0.5
  %v4607 = vadd.f32 %v4606, 0.5
  %v4608 = vmul.f32 %v4603, 0.5
  %v4609 = vadd.f32 %v4608, 0.5
  %v4610 = vmul.f32 %v4607, %v4505
  %v4611 = vmul.f32 %v4605, %v4602
  %v4612 = vadd.f32 %v4610, %v4611
  %v4613 = vtanh.pop %v4612
  %v4614 = vmul.f32 %v4609, %v4613
  %4615 = vst [vmem:[#allocation4 + $0x28] sm:$0xff] %v4614
  %v4616 = vld [vmem:[#allocation7 + $0xc0] sm:$0xff]
  %v4617 = vld [vmem:[#allocation7 + $0xc8] sm:$0xff]
  %v4618 = vld [vmem:[#allocation7 + $0xd0] sm:$0xff]
  %v4619 = vld [vmem:[#allocation7 + $0xd8] sm:$0xff]
  %v4620 = vpack.c.bf16 %v4614, %v4614
  %4621 = vmatprep.subr.bf16.mxu0 %v3944
  %4622 = vmatpush1.bf16.msra.mxu0 %v3943
  %4623 = vmatprep.subr.bf16.mxu0 %v3948
  %4624 = vmatpush1.bf16.msra.mxu0 %v3947
  %4625 = vmatprep.subr.bf16.mxu0 %v3952
  %4626 = vmatpush1.bf16.msra.mxu0 %v3951
  %4627 = vmatprep.subr.bf16.mxu0 %v3956
  %4628 = vmatpush1.bf16.msra.mxu0 %v3955
  %4629 = vmatprep.subr.bf16.mxu0 %v3960
  %4630 = vmatpush1.bf16.msra.mxu0 %v3959
  %4631 = vmatprep.subr.bf16.mxu0 %v3964
  %4632 = vmatpush1.bf16.msra.mxu0 %v3963
  %4633 = vmatprep.subr.bf16.mxu0 %v3968
  %4634 = vmatpush1.bf16.msra.mxu0 %v3967
  %4635 = vmatprep.subr.bf16.mxu0 %v3972
  %4636 = vmatpush1.bf16.msra.mxu0 %v3971
  %4637 = vmatprep.subr.bf16.mxu0 0
  %4638 = vmatpush1.bf16.msra.mxu0 0
  %4639 = vmatprep.subr.bf16.mxu0 0
  %4640 = vmatpush1.bf16.msra.mxu0 0
  %4641 = vmatprep.subr.bf16.mxu0 0
  %4642 = vmatpush1.bf16.msra.mxu0 0
  %4643 = vmatprep.subr.bf16.mxu0 0
  %4644 = vmatpush1.bf16.msra.mxu0 0
  %4645 = vmatprep.subr.bf16.mxu0 0
  %4646 = vmatpush1.bf16.msra.mxu0 0
  %4647 = vmatprep.subr.bf16.mxu0 0
  %4648 = vmatpush1.bf16.msra.mxu0 0
  %4649 = vmatprep.subr.bf16.mxu0 0
  %4650 = vmatpush1.bf16.msra.mxu0 0
  %4651 = vmatprep.subr.bf16.mxu0 0
  %4652 = vmatpush1.bf16.msra.mxu0 0
  %4653 = vmatprep.mubr.bf16.mxu0 0
  %4654 = vmatmul.mubr.bf16.gmra.mrb[0].mxu0 %v4620
  %v4655 = vpop.f32.mrb[0].mxu0
  %v4656 = vadd.f32 0.0, %v4655
  %v4657 = vpop.f32.mrb[0].mxu0
  %v4658 = vadd.f32 0.0, %v4657
  %v4659 = vpop.f32.mrb[0].mxu0
  %v4660 = vpop.f32.mrb[0].mxu0
  %4661 = vdwg.mxu0
  %4662 = vmatprep.subr.bf16.mxu0 %v3946
  %4663 = vmatpush1.bf16.msra.mxu0 %v3945
  %4664 = vmatprep.subr.bf16.mxu0 %v3950
  %4665 = vmatpush1.bf16.msra.mxu0 %v3949
  %4666 = vmatprep.subr.bf16.mxu0 %v3954
  %4667 = vmatpush1.bf16.msra.mxu0 %v3953
  %4668 = vmatprep.subr.bf16.mxu0 %v3958
  %4669 = vmatpush1.bf16.msra.mxu0 %v3957
  %4670 = vmatprep.subr.bf16.mxu0 %v3962
  %4671 = vmatpush1.bf16.msra.mxu0 %v3961
  %4672 = vmatprep.subr.bf16.mxu0 %v3966
  %4673 = vmatpush1.bf16.msra.mxu0 %v3965
  %4674 = vmatprep.subr.bf16.mxu0 %v3970
  %4675 = vmatpush1.bf16.msra.mxu0 %v3969
  %4676 = vmatprep.subr.bf16.mxu0 %v3974
  %4677 = vmatpush1.bf16.msra.mxu0 %v3973
  %4678 = vmatprep.subr.bf16.mxu0 0
  %4679 = vmatpush1.bf16.msra.mxu0 0
  %4680 = vmatprep.subr.bf16.mxu0 0
  %4681 = vmatpush1.bf16.msra.mxu0 0
  %4682 = vmatprep.subr.bf16.mxu0 0
  %4683 = vmatpush1.bf16.msra.mxu0 0
  %4684 = vmatprep.subr.bf16.mxu0 0
  %4685 = vmatpush1.bf16.msra.mxu0 0
  %4686 = vmatprep.subr.bf16.mxu0 0
  %4687 = vmatpush1.bf16.msra.mxu0 0
  %4688 = vmatprep.subr.bf16.mxu0 0
  %4689 = vmatpush1.bf16.msra.mxu0 0
  %4690 = vmatprep.subr.bf16.mxu0 0
  %4691 = vmatpush1.bf16.msra.mxu0 0
  %4692 = vmatprep.subr.bf16.mxu0 0
  %4693 = vmatpush1.bf16.msra.mxu0 0
  %4694 = vmatprep.mubr.bf16.mxu0 0
  %4695 = vmatmul.mubr.bf16.gmra.mrb[0].mxu0 %v4620
  %v4696 = vpop.f32.mrb[0].mxu0
  %v4697 = vadd.f32 0.0, %v4696
  %v4698 = vpop.f32.mrb[0].mxu0
  %v4699 = vadd.f32 0.0, %v4698
  %v4700 = vpop.f32.mrb[0].mxu0
  %v4701 = vpop.f32.mrb[0].mxu0
  %4702 = vdwg.mxu0
  %v4703 = vadd.f32 %v4616, %v4656
  %v4704 = vadd.f32 %v4617, %v4658
  %v4705 = vadd.f32 %v4618, %v4697
  %v4706 = vadd.f32 %v4619, %v4699
  %v4707 = vtanh.pop %v4703
  %v4708 = vtanh.pop %v4704
  %v4709 = vtanh.pop %v4705
  %v4710 = vtanh.pop %v4706
  %v4711 = vmul.f32 %v4707, 0.5
  %v4712 = vadd.f32 %v4711, 0.5
  %v4713 = vmul.f32 %v4708, 0.5
  %v4714 = vadd.f32 %v4713, 0.5
  %v4715 = vmul.f32 %v4710, 0.5
  %v4716 = vadd.f32 %v4715, 0.5
  %v4717 = vmul.f32 %v4714, %v4612
  %v4718 = vmul.f32 %v4712, %v4709
  %v4719 = vadd.f32 %v4717, %v4718
  %v4720 = vtanh.pop %v4719
  %v4721 = vmul.f32 %v4716, %v4720
  %4722 = vst [vmem:[#allocation4 + $0x30] sm:$0xff] %v4721
  %v4723 = vld [vmem:[#allocation7 + $0xe0] sm:$0xff]
  %v4724 = vld [vmem:[#allocation7 + $0xe8] sm:$0xff]
  %v4725 = vld [vmem:[#allocation7 + $0xf0] sm:$0xff]
  %v4726 = vld [vmem:[#allocation7 + $0xf8] sm:$0xff]
  %v4727 = vpack.c.bf16 %v4721, %v4721
  %4728 = vmatprep.subr.bf16.mxu0 %v3944
  %4729 = vmatpush1.bf16.msra.mxu0 %v3943
  %4730 = vmatprep.subr.bf16.mxu0 %v3948
  %4731 = vmatpush1.bf16.msra.mxu0 %v3947
  %4732 = vmatprep.subr.bf16.mxu0 %v3952
  %4733 = vmatpush1.bf16.msra.mxu0 %v3951
  %4734 = vmatprep.subr.bf16.mxu0 %v3956
  %4735 = vmatpush1.bf16.msra.mxu0 %v3955
  %4736 = vmatprep.subr.bf16.mxu0 %v3960
  %4737 = vmatpush1.bf16.msra.mxu0 %v3959
  %4738 = vmatprep.subr.bf16.mxu0 %v3964
  %4739 = vmatpush1.bf16.msra.mxu0 %v3963
  %4740 = vmatprep.subr.bf16.mxu0 %v3968
  %4741 = vmatpush1.bf16.msra.mxu0 %v3967
  %4742 = vmatprep.subr.bf16.mxu0 %v3972
  %4743 = vmatpush1.bf16.msra.mxu0 %v3971
  %4744 = vmatprep.subr.bf16.mxu0 0
  %4745 = vmatpush1.bf16.msra.mxu0 0
  %4746 = vmatprep.subr.bf16.mxu0 0
  %4747 = vmatpush1.bf16.msra.mxu0 0
  %4748 = vmatprep.subr.bf16.mxu0 0
  %4749 = vmatpush1.bf16.msra.mxu0 0
  %4750 = vmatprep.subr.bf16.mxu0 0
  %4751 = vmatpush1.bf16.msra.mxu0 0
  %4752 = vmatprep.subr.bf16.mxu0 0
  %4753 = vmatpush1.bf16.msra.mxu0 0
  %4754 = vmatprep.subr.bf16.mxu0 0
  %4755 = vmatpush1.bf16.msra.mxu0 0
  %4756 = vmatprep.subr.bf16.mxu0 0
  %4757 = vmatpush1.bf16.msra.mxu0 0
  %4758 = vmatprep.subr.bf16.mxu0 0
  %4759 = vmatpush1.bf16.msra.mxu0 0
  %4760 = vmatprep.mubr.bf16.mxu0 0
  %4761 = vmatmul.mubr.bf16.gmra.mrb[0].mxu0 %v4727
  %v4762 = vpop.f32.mrb[0].mxu0
  %v4763 = vadd.f32 0.0, %v4762
  %v4764 = vpop.f32.mrb[0].mxu0
  %v4765 = vadd.f32 0.0, %v4764
  %v4766 = vpop.f32.mrb[0].mxu0
  %v4767 = vpop.f32.mrb[0].mxu0
  %4768 = vdwg.mxu0
  %4769 = vmatprep.subr.bf16.mxu0 %v3946
  %4770 = vmatpush1.bf16.msra.mxu0 %v3945
  %4771 = vmatprep.subr.bf16.mxu0 %v3950
  %4772 = vmatpush1.bf16.msra.mxu0 %v3949
  %4773 = vmatprep.subr.bf16.mxu0 %v3954
  %4774 = vmatpush1.bf16.msra.mxu0 %v3953
  %4775 = vmatprep.subr.bf16.mxu0 %v3958
  %4776 = vmatpush1.bf16.msra.mxu0 %v3957
  %4777 = vmatprep.subr.bf16.mxu0 %v3962
  %4778 = vmatpush1.bf16.msra.mxu0 %v3961
  %4779 = vmatprep.subr.bf16.mxu0 %v3966
  %4780 = vmatpush1.bf16.msra.mxu0 %v3965
  %4781 = vmatprep.subr.bf16.mxu0 %v3970
  %4782 = vmatpush1.bf16.msra.mxu0 %v3969
  %4783 = vmatprep.subr.bf16.mxu0 %v3974
  %4784 = vmatpush1.bf16.msra.mxu0 %v3973
  %4785 = vmatprep.subr.bf16.mxu0 0
  %4786 = vmatpush1.bf16.msra.mxu0 0
  %4787 = vmatprep.subr.bf16.mxu0 0
  %4788 = vmatpush1.bf16.msra.mxu0 0
  %4789 = vmatprep.subr.bf16.mxu0 0
  %4790 = vmatpush1.bf16.msra.mxu0 0
  %4791 = vmatprep.subr.bf16.mxu0 0
  %4792 = vmatpush1.bf16.msra.mxu0 0
  %4793 = vmatprep.subr.bf16.mxu0 0
  %4794 = vmatpush1.bf16.msra.mxu0 0
  %4795 = vmatprep.subr.bf16.mxu0 0
  %4796 = vmatpush1.bf16.msra.mxu0 0
  %4797 = vmatprep.subr.bf16.mxu0 0
  %4798 = vmatpush1.bf16.msra.mxu0 0
  %4799 = vmatprep.subr.bf16.mxu0 0
  %4800 = vmatpush1.bf16.msra.mxu0 0
  %4801 = vmatprep.mubr.bf16.mxu0 0
  %4802 = vmatmul.mubr.bf16.gmra.mrb[0].mxu0 %v4727
  %v4803 = vpop.f32.mrb[0].mxu0
  %v4804 = vadd.f32 0.0, %v4803
  %v4805 = vpop.f32.mrb[0].mxu0
  %v4806 = vadd.f32 0.0, %v4805
  %v4807 = vpop.f32.mrb[0].mxu0
  %v4808 = vpop.f32.mrb[0].mxu0
  %4809 = vdwg.mxu0
  %v4810 = vadd.f32 %v4723, %v4763
  %v4811 = vadd.f32 %v4724, %v4765
  %v4812 = vadd.f32 %v4725, %v4804
  %v4813 = vadd.f32 %v4726, %v4806
  %v4814 = vtanh.pop %v4810
  %v4815 = vtanh.pop %v4811
  %v4816 = vtanh.pop %v4812
  %v4817 = vtanh.pop %v4813
  %v4818 = vmul.f32 %v4814, 0.5
  %v4819 = vadd.f32 %v4818, 0.5
  %v4820 = vmul.f32 %v4815, 0.5
  %v4821 = vadd.f32 %v4820, 0.5
  %v4822 = vmul.f32 %v4817, 0.5
  %v4823 = vadd.f32 %v4822, 0.5
  %v4824 = vmul.f32 %v4821, %v4719
  %v4825 = vmul.f32 %v4819, %v4816
  %v4826 = vadd.f32 %v4824, %v4825
  %v4827 = vtanh.pop %v4826
  %v4828 = vmul.f32 %v4823, %v4827
  %4829 = vst [vmem:[#allocation4 + $0x38] sm:$0xff] %v4828
  %s4830 = sshll.u32 %s3470, 4
  %4831 = dma.done %s946, %s4830
  %s4832 = sshll.u32 %s3470, 4
  %4833 = dma.done %s1251, %s4832
  %v4834 = vld [vmem:[#allocation4] sm:$0xff]
  %v4835 = vld [vmem:[#allocation4 + $0x8] sm:$0xff]
  %v4836 = vld [vmem:[#allocation4 + $0x10] sm:$0xff]
  %v4837 = vld [vmem:[#allocation4 + $0x18] sm:$0xff]
  %v4838 = vld [vmem:[#allocation4 + $0x20] sm:$0xff]
  %v4839 = vld [vmem:[#allocation4 + $0x28] sm:$0xff]
  %v4840 = vld [vmem:[#allocation4 + $0x30] sm:$0xff]
  %v4841 = vld [vmem:[#allocation4 + $0x38] sm:$0xff]
  %v4842 = vpack.c.bf16 %v4835, %v4834
  %v4843 = vpack.c.bf16 %v4837, %v4836
  %v4844 = vpack.c.bf16 %v4839, %v4838
  %v4845 = vpack.c.bf16 %v4841, %v4840
  %v4846 = vld [vmem:[#allocation12] sm:$0xff]
  %v4847 = vld [vmem:[#allocation12 + $0x8] sm:$0xff]
  %v4848 = vld [vmem:[#allocation12 + $0x10] sm:$0xff]
  %v4849 = vld [vmem:[#allocation12 + $0x18] sm:$0xff]
  %v4850 = vld [vmem:[#allocation12 + $0x20] sm:$0xff]
  %v4851 = vld [vmem:[#allocation12 + $0x28] sm:$0xff]
  %v4852 = vld [vmem:[#allocation12 + $0x30] sm:$0xff]
  %v4853 = vld [vmem:[#allocation12 + $0x38] sm:$0xff]
  %v4854 = vld [vmem:[#allocation12 + $0x40] sm:$0xff]
  %v4855 = vld [vmem:[#allocation12 + $0x48] sm:$0xff]
  %v4856 = vld [vmem:[#allocation12 + $0x50] sm:$0xff]
  %v4857 = vld [vmem:[#allocation12 + $0x58] sm:$0xff]
  %v4858 = vld [vmem:[#allocation12 + $0x60] sm:$0xff]
  %v4859 = vld [vmem:[#allocation12 + $0x68] sm:$0xff]
  %v4860 = vld [vmem:[#allocation12 + $0x70] sm:$0xff]
  %v4861 = vld [vmem:[#allocation12 + $0x78] sm:$0xff]
  %v4862 = vld [vmem:[#allocation12 + $0x80] sm:$0xff]
  %v4863 = vld [vmem:[#allocation12 + $0x88] sm:$0xff]
  %v4864 = vld [vmem:[#allocation12 + $0x90] sm:$0xff]
  %v4865 = vld [vmem:[#allocation12 + $0x98] sm:$0xff]
  %v4866 = vld [vmem:[#allocation12 + $0xa0] sm:$0xff]
  %v4867 = vld [vmem:[#allocation12 + $0xa8] sm:$0xff]
  %v4868 = vld [vmem:[#allocation12 + $0xb0] sm:$0xff]
  %v4869 = vld [vmem:[#allocation12 + $0xb8] sm:$0xff]
  %v4870 = vld [vmem:[#allocation12 + $0xc0] sm:$0xff]
  %v4871 = vld [vmem:[#allocation12 + $0xc8] sm:$0xff]
  %v4872 = vld [vmem:[#allocation12 + $0xd0] sm:$0xff]
  %v4873 = vld [vmem:[#allocation12 + $0xd8] sm:$0xff]
  %v4874 = vld [vmem:[#allocation12 + $0xe0] sm:$0xff]
  %v4875 = vld [vmem:[#allocation12 + $0xe8] sm:$0xff]
  %v4876 = vld [vmem:[#allocation12 + $0xf0] sm:$0xff]
  %v4877 = vld [vmem:[#allocation12 + $0xf8] sm:$0xff]
  %v4878 = vld [vmem:[%s11] sm:$0xf]
  %v4880 = vlaneseq
  %v4881 = vshrl.u32 %v4880, 7
  %v4882 = vsub.s32 0, %v4881
  %v4883 = vrot.slane %v4878, %v4882
  %v4884 = vlaneseq
  %v4885 = vshrl.u32 %v4884, 7
  %v4886 = vsub.s32 1, %v4885
  %v4887 = vrot.slane %v4878, %v4886
  %v4888 = vlaneseq
  %v4889 = vshrl.u32 %v4888, 7
  %v4890 = vsub.s32 2, %v4889
  %v4891 = vrot.slane %v4878, %v4890
  %v4892 = vlaneseq
  %v4893 = vshrl.u32 %v4892, 7
  %v4894 = vsub.s32 3, %v4893
  %v4895 = vrot.slane %v4878, %v4894
  %4900 = vmatprep.subr.bf16.mxu0 %v4847
  %4901 = vmatpush1.bf16.msra.mxu0 %v4846
  %4902 = vmatprep.subr.bf16.mxu0 %v4851
  %4903 = vmatpush1.bf16.msra.mxu0 %v4850
  %4904 = vmatprep.subr.bf16.mxu0 %v4855
  %4905 = vmatpush1.bf16.msra.mxu0 %v4854
  %4906 = vmatprep.subr.bf16.mxu0 %v4859
  %4907 = vmatpush1.bf16.msra.mxu0 %v4858
  %4908 = vmatprep.subr.bf16.mxu0 %v4863
  %4909 = vmatpush1.bf16.msra.mxu0 %v4862
  %4910 = vmatprep.subr.bf16.mxu0 %v4867
  %4911 = vmatpush1.bf16.msra.mxu0 %v4866
  %4912 = vmatprep.subr.bf16.mxu0 %v4871
  %4913 = vmatpush1.bf16.msra.mxu0 %v4870
  %4914 = vmatprep.subr.bf16.mxu0 %v4875
  %4915 = vmatpush1.bf16.msra.mxu0 %v4874
  %4916 = vmatprep.subr.bf16.mxu0 0
  %4917 = vmatpush1.bf16.msra.mxu0 0
  %4918 = vmatprep.subr.bf16.mxu0 0
  %4919 = vmatpush1.bf16.msra.mxu0 0
  %4920 = vmatprep.subr.bf16.mxu0 0
  %4921 = vmatpush1.bf16.msra.mxu0 0
  %4922 = vmatprep.subr.bf16.mxu0 0
  %4923 = vmatpush1.bf16.msra.mxu0 0
  %4924 = vmatprep.subr.bf16.mxu0 0
  %4925 = vmatpush1.bf16.msra.mxu0 0
  %4926 = vmatprep.subr.bf16.mxu0 0
  %4927 = vmatpush1.bf16.msra.mxu0 0
  %4928 = vmatprep.subr.bf16.mxu0 0
  %4929 = vmatpush1.bf16.msra.mxu0 0
  %4930 = vmatprep.subr.bf16.mxu0 0
  %4931 = vmatpush1.bf16.msra.mxu0 0
  %4932 = vmatprep.mubr.bf16.mxu0 0
  %4933 = vmatmul.mubr.bf16.gmra.mrb[0].mxu0 %v4842
  %v4934 = vpop.f32.mrb[0].mxu0
  %v4935 = vadd.f32 %v4883, %v4934
  %v4936 = vpop.f32.mrb[0].mxu0
  %v4937 = vadd.f32 %v4887, %v4936
  %v4938 = vpop.f32.mrb[0].mxu0
  %v4939 = vadd.f32 %v4883, %v4938
  %v4940 = vpop.f32.mrb[0].mxu0
  %v4941 = vadd.f32 %v4887, %v4940
  %4942 = vmatprep.mubr.bf16.mxu0 0
  %4943 = vmatmul.mubr.bf16.gmra.mrb[0].mxu0 %v4843
  %v4944 = vpop.f32.mrb[0].mxu0
  %v4945 = vadd.f32 %v4883, %v4944
  %v4946 = vpop.f32.mrb[0].mxu0
  %v4947 = vadd.f32 %v4887, %v4946
  %v4948 = vpop.f32.mrb[0].mxu0
  %v4949 = vadd.f32 %v4883, %v4948
  %v4950 = vpop.f32.mrb[0].mxu0
  %v4951 = vadd.f32 %v4887, %v4950
  %4952 = vmatprep.mubr.bf16.mxu0 0
  %4953 = vmatmul.mubr.bf16.gmra.mrb[0].mxu0 %v4844
  %v4954 = vpop.f32.mrb[0].mxu0
  %v4955 = vadd.f32 %v4883, %v4954
  %v4956 = vpop.f32.mrb[0].mxu0
  %v4957 = vadd.f32 %v4887, %v4956
  %v4958 = vpop.f32.mrb[0].mxu0
  %v4959 = vadd.f32 %v4883, %v4958
  %v4960 = vpop.f32.mrb[0].mxu0
  %v4961 = vadd.f32 %v4887, %v4960
  %4962 = vmatprep.mubr.bf16.mxu0 0
  %4963 = vmatmul.mubr.bf16.gmra.mrb[0].mxu0 %v4845
  %v4964 = vpop.f32.mrb[0].mxu0
  %v4965 = vadd.f32 %v4883, %v4964
  %v4966 = vpop.f32.mrb[0].mxu0
  %v4967 = vadd.f32 %v4887, %v4966
  %v4968 = vpop.f32.mrb[0].mxu0
  %v4969 = vadd.f32 %v4883, %v4968
  %v4970 = vpop.f32.mrb[0].mxu0
  %v4971 = vadd.f32 %v4887, %v4970
  %4972 = vdwg.mxu0
  %4973 = vmatprep.subr.bf16.mxu0 %v4849
  %4974 = vmatpush1.bf16.msra.mxu0 %v4848
  %4975 = vmatprep.subr.bf16.mxu0 %v4853
  %4976 = vmatpush1.bf16.msra.mxu0 %v4852
  %4977 = vmatprep.subr.bf16.mxu0 %v4857
  %4978 = vmatpush1.bf16.msra.mxu0 %v4856
  %4979 = vmatprep.subr.bf16.mxu0 %v4861
  %4980 = vmatpush1.bf16.msra.mxu0 %v4860
  %4981 = vmatprep.subr.bf16.mxu0 %v4865
  %4982 = vmatpush1.bf16.msra.mxu0 %v4864
  %4983 = vmatprep.subr.bf16.mxu0 %v4869
  %4984 = vmatpush1.bf16.msra.mxu0 %v4868
  %4985 = vmatprep.subr.bf16.mxu0 %v4873
  %4986 = vmatpush1.bf16.msra.mxu0 %v4872
  %4987 = vmatprep.subr.bf16.mxu0 %v4877
  %4988 = vmatpush1.bf16.msra.mxu0 %v4876
  %4989 = vmatprep.subr.bf16.mxu0 0
  %4990 = vmatpush1.bf16.msra.mxu0 0
  %4991 = vmatprep.subr.bf16.mxu0 0
  %4992 = vmatpush1.bf16.msra.mxu0 0
  %4993 = vmatprep.subr.bf16.mxu0 0
  %4994 = vmatpush1.bf16.msra.mxu0 0
  %4995 = vmatprep.subr.bf16.mxu0 0
  %4996 = vmatpush1.bf16.msra.mxu0 0
  %4997 = vmatprep.subr.bf16.mxu0 0
  %4998 = vmatpush1.bf16.msra.mxu0 0
  %4999 = vmatprep.subr.bf16.mxu0 0
  %5000 = vmatpush1.bf16.msra.mxu0 0
  %5001 = vmatprep.subr.bf16.mxu0 0
  %5002 = vmatpush1.bf16.msra.mxu0 0
  %5003 = vmatprep.subr.bf16.mxu0 0
  %5004 = vmatpush1.bf16.msra.mxu0 0
  %5005 = vmatprep.mubr.bf16.mxu0 0
  %5006 = vmatmul.mubr.bf16.gmra.mrb[0].mxu0 %v4842
  %v5007 = vpop.f32.mrb[0].mxu0
  %v5008 = vadd.f32 %v4891, %v5007
  %v5009 = vpop.f32.mrb[0].mxu0
  %v5010 = vadd.f32 %v4895, %v5009
  %v5011 = vpop.f32.mrb[0].mxu0
  %v5012 = vadd.f32 %v4891, %v5011
  %v5013 = vpop.f32.mrb[0].mxu0
  %v5014 = vadd.f32 %v4895, %v5013
  %5015 = vmatprep.mubr.bf16.mxu0 0
  %5016 = vmatmul.mubr.bf16.gmra.mrb[0].mxu0 %v4843
  %v5017 = vpop.f32.mrb[0].mxu0
  %v5018 = vadd.f32 %v4891, %v5017
  %v5019 = vpop.f32.mrb[0].mxu0
  %v5020 = vadd.f32 %v4895, %v5019
  %v5021 = vpop.f32.mrb[0].mxu0
  %v5022 = vadd.f32 %v4891, %v5021
  %v5023 = vpop.f32.mrb[0].mxu0
  %v5024 = vadd.f32 %v4895, %v5023
  %5025 = vmatprep.mubr.bf16.mxu0 0
  %5026 = vmatmul.mubr.bf16.gmra.mrb[0].mxu0 %v4844
  %v5027 = vpop.f32.mrb[0].mxu0
  %v5028 = vadd.f32 %v4891, %v5027
  %v5029 = vpop.f32.mrb[0].mxu0
  %v5030 = vadd.f32 %v4895, %v5029
  %v5031 = vpop.f32.mrb[0].mxu0
  %v5032 = vadd.f32 %v4891, %v5031
  %v5033 = vpop.f32.mrb[0].mxu0
  %v5034 = vadd.f32 %v4895, %v5033
  %5035 = vmatprep.mubr.bf16.mxu0 0
  %5036 = vmatmul.mubr.bf16.gmra.mrb[0].mxu0 %v4845
  %v5037 = vpop.f32.mrb[0].mxu0
  %v5038 = vadd.f32 %v4891, %v5037
  %v5039 = vpop.f32.mrb[0].mxu0
  %v5040 = vadd.f32 %v4895, %v5039
  %v5041 = vpop.f32.mrb[0].mxu0
  %v5042 = vadd.f32 %v4891, %v5041
  %v5043 = vpop.f32.mrb[0].mxu0
  %v5044 = vadd.f32 %v4895, %v5043
  %5045 = vdwg.mxu0
  %5046 = vst [vmem:[#allocation8] sm:$0xff] %v4935
  %5047 = vst [vmem:[#allocation8 + $0x8] sm:$0xff] %v4937
  %5048 = vst [vmem:[#allocation8 + $0x10] sm:$0xff] %v5008
  %5049 = vst [vmem:[#allocation8 + $0x18] sm:$0xff] %v5010
  %5050 = vst [vmem:[#allocation8 + $0x20] sm:$0xff] %v4939
  %5051 = vst [vmem:[#allocation8 + $0x28] sm:$0xff] %v4941
  %5052 = vst [vmem:[#allocation8 + $0x30] sm:$0xff] %v5012
  %5053 = vst [vmem:[#allocation8 + $0x38] sm:$0xff] %v5014
  %5054 = vst [vmem:[#allocation8 + $0x40] sm:$0xff] %v4945
  %5055 = vst [vmem:[#allocation8 + $0x48] sm:$0xff] %v4947
  %5056 = vst [vmem:[#allocation8 + $0x50] sm:$0xff] %v5018
  %5057 = vst [vmem:[#allocation8 + $0x58] sm:$0xff] %v5020
  %5058 = vst [vmem:[#allocation8 + $0x60] sm:$0xff] %v4949
  %5059 = vst [vmem:[#allocation8 + $0x68] sm:$0xff] %v4951
  %5060 = vst [vmem:[#allocation8 + $0x70] sm:$0xff] %v5022
  %5061 = vst [vmem:[#allocation8 + $0x78] sm:$0xff] %v5024
  %5062 = vst [vmem:[#allocation8 + $0x80] sm:$0xff] %v4955
  %5063 = vst [vmem:[#allocation8 + $0x88] sm:$0xff] %v4957
  %5064 = vst [vmem:[#allocation8 + $0x90] sm:$0xff] %v5028
  %5065 = vst [vmem:[#allocation8 + $0x98] sm:$0xff] %v5030
  %5066 = vst [vmem:[#allocation8 + $0xa0] sm:$0xff] %v4959
  %5067 = vst [vmem:[#allocation8 + $0xa8] sm:$0xff] %v4961
  %5068 = vst [vmem:[#allocation8 + $0xb0] sm:$0xff] %v5032
  %5069 = vst [vmem:[#allocation8 + $0xb8] sm:$0xff] %v5034
  %5070 = vst [vmem:[#allocation8 + $0xc0] sm:$0xff] %v4965
  %5071 = vst [vmem:[#allocation8 + $0xc8] sm:$0xff] %v4967
  %5072 = vst [vmem:[#allocation8 + $0xd0] sm:$0xff] %v5038
  %5073 = vst [vmem:[#allocation8 + $0xd8] sm:$0xff] %v5040
  %5074 = vst [vmem:[#allocation8 + $0xe0] sm:$0xff] %v4969
  %5075 = vst [vmem:[#allocation8 + $0xe8] sm:$0xff] %v4971
  %5076 = vst [vmem:[#allocation8 + $0xf0] sm:$0xff] %v5042
  %5077 = vst [vmem:[#allocation8 + $0xf8] sm:$0xff] %v5044
  %v5078 = vlaneseq
  %v5079 = vand.u32 %v5078, 127
  %v5080 = vld [vmem:[#allocation13] sm:$0xff]
  %v5081 = vld [vmem:[#allocation13 + $0x8] sm:$0xff]
  %v5082 = vld [vmem:[#allocation13 + $0x10] sm:$0xff]
  %v5083 = vld [vmem:[#allocation13 + $0x18] sm:$0xff]
  %v5084 = vld [vmem:[#allocation13 + $0x20] sm:$0xff]
  %v5085 = vld [vmem:[#allocation13 + $0x28] sm:$0xff]
  %v5086 = vld [vmem:[#allocation13 + $0x30] sm:$0xff]
  %v5087 = vld [vmem:[#allocation13 + $0x38] sm:$0xff]
  %v5088 = vld [vmem:[#allocation13 + $0x40] sm:$0xff]
  %v5089 = vld [vmem:[#allocation13 + $0x48] sm:$0xff]
  %v5090 = vld [vmem:[#allocation13 + $0x50] sm:$0xff]
  %v5091 = vld [vmem:[#allocation13 + $0x58] sm:$0xff]
  %v5092 = vld [vmem:[#allocation13 + $0x60] sm:$0xff]
  %v5093 = vld [vmem:[#allocation13 + $0x68] sm:$0xff]
  %v5094 = vld [vmem:[#allocation13 + $0x70] sm:$0xff]
  %v5095 = vld [vmem:[#allocation13 + $0x78] sm:$0xff]
  %v5096 = vld [vmem:[#allocation13 + $0x80] sm:$0xff]
  %v5097 = vld [vmem:[#allocation13 + $0x88] sm:$0xff]
  %v5098 = vld [vmem:[#allocation13 + $0x90] sm:$0xff]
  %v5099 = vld [vmem:[#allocation13 + $0x98] sm:$0xff]
  %v5100 = vld [vmem:[#allocation13 + $0xa0] sm:$0xff]
  %v5101 = vld [vmem:[#allocation13 + $0xa8] sm:$0xff]
  %v5102 = vld [vmem:[#allocation13 + $0xb0] sm:$0xff]
  %v5103 = vld [vmem:[#allocation13 + $0xb8] sm:$0xff]
  %v5104 = vld [vmem:[#allocation13 + $0xc0] sm:$0xff]
  %v5105 = vld [vmem:[#allocation13 + $0xc8] sm:$0xff]
  %v5106 = vld [vmem:[#allocation13 + $0xd0] sm:$0xff]
  %v5107 = vld [vmem:[#allocation13 + $0xd8] sm:$0xff]
  %v5108 = vld [vmem:[#allocation13 + $0xe0] sm:$0xff]
  %v5109 = vld [vmem:[#allocation13 + $0xe8] sm:$0xff]
  %v5110 = vld [vmem:[#allocation13 + $0xf0] sm:$0xff]
  %v5111 = vld [vmem:[#allocation13 + $0xf8] sm:$0xff]
  %v5112 = vld [vmem:[#allocation8] sm:$0xff]
  %v5113 = vld [vmem:[#allocation8 + $0x8] sm:$0xff]
  %v5114 = vld [vmem:[#allocation8 + $0x10] sm:$0xff]
  %v5115 = vld [vmem:[#allocation8 + $0x18] sm:$0xff]
  %5116 = vmatprep.subr.bf16.mxu0 %v5081
  %5117 = vmatpush1.bf16.msra.mxu0 %v5080
  %5118 = vmatprep.subr.bf16.mxu0 %v5085
  %5119 = vmatpush1.bf16.msra.mxu0 %v5084
  %5120 = vmatprep.subr.bf16.mxu0 %v5089
  %5121 = vmatpush1.bf16.msra.mxu0 %v5088
  %5122 = vmatprep.subr.bf16.mxu0 %v5093
  %5123 = vmatpush1.bf16.msra.mxu0 %v5092
  %5124 = vmatprep.subr.bf16.mxu0 %v5097
  %5125 = vmatpush1.bf16.msra.mxu0 %v5096
  %5126 = vmatprep.subr.bf16.mxu0 %v5101
  %5127 = vmatpush1.bf16.msra.mxu0 %v5100
  %5128 = vmatprep.subr.bf16.mxu0 %v5105
  %5129 = vmatpush1.bf16.msra.mxu0 %v5104
  %5130 = vmatprep.subr.bf16.mxu0 %v5109
  %5131 = vmatpush1.bf16.msra.mxu0 %v5108
  %5132 = vmatprep.subr.bf16.mxu0 0
  %5133 = vmatpush1.bf16.msra.mxu0 0
  %5134 = vmatprep.subr.bf16.mxu0 0
  %5135 = vmatpush1.bf16.msra.mxu0 0
  %5136 = vmatprep.subr.bf16.mxu0 0
  %5137 = vmatpush1.bf16.msra.mxu0 0
  %5138 = vmatprep.subr.bf16.mxu0 0
  %5139 = vmatpush1.bf16.msra.mxu0 0
  %5140 = vmatprep.subr.bf16.mxu0 0
  %5141 = vmatpush1.bf16.msra.mxu0 0
  %5142 = vmatprep.subr.bf16.mxu0 0
  %5143 = vmatpush1.bf16.msra.mxu0 0
  %5144 = vmatprep.subr.bf16.mxu0 0
  %5145 = vmatpush1.bf16.msra.mxu0 0
  %5146 = vmatprep.subr.bf16.mxu0 0
  %5147 = vmatpush1.bf16.msra.mxu0 0
  %5148 = vmatprep.mubr.bf16.mxu0 0
  %5149 = vmatmul.mubr.bf16.gmra.mrb[0].mxu0 0
  %v5150 = vpop.f32.mrb[0].mxu0
  %v5151 = vadd.f32 0.0, %v5150
  %v5152 = vpop.f32.mrb[0].mxu0
  %v5153 = vadd.f32 0.0, %v5152
  %v5154 = vpop.f32.mrb[0].mxu0
  %v5155 = vpop.f32.mrb[0].mxu0
  %5156 = vdwg.mxu0
  %5157 = vmatprep.subr.bf16.mxu0 %v5083
  %5158 = vmatpush1.bf16.msra.mxu0 %v5082
  %5159 = vmatprep.subr.bf16.mxu0 %v5087
  %5160 = vmatpush1.bf16.msra.mxu0 %v5086
  %5161 = vmatprep.subr.bf16.mxu0 %v5091
  %5162 = vmatpush1.bf16.msra.mxu0 %v5090
  %5163 = vmatprep.subr.bf16.mxu0 %v5095
  %5164 = vmatpush1.bf16.msra.mxu0 %v5094
  %5165 = vmatprep.subr.bf16.mxu0 %v5099
  %5166 = vmatpush1.bf16.msra.mxu0 %v5098
  %5167 = vmatprep.subr.bf16.mxu0 %v5103
  %5168 = vmatpush1.bf16.msra.mxu0 %v5102
  %5169 = vmatprep.subr.bf16.mxu0 %v5107
  %5170 = vmatpush1.bf16.msra.mxu0 %v5106
  %5171 = vmatprep.subr.bf16.mxu0 %v5111
  %5172 = vmatpush1.bf16.msra.mxu0 %v5110
  %5173 = vmatprep.subr.bf16.mxu0 0
  %5174 = vmatpush1.bf16.msra.mxu0 0
  %5175 = vmatprep.subr.bf16.mxu0 0
  %5176 = vmatpush1.bf16.msra.mxu0 0
  %5177 = vmatprep.subr.bf16.mxu0 0
  %5178 = vmatpush1.bf16.msra.mxu0 0
  %5179 = vmatprep.subr.bf16.mxu0 0
  %5180 = vmatpush1.bf16.msra.mxu0 0
  %5181 = vmatprep.subr.bf16.mxu0 0
  %5182 = vmatpush1.bf16.msra.mxu0 0
  %5183 = vmatprep.subr.bf16.mxu0 0
  %5184 = vmatpush1.bf16.msra.mxu0 0
  %5185 = vmatprep.subr.bf16.mxu0 0
  %5186 = vmatpush1.bf16.msra.mxu0 0
  %5187 = vmatprep.subr.bf16.mxu0 0
  %5188 = vmatpush1.bf16.msra.mxu0 0
  %5189 = vmatprep.mubr.bf16.mxu0 0
  %5190 = vmatmul.mubr.bf16.gmra.mrb[0].mxu0 0
  %v5191 = vpop.f32.mrb[0].mxu0
  %v5192 = vadd.f32 0.0, %v5191
  %v5193 = vpop.f32.mrb[0].mxu0
  %v5194 = vadd.f32 0.0, %v5193
  %v5195 = vpop.f32.mrb[0].mxu0
  %v5196 = vpop.f32.mrb[0].mxu0
  %5197 = vdwg.mxu0
  %v5198 = vadd.f32 %v5112, %v5151
  %v5199 = vadd.f32 %v5113, %v5153
  %v5200 = vadd.f32 %v5114, %v5192
  %v5201 = vadd.f32 %v5115, %v5194
  %v5202 = vtanh.pop %v5198
  %v5203 = vtanh.pop %v5199
  %v5204 = vtanh.pop %v5200
  %v5205 = vtanh.pop %v5201
  %v5206 = vmul.f32 %v5202, 0.5
  %v5207 = vadd.f32 %v5206, 0.5
  %v5208 = vmul.f32 %v5203, 0.5
  %v5209 = vadd.f32 %v5208, 0.5
  %v5210 = vmul.f32 %v5205, 0.5
  %v5211 = vadd.f32 %v5210, 0.5
  %v5212 = vmul.f32 %v5209, 0.0
  %v5213 = vmul.f32 %v5207, %v5204
  %v5214 = vadd.f32 %v5212, %v5213
  %v5215 = vtanh.pop %v5214
  %v5216 = vmul.f32 %v5211, %v5215
  %vm5217 = vcmp.eq.s32.totalorder %v5079, 0
  %5219 = vset.pattern.permute.xlu0 0
  %5220 = vperm.xlu0 %5219, %v5216
  %v5221 = vpop.permute.xlu0 %5220
  %v5223 = vsel %vm5217, %v5221, 0.0
  %v5224 = vld [vmem:[#allocation8 + $0x20] sm:$0xff]
  %v5225 = vld [vmem:[#allocation8 + $0x28] sm:$0xff]
  %v5226 = vld [vmem:[#allocation8 + $0x30] sm:$0xff]
  %v5227 = vld [vmem:[#allocation8 + $0x38] sm:$0xff]
  %v5228 = vpack.c.bf16 %v5216, %v5216
  %5229 = vmatprep.subr.bf16.mxu0 %v5081
  %5230 = vmatpush1.bf16.msra.mxu0 %v5080
  %5231 = vmatprep.subr.bf16.mxu0 %v5085
  %5232 = vmatpush1.bf16.msra.mxu0 %v5084
  %5233 = vmatprep.subr.bf16.mxu0 %v5089
  %5234 = vmatpush1.bf16.msra.mxu0 %v5088
  %5235 = vmatprep.subr.bf16.mxu0 %v5093
  %5236 = vmatpush1.bf16.msra.mxu0 %v5092
  %5237 = vmatprep.subr.bf16.mxu0 %v5097
  %5238 = vmatpush1.bf16.msra.mxu0 %v5096
  %5239 = vmatprep.subr.bf16.mxu0 %v5101
  %5240 = vmatpush1.bf16.msra.mxu0 %v5100
  %5241 = vmatprep.subr.bf16.mxu0 %v5105
  %5242 = vmatpush1.bf16.msra.mxu0 %v5104
  %5243 = vmatprep.subr.bf16.mxu0 %v5109
  %5244 = vmatpush1.bf16.msra.mxu0 %v5108
  %5245 = vmatprep.subr.bf16.mxu0 0
  %5246 = vmatpush1.bf16.msra.mxu0 0
  %5247 = vmatprep.subr.bf16.mxu0 0
  %5248 = vmatpush1.bf16.msra.mxu0 0
  %5249 = vmatprep.subr.bf16.mxu0 0
  %5250 = vmatpush1.bf16.msra.mxu0 0
  %5251 = vmatprep.subr.bf16.mxu0 0
  %5252 = vmatpush1.bf16.msra.mxu0 0
  %5253 = vmatprep.subr.bf16.mxu0 0
  %5254 = vmatpush1.bf16.msra.mxu0 0
  %5255 = vmatprep.subr.bf16.mxu0 0
  %5256 = vmatpush1.bf16.msra.mxu0 0
  %5257 = vmatprep.subr.bf16.mxu0 0
  %5258 = vmatpush1.bf16.msra.mxu0 0
  %5259 = vmatprep.subr.bf16.mxu0 0
  %5260 = vmatpush1.bf16.msra.mxu0 0
  %5261 = vmatprep.mubr.bf16.mxu0 0
  %5262 = vmatmul.mubr.bf16.gmra.mrb[0].mxu0 %v5228
  %v5263 = vpop.f32.mrb[0].mxu0
  %v5264 = vadd.f32 0.0, %v5263
  %v5265 = vpop.f32.mrb[0].mxu0
  %v5266 = vadd.f32 0.0, %v5265
  %v5267 = vpop.f32.mrb[0].mxu0
  %v5268 = vpop.f32.mrb[0].mxu0
  %5269 = vdwg.mxu0
  %5270 = vmatprep.subr.bf16.mxu0 %v5083
  %5271 = vmatpush1.bf16.msra.mxu0 %v5082
  %5272 = vmatprep.subr.bf16.mxu0 %v5087
  %5273 = vmatpush1.bf16.msra.mxu0 %v5086
  %5274 = vmatprep.subr.bf16.mxu0 %v5091
  %5275 = vmatpush1.bf16.msra.mxu0 %v5090
  %5276 = vmatprep.subr.bf16.mxu0 %v5095
  %5277 = vmatpush1.bf16.msra.mxu0 %v5094
  %5278 = vmatprep.subr.bf16.mxu0 %v5099
  %5279 = vmatpush1.bf16.msra.mxu0 %v5098
  %5280 = vmatprep.subr.bf16.mxu0 %v5103
  %5281 = vmatpush1.bf16.msra.mxu0 %v5102
  %5282 = vmatprep.subr.bf16.mxu0 %v5107
  %5283 = vmatpush1.bf16.msra.mxu0 %v5106
  %5284 = vmatprep.subr.bf16.mxu0 %v5111
  %5285 = vmatpush1.bf16.msra.mxu0 %v5110
  %5286 = vmatprep.subr.bf16.mxu0 0
  %5287 = vmatpush1.bf16.msra.mxu0 0
  %5288 = vmatprep.subr.bf16.mxu0 0
  %5289 = vmatpush1.bf16.msra.mxu0 0
  %5290 = vmatprep.subr.bf16.mxu0 0
  %5291 = vmatpush1.bf16.msra.mxu0 0
  %5292 = vmatprep.subr.bf16.mxu0 0
  %5293 = vmatpush1.bf16.msra.mxu0 0
  %5294 = vmatprep.subr.bf16.mxu0 0
  %5295 = vmatpush1.bf16.msra.mxu0 0
  %5296 = vmatprep.subr.bf16.mxu0 0
  %5297 = vmatpush1.bf16.msra.mxu0 0
  %5298 = vmatprep.subr.bf16.mxu0 0
  %5299 = vmatpush1.bf16.msra.mxu0 0
  %5300 = vmatprep.subr.bf16.mxu0 0
  %5301 = vmatpush1.bf16.msra.mxu0 0
  %5302 = vmatprep.mubr.bf16.mxu0 0
  %5303 = vmatmul.mubr.bf16.gmra.mrb[0].mxu0 %v5228
  %v5304 = vpop.f32.mrb[0].mxu0
  %v5305 = vadd.f32 0.0, %v5304
  %v5306 = vpop.f32.mrb[0].mxu0
  %v5307 = vadd.f32 0.0, %v5306
  %v5308 = vpop.f32.mrb[0].mxu0
  %v5309 = vpop.f32.mrb[0].mxu0
  %5310 = vdwg.mxu0
  %v5311 = vadd.f32 %v5224, %v5264
  %v5312 = vadd.f32 %v5225, %v5266
  %v5313 = vadd.f32 %v5226, %v5305
  %v5314 = vadd.f32 %v5227, %v5307
  %v5315 = vtanh.pop %v5311
  %v5316 = vtanh.pop %v5312
  %v5317 = vtanh.pop %v5313
  %v5318 = vtanh.pop %v5314
  %v5319 = vmul.f32 %v5315, 0.5
  %v5320 = vadd.f32 %v5319, 0.5
  %v5321 = vmul.f32 %v5316, 0.5
  %v5322 = vadd.f32 %v5321, 0.5
  %v5323 = vmul.f32 %v5318, 0.5
  %v5324 = vadd.f32 %v5323, 0.5
  %v5325 = vmul.f32 %v5322, %v5214
  %v5326 = vmul.f32 %v5320, %v5317
  %v5327 = vadd.f32 %v5325, %v5326
  %v5328 = vtanh.pop %v5327
  %v5329 = vmul.f32 %v5324, %v5328
  %vm5330 = vcmp.eq.s32.totalorder %v5079, 1
  %5332 = vset.pattern.permute.xlu0 0
  %5333 = vperm.xlu0 %5332, %v5329
  %v5334 = vpop.permute.xlu0 %5333
  %v5336 = vsel %vm5330, %v5334, %v5223
  %v5337 = vld [vmem:[#allocation8 + $0x40] sm:$0xff]
  %v5338 = vld [vmem:[#allocation8 + $0x48] sm:$0xff]
  %v5339 = vld [vmem:[#allocation8 + $0x50] sm:$0xff]
  %v5340 = vld [vmem:[#allocation8 + $0x58] sm:$0xff]
  %v5341 = vpack.c.bf16 %v5329, %v5329
  %5342 = vmatprep.subr.bf16.mxu0 %v5081
  %5343 = vmatpush1.bf16.msra.mxu0 %v5080
  %5344 = vmatprep.subr.bf16.mxu0 %v5085
  %5345 = vmatpush1.bf16.msra.mxu0 %v5084
  %5346 = vmatprep.subr.bf16.mxu0 %v5089
  %5347 = vmatpush1.bf16.msra.mxu0 %v5088
  %5348 = vmatprep.subr.bf16.mxu0 %v5093
  %5349 = vmatpush1.bf16.msra.mxu0 %v5092
  %5350 = vmatprep.subr.bf16.mxu0 %v5097
  %5351 = vmatpush1.bf16.msra.mxu0 %v5096
  %5352 = vmatprep.subr.bf16.mxu0 %v5101
  %5353 = vmatpush1.bf16.msra.mxu0 %v5100
  %5354 = vmatprep.subr.bf16.mxu0 %v5105
  %5355 = vmatpush1.bf16.msra.mxu0 %v5104
  %5356 = vmatprep.subr.bf16.mxu0 %v5109
  %5357 = vmatpush1.bf16.msra.mxu0 %v5108
  %5358 = vmatprep.subr.bf16.mxu0 0
  %5359 = vmatpush1.bf16.msra.mxu0 0
  %5360 = vmatprep.subr.bf16.mxu0 0
  %5361 = vmatpush1.bf16.msra.mxu0 0
  %5362 = vmatprep.subr.bf16.mxu0 0
  %5363 = vmatpush1.bf16.msra.mxu0 0
  %5364 = vmatprep.subr.bf16.mxu0 0
  %5365 = vmatpush1.bf16.msra.mxu0 0
  %5366 = vmatprep.subr.bf16.mxu0 0
  %5367 = vmatpush1.bf16.msra.mxu0 0
  %5368 = vmatprep.subr.bf16.mxu0 0
  %5369 = vmatpush1.bf16.msra.mxu0 0
  %5370 = vmatprep.subr.bf16.mxu0 0
  %5371 = vmatpush1.bf16.msra.mxu0 0
  %5372 = vmatprep.subr.bf16.mxu0 0
  %5373 = vmatpush1.bf16.msra.mxu0 0
  %5374 = vmatprep.mubr.bf16.mxu0 0
  %5375 = vmatmul.mubr.bf16.gmra.mrb[0].mxu0 %v5341
  %v5376 = vpop.f32.mrb[0].mxu0
  %v5377 = vadd.f32 0.0, %v5376
  %v5378 = vpop.f32.mrb[0].mxu0
  %v5379 = vadd.f32 0.0, %v5378
  %v5380 = vpop.f32.mrb[0].mxu0
  %v5381 = vpop.f32.mrb[0].mxu0
  %5382 = vdwg.mxu0
  %5383 = vmatprep.subr.bf16.mxu0 %v5083
  %5384 = vmatpush1.bf16.msra.mxu0 %v5082
  %5385 = vmatprep.subr.bf16.mxu0 %v5087
  %5386 = vmatpush1.bf16.msra.mxu0 %v5086
  %5387 = vmatprep.subr.bf16.mxu0 %v5091
  %5388 = vmatpush1.bf16.msra.mxu0 %v5090
  %5389 = vmatprep.subr.bf16.mxu0 %v5095
  %5390 = vmatpush1.bf16.msra.mxu0 %v5094
  %5391 = vmatprep.subr.bf16.mxu0 %v5099
  %5392 = vmatpush1.bf16.msra.mxu0 %v5098
  %5393 = vmatprep.subr.bf16.mxu0 %v5103
  %5394 = vmatpush1.bf16.msra.mxu0 %v5102
  %5395 = vmatprep.subr.bf16.mxu0 %v5107
  %5396 = vmatpush1.bf16.msra.mxu0 %v5106
  %5397 = vmatprep.subr.bf16.mxu0 %v5111
  %5398 = vmatpush1.bf16.msra.mxu0 %v5110
  %5399 = vmatprep.subr.bf16.mxu0 0
  %5400 = vmatpush1.bf16.msra.mxu0 0
  %5401 = vmatprep.subr.bf16.mxu0 0
  %5402 = vmatpush1.bf16.msra.mxu0 0
  %5403 = vmatprep.subr.bf16.mxu0 0
  %5404 = vmatpush1.bf16.msra.mxu0 0
  %5405 = vmatprep.subr.bf16.mxu0 0
  %5406 = vmatpush1.bf16.msra.mxu0 0
  %5407 = vmatprep.subr.bf16.mxu0 0
  %5408 = vmatpush1.bf16.msra.mxu0 0
  %5409 = vmatprep.subr.bf16.mxu0 0
  %5410 = vmatpush1.bf16.msra.mxu0 0
  %5411 = vmatprep.subr.bf16.mxu0 0
  %5412 = vmatpush1.bf16.msra.mxu0 0
  %5413 = vmatprep.subr.bf16.mxu0 0
  %5414 = vmatpush1.bf16.msra.mxu0 0
  %5415 = vmatprep.mubr.bf16.mxu0 0
  %5416 = vmatmul.mubr.bf16.gmra.mrb[0].mxu0 %v5341
  %v5417 = vpop.f32.mrb[0].mxu0
  %v5418 = vadd.f32 0.0, %v5417
  %v5419 = vpop.f32.mrb[0].mxu0
  %v5420 = vadd.f32 0.0, %v5419
  %v5421 = vpop.f32.mrb[0].mxu0
  %v5422 = vpop.f32.mrb[0].mxu0
  %5423 = vdwg.mxu0
  %v5424 = vadd.f32 %v5337, %v5377
  %v5425 = vadd.f32 %v5338, %v5379
  %v5426 = vadd.f32 %v5339, %v5418
  %v5427 = vadd.f32 %v5340, %v5420
  %v5428 = vtanh.pop %v5424
  %v5429 = vtanh.pop %v5425
  %v5430 = vtanh.pop %v5426
  %v5431 = vtanh.pop %v5427
  %v5432 = vmul.f32 %v5428, 0.5
  %v5433 = vadd.f32 %v5432, 0.5
  %v5434 = vmul.f32 %v5429, 0.5
  %v5435 = vadd.f32 %v5434, 0.5
  %v5436 = vmul.f32 %v5431, 0.5
  %v5437 = vadd.f32 %v5436, 0.5
  %v5438 = vmul.f32 %v5435, %v5327
  %v5439 = vmul.f32 %v5433, %v5430
  %v5440 = vadd.f32 %v5438, %v5439
  %v5441 = vtanh.pop %v5440
  %v5442 = vmul.f32 %v5437, %v5441
  %vm5443 = vcmp.eq.s32.totalorder %v5079, 2
  %5445 = vset.pattern.permute.xlu0 0
  %5446 = vperm.xlu0 %5445, %v5442
  %v5447 = vpop.permute.xlu0 %5446
  %v5449 = vsel %vm5443, %v5447, %v5336
  %v5450 = vld [vmem:[#allocation8 + $0x60] sm:$0xff]
  %v5451 = vld [vmem:[#allocation8 + $0x68] sm:$0xff]
  %v5452 = vld [vmem:[#allocation8 + $0x70] sm:$0xff]
  %v5453 = vld [vmem:[#allocation8 + $0x78] sm:$0xff]
  %v5454 = vpack.c.bf16 %v5442, %v5442
  %5455 = vmatprep.subr.bf16.mxu0 %v5081
  %5456 = vmatpush1.bf16.msra.mxu0 %v5080
  %5457 = vmatprep.subr.bf16.mxu0 %v5085
  %5458 = vmatpush1.bf16.msra.mxu0 %v5084
  %5459 = vmatprep.subr.bf16.mxu0 %v5089
  %5460 = vmatpush1.bf16.msra.mxu0 %v5088
  %5461 = vmatprep.subr.bf16.mxu0 %v5093
  %5462 = vmatpush1.bf16.msra.mxu0 %v5092
  %5463 = vmatprep.subr.bf16.mxu0 %v5097
  %5464 = vmatpush1.bf16.msra.mxu0 %v5096
  %5465 = vmatprep.subr.bf16.mxu0 %v5101
  %5466 = vmatpush1.bf16.msra.mxu0 %v5100
  %5467 = vmatprep.subr.bf16.mxu0 %v5105
  %5468 = vmatpush1.bf16.msra.mxu0 %v5104
  %5469 = vmatprep.subr.bf16.mxu0 %v5109
  %5470 = vmatpush1.bf16.msra.mxu0 %v5108
  %5471 = vmatprep.subr.bf16.mxu0 0
  %5472 = vmatpush1.bf16.msra.mxu0 0
  %5473 = vmatprep.subr.bf16.mxu0 0
  %5474 = vmatpush1.bf16.msra.mxu0 0
  %5475 = vmatprep.subr.bf16.mxu0 0
  %5476 = vmatpush1.bf16.msra.mxu0 0
  %5477 = vmatprep.subr.bf16.mxu0 0
  %5478 = vmatpush1.bf16.msra.mxu0 0
  %5479 = vmatprep.subr.bf16.mxu0 0
  %5480 = vmatpush1.bf16.msra.mxu0 0
  %5481 = vmatprep.subr.bf16.mxu0 0
  %5482 = vmatpush1.bf16.msra.mxu0 0
  %5483 = vmatprep.subr.bf16.mxu0 0
  %5484 = vmatpush1.bf16.msra.mxu0 0
  %5485 = vmatprep.subr.bf16.mxu0 0
  %5486 = vmatpush1.bf16.msra.mxu0 0
  %5487 = vmatprep.mubr.bf16.mxu0 0
  %5488 = vmatmul.mubr.bf16.gmra.mrb[0].mxu0 %v5454
  %v5489 = vpop.f32.mrb[0].mxu0
  %v5490 = vadd.f32 0.0, %v5489
  %v5491 = vpop.f32.mrb[0].mxu0
  %v5492 = vadd.f32 0.0, %v5491
  %v5493 = vpop.f32.mrb[0].mxu0
  %v5494 = vpop.f32.mrb[0].mxu0
  %5495 = vdwg.mxu0
  %5496 = vmatprep.subr.bf16.mxu0 %v5083
  %5497 = vmatpush1.bf16.msra.mxu0 %v5082
  %5498 = vmatprep.subr.bf16.mxu0 %v5087
  %5499 = vmatpush1.bf16.msra.mxu0 %v5086
  %5500 = vmatprep.subr.bf16.mxu0 %v5091
  %5501 = vmatpush1.bf16.msra.mxu0 %v5090
  %5502 = vmatprep.subr.bf16.mxu0 %v5095
  %5503 = vmatpush1.bf16.msra.mxu0 %v5094
  %5504 = vmatprep.subr.bf16.mxu0 %v5099
  %5505 = vmatpush1.bf16.msra.mxu0 %v5098
  %5506 = vmatprep.subr.bf16.mxu0 %v5103
  %5507 = vmatpush1.bf16.msra.mxu0 %v5102
  %5508 = vmatprep.subr.bf16.mxu0 %v5107
  %5509 = vmatpush1.bf16.msra.mxu0 %v5106
  %5510 = vmatprep.subr.bf16.mxu0 %v5111
  %5511 = vmatpush1.bf16.msra.mxu0 %v5110
  %5512 = vmatprep.subr.bf16.mxu0 0
  %5513 = vmatpush1.bf16.msra.mxu0 0
  %5514 = vmatprep.subr.bf16.mxu0 0
  %5515 = vmatpush1.bf16.msra.mxu0 0
  %5516 = vmatprep.subr.bf16.mxu0 0
  %5517 = vmatpush1.bf16.msra.mxu0 0
  %5518 = vmatprep.subr.bf16.mxu0 0
  %5519 = vmatpush1.bf16.msra.mxu0 0
  %5520 = vmatprep.subr.bf16.mxu0 0
  %5521 = vmatpush1.bf16.msra.mxu0 0
  %5522 = vmatprep.subr.bf16.mxu0 0
  %5523 = vmatpush1.bf16.msra.mxu0 0
  %5524 = vmatprep.subr.bf16.mxu0 0
  %5525 = vmatpush1.bf16.msra.mxu0 0
  %5526 = vmatprep.subr.bf16.mxu0 0
  %5527 = vmatpush1.bf16.msra.mxu0 0
  %5528 = vmatprep.mubr.bf16.mxu0 0
  %5529 = vmatmul.mubr.bf16.gmra.mrb[0].mxu0 %v5454
  %v5530 = vpop.f32.mrb[0].mxu0
  %v5531 = vadd.f32 0.0, %v5530
  %v5532 = vpop.f32.mrb[0].mxu0
  %v5533 = vadd.f32 0.0, %v5532
  %v5534 = vpop.f32.mrb[0].mxu0
  %v5535 = vpop.f32.mrb[0].mxu0
  %5536 = vdwg.mxu0
  %v5537 = vadd.f32 %v5450, %v5490
  %v5538 = vadd.f32 %v5451, %v5492
  %v5539 = vadd.f32 %v5452, %v5531
  %v5540 = vadd.f32 %v5453, %v5533
  %v5541 = vtanh.pop %v5537
  %v5542 = vtanh.pop %v5538
  %v5543 = vtanh.pop %v5539
  %v5544 = vtanh.pop %v5540
  %v5545 = vmul.f32 %v5541, 0.5
  %v5546 = vadd.f32 %v5545, 0.5
  %v5547 = vmul.f32 %v5542, 0.5
  %v5548 = vadd.f32 %v5547, 0.5
  %v5549 = vmul.f32 %v5544, 0.5
  %v5550 = vadd.f32 %v5549, 0.5
  %v5551 = vmul.f32 %v5548, %v5440
  %v5552 = vmul.f32 %v5546, %v5543
  %v5553 = vadd.f32 %v5551, %v5552
  %v5554 = vtanh.pop %v5553
  %v5555 = vmul.f32 %v5550, %v5554
  %vm5556 = vcmp.eq.s32.totalorder %v5079, 3
  %5558 = vset.pattern.permute.xlu0 0
  %5559 = vperm.xlu0 %5558, %v5555
  %v5560 = vpop.permute.xlu0 %5559
  %v5562 = vsel %vm5556, %v5560, %v5449
  %v5563 = vld [vmem:[#allocation8 + $0x80] sm:$0xff]
  %v5564 = vld [vmem:[#allocation8 + $0x88] sm:$0xff]
  %v5565 = vld [vmem:[#allocation8 + $0x90] sm:$0xff]
  %v5566 = vld [vmem:[#allocation8 + $0x98] sm:$0xff]
  %v5567 = vpack.c.bf16 %v5555, %v5555
  %5568 = vmatprep.subr.bf16.mxu0 %v5081
  %5569 = vmatpush1.bf16.msra.mxu0 %v5080
  %5570 = vmatprep.subr.bf16.mxu0 %v5085
  %5571 = vmatpush1.bf16.msra.mxu0 %v5084
  %5572 = vmatprep.subr.bf16.mxu0 %v5089
  %5573 = vmatpush1.bf16.msra.mxu0 %v5088
  %5574 = vmatprep.subr.bf16.mxu0 %v5093
  %5575 = vmatpush1.bf16.msra.mxu0 %v5092
  %5576 = vmatprep.subr.bf16.mxu0 %v5097
  %5577 = vmatpush1.bf16.msra.mxu0 %v5096
  %5578 = vmatprep.subr.bf16.mxu0 %v5101
  %5579 = vmatpush1.bf16.msra.mxu0 %v5100
  %5580 = vmatprep.subr.bf16.mxu0 %v5105
  %5581 = vmatpush1.bf16.msra.mxu0 %v5104
  %5582 = vmatprep.subr.bf16.mxu0 %v5109
  %5583 = vmatpush1.bf16.msra.mxu0 %v5108
  %5584 = vmatprep.subr.bf16.mxu0 0
  %5585 = vmatpush1.bf16.msra.mxu0 0
  %5586 = vmatprep.subr.bf16.mxu0 0
  %5587 = vmatpush1.bf16.msra.mxu0 0
  %5588 = vmatprep.subr.bf16.mxu0 0
  %5589 = vmatpush1.bf16.msra.mxu0 0
  %5590 = vmatprep.subr.bf16.mxu0 0
  %5591 = vmatpush1.bf16.msra.mxu0 0
  %5592 = vmatprep.subr.bf16.mxu0 0
  %5593 = vmatpush1.bf16.msra.mxu0 0
  %5594 = vmatprep.subr.bf16.mxu0 0
  %5595 = vmatpush1.bf16.msra.mxu0 0
  %5596 = vmatprep.subr.bf16.mxu0 0
  %5597 = vmatpush1.bf16.msra.mxu0 0
  %5598 = vmatprep.subr.bf16.mxu0 0
  %5599 = vmatpush1.bf16.msra.mxu0 0
  %5600 = vmatprep.mubr.bf16.mxu0 0
  %5601 = vmatmul.mubr.bf16.gmra.mrb[0].mxu0 %v5567
  %v5602 = vpop.f32.mrb[0].mxu0
  %v5603 = vadd.f32 0.0, %v5602
  %v5604 = vpop.f32.mrb[0].mxu0
  %v5605 = vadd.f32 0.0, %v5604
  %v5606 = vpop.f32.mrb[0].mxu0
  %v5607 = vpop.f32.mrb[0].mxu0
  %5608 = vdwg.mxu0
  %5609 = vmatprep.subr.bf16.mxu0 %v5083
  %5610 = vmatpush1.bf16.msra.mxu0 %v5082
  %5611 = vmatprep.subr.bf16.mxu0 %v5087
  %5612 = vmatpush1.bf16.msra.mxu0 %v5086
  %5613 = vmatprep.subr.bf16.mxu0 %v5091
  %5614 = vmatpush1.bf16.msra.mxu0 %v5090
  %5615 = vmatprep.subr.bf16.mxu0 %v5095
  %5616 = vmatpush1.bf16.msra.mxu0 %v5094
  %5617 = vmatprep.subr.bf16.mxu0 %v5099
  %5618 = vmatpush1.bf16.msra.mxu0 %v5098
  %5619 = vmatprep.subr.bf16.mxu0 %v5103
  %5620 = vmatpush1.bf16.msra.mxu0 %v5102
  %5621 = vmatprep.subr.bf16.mxu0 %v5107
  %5622 = vmatpush1.bf16.msra.mxu0 %v5106
  %5623 = vmatprep.subr.bf16.mxu0 %v5111
  %5624 = vmatpush1.bf16.msra.mxu0 %v5110
  %5625 = vmatprep.subr.bf16.mxu0 0
  %5626 = vmatpush1.bf16.msra.mxu0 0
  %5627 = vmatprep.subr.bf16.mxu0 0
  %5628 = vmatpush1.bf16.msra.mxu0 0
  %5629 = vmatprep.subr.bf16.mxu0 0
  %5630 = vmatpush1.bf16.msra.mxu0 0
  %5631 = vmatprep.subr.bf16.mxu0 0
  %5632 = vmatpush1.bf16.msra.mxu0 0
  %5633 = vmatprep.subr.bf16.mxu0 0
  %5634 = vmatpush1.bf16.msra.mxu0 0
  %5635 = vmatprep.subr.bf16.mxu0 0
  %5636 = vmatpush1.bf16.msra.mxu0 0
  %5637 = vmatprep.subr.bf16.mxu0 0
  %5638 = vmatpush1.bf16.msra.mxu0 0
  %5639 = vmatprep.subr.bf16.mxu0 0
  %5640 = vmatpush1.bf16.msra.mxu0 0
  %5641 = vmatprep.mubr.bf16.mxu0 0
  %5642 = vmatmul.mubr.bf16.gmra.mrb[0].mxu0 %v5567
  %v5643 = vpop.f32.mrb[0].mxu0
  %v5644 = vadd.f32 0.0, %v5643
  %v5645 = vpop.f32.mrb[0].mxu0
  %v5646 = vadd.f32 0.0, %v5645
  %v5647 = vpop.f32.mrb[0].mxu0
  %v5648 = vpop.f32.mrb[0].mxu0
  %5649 = vdwg.mxu0
  %v5650 = vadd.f32 %v5563, %v5603
  %v5651 = vadd.f32 %v5564, %v5605
  %v5652 = vadd.f32 %v5565, %v5644
  %v5653 = vadd.f32 %v5566, %v5646
  %v5654 = vtanh.pop %v5650
  %v5655 = vtanh.pop %v5651
  %v5656 = vtanh.pop %v5652
  %v5657 = vtanh.pop %v5653
  %v5658 = vmul.f32 %v5654, 0.5
  %v5659 = vadd.f32 %v5658, 0.5
  %v5660 = vmul.f32 %v5655, 0.5
  %v5661 = vadd.f32 %v5660, 0.5
  %v5662 = vmul.f32 %v5657, 0.5
  %v5663 = vadd.f32 %v5662, 0.5
  %v5664 = vmul.f32 %v5661, %v5553
  %v5665 = vmul.f32 %v5659, %v5656
  %v5666 = vadd.f32 %v5664, %v5665
  %v5667 = vtanh.pop %v5666
  %v5668 = vmul.f32 %v5663, %v5667
  %vm5669 = vcmp.eq.s32.totalorder %v5079, 4
  %5671 = vset.pattern.permute.xlu0 0
  %5672 = vperm.xlu0 %5671, %v5668
  %v5673 = vpop.permute.xlu0 %5672
  %v5675 = vsel %vm5669, %v5673, %v5562
  %v5676 = vld [vmem:[#allocation8 + $0xa0] sm:$0xff]
  %v5677 = vld [vmem:[#allocation8 + $0xa8] sm:$0xff]
  %v5678 = vld [vmem:[#allocation8 + $0xb0] sm:$0xff]
  %v5679 = vld [vmem:[#allocation8 + $0xb8] sm:$0xff]
  %v5680 = vpack.c.bf16 %v5668, %v5668
  %5681 = vmatprep.subr.bf16.mxu0 %v5081
  %5682 = vmatpush1.bf16.msra.mxu0 %v5080
  %5683 = vmatprep.subr.bf16.mxu0 %v5085
  %5684 = vmatpush1.bf16.msra.mxu0 %v5084
  %5685 = vmatprep.subr.bf16.mxu0 %v5089
  %5686 = vmatpush1.bf16.msra.mxu0 %v5088
  %5687 = vmatprep.subr.bf16.mxu0 %v5093
  %5688 = vmatpush1.bf16.msra.mxu0 %v5092
  %5689 = vmatprep.subr.bf16.mxu0 %v5097
  %5690 = vmatpush1.bf16.msra.mxu0 %v5096
  %5691 = vmatprep.subr.bf16.mxu0 %v5101
  %5692 = vmatpush1.bf16.msra.mxu0 %v5100
  %5693 = vmatprep.subr.bf16.mxu0 %v5105
  %5694 = vmatpush1.bf16.msra.mxu0 %v5104
  %5695 = vmatprep.subr.bf16.mxu0 %v5109
  %5696 = vmatpush1.bf16.msra.mxu0 %v5108
  %5697 = vmatprep.subr.bf16.mxu0 0
  %5698 = vmatpush1.bf16.msra.mxu0 0
  %5699 = vmatprep.subr.bf16.mxu0 0
  %5700 = vmatpush1.bf16.msra.mxu0 0
  %5701 = vmatprep.subr.bf16.mxu0 0
  %5702 = vmatpush1.bf16.msra.mxu0 0
  %5703 = vmatprep.subr.bf16.mxu0 0
  %5704 = vmatpush1.bf16.msra.mxu0 0
  %5705 = vmatprep.subr.bf16.mxu0 0
  %5706 = vmatpush1.bf16.msra.mxu0 0
  %5707 = vmatprep.subr.bf16.mxu0 0
  %5708 = vmatpush1.bf16.msra.mxu0 0
  %5709 = vmatprep.subr.bf16.mxu0 0
  %5710 = vmatpush1.bf16.msra.mxu0 0
  %5711 = vmatprep.subr.bf16.mxu0 0
  %5712 = vmatpush1.bf16.msra.mxu0 0
  %5713 = vmatprep.mubr.bf16.mxu0 0
  %5714 = vmatmul.mubr.bf16.gmra.mrb[0].mxu0 %v5680
  %v5715 = vpop.f32.mrb[0].mxu0
  %v5716 = vadd.f32 0.0, %v5715
  %v5717 = vpop.f32.mrb[0].mxu0
  %v5718 = vadd.f32 0.0, %v5717
  %v5719 = vpop.f32.mrb[0].mxu0
  %v5720 = vpop.f32.mrb[0].mxu0
  %5721 = vdwg.mxu0
  %5722 = vmatprep.subr.bf16.mxu0 %v5083
  %5723 = vmatpush1.bf16.msra.mxu0 %v5082
  %5724 = vmatprep.subr.bf16.mxu0 %v5087
  %5725 = vmatpush1.bf16.msra.mxu0 %v5086
  %5726 = vmatprep.subr.bf16.mxu0 %v5091
  %5727 = vmatpush1.bf16.msra.mxu0 %v5090
  %5728 = vmatprep.subr.bf16.mxu0 %v5095
  %5729 = vmatpush1.bf16.msra.mxu0 %v5094
  %5730 = vmatprep.subr.bf16.mxu0 %v5099
  %5731 = vmatpush1.bf16.msra.mxu0 %v5098
  %5732 = vmatprep.subr.bf16.mxu0 %v5103
  %5733 = vmatpush1.bf16.msra.mxu0 %v5102
  %5734 = vmatprep.subr.bf16.mxu0 %v5107
  %5735 = vmatpush1.bf16.msra.mxu0 %v5106
  %5736 = vmatprep.subr.bf16.mxu0 %v5111
  %5737 = vmatpush1.bf16.msra.mxu0 %v5110
  %5738 = vmatprep.subr.bf16.mxu0 0
  %5739 = vmatpush1.bf16.msra.mxu0 0
  %5740 = vmatprep.subr.bf16.mxu0 0
  %5741 = vmatpush1.bf16.msra.mxu0 0
  %5742 = vmatprep.subr.bf16.mxu0 0
  %5743 = vmatpush1.bf16.msra.mxu0 0
  %5744 = vmatprep.subr.bf16.mxu0 0
  %5745 = vmatpush1.bf16.msra.mxu0 0
  %5746 = vmatprep.subr.bf16.mxu0 0
  %5747 = vmatpush1.bf16.msra.mxu0 0
  %5748 = vmatprep.subr.bf16.mxu0 0
  %5749 = vmatpush1.bf16.msra.mxu0 0
  %5750 = vmatprep.subr.bf16.mxu0 0
  %5751 = vmatpush1.bf16.msra.mxu0 0
  %5752 = vmatprep.subr.bf16.mxu0 0
  %5753 = vmatpush1.bf16.msra.mxu0 0
  %5754 = vmatprep.mubr.bf16.mxu0 0
  %5755 = vmatmul.mubr.bf16.gmra.mrb[0].mxu0 %v5680
  %v5756 = vpop.f32.mrb[0].mxu0
  %v5757 = vadd.f32 0.0, %v5756
  %v5758 = vpop.f32.mrb[0].mxu0
  %v5759 = vadd.f32 0.0, %v5758
  %v5760 = vpop.f32.mrb[0].mxu0
  %v5761 = vpop.f32.mrb[0].mxu0
  %5762 = vdwg.mxu0
  %v5763 = vadd.f32 %v5676, %v5716
  %v5764 = vadd.f32 %v5677, %v5718
  %v5765 = vadd.f32 %v5678, %v5757
  %v5766 = vadd.f32 %v5679, %v5759
  %v5767 = vtanh.pop %v5763
  %v5768 = vtanh.pop %v5764
  %v5769 = vtanh.pop %v5765
  %v5770 = vtanh.pop %v5766
  %v5771 = vmul.f32 %v5767, 0.5
  %v5772 = vadd.f32 %v5771, 0.5
  %v5773 = vmul.f32 %v5768, 0.5
  %v5774 = vadd.f32 %v5773, 0.5
  %v5775 = vmul.f32 %v5770, 0.5
  %v5776 = vadd.f32 %v5775, 0.5
  %v5777 = vmul.f32 %v5774, %v5666
  %v5778 = vmul.f32 %v5772, %v5769
  %v5779 = vadd.f32 %v5777, %v5778
  %v5780 = vtanh.pop %v5779
  %v5781 = vmul.f32 %v5776, %v5780
  %vm5782 = vcmp.eq.s32.totalorder %v5079, 5
  %5784 = vset.pattern.permute.xlu0 0
  %5785 = vperm.xlu0 %5784, %v5781
  %v5786 = vpop.permute.xlu0 %5785
  %v5788 = vsel %vm5782, %v5786, %v5675
  %v5789 = vld [vmem:[#allocation8 + $0xc0] sm:$0xff]
  %v5790 = vld [vmem:[#allocation8 + $0xc8] sm:$0xff]
  %v5791 = vld [vmem:[#allocation8 + $0xd0] sm:$0xff]
  %v5792 = vld [vmem:[#allocation8 + $0xd8] sm:$0xff]
  %v5793 = vpack.c.bf16 %v5781, %v5781
  %5794 = vmatprep.subr.bf16.mxu0 %v5081
  %5795 = vmatpush1.bf16.msra.mxu0 %v5080
  %5796 = vmatprep.subr.bf16.mxu0 %v5085
  %5797 = vmatpush1.bf16.msra.mxu0 %v5084
  %5798 = vmatprep.subr.bf16.mxu0 %v5089
  %5799 = vmatpush1.bf16.msra.mxu0 %v5088
  %5800 = vmatprep.subr.bf16.mxu0 %v5093
  %5801 = vmatpush1.bf16.msra.mxu0 %v5092
  %5802 = vmatprep.subr.bf16.mxu0 %v5097
  %5803 = vmatpush1.bf16.msra.mxu0 %v5096
  %5804 = vmatprep.subr.bf16.mxu0 %v5101
  %5805 = vmatpush1.bf16.msra.mxu0 %v5100
  %5806 = vmatprep.subr.bf16.mxu0 %v5105
  %5807 = vmatpush1.bf16.msra.mxu0 %v5104
  %5808 = vmatprep.subr.bf16.mxu0 %v5109
  %5809 = vmatpush1.bf16.msra.mxu0 %v5108
  %5810 = vmatprep.subr.bf16.mxu0 0
  %5811 = vmatpush1.bf16.msra.mxu0 0
  %5812 = vmatprep.subr.bf16.mxu0 0
  %5813 = vmatpush1.bf16.msra.mxu0 0
  %5814 = vmatprep.subr.bf16.mxu0 0
  %5815 = vmatpush1.bf16.msra.mxu0 0
  %5816 = vmatprep.subr.bf16.mxu0 0
  %5817 = vmatpush1.bf16.msra.mxu0 0
  %5818 = vmatprep.subr.bf16.mxu0 0
  %5819 = vmatpush1.bf16.msra.mxu0 0
  %5820 = vmatprep.subr.bf16.mxu0 0
  %5821 = vmatpush1.bf16.msra.mxu0 0
  %5822 = vmatprep.subr.bf16.mxu0 0
  %5823 = vmatpush1.bf16.msra.mxu0 0
  %5824 = vmatprep.subr.bf16.mxu0 0
  %5825 = vmatpush1.bf16.msra.mxu0 0
  %5826 = vmatprep.mubr.bf16.mxu0 0
  %5827 = vmatmul.mubr.bf16.gmra.mrb[0].mxu0 %v5793
  %v5828 = vpop.f32.mrb[0].mxu0
  %v5829 = vadd.f32 0.0, %v5828
  %v5830 = vpop.f32.mrb[0].mxu0
  %v5831 = vadd.f32 0.0, %v5830
  %v5832 = vpop.f32.mrb[0].mxu0
  %v5833 = vpop.f32.mrb[0].mxu0
  %5834 = vdwg.mxu0
  %5835 = vmatprep.subr.bf16.mxu0 %v5083
  %5836 = vmatpush1.bf16.msra.mxu0 %v5082
  %5837 = vmatprep.subr.bf16.mxu0 %v5087
  %5838 = vmatpush1.bf16.msra.mxu0 %v5086
  %5839 = vmatprep.subr.bf16.mxu0 %v5091
  %5840 = vmatpush1.bf16.msra.mxu0 %v5090
  %5841 = vmatprep.subr.bf16.mxu0 %v5095
  %5842 = vmatpush1.bf16.msra.mxu0 %v5094
  %5843 = vmatprep.subr.bf16.mxu0 %v5099
  %5844 = vmatpush1.bf16.msra.mxu0 %v5098
  %5845 = vmatprep.subr.bf16.mxu0 %v5103
  %5846 = vmatpush1.bf16.msra.mxu0 %v5102
  %5847 = vmatprep.subr.bf16.mxu0 %v5107
  %5848 = vmatpush1.bf16.msra.mxu0 %v5106
  %5849 = vmatprep.subr.bf16.mxu0 %v5111
  %5850 = vmatpush1.bf16.msra.mxu0 %v5110
  %5851 = vmatprep.subr.bf16.mxu0 0
  %5852 = vmatpush1.bf16.msra.mxu0 0
  %5853 = vmatprep.subr.bf16.mxu0 0
  %5854 = vmatpush1.bf16.msra.mxu0 0
  %5855 = vmatprep.subr.bf16.mxu0 0
  %5856 = vmatpush1.bf16.msra.mxu0 0
  %5857 = vmatprep.subr.bf16.mxu0 0
  %5858 = vmatpush1.bf16.msra.mxu0 0
  %5859 = vmatprep.subr.bf16.mxu0 0
  %5860 = vmatpush1.bf16.msra.mxu0 0
  %5861 = vmatprep.subr.bf16.mxu0 0
  %5862 = vmatpush1.bf16.msra.mxu0 0
  %5863 = vmatprep.subr.bf16.mxu0 0
  %5864 = vmatpush1.bf16.msra.mxu0 0
  %5865 = vmatprep.subr.bf16.mxu0 0
  %5866 = vmatpush1.bf16.msra.mxu0 0
  %5867 = vmatprep.mubr.bf16.mxu0 0
  %5868 = vmatmul.mubr.bf16.gmra.mrb[0].mxu0 %v5793
  %v5869 = vpop.f32.mrb[0].mxu0
  %v5870 = vadd.f32 0.0, %v5869
  %v5871 = vpop.f32.mrb[0].mxu0
  %v5872 = vadd.f32 0.0, %v5871
  %v5873 = vpop.f32.mrb[0].mxu0
  %v5874 = vpop.f32.mrb[0].mxu0
  %5875 = vdwg.mxu0
  %v5876 = vadd.f32 %v5789, %v5829
  %v5877 = vadd.f32 %v5790, %v5831
  %v5878 = vadd.f32 %v5791, %v5870
  %v5879 = vadd.f32 %v5792, %v5872
  %v5880 = vtanh.pop %v5876
  %v5881 = vtanh.pop %v5877
  %v5882 = vtanh.pop %v5878
  %v5883 = vtanh.pop %v5879
  %v5884 = vmul.f32 %v5880, 0.5
  %v5885 = vadd.f32 %v5884, 0.5
  %v5886 = vmul.f32 %v5881, 0.5
  %v5887 = vadd.f32 %v5886, 0.5
  %v5888 = vmul.f32 %v5883, 0.5
  %v5889 = vadd.f32 %v5888, 0.5
  %v5890 = vmul.f32 %v5887, %v5779
  %v5891 = vmul.f32 %v5885, %v5882
  %v5892 = vadd.f32 %v5890, %v5891
  %v5893 = vtanh.pop %v5892
  %v5894 = vmul.f32 %v5889, %v5893
  %vm5895 = vcmp.eq.s32.totalorder %v5079, 6
  %5897 = vset.pattern.permute.xlu0 0
  %5898 = vperm.xlu0 %5897, %v5894
  %v5899 = vpop.permute.xlu0 %5898
  %v5901 = vsel %vm5895, %v5899, %v5788
  %v5902 = vld [vmem:[#allocation8 + $0xe0] sm:$0xff]
  %v5903 = vld [vmem:[#allocation8 + $0xe8] sm:$0xff]
  %v5904 = vld [vmem:[#allocation8 + $0xf0] sm:$0xff]
  %v5905 = vld [vmem:[#allocation8 + $0xf8] sm:$0xff]
  %v5906 = vpack.c.bf16 %v5894, %v5894
  %5907 = vmatprep.subr.bf16.mxu0 %v5081
  %5908 = vmatpush1.bf16.msra.mxu0 %v5080
  %5909 = vmatprep.subr.bf16.mxu0 %v5085
  %5910 = vmatpush1.bf16.msra.mxu0 %v5084
  %5911 = vmatprep.subr.bf16.mxu0 %v5089
  %5912 = vmatpush1.bf16.msra.mxu0 %v5088
  %5913 = vmatprep.subr.bf16.mxu0 %v5093
  %5914 = vmatpush1.bf16.msra.mxu0 %v5092
  %5915 = vmatprep.subr.bf16.mxu0 %v5097
  %5916 = vmatpush1.bf16.msra.mxu0 %v5096
  %5917 = vmatprep.subr.bf16.mxu0 %v5101
  %5918 = vmatpush1.bf16.msra.mxu0 %v5100
  %5919 = vmatprep.subr.bf16.mxu0 %v5105
  %5920 = vmatpush1.bf16.msra.mxu0 %v5104
  %5921 = vmatprep.subr.bf16.mxu0 %v5109
  %5922 = vmatpush1.bf16.msra.mxu0 %v5108
  %5923 = vmatprep.subr.bf16.mxu0 0
  %5924 = vmatpush1.bf16.msra.mxu0 0
  %5925 = vmatprep.subr.bf16.mxu0 0
  %5926 = vmatpush1.bf16.msra.mxu0 0
  %5927 = vmatprep.subr.bf16.mxu0 0
  %5928 = vmatpush1.bf16.msra.mxu0 0
  %5929 = vmatprep.subr.bf16.mxu0 0
  %5930 = vmatpush1.bf16.msra.mxu0 0
  %5931 = vmatprep.subr.bf16.mxu0 0
  %5932 = vmatpush1.bf16.msra.mxu0 0
  %5933 = vmatprep.subr.bf16.mxu0 0
  %5934 = vmatpush1.bf16.msra.mxu0 0
  %5935 = vmatprep.subr.bf16.mxu0 0
  %5936 = vmatpush1.bf16.msra.mxu0 0
  %5937 = vmatprep.subr.bf16.mxu0 0
  %5938 = vmatpush1.bf16.msra.mxu0 0
  %5939 = vmatprep.mubr.bf16.mxu0 0
  %5940 = vmatmul.mubr.bf16.gmra.mrb[0].mxu0 %v5906
  %v5941 = vpop.f32.mrb[0].mxu0
  %v5942 = vadd.f32 0.0, %v5941
  %v5943 = vpop.f32.mrb[0].mxu0
  %v5944 = vadd.f32 0.0, %v5943
  %v5945 = vpop.f32.mrb[0].mxu0
  %v5946 = vpop.f32.mrb[0].mxu0
  %5947 = vdwg.mxu0
  %5948 = vmatprep.subr.bf16.mxu0 %v5083
  %5949 = vmatpush1.bf16.msra.mxu0 %v5082
  %5950 = vmatprep.subr.bf16.mxu0 %v5087
  %5951 = vmatpush1.bf16.msra.mxu0 %v5086
  %5952 = vmatprep.subr.bf16.mxu0 %v5091
  %5953 = vmatpush1.bf16.msra.mxu0 %v5090
  %5954 = vmatprep.subr.bf16.mxu0 %v5095
  %5955 = vmatpush1.bf16.msra.mxu0 %v5094
  %5956 = vmatprep.subr.bf16.mxu0 %v5099
  %5957 = vmatpush1.bf16.msra.mxu0 %v5098
  %5958 = vmatprep.subr.bf16.mxu0 %v5103
  %5959 = vmatpush1.bf16.msra.mxu0 %v5102
  %5960 = vmatprep.subr.bf16.mxu0 %v5107
  %5961 = vmatpush1.bf16.msra.mxu0 %v5106
  %5962 = vmatprep.subr.bf16.mxu0 %v5111
  %5963 = vmatpush1.bf16.msra.mxu0 %v5110
  %5964 = vmatprep.subr.bf16.mxu0 0
  %5965 = vmatpush1.bf16.msra.mxu0 0
  %5966 = vmatprep.subr.bf16.mxu0 0
  %5967 = vmatpush1.bf16.msra.mxu0 0
  %5968 = vmatprep.subr.bf16.mxu0 0
  %5969 = vmatpush1.bf16.msra.mxu0 0
  %5970 = vmatprep.subr.bf16.mxu0 0
  %5971 = vmatpush1.bf16.msra.mxu0 0
  %5972 = vmatprep.subr.bf16.mxu0 0
  %5973 = vmatpush1.bf16.msra.mxu0 0
  %5974 = vmatprep.subr.bf16.mxu0 0
  %5975 = vmatpush1.bf16.msra.mxu0 0
  %5976 = vmatprep.subr.bf16.mxu0 0
  %5977 = vmatpush1.bf16.msra.mxu0 0
  %5978 = vmatprep.subr.bf16.mxu0 0
  %5979 = vmatpush1.bf16.msra.mxu0 0
  %5980 = vmatprep.mubr.bf16.mxu0 0
  %5981 = vmatmul.mubr.bf16.gmra.mrb[0].mxu0 %v5906
  %v5982 = vpop.f32.mrb[0].mxu0
  %v5983 = vadd.f32 0.0, %v5982
  %v5984 = vpop.f32.mrb[0].mxu0
  %v5985 = vadd.f32 0.0, %v5984
  %v5986 = vpop.f32.mrb[0].mxu0
  %v5987 = vpop.f32.mrb[0].mxu0
  %5988 = vdwg.mxu0
  %v5989 = vadd.f32 %v5902, %v5942
  %v5990 = vadd.f32 %v5903, %v5944
  %v5991 = vadd.f32 %v5904, %v5983
  %v5992 = vadd.f32 %v5905, %v5985
  %v5993 = vtanh.pop %v5989
  %v5994 = vtanh.pop %v5990
  %v5995 = vtanh.pop %v5991
  %v5996 = vtanh.pop %v5992
  %v5997 = vmul.f32 %v5993, 0.5
  %v5998 = vadd.f32 %v5997, 0.5
  %v5999 = vmul.f32 %v5994, 0.5
  %v6000 = vadd.f32 %v5999, 0.5
  %v6001 = vmul.f32 %v5996, 0.5
  %v6002 = vadd.f32 %v6001, 0.5
  %v6003 = vmul.f32 %v6000, %v5892
  %v6004 = vmul.f32 %v5998, %v5995
  %v6005 = vadd.f32 %v6003, %v6004
  %v6006 = vtanh.pop %v6005
  %v6007 = vmul.f32 %v6002, %v6006
  %vm6008 = vcmp.eq.s32.totalorder %v5079, 7
  %6010 = vset.pattern.permute.xlu0 0
  %6011 = vperm.xlu0 %6010, %v6007
  %v6012 = vpop.permute.xlu0 %6011
  %v6014 = vsel %vm6008, %v6012, %v5901
  %6015 = vst [vmem:[%s12] sm:$0xff] %v6014
  // Predicated region
  $region215: #{model_1_3_forward.1} parent=0 // pred_check
    _
  $region216: #{model_1_3_forward.1} parent=0 // pred_check_branch
    %6017 = sbr.rel (0) target = $region218
  $region217: #{model_1_3_forward.1} parent=0 // pred_region
    _
  $region218: #{model_1_3_forward.1} parent=0 // pred_fallthru
    _
  // Predicated region
  $region219: #{model_1_3_forward.1} parent=0 // pred_check
    _
  $region220: #{model_1_3_forward.1} parent=0 // pred_check_branch
    %6019 = sbr.rel (0) target = $region222
  $region221: #{model_1_3_forward.1} parent=0 // pred_region
    _
  $region222: #{model_1_3_forward.1} parent=0 // pred_fallthru
    _
  %6020 = vsyncmov [#allocation14]
  %s6021 = vpop.sfrf %6020
  %p6022 = scmp.eq.s32.totalorder %s6021, 0
  %p6023 = pneg %p6022
  %6025 = shalt.err (%p6023)
  %s6026 = scalar_lea.sflag [#allocation14], 1
  %6027 = vsyncmov %s6026
  %s6028 = vpop.sfrf %6027
  %p6029 = scmp.eq.s32.totalorder %s6028, 0
  %p6030 = pneg %p6029
  %6032 = shalt.err (%p6030)
  %s6033 = scalar_lea.sflag [#allocation14], 2
  %6034 = vsyncmov %s6033
  %s6035 = vpop.sfrf %6034
  %p6036 = scmp.eq.s32.totalorder %s6035, 0
  %p6037 = pneg %p6036
  %6039 = shalt.err (%p6037)
  %s6040 = scalar_lea.sflag [#allocation14], 3
  %6041 = vsyncmov %s6040
  %s6042 = vpop.sfrf %6041
  %p6043 = scmp.eq.s32.totalorder %s6042, 0
  %p6044 = pneg %p6043
  %6046 = shalt.err (%p6044)
  %s6047 = scalar_lea.sflag [#allocation14], 4
  %6048 = vsyncmov %s6047
  %s6049 = vpop.sfrf %6048
  %p6050 = scmp.eq.s32.totalorder %s6049, 0
  %p6051 = pneg %p6050
  %6053 = shalt.err (%p6051)

</llo_original>
